<compile_context>
chip_gen: v5e
topology: v5e:2x2
jax: 0.10.0
libtpu: 0.0.40
codegen_flags: <defaults>
</compile_context>

<pallas_src>
import functools
import math

import jax
import jax.numpy as jnp
from jax import lax
from jax.experimental import pallas as pl
from jax.experimental.pallas import tpu as pltpu

LN_EPS = 1e-5          # torch.nn.LayerNorm default
HYPER_HIDDEN = 256     # hardcoded in HyperImplicitField: HyperFC(..., 1, 256, ...)


# ----------------------------------------------------------------------------
# Fused, lane-packed hypo-MLP Pallas kernel (all layers in one call)
# ----------------------------------------------------------------------------
def _make_packed_mlp_kernel(num_layers, ln_flags, m_index, num_m, compute_dtype):
    """refs = (w_0..w_{L-1}, b_0..b_{L-1}, M_0..M_{num_m-1}, o_ref)

    w_l : (G*Din_l, G*Dout_l) block-diagonal weights, compute_dtype, VMEM-resident
    b_l : (1, G*Dout_l) f32 packed bias
    M_k : (G*D, G*D) f32 block-averaging matrix (exact per-segment mean via MXU)
    """

    def kernel(x_ref, *refs):
        w_refs = refs[:num_layers]
        b_refs = refs[num_layers:2 * num_layers]
        m_refs = refs[2 * num_layers:2 * num_layers + num_m]
        o_ref = refs[-1]

        z = x_ref[...]                                   # (tn, G*Din0), compute_dtype
        for l in range(num_layers):                      # static unroll; dims differ
            y = jnp.dot(z, w_refs[l][...],
                        preferred_element_type=jnp.float32) + b_refs[l][...]
            if ln_flags[l]:
                # LayerNorm (no affine) per Dout-wide segment of the packed row.
                # One-pass stats; segment mean / mean-of-squares via a constant
                # block-averaging matmul on the idle MXU (no XLU reductions).
                # Epilogue math stays in f32 on all generations.
                m = m_refs[m_index[l]][...]
                mu = jnp.dot(y, m, preferred_element_type=jnp.float32)
                ex2 = jnp.dot(y * y, m, preferred_element_type=jnp.float32)
                var = jnp.maximum(ex2 - mu * mu, 0.0)
                y = (y - mu) * lax.rsqrt(var + LN_EPS)
                y = jnp.maximum(y, 0.0)                  # ReLU
            z = y.astype(compute_dtype) if l + 1 < num_layers else y
        o_ref[...] = z.astype(o_ref.dtype)

    return kernel


def _pick_row_tile(rows, max_tile=1024):
    """Packed-row tile: as large as comfortably fits VMEM on every generation
    (<= ~1 MiB of f32 intermediates), with an even step count >= 2 so the single
    'parallel' grid axis load-balances across v7x's two TensorCores."""
    steps = max(2, pl.cdiv(rows, max_tile))
    if steps % 2:
        steps += 1
    tile = pl.cdiv(rows, steps)
    tile = pl.cdiv(tile, 8) * 8                 # sublane multiple
    return int(max(8, min(tile, max_tile)))


def _hypo_mlp_xla(x, wts, bs, *, outmost_linear):
    """Fused plain-XLA path for small N (Pallas fixed costs would dominate)."""
    L = len(wts)
    z = x
    for l, (wt, b) in enumerate(zip(wts, bs)):
        z = z @ wt + b
        if not (l == L - 1 and outmost_linear):
            mean = z.mean(-1, keepdims=True)
            var = jnp.square(z - mean).mean(-1, keepdims=True)
            z = jnp.maximum((z - mean) * lax.rsqrt(var + LN_EPS), 0.0)
    return z


def hypo_mlp_apply(x, wts, bs, *, outmost_linear, compute_dtype=jnp.bfloat16,
                   tile_rows=None, xla_fallback_rows=1024):
    """Apply the generated hypo MLP to all points in one fused pallas_call.

    x:   (N, in_dim) f32
    wts: list of per-layer transposed weights, wts[l] has shape (Din_l, Dout_l)
    bs:  list of per-layer biases, bs[l] has shape (Dout_l,)
    """
    N, in_dim = x.shape
    L = len(wts)
    out_dim = wts[-1].shape[1]

    if N <= xla_fallback_rows:
        return _hypo_mlp_xla(x, wts, bs, outmost_linear=outmost_linear)

    # Lane packing factor: pack G original rows per packed row so the widest
    # activation occupies (close to) all 128 lanes.
    widest = max(w.shape[1] for w in wts)
    G = max(1, 128 // widest)

    n_pad = (-N) % G
    if n_pad:
        x = jnp.pad(x, ((0, n_pad), (0, 0)))     # at most G-1 extra rows
    rows = (N + n_pad) // G
    # cast once (halves the dominant HBM read when bf16); reshape is free.
    xp = x.astype(compute_dtype).reshape(rows, G * in_dim)

    tn = _pick_row_tile(rows) if tile_rows is None else tile_rows
    grid = (pl.cdiv(rows, tn),)

    eye_g = jnp.eye(G, dtype=jnp.float32)
    w_args, w_specs, b_args, b_specs, ln_flags = [], [], [], [], []
    for l, (wt, b) in enumerate(zip(wts, bs)):
        din, dout = wt.shape
        # one-time per-call prep (weights are tiny): block-diag weight, packed
        # bias, pre-cast to compute_dtype -> no per-grid-step casts in-kernel.
        w_args.append(jnp.kron(eye_g, wt).astype(compute_dtype))
        b_args.append(jnp.tile(b, G).reshape(1, G * dout).astype(jnp.float32))
        w_specs.append(pl.BlockSpec((G * din, G * dout), lambda i: (0, 0)))
        b_specs.append(pl.BlockSpec((1, G * dout), lambda i: (0, 0)))
        ln_flags.append(not (l == L - 1 and outmost_linear))

    # Unique block-averaging matrices, one per distinct LayerNorm width.
    m_args, m_specs, m_index, m_of_width = [], [], [], {}
    for l, wt in enumerate(wts):
        dout = wt.shape[1]
        if ln_flags[l]:
            if dout not in m_of_width:
                m_of_width[dout] = len(m_args)
                m_args.append(jnp.kron(
                    eye_g, jnp.full((dout, dout), 1.0 / dout, jnp.float32)))
                m_specs.append(pl.BlockSpec((G * dout, G * dout),
                                            lambda i: (0, 0)))
            m_index.append(m_of_width[dout])
        else:
            m_index.append(-1)

    kernel = _make_packed_mlp_kernel(L, tuple(ln_flags), tuple(m_index),
                                     len(m_args), compute_dtype)
    # TODO(synk): the 2L+num_m constant operands (<200 KB total) could be
    # concatenated into one flat VMEM-resident buffer (fewer BlockSpecs / DMA
    # descriptors); kept separate here for clarity.
    out_p = pl.pallas_call(
        kernel,
        out_shape=jax.ShapeDtypeStruct((rows, G * out_dim), jnp.float32),
        grid=grid,
        in_specs=([pl.BlockSpec((tn, G * in_dim), lambda i: (i, 0))]
                  + w_specs + b_specs + m_specs),
        out_specs=pl.BlockSpec((tn, G * out_dim), lambda i: (i, 0)),
        compiler_params=pltpu.CompilerParams(
            dimension_semantics=("parallel",)),
    )(xp, *w_args, *b_args, *m_args)

    out = out_p.reshape(rows * G, out_dim)
    return out[:N] if n_pad else out


# ----------------------------------------------------------------------------
# Parameters (deterministic synthetic init; shapes follow the module __init__)
# ----------------------------------------------------------------------------
def init_params(key, hyper_in_dim, in_dim, out_dim, hidden_dim, num_layers):
    layer_dims = tuple([(in_dim, hidden_dim)]
                       + [(hidden_dim, hidden_dim)] * num_layers
                       + [(hidden_dim, out_dim)])
    params = []
    for (ic, oc) in layer_dims:
        key, k1, k2, k3 = jax.random.split(key, 4)
        out_feat = ic * oc + oc
        params.append(dict(
            # FCLayer 1: Linear(hyper_in -> 256) + LayerNorm(256, affine) + ReLU
            w1=(jax.random.normal(k1, (HYPER_HIDDEN, hyper_in_dim), jnp.float32)
                * math.sqrt(2.0 / hyper_in_dim)),
            b1=jnp.zeros((HYPER_HIDDEN,), jnp.float32),
            g1=jnp.ones((HYPER_HIDDEN,), jnp.float32),
            be1=jnp.zeros((HYPER_HIDDEN,), jnp.float32),
            # FCLayer 2: Linear(256 -> 256) + LayerNorm(256, affine) + ReLU
            w2=(jax.random.normal(k2, (HYPER_HIDDEN, HYPER_HIDDEN), jnp.float32)
                * math.sqrt(2.0 / HYPER_HIDDEN)),
            b2=jnp.zeros((HYPER_HIDDEN,), jnp.float32),
            g2=jnp.ones((HYPER_HIDDEN,), jnp.float32),
            be2=jnp.zeros((HYPER_HIDDEN,), jnp.float32),
            # outermost Linear(256 -> in_ch*out_ch + out_ch), scaled 0.1
            w3=(jax.random.normal(k3, (out_feat, HYPER_HIDDEN), jnp.float32)
                * math.sqrt(2.0 / HYPER_HIDDEN) * 0.1),
            b3=jnp.zeros((out_feat,), jnp.float32),
        ))
    return params, layer_dims


def preprocess_params(params, layer_dims):
    """One-time static permutation of w3/b3 rows so the hypernet output directly
    yields W^T in (Din, Dout) layout (removes a runtime transpose)."""
    out = []
    for lp, (ic, oc) in zip(params, layer_dims):
        perm_w = jnp.arange(ic * oc).reshape(oc, ic).T.reshape(-1)
        perm = jnp.concatenate([perm_w, ic * oc + jnp.arange(oc)])
        lp = dict(lp)
        lp["w3p"] = lp["w3"][perm]
        lp["b3p"] = lp["b3"][perm]
        out.append(lp)
    return out


# ----------------------------------------------------------------------------
# HyperImplicitField forward
# ----------------------------------------------------------------------------
def hyper_implicit_field_forward(params, x, c, *, layer_dims, outmost_linear=False,
                                 compute_dtype=jnp.bfloat16):
    """x: (N, in_dim)  (the x.dim()==2 path of the module), c: (1, hyper_in_dim)."""

    # --- hypernetwork in plain XLA: batch=1 chains, pure launch overhead in Pallas
    def ln_affine(y, g, b):
        mean = y.mean(-1, keepdims=True)
        var = jnp.square(y - mean).mean(-1, keepdims=True)
        return (y - mean) * lax.rsqrt(var + LN_EPS) * g + b

    wts, bs = [], []
    for lp, (ic, oc) in zip(params, layer_dims):
        h = jax.nn.relu(ln_affine(c @ lp["w1"].T + lp["b1"], lp["g1"], lp["be1"]))
        h = jax.nn.relu(ln_affine(h @ lp["w2"].T + lp["b2"], lp["g2"], lp["be2"]))
        p = (h @ lp["w3p"].T + lp["b3p"])[0]
        wts.append(p[: ic * oc].reshape(ic, oc))     # already W^T: (Din, Dout)
        bs.append(p[ic * oc: ic * oc + oc])          # (Dout,)

    # --- hot path: whole generated MLP in one fused, lane-packed Pallas kernel
    return hypo_mlp_apply(x, wts, bs, outmost_linear=outmost_linear,
                          compute_dtype=compute_dtype)


# ----------------------------------------------------------------------------
# Pure-JAX reference (follows the torch module layout exactly)
# ----------------------------------------------------------------------------
def reference_forward(params, x, c, *, layer_dims, outmost_linear=False):
    def ln(y, gamma=None, beta=None):
        mean = y.mean(-1, keepdims=True)
        var = jnp.square(y - mean).mean(-1, keepdims=True)
        out = (y - mean) / jnp.sqrt(var + LN_EPS)
        if gamma is not None:
            out = out * gamma + beta
        return out

    hypo = []
    for lp, (ic, oc) in zip(params, layer_dims):
        h = jax.nn.relu(ln(c @ lp["w1"].T + lp["b1"], lp["g1"], lp["be1"]))
        h = jax.nn.relu(ln(h @ lp["w2"].T + lp["b2"], lp["g2"], lp["be2"]))
        p = (h @ lp["w3"].T + lp["b3"])[0]
        hypo.append((p[: ic * oc].reshape(oc, ic), p[ic * oc: ic * oc + oc]))

    z = x
    for i, (W, bb) in enumerate(hypo):
        z = z @ W.T + bb
        if not (i == len(hypo) - 1 and outmost_linear):
            z = jax.nn.relu(ln(z))
    return z


# ----------------------------------------------------------------------------
if __name__ == "__main__":
    # module hyperparameters (small, consistent with the forward)
    hyper_in_dim = 8
    in_dim = 16
    out_dim = 4
    hidden_dim = 32
    num_layers = 2
    outmost_linear = False

    key = jax.random.PRNGKey(0)
    kp, kx, kc, kxs = jax.random.split(key, 4)
    params, layer_dims = init_params(kp, hyper_in_dim, in_dim, out_dim,
                                     hidden_dim, num_layers)
    params_p = preprocess_params(params, layer_dims)      # static, one-time

    N = 4096                                              # query points -> Pallas path
    x = jax.random.normal(kx, (N, in_dim), jnp.float32)   # x.dim() == 2 path
    c = jax.random.normal(kc, (1, hyper_in_dim), jnp.float32)

    fwd_f32 = jax.jit(functools.partial(
        hyper_implicit_field_forward, layer_dims=layer_dims,
        outmost_linear=outmost_linear, compute_dtype=jnp.float32))
    fwd_bf16 = jax.jit(functools.partial(
        hyper_implicit_field_forward, layer_dims=layer_dims,
        outmost_linear=outmost_linear, compute_dtype=jnp.bfloat16))  # default fast path

    ref = reference_forward(params, x, c, layer_dims=layer_dims,
                            outmost_linear=outmost_linear)

    # f32 compute path: tight parity with the f32 reference
    out_f32 = jax.block_until_ready(fwd_f32(params_p, x, c))
    assert out_f32.shape == (N, out_dim), out_f32.shape
    assert jnp.allclose(out_f32, ref, rtol=1e-2, atol=1e-2), (
        float(jnp.max(jnp.abs(out_f32 - ref))))

    # bf16 compute path (v6e/v7x-preferred): loose parity (bf16 matmuls, f32 epilogue)
    out_bf16 = jax.block_until_ready(fwd_bf16(params_p, x, c))
    assert out_bf16.shape == (N, out_dim), out_bf16.shape
    assert jnp.allclose(out_bf16, ref, rtol=2.5e-1, atol=2.5e-1), (
        float(jnp.max(jnp.abs(out_bf16 - ref))))

    # small-N path: fused XLA fallback (no Pallas fixed costs), exact parity
    Ns = 192
    xs = jax.random.normal(kxs, (Ns, in_dim), jnp.float32)
    out_s = jax.block_until_ready(fwd_f32(params_p, xs, c))
    ref_s = reference_forward(params, xs, c, layer_dims=layer_dims,
                              outmost_linear=outmost_linear)
    assert jnp.allclose(out_s, ref_s, rtol=1e-4, atol=1e-4), (
        float(jnp.max(jnp.abs(out_s - ref_s))))

    print("KERNEL_OK")
</pallas_src>

<mosaic_0001>
module attributes {stable_mosaic.version = 11 : i64} {
  func.func @kernel(%arg0: i32, %arg1: memref<512x64xf32, #tpu.memory_space<vmem>>, %arg2: memref<64x128xf32, #tpu.memory_space<vmem>>, %arg3: memref<128x128xf32, #tpu.memory_space<vmem>>, %arg4: memref<128x128xf32, #tpu.memory_space<vmem>>, %arg5: memref<128x16xf32, #tpu.memory_space<vmem>>, %arg6: memref<1x128xf32, #tpu.memory_space<vmem>>, %arg7: memref<1x128xf32, #tpu.memory_space<vmem>>, %arg8: memref<1x128xf32, #tpu.memory_space<vmem>>, %arg9: memref<1x16xf32, #tpu.memory_space<vmem>>, %arg10: memref<128x128xf32, #tpu.memory_space<vmem>>, %arg11: memref<16x16xf32, #tpu.memory_space<vmem>>, %arg12: memref<512x16xf32, #tpu.memory_space<vmem>>) attributes {dimension_semantics = [#tpu.dimension_semantics<parallel>], iteration_bounds = array<i64: 2>, scalar_prefetch = 0 : i64, scratch_operands = 0 : i64, tpu.core_type = #tpu.core_type<tc>, window_params = [{transform_indices = @transform_0, window_bounds = array<i64: 512, 64>}, {pipeline_mode = #tpu.pipeline_mode<synchronous>, transform_indices = @transform_1, window_bounds = array<i64: 64, 128>}, {pipeline_mode = #tpu.pipeline_mode<synchronous>, transform_indices = @transform_2, window_bounds = array<i64: 128, 128>}, {pipeline_mode = #tpu.pipeline_mode<synchronous>, transform_indices = @transform_3, window_bounds = array<i64: 128, 128>}, {pipeline_mode = #tpu.pipeline_mode<synchronous>, transform_indices = @transform_4, window_bounds = array<i64: 128, 16>}, {pipeline_mode = #tpu.pipeline_mode<synchronous>, transform_indices = @transform_5, window_bounds = array<i64: 1, 128>}, {pipeline_mode = #tpu.pipeline_mode<synchronous>, transform_indices = @transform_6, window_bounds = array<i64: 1, 128>}, {pipeline_mode = #tpu.pipeline_mode<synchronous>, transform_indices = @transform_7, window_bounds = array<i64: 1, 128>}, {pipeline_mode = #tpu.pipeline_mode<synchronous>, transform_indices = @transform_8, window_bounds = array<i64: 1, 16>}, {pipeline_mode = #tpu.pipeline_mode<synchronous>, transform_indices = @transform_9, window_bounds = array<i64: 128, 128>}, {pipeline_mode = #tpu.pipeline_mode<synchronous>, transform_indices = @transform_10, window_bounds = array<i64: 16, 16>}, {transform_indices = @transform_11, window_bounds = array<i64: 512, 16>}]} {
    %c0 = arith.constant 0 : index
    %c0_0 = arith.constant 0 : index
    %0 = vector.load %arg1[%c0, %c0_0] : memref<512x64xf32, #tpu.memory_space<vmem>>, vector<512x64xf32>
    %c0_1 = arith.constant 0 : index
    %c0_2 = arith.constant 0 : index
    %1 = vector.load %arg2[%c0_1, %c0_2] : memref<64x128xf32, #tpu.memory_space<vmem>>, vector<64x128xf32>
    %cst = arith.constant dense<0.000000e+00> : vector<512x128xf32>
    %2 = tpu.matmul %0, %1, %cst {dimension_numbers = #tpu.dot_dimension_numbers<[1], [0], [0], [1], [0, 0, 1, 1], [], []>} : vector<512x64xf32>, vector<64x128xf32>, vector<512x128xf32> -> vector<512x128xf32>
    %c0_3 = arith.constant 0 : index
    %c0_4 = arith.constant 0 : index
    %3 = vector.load %arg6[%c0_3, %c0_4] : memref<1x128xf32, #tpu.memory_space<vmem>>, vector<1x128xf32>
    %4 = vector.broadcast %3 : vector<1x128xf32> to vector<512x128xf32>
    %5 = arith.addf %2, %4 : vector<512x128xf32>
    %c0_5 = arith.constant 0 : index
    %c0_6 = arith.constant 0 : index
    %6 = vector.load %arg10[%c0_5, %c0_6] : memref<128x128xf32, #tpu.memory_space<vmem>>, vector<128x128xf32>
    %cst_7 = arith.constant dense<0.000000e+00> : vector<512x128xf32>
    %7 = tpu.matmul %5, %6, %cst_7 {dimension_numbers = #tpu.dot_dimension_numbers<[1], [0], [0], [1], [0, 0, 1, 1], [], []>} : vector<512x128xf32>, vector<128x128xf32>, vector<512x128xf32> -> vector<512x128xf32>
    %8 = arith.mulf %5, %5 : vector<512x128xf32>
    %cst_8 = arith.constant dense<0.000000e+00> : vector<512x128xf32>
    %9 = tpu.matmul %8, %6, %cst_8 {dimension_numbers = #tpu.dot_dimension_numbers<[1], [0], [0], [1], [0, 0, 1, 1], [], []>} : vector<512x128xf32>, vector<128x128xf32>, vector<512x128xf32> -> vector<512x128xf32>
    %10 = arith.mulf %7, %7 : vector<512x128xf32>
    %11 = arith.subf %9, %10 : vector<512x128xf32>
    %cst_9 = arith.constant 0.000000e+00 : f32
    %12 = vector.broadcast %cst_9 : f32 to vector<512x128xf32>
    %13 = arith.maximumf %11, %12 : vector<512x128xf32>
    %14 = arith.subf %5, %7 : vector<512x128xf32>
    %cst_10 = arith.constant 9.99999974E-6 : f32
    %15 = vector.broadcast %cst_10 : f32 to vector<512x128xf32>
    %16 = arith.addf %13, %15 : vector<512x128xf32>
    %17 = math.rsqrt %16 : vector<512x128xf32>
    %18 = arith.mulf %14, %17 : vector<512x128xf32>
    %cst_11 = arith.constant 0.000000e+00 : f32
    %19 = vector.broadcast %cst_11 : f32 to vector<512x128xf32>
    %20 = arith.maximumf %18, %19 : vector<512x128xf32>
    %c0_12 = arith.constant 0 : index
    %c0_13 = arith.constant 0 : index
    %21 = vector.load %arg3[%c0_12, %c0_13] : memref<128x128xf32, #tpu.memory_space<vmem>>, vector<128x128xf32>
    %cst_14 = arith.constant dense<0.000000e+00> : vector<512x128xf32>
    %22 = tpu.matmul %20, %21, %cst_14 {dimension_numbers = #tpu.dot_dimension_numbers<[1], [0], [0], [1], [0, 0, 1, 1], [], []>} : vector<512x128xf32>, vector<128x128xf32>, vector<512x128xf32> -> vector<512x128xf32>
    %c0_15 = arith.constant 0 : index
    %c0_16 = arith.constant 0 : index
    %23 = vector.load %arg7[%c0_15, %c0_16] : memref<1x128xf32, #tpu.memory_space<vmem>>, vector<1x128xf32>
    %24 = vector.broadcast %23 : vector<1x128xf32> to vector<512x128xf32>
    %25 = arith.addf %22, %24 : vector<512x128xf32>
    %c0_17 = arith.constant 0 : index
    %c0_18 = arith.constant 0 : index
    %26 = vector.load %arg10[%c0_17, %c0_18] : memref<128x128xf32, #tpu.memory_space<vmem>>, vector<128x128xf32>
    %cst_19 = arith.constant dense<0.000000e+00> : vector<512x128xf32>
    %27 = tpu.matmul %25, %26, %cst_19 {dimension_numbers = #tpu.dot_dimension_numbers<[1], [0], [0], [1], [0, 0, 1, 1], [], []>} : vector<512x128xf32>, vector<128x128xf32>, vector<512x128xf32> -> vector<512x128xf32>
    %28 = arith.mulf %25, %25 : vector<512x128xf32>
    %cst_20 = arith.constant dense<0.000000e+00> : vector<512x128xf32>
    %29 = tpu.matmul %28, %26, %cst_20 {dimension_numbers = #tpu.dot_dimension_numbers<[1], [0], [0], [1], [0, 0, 1, 1], [], []>} : vector<512x128xf32>, vector<128x128xf32>, vector<512x128xf32> -> vector<512x128xf32>
    %30 = arith.mulf %27, %27 : vector<512x128xf32>
    %31 = arith.subf %29, %30 : vector<512x128xf32>
    %cst_21 = arith.constant 0.000000e+00 : f32
    %32 = vector.broadcast %cst_21 : f32 to vector<512x128xf32>
    %33 = arith.maximumf %31, %32 : vector<512x128xf32>
    %34 = arith.subf %25, %27 : vector<512x128xf32>
    %cst_22 = arith.constant 9.99999974E-6 : f32
    %35 = vector.broadcast %cst_22 : f32 to vector<512x128xf32>
    %36 = arith.addf %33, %35 : vector<512x128xf32>
    %37 = math.rsqrt %36 : vector<512x128xf32>
    %38 = arith.mulf %34, %37 : vector<512x128xf32>
    %cst_23 = arith.constant 0.000000e+00 : f32
    %39 = vector.broadcast %cst_23 : f32 to vector<512x128xf32>
    %40 = arith.maximumf %38, %39 : vector<512x128xf32>
    %c0_24 = arith.constant 0 : index
    %c0_25 = arith.constant 0 : index
    %41 = vector.load %arg4[%c0_24, %c0_25] : memref<128x128xf32, #tpu.memory_space<vmem>>, vector<128x128xf32>
    %cst_26 = arith.constant dense<0.000000e+00> : vector<512x128xf32>
    %42 = tpu.matmul %40, %41, %cst_26 {dimension_numbers = #tpu.dot_dimension_numbers<[1], [0], [0], [1], [0, 0, 1, 1], [], []>} : vector<512x128xf32>, vector<128x128xf32>, vector<512x128xf32> -> vector<512x128xf32>
    %c0_27 = arith.constant 0 : index
    %c0_28 = arith.constant 0 : index
    %43 = vector.load %arg8[%c0_27, %c0_28] : memref<1x128xf32, #tpu.memory_space<vmem>>, vector<1x128xf32>
    %44 = vector.broadcast %43 : vector<1x128xf32> to vector<512x128xf32>
    %45 = arith.addf %42, %44 : vector<512x128xf32>
    %c0_29 = arith.constant 0 : index
    %c0_30 = arith.constant 0 : index
    %46 = vector.load %arg10[%c0_29, %c0_30] : memref<128x128xf32, #tpu.memory_space<vmem>>, vector<128x128xf32>
    %cst_31 = arith.constant dense<0.000000e+00> : vector<512x128xf32>
    %47 = tpu.matmul %45, %46, %cst_31 {dimension_numbers = #tpu.dot_dimension_numbers<[1], [0], [0], [1], [0, 0, 1, 1], [], []>} : vector<512x128xf32>, vector<128x128xf32>, vector<512x128xf32> -> vector<512x128xf32>
    %48 = arith.mulf %45, %45 : vector<512x128xf32>
    %cst_32 = arith.constant dense<0.000000e+00> : vector<512x128xf32>
    %49 = tpu.matmul %48, %46, %cst_32 {dimension_numbers = #tpu.dot_dimension_numbers<[1], [0], [0], [1], [0, 0, 1, 1], [], []>} : vector<512x128xf32>, vector<128x128xf32>, vector<512x128xf32> -> vector<512x128xf32>
    %50 = arith.mulf %47, %47 : vector<512x128xf32>
    %51 = arith.subf %49, %50 : vector<512x128xf32>
    %cst_33 = arith.constant 0.000000e+00 : f32
    %52 = vector.broadcast %cst_33 : f32 to vector<512x128xf32>
    %53 = arith.maximumf %51, %52 : vector<512x128xf32>
    %54 = arith.subf %45, %47 : vector<512x128xf32>
    %cst_34 = arith.constant 9.99999974E-6 : f32
    %55 = vector.broadcast %cst_34 : f32 to vector<512x128xf32>
    %56 = arith.addf %53, %55 : vector<512x128xf32>
    %57 = math.rsqrt %56 : vector<512x128xf32>
    %58 = arith.mulf %54, %57 : vector<512x128xf32>
    %cst_35 = arith.constant 0.000000e+00 : f32
    %59 = vector.broadcast %cst_35 : f32 to vector<512x128xf32>
    %60 = arith.maximumf %58, %59 : vector<512x128xf32>
    %c0_36 = arith.constant 0 : index
    %c0_37 = arith.constant 0 : index
    %61 = vector.load %arg5[%c0_36, %c0_37] : memref<128x16xf32, #tpu.memory_space<vmem>>, vector<128x16xf32>
    %cst_38 = arith.constant dense<0.000000e+00> : vector<512x16xf32>
    %62 = tpu.matmul %60, %61, %cst_38 {dimension_numbers = #tpu.dot_dimension_numbers<[1], [0], [0], [1], [0, 0, 1, 1], [], []>} : vector<512x128xf32>, vector<128x16xf32>, vector<512x16xf32> -> vector<512x16xf32>
    %c0_39 = arith.constant 0 : index
    %c0_40 = arith.constant 0 : index
    %63 = vector.load %arg9[%c0_39, %c0_40] : memref<1x16xf32, #tpu.memory_space<vmem>>, vector<1x16xf32>
    %64 = vector.broadcast %63 : vector<1x16xf32> to vector<512x16xf32>
    %65 = arith.addf %62, %64 : vector<512x16xf32>
    %c0_41 = arith.constant 0 : index
    %c0_42 = arith.constant 0 : index
    %66 = vector.load %arg11[%c0_41, %c0_42] : memref<16x16xf32, #tpu.memory_space<vmem>>, vector<16x16xf32>
    %cst_43 = arith.constant dense<0.000000e+00> : vector<512x16xf32>
    %67 = tpu.matmul %65, %66, %cst_43 {dimension_numbers = #tpu.dot_dimension_numbers<[1], [0], [0], [1], [0, 0, 1, 1], [], []>} : vector<512x16xf32>, vector<16x16xf32>, vector<512x16xf32> -> vector<512x16xf32>
    %68 = arith.mulf %65, %65 : vector<512x16xf32>
    %cst_44 = arith.constant dense<0.000000e+00> : vector<512x16xf32>
    %69 = tpu.matmul %68, %66, %cst_44 {dimension_numbers = #tpu.dot_dimension_numbers<[1], [0], [0], [1], [0, 0, 1, 1], [], []>} : vector<512x16xf32>, vector<16x16xf32>, vector<512x16xf32> -> vector<512x16xf32>
    %70 = arith.mulf %67, %67 : vector<512x16xf32>
    %71 = arith.subf %69, %70 : vector<512x16xf32>
    %cst_45 = arith.constant 0.000000e+00 : f32
    %72 = vector.broadcast %cst_45 : f32 to vector<512x16xf32>
    %73 = arith.maximumf %71, %72 : vector<512x16xf32>
    %74 = arith.subf %65, %67 : vector<512x16xf32>
    %cst_46 = arith.constant 9.99999974E-6 : f32
    %75 = vector.broadcast %cst_46 : f32 to vector<512x16xf32>
    %76 = arith.addf %73, %75 : vector<512x16xf32>
    %77 = math.rsqrt %76 : vector<512x16xf32>
    %78 = arith.mulf %74, %77 : vector<512x16xf32>
    %cst_47 = arith.constant 0.000000e+00 : f32
    %79 = vector.broadcast %cst_47 : f32 to vector<512x16xf32>
    %80 = arith.maximumf %78, %79 : vector<512x16xf32>
    %c0_48 = arith.constant 0 : index
    %c0_49 = arith.constant 0 : index
    %81 = vector.load %arg12[%c0_48, %c0_49] : memref<512x16xf32, #tpu.memory_space<vmem>>, vector<512x16xf32>
    tpu.vector_store %arg12[%c0_48, %c0_49], %80 {strides = array<i32>} : memref<512x16xf32, #tpu.memory_space<vmem>>, vector<512x16xf32>,
    return
  }
  func.func @transform_0(%arg0: i32) -> (i32, i32) {
    %c0_i32 = arith.constant 0 : i32
    %c0_i32_0 = arith.constant 0 : i32
    return %arg0, %c0_i32 : i32, i32
  }
  func.func @transform_1(%arg0: i32) -> (i32, i32) {
    %c0_i32 = arith.constant 0 : i32
    %c0_i32_0 = arith.constant 0 : i32
    %c0_i32_1 = arith.constant 0 : i32
    return %c0_i32, %c0_i32_0 : i32, i32
  }
  func.func @transform_2(%arg0: i32) -> (i32, i32) {
    %c0_i32 = arith.constant 0 : i32
    %c0_i32_0 = arith.constant 0 : i32
    %c0_i32_1 = arith.constant 0 : i32
    return %c0_i32, %c0_i32_0 : i32, i32
  }
  func.func @transform_3(%arg0: i32) -> (i32, i32) {
    %c0_i32 = arith.constant 0 : i32
    %c0_i32_0 = arith.constant 0 : i32
    %c0_i32_1 = arith.constant 0 : i32
    return %c0_i32, %c0_i32_0 : i32, i32
  }
  func.func @transform_4(%arg0: i32) -> (i32, i32) {
    %c0_i32 = arith.constant 0 : i32
    %c0_i32_0 = arith.constant 0 : i32
    %c0_i32_1 = arith.constant 0 : i32
    return %c0_i32, %c0_i32_0 : i32, i32
  }
  func.func @transform_5(%arg0: i32) -> (i32, i32) {
    %c0_i32 = arith.constant 0 : i32
    %c0_i32_0 = arith.constant 0 : i32
    %c0_i32_1 = arith.constant 0 : i32
    return %c0_i32, %c0_i32_0 : i32, i32
  }
  func.func @transform_6(%arg0: i32) -> (i32, i32) {
    %c0_i32 = arith.constant 0 : i32
    %c0_i32_0 = arith.constant 0 : i32
    %c0_i32_1 = arith.constant 0 : i32
    return %c0_i32, %c0_i32_0 : i32, i32
  }
  func.func @transform_7(%arg0: i32) -> (i32, i32) {
    %c0_i32 = arith.constant 0 : i32
    %c0_i32_0 = arith.constant 0 : i32
    %c0_i32_1 = arith.constant 0 : i32
    return %c0_i32, %c0_i32_0 : i32, i32
  }
  func.func @transform_8(%arg0: i32) -> (i32, i32) {
    %c0_i32 = arith.constant 0 : i32
    %c0_i32_0 = arith.constant 0 : i32
    %c0_i32_1 = arith.constant 0 : i32
    return %c0_i32, %c0_i32_0 : i32, i32
  }
  func.func @transform_9(%arg0: i32) -> (i32, i32) {
    %c0_i32 = arith.constant 0 : i32
    %c0_i32_0 = arith.constant 0 : i32
    %c0_i32_1 = arith.constant 0 : i32
    return %c0_i32, %c0_i32_0 : i32, i32
  }
  func.func @transform_10(%arg0: i32) -> (i32, i32) {
    %c0_i32 = arith.constant 0 : i32
    %c0_i32_0 = arith.constant 0 : i32
    %c0_i32_1 = arith.constant 0 : i32
    return %c0_i32, %c0_i32_0 : i32, i32
  }
  func.func @transform_11(%arg0: i32) -> (i32, i32) {
    %c0_i32 = arith.constant 0 : i32
    %c0_i32_0 = arith.constant 0 : i32
    return %arg0, %c0_i32 : i32, i32
  }
}

</mosaic_0001>

<llo_original>
// kernel: mul.4
$region0: #{mul.4}
  %s0 = inlined_call_operand.vmem [shape: f32[512], index: 0, kind: input, shape index: {}]
  %s1 = inlined_call_operand.vmem [shape: f32[16,32], index: 1, kind: output, shape index: {}]
  $region1: #{mul.4} parent=0
    #allocation0 [shape = 'u8[4096]{0}', space=vmem, size = 0x1000, scoped, tag = 'scoped mem for input reshape']
    %s3 = ssub.s32 16, 1
    %v4 = vld [vmem:[%s0] sm:%s3]
    %5 = vst [vmem:[#allocation0] sm:%s3] %v4
    %v6 = vld [vmem:[#allocation0] sm:$0xf]
    %vm7 = vcmask 261120
    %8 = vst.msk [vmem:[%s1] ss:$4 sm:$0xf] %vm7, %v6
    %v9 = vld [vmem:[#allocation0] sm:$0xf]
    %10 = vrot.lane.b32.xlu0 %v9, 96
    %v11 = vpop.permute.xlu0 %10
    %vm12 = vcmask 261120
    %s13 = scalar_lea.vmem %s1, 1
    %14 = vst.msk [vmem:[%s13] ss:$4 sm:$0xf] %vm12, %v11
    %v15 = vld [vmem:[#allocation0] sm:$0xf]
    %16 = vrot.lane.b32.xlu0 %v15, 64
    %v17 = vpop.permute.xlu0 %16
    %vm18 = vcmask 261120
    %s19 = scalar_lea.vmem %s1, 2
    %20 = vst.msk [vmem:[%s19] ss:$4 sm:$0xf] %vm18, %v17
    %v21 = vld [vmem:[#allocation0] sm:$0xf]
    %22 = vrot.lane.b32.xlu0 %v21, 32
    %v23 = vpop.permute.xlu0 %22
    %vm24 = vcmask 261120
    %s25 = scalar_lea.vmem %s1, 3
    %26 = vst.msk [vmem:[%s25] ss:$4 sm:$0xf] %vm24, %v23

// kernel: mul.18
$region0: #{mul.18}
  %s0 = inlined_call_operand.vmem [shape: f32[1024], index: 0, kind: input, shape index: {}]
  %s1 = inlined_call_operand.vmem [shape: f32[32,32], index: 1, kind: output, shape index: {}]
  %v2 = vld [vmem:[%s0] sm:$0xff]
  %vm3 = vcmask 261120
  %4 = vst.msk [vmem:[%s1] ss:$4 sm:$0xff] %vm3, %v2
  %v5 = vld [vmem:[%s0] sm:$0xff]
  %6 = vrot.lane.b32.xlu0 %v5, 96
  %v7 = vpop.permute.xlu0 %6
  %vm8 = vcmask 261120
  %s9 = scalar_lea.vmem %s1, 1
  %10 = vst.msk [vmem:[%s9] ss:$4 sm:$0xff] %vm8, %v7
  %v11 = vld [vmem:[%s0] sm:$0xff]
  %12 = vrot.lane.b32.xlu0 %v11, 64
  %v13 = vpop.permute.xlu0 %12
  %vm14 = vcmask 261120
  %s15 = scalar_lea.vmem %s1, 2
  %16 = vst.msk [vmem:[%s15] ss:$4 sm:$0xff] %vm14, %v13
  %v17 = vld [vmem:[%s0] sm:$0xff]
  %18 = vrot.lane.b32.xlu0 %v17, 32
  %v19 = vpop.permute.xlu0 %18
  %vm20 = vcmask 261120
  %s21 = scalar_lea.vmem %s1, 3
  %22 = vst.msk [vmem:[%s21] ss:$4 sm:$0xff] %vm20, %v19

// kernel: mul.25
$region0: #{mul.25}
  %s0 = inlined_call_operand.vmem [shape: f32[128], index: 0, kind: input, shape index: {}]
  %s1 = inlined_call_operand.vmem [shape: f32[32,4], index: 1, kind: output, shape index: {}]
  $region1: #{mul.25} parent=0
    #allocation0 [shape = 'u8[4096]{0}', space=vmem, size = 0x1000, scoped, tag = 'scoped mem for input reshape']
    %s3 = ssub.s32 2, 1
    %v4 = vld [vmem:[%s0] sm:%s3]
    %5 = vst [vmem:[#allocation0] sm:%s3] %v4
    %v6 = vld [vmem:[#allocation0] sm:$0x1]
    %vm7 = vcmask 31744
    %8 = vst.msk [vmem:[%s1] sm:$0x1] %vm7, %v6
    %v9 = vld [vmem:[#allocation0] sm:$0x1]
    %10 = vrot.lane.b32.xlu0 %v9, 124
    %v11 = vpop.permute.xlu0 %10
    %vm12 = vcmask 31744
    %s13 = scalar_lea.vmem %s1, 1
    %14 = vst.msk [vmem:[%s13] sm:$0x1] %vm12, %v11
    %v15 = vld [vmem:[#allocation0] sm:$0x1]
    %16 = vrot.lane.b32.xlu0 %v15, 120
    %v17 = vpop.permute.xlu0 %16
    %vm18 = vcmask 31744
    %s19 = scalar_lea.vmem %s1, 2
    %20 = vst.msk [vmem:[%s19] sm:$0x1] %vm18, %v17
    %v21 = vld [vmem:[#allocation0] sm:$0x1]
    %22 = vrot.lane.b32.xlu0 %v21, 116
    %v23 = vpop.permute.xlu0 %22
    %vm24 = vcmask 31744
    %s25 = scalar_lea.vmem %s1, 3
    %26 = vst.msk [vmem:[%s25] sm:$0x1] %vm24, %v23
    %v27 = vld [vmem:[#allocation0] sm:$0x1]
    %28 = vrot.lane.b32.xlu0 %v27, 112
    %v29 = vpop.permute.xlu0 %28
    %vm30 = vcmask 31744
    %s31 = scalar_lea.vmem %s1, 4
    %32 = vst.msk [vmem:[%s31] sm:$0x1] %vm30, %v29
    %v33 = vld [vmem:[#allocation0] sm:$0x1]
    %34 = vrot.lane.b32.xlu0 %v33, 108
    %v35 = vpop.permute.xlu0 %34
    %vm36 = vcmask 31744
    %s37 = scalar_lea.vmem %s1, 5
    %38 = vst.msk [vmem:[%s37] sm:$0x1] %vm36, %v35
    %v39 = vld [vmem:[#allocation0] sm:$0x1]
    %40 = vrot.lane.b32.xlu0 %v39, 104
    %v41 = vpop.permute.xlu0 %40
    %vm42 = vcmask 31744
    %s43 = scalar_lea.vmem %s1, 6
    %44 = vst.msk [vmem:[%s43] sm:$0x1] %vm42, %v41
    %v45 = vld [vmem:[#allocation0] sm:$0x1]
    %46 = vrot.lane.b32.xlu0 %v45, 100
    %v47 = vpop.permute.xlu0 %46
    %vm48 = vcmask 31744
    %s49 = scalar_lea.vmem %s1, 7
    %50 = vst.msk [vmem:[%s49] sm:$0x1] %vm48, %v47
    %v51 = vld [vmem:[#allocation0] sm:$0x1]
    %52 = vrot.lane.b32.xlu0 %v51, 96
    %v53 = vpop.permute.xlu0 %52
    %vm54 = vcmask 31744
    %s55 = scalar_lea.vmem %s1, 8
    %56 = vst.msk [vmem:[%s55] sm:$0x1] %vm54, %v53
    %v57 = vld [vmem:[#allocation0] sm:$0x1]
    %58 = vrot.lane.b32.xlu0 %v57, 92
    %v59 = vpop.permute.xlu0 %58
    %vm60 = vcmask 31744
    %s61 = scalar_lea.vmem %s1, 9
    %62 = vst.msk [vmem:[%s61] sm:$0x1] %vm60, %v59
    %v63 = vld [vmem:[#allocation0] sm:$0x1]
    %64 = vrot.lane.b32.xlu0 %v63, 88
    %v65 = vpop.permute.xlu0 %64
    %vm66 = vcmask 31744
    %s67 = scalar_lea.vmem %s1, 10
    %68 = vst.msk [vmem:[%s67] sm:$0x1] %vm66, %v65
    %v69 = vld [vmem:[#allocation0] sm:$0x1]
    %70 = vrot.lane.b32.xlu0 %v69, 84
    %v71 = vpop.permute.xlu0 %70
    %vm72 = vcmask 31744
    %s73 = scalar_lea.vmem %s1, 11
    %74 = vst.msk [vmem:[%s73] sm:$0x1] %vm72, %v71
    %v75 = vld [vmem:[#allocation0] sm:$0x1]
    %76 = vrot.lane.b32.xlu0 %v75, 80
    %v77 = vpop.permute.xlu0 %76
    %vm78 = vcmask 31744
    %s79 = scalar_lea.vmem %s1, 12
    %80 = vst.msk [vmem:[%s79] sm:$0x1] %vm78, %v77
    %v81 = vld [vmem:[#allocation0] sm:$0x1]
    %82 = vrot.lane.b32.xlu0 %v81, 76
    %v83 = vpop.permute.xlu0 %82
    %vm84 = vcmask 31744
    %s85 = scalar_lea.vmem %s1, 13
    %86 = vst.msk [vmem:[%s85] sm:$0x1] %vm84, %v83
    %v87 = vld [vmem:[#allocation0] sm:$0x1]
    %88 = vrot.lane.b32.xlu0 %v87, 72
    %v89 = vpop.permute.xlu0 %88
    %vm90 = vcmask 31744
    %s91 = scalar_lea.vmem %s1, 14
    %92 = vst.msk [vmem:[%s91] sm:$0x1] %vm90, %v89
    %v93 = vld [vmem:[#allocation0] sm:$0x1]
    %94 = vrot.lane.b32.xlu0 %v93, 68
    %v95 = vpop.permute.xlu0 %94
    %vm96 = vcmask 31744
    %s97 = scalar_lea.vmem %s1, 15
    %98 = vst.msk [vmem:[%s97] sm:$0x1] %vm96, %v95
    %v99 = vld [vmem:[#allocation0] sm:$0x1]
    %100 = vrot.lane.b32.xlu0 %v99, 64
    %v101 = vpop.permute.xlu0 %100
    %vm102 = vcmask 31744
    %s103 = scalar_lea.vmem %s1, 16
    %104 = vst.msk [vmem:[%s103] sm:$0x1] %vm102, %v101
    %v105 = vld [vmem:[#allocation0] sm:$0x1]
    %106 = vrot.lane.b32.xlu0 %v105, 60
    %v107 = vpop.permute.xlu0 %106
    %vm108 = vcmask 31744
    %s109 = scalar_lea.vmem %s1, 17
    %110 = vst.msk [vmem:[%s109] sm:$0x1] %vm108, %v107
    %v111 = vld [vmem:[#allocation0] sm:$0x1]
    %112 = vrot.lane.b32.xlu0 %v111, 56
    %v113 = vpop.permute.xlu0 %112
    %vm114 = vcmask 31744
    %s115 = scalar_lea.vmem %s1, 18
    %116 = vst.msk [vmem:[%s115] sm:$0x1] %vm114, %v113
    %v117 = vld [vmem:[#allocation0] sm:$0x1]
    %118 = vrot.lane.b32.xlu0 %v117, 52
    %v119 = vpop.permute.xlu0 %118
    %vm120 = vcmask 31744
    %s121 = scalar_lea.vmem %s1, 19
    %122 = vst.msk [vmem:[%s121] sm:$0x1] %vm120, %v119
    %v123 = vld [vmem:[#allocation0] sm:$0x1]
    %124 = vrot.lane.b32.xlu0 %v123, 48
    %v125 = vpop.permute.xlu0 %124
    %vm126 = vcmask 31744
    %s127 = scalar_lea.vmem %s1, 20
    %128 = vst.msk [vmem:[%s127] sm:$0x1] %vm126, %v125
    %v129 = vld [vmem:[#allocation0] sm:$0x1]
    %130 = vrot.lane.b32.xlu0 %v129, 44
    %v131 = vpop.permute.xlu0 %130
    %vm132 = vcmask 31744
    %s133 = scalar_lea.vmem %s1, 21
    %134 = vst.msk [vmem:[%s133] sm:$0x1] %vm132, %v131
    %v135 = vld [vmem:[#allocation0] sm:$0x1]
    %136 = vrot.lane.b32.xlu0 %v135, 40
    %v137 = vpop.permute.xlu0 %136
    %vm138 = vcmask 31744
    %s139 = scalar_lea.vmem %s1, 22
    %140 = vst.msk [vmem:[%s139] sm:$0x1] %vm138, %v137
    %v141 = vld [vmem:[#allocation0] sm:$0x1]
    %142 = vrot.lane.b32.xlu0 %v141, 36
    %v143 = vpop.permute.xlu0 %142
    %vm144 = vcmask 31744
    %s145 = scalar_lea.vmem %s1, 23
    %146 = vst.msk [vmem:[%s145] sm:$0x1] %vm144, %v143
    %v147 = vld [vmem:[#allocation0] sm:$0x1]
    %148 = vrot.lane.b32.xlu0 %v147, 32
    %v149 = vpop.permute.xlu0 %148
    %vm150 = vcmask 31744
    %s151 = scalar_lea.vmem %s1, 24
    %152 = vst.msk [vmem:[%s151] sm:$0x1] %vm150, %v149
    %v153 = vld [vmem:[#allocation0] sm:$0x1]
    %154 = vrot.lane.b32.xlu0 %v153, 28
    %v155 = vpop.permute.xlu0 %154
    %vm156 = vcmask 31744
    %s157 = scalar_lea.vmem %s1, 25
    %158 = vst.msk [vmem:[%s157] sm:$0x1] %vm156, %v155
    %v159 = vld [vmem:[#allocation0] sm:$0x1]
    %160 = vrot.lane.b32.xlu0 %v159, 24
    %v161 = vpop.permute.xlu0 %160
    %vm162 = vcmask 31744
    %s163 = scalar_lea.vmem %s1, 26
    %164 = vst.msk [vmem:[%s163] sm:$0x1] %vm162, %v161
    %v165 = vld [vmem:[#allocation0] sm:$0x1]
    %166 = vrot.lane.b32.xlu0 %v165, 20
    %v167 = vpop.permute.xlu0 %166
    %vm168 = vcmask 31744
    %s169 = scalar_lea.vmem %s1, 27
    %170 = vst.msk [vmem:[%s169] sm:$0x1] %vm168, %v167
    %v171 = vld [vmem:[#allocation0] sm:$0x1]
    %172 = vrot.lane.b32.xlu0 %v171, 16
    %v173 = vpop.permute.xlu0 %172
    %vm174 = vcmask 31744
    %s175 = scalar_lea.vmem %s1, 28
    %176 = vst.msk [vmem:[%s175] sm:$0x1] %vm174, %v173
    %v177 = vld [vmem:[#allocation0] sm:$0x1]
    %178 = vrot.lane.b32.xlu0 %v177, 12
    %v179 = vpop.permute.xlu0 %178
    %vm180 = vcmask 31744
    %s181 = scalar_lea.vmem %s1, 29
    %182 = vst.msk [vmem:[%s181] sm:$0x1] %vm180, %v179
    %v183 = vld [vmem:[#allocation0] sm:$0x1]
    %184 = vrot.lane.b32.xlu0 %v183, 8
    %v185 = vpop.permute.xlu0 %184
    %vm186 = vcmask 31744
    %s187 = scalar_lea.vmem %s1, 30
    %188 = vst.msk [vmem:[%s187] sm:$0x1] %vm186, %v185
    %v189 = vld [vmem:[#allocation0] sm:$0x1]
    %190 = vrot.lane.b32.xlu0 %v189, 4
    %v191 = vpop.permute.xlu0 %190
    %vm192 = vcmask 31744
    %s193 = scalar_lea.vmem %s1, 31
    %194 = vst.msk [vmem:[%s193] sm:$0x1] %vm192, %v191

// kernel: tile.23
$region0: #{tile.23}
  #allocation0 [shape = 's32[1]{0}', space=sflag, size = 0x4, scoped, tag = 'scoped memory for tile.23']
  %s0 = inlined_call_operand.vmem [shape: f32[32], index: 0, kind: input, shape index: {}]
  %s1 = inlined_call_operand.vmem [shape: f32[4,32], index: 1, kind: output, shape index: {}]
  // Predicated region
  $region2: #{tile.23} parent=0 // pred_check
    _
  $region3: #{tile.23} parent=0 // pred_check_branch
    %3 = sbr.rel (0) target = $region5
  $region4: #{tile.23} parent=0 // pred_region
    _
  $region5: #{tile.23} parent=0 // pred_fallthru
    _
  %v4 = vld [vmem:[%s0] ss:$0 sm:$0xff]
  %5 = vst [vmem:[%s1] sm:$0xf] %v4

// kernel: tile.24
$region0: #{tile.24}
  %s0 = inlined_call_operand.vmem [shape: f32[4,32], index: 0, kind: input, shape index: {}]
  %s1 = inlined_call_operand.vmem [shape: f32[1,128], index: 1, kind: output, shape index: {}]
  $region1: #{tile.24} parent=0
    #allocation0 [shape = 'u8[4096]{0}', space=vmem, size = 0x1000, scoped, tag = 'scoped mem for output reshape']
    #allocation1 [shape = 'u8[4096]{0}', space=vmem, size = 0x1000, scoped, tag = 'scoped mem for input reshape']
    %s3 = ssub.s32 16, 1
    %v4 = vld [vmem:[%s0] sm:%s3]
    %5 = vst [vmem:[#allocation1] sm:%s3] %v4
    %v6 = vld [vmem:[#allocation1] sm:$0x1]
    %vm7 = vcmask 261120
    %8 = vst.msk [vmem:[#allocation0] sm:$0x1] %vm7, %v6
    %s9 = scalar_lea.vmem [#allocation1], 3
    %v10 = vld [vmem:[%s9] sm:$0x1]
    %11 = vrot.lane.b32.xlu0 %v10, 96
    %v12 = vpop.permute.xlu0 %11
    %vm13 = vcmask 1048320
    %14 = vst.msk [vmem:[#allocation0] sm:$0x1] %vm13, %v12
    %s15 = scalar_lea.vmem [#allocation1], 2
    %v16 = vld [vmem:[%s15] sm:$0x1]
    %17 = vrot.lane.b32.xlu0 %v16, 64
    %v18 = vpop.permute.xlu0 %17
    %vm19 = vcmask 785920
    %20 = vst.msk [vmem:[#allocation0] sm:$0x1] %vm19, %v18
    %s21 = scalar_lea.vmem [#allocation1], 1
    %v22 = vld [vmem:[%s21] sm:$0x1]
    %23 = vrot.lane.b32.xlu0 %v22, 32
    %v24 = vpop.permute.xlu0 %23
    %vm25 = vcmask 523520
    %26 = vst.msk [vmem:[#allocation0] sm:$0x1] %vm25, %v24
    %s28 = ssub.s32 2, 1
    %v29 = vld [vmem:[#allocation0] sm:%s28]
    %s31 = ssub.s32 2, 1
    %32 = vst [vmem:[%s1] sm:%s31] %v29

// kernel: tile.39
$region0: #{tile.39}
  %s0 = inlined_call_operand.vmem [shape: f32[4,4], index: 0, kind: input, shape index: {}]
  %s1 = inlined_call_operand.vmem [shape: f32[1,16], index: 1, kind: output, shape index: {}]
  $region1: #{tile.39} parent=0
    #allocation0 [shape = 'u8[4096]{0}', space=vmem, size = 0x1000, scoped, tag = 'scoped mem for output reshape']
    #allocation1 [shape = 'u8[4096]{0}', space=vmem, size = 0x1000, scoped, tag = 'scoped mem for input reshape']
    %s3 = ssub.s32 16, 1
    %v4 = vld [vmem:[%s0] sm:%s3]
    %5 = vst [vmem:[#allocation1] sm:%s3] %v4
    %v6 = vld [vmem:[#allocation1] sm:$0x1]
    %vm7 = vcmask 31744
    %8 = vst.msk [vmem:[#allocation0] sm:$0x1] %vm7, %v6
    %s9 = scalar_lea.vmem [#allocation1], 3
    %v10 = vld [vmem:[%s9] sm:$0x1]
    %11 = vrot.lane.b32.xlu0 %v10, 12
    %v12 = vpop.permute.xlu0 %11
    %vm13 = vcmask 130144
    %14 = vst.msk [vmem:[#allocation0] sm:$0x1] %vm13, %v12
    %s15 = scalar_lea.vmem [#allocation1], 2
    %v16 = vld [vmem:[%s15] sm:$0x1]
    %17 = vrot.lane.b32.xlu0 %v16, 8
    %v18 = vpop.permute.xlu0 %17
    %vm19 = vcmask 97344
    %20 = vst.msk [vmem:[#allocation0] sm:$0x1] %vm19, %v18
    %s21 = scalar_lea.vmem [#allocation1], 1
    %v22 = vld [vmem:[%s21] sm:$0x1]
    %23 = vrot.lane.b32.xlu0 %v22, 4
    %v24 = vpop.permute.xlu0 %23
    %vm25 = vcmask 64544
    %26 = vst.msk [vmem:[#allocation0] sm:$0x1] %vm25, %v24
    %s28 = ssub.s32 2, 1
    %v29 = vld [vmem:[#allocation0] sm:%s28]
    %s31 = ssub.s32 2, 1
    %32 = vst [vmem:[%s1] sm:%s31] %v29

// kernel: tile.38
$region0: #{tile.38}
  #allocation0 [shape = 's32[1]{0}', space=sflag, size = 0x4, scoped, tag = 'scoped memory for tile.38']
  %s0 = inlined_call_operand.vmem [shape: f32[4], index: 0, kind: input, shape index: {}]
  %s1 = inlined_call_operand.vmem [shape: f32[4,4], index: 1, kind: output, shape index: {}]
  // Predicated region
  $region2: #{tile.38} parent=0 // pred_check
    _
  $region3: #{tile.38} parent=0 // pred_check_branch
    %3 = sbr.rel (0) target = $region5
  $region4: #{tile.38} parent=0 // pred_region
    _
  $region5: #{tile.38} parent=0 // pred_fallthru
    _
  %v4 = vld [vmem:[%s0] ss:$0 sm:$0xff]
  %5 = vst [vmem:[%s1] sm:$0xf] %v4

// kernel: hyper_implicit_field_forward.1
$region0: #{hyper_implicit_field_forward.1}
  #allocation0 [shape = 'u32[]', space=smem, size = 0x4, offset = 0x4, fixed_abs, tag = 'smem constant byte address 0x4 - core index']
  #allocation1 [shape = 'u32[72,128]{1,0:T(1,128)}', space=vmem, size = 0x9000, scoped, tag = 'internal scratch']
  %s0 = inlined_call_operand.vmem [shape: f32[1024,64], index: 0, kind: input, shape index: {}]
  %s1 = inlined_call_operand.vmem [shape: f32[64,128], index: 1, kind: input, shape index: {}]
  %s2 = inlined_call_operand.vmem [shape: f32[128,128], index: 2, kind: input, shape index: {}]
  %s3 = inlined_call_operand.vmem [shape: f32[128,128], index: 3, kind: input, shape index: {}]
  %s4 = inlined_call_operand.vmem [shape: f32[128,16], index: 4, kind: input, shape index: {}]
  %s5 = inlined_call_operand.vmem [shape: f32[1,128], index: 5, kind: input, shape index: {}]
  %s6 = inlined_call_operand.vmem [shape: f32[1,128], index: 6, kind: input, shape index: {}]
  %s7 = inlined_call_operand.vmem [shape: f32[1,128], index: 7, kind: input, shape index: {}]
  %s8 = inlined_call_operand.vmem [shape: f32[1,16], index: 8, kind: input, shape index: {}]
  %s9 = inlined_call_operand.vmem [shape: f32[128,128], index: 9, kind: input, shape index: {}]
  %s10 = inlined_call_operand.vmem [shape: f32[16,16], index: 10, kind: input, shape index: {}]
  %s11 = inlined_call_operand.vmem [shape: f32[1024,16], index: 11, kind: output, shape index: {}]
  %s12 = sld [smem:[#allocation0]]
  $region77: #{hyper_implicit_field_forward.1} parent=0
    _
  %s14 = ssub.s32 1, %s12
  %s15 = scalar_select 0, %s14, %s12
  loop: start=0, step=1, limit=4
  $region2: #{hyper_implicit_field_forward.1} parent=0 // loop_pre_header
    _
  $region3: #{hyper_implicit_field_forward.1} parent=0 // loop_header
    %s17 = sphi 0, %s21
    %p18 = scmp.ge.s32.totalorder %s17, 4
    %s27 = sphi 0, %s29
    %s30 = sphi 0, %s27
    %s31 = sphi 0, %s30
    %s47 = sphi 0, %s31
    %s51 = sphi 0, %s51
    %s53 = sphi 0, %s51
    %s54 = sphi 0, %s53
    %s68 = sphi 0, %s54
    %s72 = sphi 0, %s72
    %s74 = sphi 0, %s72
    %s75 = sphi 0, %s74
    %s89 = sphi 0, %s75
    %s93 = sphi 0, %s93
    %s95 = sphi 0, %s93
    %s96 = sphi 0, %s95
    %s110 = sphi 0, %s96
    %s114 = sphi 0, %s114
    %s116 = sphi 0, %s114
    %s117 = sphi 0, %s116
    %s131 = sphi 0, %s117
    %s135 = sphi 0, %s135
    %s137 = sphi 0, %s135
    %s138 = sphi 0, %s137
    %s152 = sphi 0, %s138
    %s156 = sphi 0, %s156
    %s158 = sphi 0, %s156
    %s159 = sphi 0, %s158
    %s173 = sphi 0, %s159
    %s177 = sphi 0, %s177
    %s179 = sphi 0, %s177
    %s180 = sphi 0, %s179
    %s194 = sphi 0, %s180
    %s198 = sphi 0, %s198
    %s200 = sphi 0, %s198
    %s201 = sphi 0, %s200
    %s215 = sphi 0, %s201
    %s219 = sphi 0, %s219
    %s221 = sphi 0, %s219
    %s222 = sphi 0, %s221
    %s236 = sphi 0, %s222
    %s240 = sphi 0, %s240
    %s242 = sphi 0, %s240
    %s243 = sphi 0, %s242
    %s257 = sphi 0, %s243
    %s263 = sphi 0, %s265
    %s266 = sphi 0, %s263
    %s267 = sphi 0, %s266
    %s283 = sphi 0, %s267
  $region4: #{hyper_implicit_field_forward.1} parent=0 // loop_header_branch
    %20 = sbr.rel (%p18) target = $region8
  $region5: #{hyper_implicit_field_forward.1} parent=0 // loop_body
    %s22 = ssub.s32 %s17, 1
    %s23 = ssub.s32 %s17, 2
    %s24 = sadd.s32 %s17, 1
    %s25 = ssub.s32 %s17, %s24
    %p26 = scmp.eq.s32.totalorder %s25, 0
    %s28 = sadd.s32 %s27, 1
    %s29 = scalar_select %p26, %s27, %s28
    %p32 = pneg %p26
    %p33 = scmp.eq.s32.totalorder %s17, 1
    %p34 = por %p32, %p33
    %p35 = scmp.ne.s32.totalorder %s27, %s30
    %p36 = scmp.eq.s32.totalorder %s17, 0
    %p37 = por %p35, %p36
    %p38 = scmp.ne.s32.totalorder %s27, %s30
    %p39 = scmp.eq.s32.totalorder %s22, 1
    %p40 = por %p38, %p39
    %p41 = scmp.ne.s32.totalorder %s30, %s31
    %p42 = scmp.eq.s32.totalorder %s22, 0
    %p43 = por %p41, %p42
    %p44 = scmp.ne.s32.totalorder %s30, %s31
    %p45 = scmp.eq.s32.totalorder %s23, 1
    %p46 = por %p44, %p45
    %p48 = scmp.ne.s32.totalorder %s31, %s47
    %p49 = scmp.eq.s32.totalorder %s23, 0
    %p50 = por %p48, %p49
    %s52 = sadd.s32 %s51, 1
    %p55 = scmp.eq.s32.totalorder %s17, 1
    %p56 = scmp.ne.s32.totalorder %s51, %s53
    %p57 = scmp.eq.s32.totalorder %s17, 0
    %p58 = por %p56, %p57
    %p59 = scmp.ne.s32.totalorder %s51, %s53
    %p60 = scmp.eq.s32.totalorder %s22, 1
    %p61 = por %p59, %p60
    %p62 = scmp.ne.s32.totalorder %s53, %s54
    %p63 = scmp.eq.s32.totalorder %s22, 0
    %p64 = por %p62, %p63
    %p65 = scmp.ne.s32.totalorder %s53, %s54
    %p66 = scmp.eq.s32.totalorder %s23, 1
    %p67 = por %p65, %p66
    %p69 = scmp.ne.s32.totalorder %s54, %s68
    %p70 = scmp.eq.s32.totalorder %s23, 0
    %p71 = por %p69, %p70
    %s73 = sadd.s32 %s72, 1
    %p76 = scmp.eq.s32.totalorder %s17, 1
    %p77 = scmp.ne.s32.totalorder %s72, %s74
    %p78 = scmp.eq.s32.totalorder %s17, 0
    %p79 = por %p77, %p78
    %p80 = scmp.ne.s32.totalorder %s72, %s74
    %p81 = scmp.eq.s32.totalorder %s22, 1
    %p82 = por %p80, %p81
    %p83 = scmp.ne.s32.totalorder %s74, %s75
    %p84 = scmp.eq.s32.totalorder %s22, 0
    %p85 = por %p83, %p84
    %p86 = scmp.ne.s32.totalorder %s74, %s75
    %p87 = scmp.eq.s32.totalorder %s23, 1
    %p88 = por %p86, %p87
    %p90 = scmp.ne.s32.totalorder %s75, %s89
    %p91 = scmp.eq.s32.totalorder %s23, 0
    %p92 = por %p90, %p91
    %s94 = sadd.s32 %s93, 1
    %p97 = scmp.eq.s32.totalorder %s17, 1
    %p98 = scmp.ne.s32.totalorder %s93, %s95
    %p99 = scmp.eq.s32.totalorder %s17, 0
    %p100 = por %p98, %p99
    %p101 = scmp.ne.s32.totalorder %s93, %s95
    %p102 = scmp.eq.s32.totalorder %s22, 1
    %p103 = por %p101, %p102
    %p104 = scmp.ne.s32.totalorder %s95, %s96
    %p105 = scmp.eq.s32.totalorder %s22, 0
    %p106 = por %p104, %p105
    %p107 = scmp.ne.s32.totalorder %s95, %s96
    %p108 = scmp.eq.s32.totalorder %s23, 1
    %p109 = por %p107, %p108
    %p111 = scmp.ne.s32.totalorder %s96, %s110
    %p112 = scmp.eq.s32.totalorder %s23, 0
    %p113 = por %p111, %p112
    %s115 = sadd.s32 %s114, 1
    %p118 = scmp.eq.s32.totalorder %s17, 1
    %p119 = scmp.ne.s32.totalorder %s114, %s116
    %p120 = scmp.eq.s32.totalorder %s17, 0
    %p121 = por %p119, %p120
    %p122 = scmp.ne.s32.totalorder %s114, %s116
    %p123 = scmp.eq.s32.totalorder %s22, 1
    %p124 = por %p122, %p123
    %p125 = scmp.ne.s32.totalorder %s116, %s117
    %p126 = scmp.eq.s32.totalorder %s22, 0
    %p127 = por %p125, %p126
    %p128 = scmp.ne.s32.totalorder %s116, %s117
    %p129 = scmp.eq.s32.totalorder %s23, 1
    %p130 = por %p128, %p129
    %p132 = scmp.ne.s32.totalorder %s117, %s131
    %p133 = scmp.eq.s32.totalorder %s23, 0
    %p134 = por %p132, %p133
    %s136 = sadd.s32 %s135, 1
    %p139 = scmp.eq.s32.totalorder %s17, 1
    %p140 = scmp.ne.s32.totalorder %s135, %s137
    %p141 = scmp.eq.s32.totalorder %s17, 0
    %p142 = por %p140, %p141
    %p143 = scmp.ne.s32.totalorder %s135, %s137
    %p144 = scmp.eq.s32.totalorder %s22, 1
    %p145 = por %p143, %p144
    %p146 = scmp.ne.s32.totalorder %s137, %s138
    %p147 = scmp.eq.s32.totalorder %s22, 0
    %p148 = por %p146, %p147
    %p149 = scmp.ne.s32.totalorder %s137, %s138
    %p150 = scmp.eq.s32.totalorder %s23, 1
    %p151 = por %p149, %p150
    %p153 = scmp.ne.s32.totalorder %s138, %s152
    %p154 = scmp.eq.s32.totalorder %s23, 0
    %p155 = por %p153, %p154
    %s157 = sadd.s32 %s156, 1
    %p160 = scmp.eq.s32.totalorder %s17, 1
    %p161 = scmp.ne.s32.totalorder %s156, %s158
    %p162 = scmp.eq.s32.totalorder %s17, 0
    %p163 = por %p161, %p162
    %p164 = scmp.ne.s32.totalorder %s156, %s158
    %p165 = scmp.eq.s32.totalorder %s22, 1
    %p166 = por %p164, %p165
    %p167 = scmp.ne.s32.totalorder %s158, %s159
    %p168 = scmp.eq.s32.totalorder %s22, 0
    %p169 = por %p167, %p168
    %p170 = scmp.ne.s32.totalorder %s158, %s159
    %p171 = scmp.eq.s32.totalorder %s23, 1
    %p172 = por %p170, %p171
    %p174 = scmp.ne.s32.totalorder %s159, %s173
    %p175 = scmp.eq.s32.totalorder %s23, 0
    %p176 = por %p174, %p175
    %s178 = sadd.s32 %s177, 1
    %p181 = scmp.eq.s32.totalorder %s17, 1
    %p182 = scmp.ne.s32.totalorder %s177, %s179
    %p183 = scmp.eq.s32.totalorder %s17, 0
    %p184 = por %p182, %p183
    %p185 = scmp.ne.s32.totalorder %s177, %s179
    %p186 = scmp.eq.s32.totalorder %s22, 1
    %p187 = por %p185, %p186
    %p188 = scmp.ne.s32.totalorder %s179, %s180
    %p189 = scmp.eq.s32.totalorder %s22, 0
    %p190 = por %p188, %p189
    %p191 = scmp.ne.s32.totalorder %s179, %s180
    %p192 = scmp.eq.s32.totalorder %s23, 1
    %p193 = por %p191, %p192
    %p195 = scmp.ne.s32.totalorder %s180, %s194
    %p196 = scmp.eq.s32.totalorder %s23, 0
    %p197 = por %p195, %p196
    %s199 = sadd.s32 %s198, 1
    %p202 = scmp.eq.s32.totalorder %s17, 1
    %p203 = scmp.ne.s32.totalorder %s198, %s200
    %p204 = scmp.eq.s32.totalorder %s17, 0
    %p205 = por %p203, %p204
    %p206 = scmp.ne.s32.totalorder %s198, %s200
    %p207 = scmp.eq.s32.totalorder %s22, 1
    %p208 = por %p206, %p207
    %p209 = scmp.ne.s32.totalorder %s200, %s201
    %p210 = scmp.eq.s32.totalorder %s22, 0
    %p211 = por %p209, %p210
    %p212 = scmp.ne.s32.totalorder %s200, %s201
    %p213 = scmp.eq.s32.totalorder %s23, 1
    %p214 = por %p212, %p213
    %p216 = scmp.ne.s32.totalorder %s201, %s215
    %p217 = scmp.eq.s32.totalorder %s23, 0
    %p218 = por %p216, %p217
    %s220 = sadd.s32 %s219, 1
    %p223 = scmp.eq.s32.totalorder %s17, 1
    %p224 = scmp.ne.s32.totalorder %s219, %s221
    %p225 = scmp.eq.s32.totalorder %s17, 0
    %p226 = por %p224, %p225
    %p227 = scmp.ne.s32.totalorder %s219, %s221
    %p228 = scmp.eq.s32.totalorder %s22, 1
    %p229 = por %p227, %p228
    %p230 = scmp.ne.s32.totalorder %s221, %s222
    %p231 = scmp.eq.s32.totalorder %s22, 0
    %p232 = por %p230, %p231
    %p233 = scmp.ne.s32.totalorder %s221, %s222
    %p234 = scmp.eq.s32.totalorder %s23, 1
    %p235 = por %p233, %p234
    %p237 = scmp.ne.s32.totalorder %s222, %s236
    %p238 = scmp.eq.s32.totalorder %s23, 0
    %p239 = por %p237, %p238
    %s241 = sadd.s32 %s240, 1
    %p244 = scmp.eq.s32.totalorder %s17, 1
    %p245 = scmp.ne.s32.totalorder %s240, %s242
    %p246 = scmp.eq.s32.totalorder %s17, 0
    %p247 = por %p245, %p246
    %p248 = scmp.ne.s32.totalorder %s240, %s242
    %p249 = scmp.eq.s32.totalorder %s22, 1
    %p250 = por %p248, %p249
    %p251 = scmp.ne.s32.totalorder %s242, %s243
    %p252 = scmp.eq.s32.totalorder %s22, 0
    %p253 = por %p251, %p252
    %p254 = scmp.ne.s32.totalorder %s242, %s243
    %p255 = scmp.eq.s32.totalorder %s23, 1
    %p256 = por %p254, %p255
    %p258 = scmp.ne.s32.totalorder %s243, %s257
    %p259 = scmp.eq.s32.totalorder %s23, 0
    %p260 = por %p258, %p259
    %s261 = ssub.s32 %s17, %s24
    %p262 = scmp.eq.s32.totalorder %s261, 0
    %s264 = sadd.s32 %s263, 1
    %s265 = scalar_select %p262, %s263, %s264
    %p268 = pneg %p262
    %p269 = scmp.eq.s32.totalorder %s17, 1
    %p270 = por %p268, %p269
    %p271 = scmp.ne.s32.totalorder %s263, %s266
    %p272 = scmp.eq.s32.totalorder %s17, 0
    %p273 = por %p271, %p272
    %p274 = scmp.ne.s32.totalorder %s263, %s266
    %p275 = scmp.eq.s32.totalorder %s22, 1
    %p276 = por %p274, %p275
    %p277 = scmp.ne.s32.totalorder %s266, %s267
    %p278 = scmp.eq.s32.totalorder %s22, 0
    %p279 = por %p277, %p278
    %p280 = scmp.ne.s32.totalorder %s266, %s267
    %p281 = scmp.eq.s32.totalorder %s23, 1
    %p282 = por %p280, %p281
    %p284 = scmp.ne.s32.totalorder %s267, %s283
    %p285 = scmp.eq.s32.totalorder %s23, 0
    %p286 = por %p284, %p285
    %p287 = scmp.le.s32.totalorder 1, %s17
    %p288 = scmp.lt.s32.totalorder %s17, 3
    %p289 = pnand %p287, %p288
    %p290 = pneg %p289
    // Predicated region
    $region9: #{hyper_implicit_field_forward.1} parent=5 // pred_check
      _
    $region10: #{hyper_implicit_field_forward.1} parent=5 // pred_check_branch
      %292 = sbr.rel (%p289) target = $region12
    $region11: #{hyper_implicit_field_forward.1} parent=5 // pred_region
      %s293 = ssub.s32 %s17, 1
      // Predicated region
      $region13: #{hyper_implicit_field_forward.1} parent=11 // pred_check
        %p294 = pneg %p64
      $region14: #{hyper_implicit_field_forward.1} parent=11 // pred_check_branch
        %296 = sbr.rel (%p294) target = $region16
      $region15: #{hyper_implicit_field_forward.1} parent=11 // pred_region
        _
      $region16: #{hyper_implicit_field_forward.1} parent=11 // pred_fallthru
        _
      // Predicated region
      $region17: #{hyper_implicit_field_forward.1} parent=11 // pred_check
        %p297 = pneg %p85
      $region18: #{hyper_implicit_field_forward.1} parent=11 // pred_check_branch
        %299 = sbr.rel (%p297) target = $region20
      $region19: #{hyper_implicit_field_forward.1} parent=11 // pred_region
        _
      $region20: #{hyper_implicit_field_forward.1} parent=11 // pred_fallthru
        _
      // Predicated region
      $region21: #{hyper_implicit_field_forward.1} parent=11 // pred_check
        %p300 = pneg %p106
      $region22: #{hyper_implicit_field_forward.1} parent=11 // pred_check_branch
        %302 = sbr.rel (%p300) target = $region24
      $region23: #{hyper_implicit_field_forward.1} parent=11 // pred_region
        _
      $region24: #{hyper_implicit_field_forward.1} parent=11 // pred_fallthru
        _
      // Predicated region
      $region25: #{hyper_implicit_field_forward.1} parent=11 // pred_check
        %p303 = pneg %p127
      $region26: #{hyper_implicit_field_forward.1} parent=11 // pred_check_branch
        %305 = sbr.rel (%p303) target = $region28
      $region27: #{hyper_implicit_field_forward.1} parent=11 // pred_region
        _
      $region28: #{hyper_implicit_field_forward.1} parent=11 // pred_fallthru
        _
      // Predicated region
      $region29: #{hyper_implicit_field_forward.1} parent=11 // pred_check
        %p306 = pneg %p148
      $region30: #{hyper_implicit_field_forward.1} parent=11 // pred_check_branch
        %308 = sbr.rel (%p306) target = $region32
      $region31: #{hyper_implicit_field_forward.1} parent=11 // pred_region
        _
      $region32: #{hyper_implicit_field_forward.1} parent=11 // pred_fallthru
        _
      // Predicated region
      $region33: #{hyper_implicit_field_forward.1} parent=11 // pred_check
        %p309 = pneg %p169
      $region34: #{hyper_implicit_field_forward.1} parent=11 // pred_check_branch
        %311 = sbr.rel (%p309) target = $region36
      $region35: #{hyper_implicit_field_forward.1} parent=11 // pred_region
        _
      $region36: #{hyper_implicit_field_forward.1} parent=11 // pred_fallthru
        _
      // Predicated region
      $region37: #{hyper_implicit_field_forward.1} parent=11 // pred_check
        %p312 = pneg %p190
      $region38: #{hyper_implicit_field_forward.1} parent=11 // pred_check_branch
        %314 = sbr.rel (%p312) target = $region40
      $region39: #{hyper_implicit_field_forward.1} parent=11 // pred_region
        _
      $region40: #{hyper_implicit_field_forward.1} parent=11 // pred_fallthru
        _
      // Predicated region
      $region41: #{hyper_implicit_field_forward.1} parent=11 // pred_check
        %p315 = pneg %p211
      $region42: #{hyper_implicit_field_forward.1} parent=11 // pred_check_branch
        %317 = sbr.rel (%p315) target = $region44
      $region43: #{hyper_implicit_field_forward.1} parent=11 // pred_region
        _
      $region44: #{hyper_implicit_field_forward.1} parent=11 // pred_fallthru
        _
      // Predicated region
      $region45: #{hyper_implicit_field_forward.1} parent=11 // pred_check
        %p318 = pneg %p232
      $region46: #{hyper_implicit_field_forward.1} parent=11 // pred_check_branch
        %320 = sbr.rel (%p318) target = $region48
      $region47: #{hyper_implicit_field_forward.1} parent=11 // pred_region
        _
      $region48: #{hyper_implicit_field_forward.1} parent=11 // pred_fallthru
        _
      // Predicated region
      $region49: #{hyper_implicit_field_forward.1} parent=11 // pred_check
        %p321 = pneg %p253
      $region50: #{hyper_implicit_field_forward.1} parent=11 // pred_check_branch
        %323 = sbr.rel (%p321) target = $region52
      $region51: #{hyper_implicit_field_forward.1} parent=11 // pred_region
        _
      $region52: #{hyper_implicit_field_forward.1} parent=11 // pred_fallthru
        _
    $region12: #{hyper_implicit_field_forward.1} parent=5 // pred_fallthru
      _
    %p324 = scmp.lt.s32.totalorder %s17, 2
    // Predicated region
    $region53: #{hyper_implicit_field_forward.1} parent=5 // pred_check
      %p325 = pneg %p324
    $region54: #{hyper_implicit_field_forward.1} parent=5 // pred_check_branch
      %327 = sbr.rel (%p325) target = $region56
    $region55: #{hyper_implicit_field_forward.1} parent=5 // pred_region
      // Predicated region
      $region57: #{hyper_implicit_field_forward.1} parent=55 // pred_check
        %p328 = pneg %p37
      $region58: #{hyper_implicit_field_forward.1} parent=55 // pred_check_branch
        %330 = sbr.rel (%p328) target = $region60
      $region59: #{hyper_implicit_field_forward.1} parent=55 // pred_region
        %s331 = smul.u32 64, %s17
        %p332 = scmp.lt.s32.totalorder %s331, 127
        %s333 = scalar_select %p332, %s331, 127
        %s334 = smul.addr %s333, 8
        %s335 = scalar_lea.vmem %s0, %s334
        %s336 = smul.u32 64, %s17
      $region60: #{hyper_implicit_field_forward.1} parent=55 // pred_fallthru
        _
    $region56: #{hyper_implicit_field_forward.1} parent=5 // pred_fallthru
      _
    %p337 = scmp.le.s32.totalorder 1, %s17
    %p338 = scmp.lt.s32.totalorder %s17, 3
    %p339 = pnand %p337, %p338
    %p340 = pneg %p339
    // Predicated region
    $region61: #{hyper_implicit_field_forward.1} parent=5 // pred_check
      _
    $region62: #{hyper_implicit_field_forward.1} parent=5 // pred_check_branch
      %342 = sbr.rel (%p339) target = $region64
    $region63: #{hyper_implicit_field_forward.1} parent=5 // pred_region
      %s343 = ssub.s32 %s17, 1
      %s344 = smul.u32 64, %s22
      %p345 = scmp.lt.s32.totalorder %s344, 127
      %s346 = scalar_select %p345, %s344, 127
      %s347 = smul.addr %s346, 8
      %s348 = scalar_lea.vmem %s0, %s347
      %p349 = pneg %p43
      %p350 = pneg %p40
      %p351 = pneg %p64
      %p352 = pneg %p61
      %p353 = pneg %p85
      %p354 = pneg %p82
      %p355 = pneg %p106
      %p356 = pneg %p103
      %p357 = pneg %p127
      %p358 = pneg %p124
      %p359 = pneg %p148
      %p360 = pneg %p145
      %p361 = pneg %p169
      %p362 = pneg %p166
      %p363 = pneg %p190
      %p364 = pneg %p187
      %p365 = pneg %p211
      %p366 = pneg %p208
      %p367 = pneg %p232
      %p368 = pneg %p229
      %p369 = pneg %p253
      %p370 = pneg %p250
      %p371 = pneg %p279
      %p372 = pneg %p276
      %s373 = smul.u32 64, %s22
      %p374 = scmp.lt.s32.totalorder %s373, 127
      %s375 = scalar_select %p374, %s373, 127
      %s376 = smul.addr %s375, 8
      %s377 = scalar_lea.vmem %s11, %s376
      %s378 = smul.u32 64, %s22
      %p379 = scmp.lt.s32.totalorder %s378, 127
      %s380 = scalar_select %p379, %s378, 127
      %s381 = smul.addr %s380, 8
      %s382 = scalar_lea.vmem %s0, %s381
      %s383 = smul.u32 64, %s22
      %s384 = smul.u32 64, %s22
      %p385 = scmp.lt.s32.totalorder %s384, 127
      %s386 = scalar_select %p385, %s384, 127
      %s387 = smul.addr %s386, 8
      %s388 = scalar_lea.vmem %s11, %s387
      %s389 = smul.u32 64, %s22
      %v390 = vld [vmem:[%s382] sm:$0xff]
      %v391 = vld [vmem:[%s382 + $0x8] sm:$0xff]
      %v392 = vld [vmem:[%s382 + $0x10] sm:$0xff]
      %v393 = vld [vmem:[%s382 + $0x18] sm:$0xff]
      %v394 = vld [vmem:[%s382 + $0x20] sm:$0xff]
      %v395 = vld [vmem:[%s382 + $0x28] sm:$0xff]
      %v396 = vld [vmem:[%s382 + $0x30] sm:$0xff]
      %v397 = vld [vmem:[%s382 + $0x38] sm:$0xff]
      %v398 = vld [vmem:[%s382 + $0x40] sm:$0xff]
      %v399 = vld [vmem:[%s382 + $0x48] sm:$0xff]
      %v400 = vld [vmem:[%s382 + $0x50] sm:$0xff]
      %v401 = vld [vmem:[%s382 + $0x58] sm:$0xff]
      %v402 = vld [vmem:[%s382 + $0x60] sm:$0xff]
      %v403 = vld [vmem:[%s382 + $0x68] sm:$0xff]
      %v404 = vld [vmem:[%s382 + $0x70] sm:$0xff]
      %v405 = vld [vmem:[%s382 + $0x78] sm:$0xff]
      %v406 = vld [vmem:[%s382 + $0x80] sm:$0xff]
      %v407 = vld [vmem:[%s382 + $0x88] sm:$0xff]
      %v408 = vld [vmem:[%s382 + $0x90] sm:$0xff]
      %v409 = vld [vmem:[%s382 + $0x98] sm:$0xff]
      %v410 = vld [vmem:[%s382 + $0xa0] sm:$0xff]
      %v411 = vld [vmem:[%s382 + $0xa8] sm:$0xff]
      %v412 = vld [vmem:[%s382 + $0xb0] sm:$0xff]
      %v413 = vld [vmem:[%s382 + $0xb8] sm:$0xff]
      %v414 = vld [vmem:[%s382 + $0xc0] sm:$0xff]
      %v415 = vld [vmem:[%s382 + $0xc8] sm:$0xff]
      %v416 = vld [vmem:[%s382 + $0xd0] sm:$0xff]
      %v417 = vld [vmem:[%s382 + $0xd8] sm:$0xff]
      %v418 = vld [vmem:[%s382 + $0xe0] sm:$0xff]
      %v419 = vld [vmem:[%s382 + $0xe8] sm:$0xff]
      %v420 = vld [vmem:[%s382 + $0xf0] sm:$0xff]
      %v421 = vld [vmem:[%s382 + $0xf8] sm:$0xff]
      %v422 = vld [vmem:[%s382 + $0x100] sm:$0xff]
      %v423 = vld [vmem:[%s382 + $0x108] sm:$0xff]
      %v424 = vld [vmem:[%s382 + $0x110] sm:$0xff]
      %v425 = vld [vmem:[%s382 + $0x118] sm:$0xff]
      %v426 = vld [vmem:[%s382 + $0x120] sm:$0xff]
      %v427 = vld [vmem:[%s382 + $0x128] sm:$0xff]
      %v428 = vld [vmem:[%s382 + $0x130] sm:$0xff]
      %v429 = vld [vmem:[%s382 + $0x138] sm:$0xff]
      %v430 = vld [vmem:[%s382 + $0x140] sm:$0xff]
      %v431 = vld [vmem:[%s382 + $0x148] sm:$0xff]
      %v432 = vld [vmem:[%s382 + $0x150] sm:$0xff]
      %v433 = vld [vmem:[%s382 + $0x158] sm:$0xff]
      %v434 = vld [vmem:[%s382 + $0x160] sm:$0xff]
      %v435 = vld [vmem:[%s382 + $0x168] sm:$0xff]
      %v436 = vld [vmem:[%s382 + $0x170] sm:$0xff]
      %v437 = vld [vmem:[%s382 + $0x178] sm:$0xff]
      %v438 = vld [vmem:[%s382 + $0x180] sm:$0xff]
      %v439 = vld [vmem:[%s382 + $0x188] sm:$0xff]
      %v440 = vld [vmem:[%s382 + $0x190] sm:$0xff]
      %v441 = vld [vmem:[%s382 + $0x198] sm:$0xff]
      %v442 = vld [vmem:[%s382 + $0x1a0] sm:$0xff]
      %v443 = vld [vmem:[%s382 + $0x1a8] sm:$0xff]
      %v444 = vld [vmem:[%s382 + $0x1b0] sm:$0xff]
      %v445 = vld [vmem:[%s382 + $0x1b8] sm:$0xff]
      %v446 = vld [vmem:[%s382 + $0x1c0] sm:$0xff]
      %v447 = vld [vmem:[%s382 + $0x1c8] sm:$0xff]
      %v448 = vld [vmem:[%s382 + $0x1d0] sm:$0xff]
      %v449 = vld [vmem:[%s382 + $0x1d8] sm:$0xff]
      %v450 = vld [vmem:[%s382 + $0x1e0] sm:$0xff]
      %v451 = vld [vmem:[%s382 + $0x1e8] sm:$0xff]
      %v452 = vld [vmem:[%s382 + $0x1f0] sm:$0xff]
      %v453 = vld [vmem:[%s382 + $0x1f8] sm:$0xff]
      %v454 = vld [vmem:[%s1] sm:$0xff]
      %v455 = vld [vmem:[%s1 + $0x8] sm:$0xff]
      %v456 = vld [vmem:[%s1 + $0x10] sm:$0xff]
      %v457 = vld [vmem:[%s1 + $0x18] sm:$0xff]
      %v458 = vld [vmem:[%s1 + $0x20] sm:$0xff]
      %v459 = vld [vmem:[%s1 + $0x28] sm:$0xff]
      %v460 = vld [vmem:[%s1 + $0x30] sm:$0xff]
      %v461 = vld [vmem:[%s1 + $0x38] sm:$0xff]
      %v462 = vld [vmem:[%s5] sm:$0x1]
      %v464 = vperm.slane %v462, 0
      %vm466 = vcmask 523264
      %v468 = vsel %vm466, %v390, 0
      %v471 = vsel %vm466, %v391, 0
      %v474 = vsel %vm466, %v392, 0
      %v477 = vsel %vm466, %v393, 0
      %v480 = vsel %vm466, %v394, 0
      %v483 = vsel %vm466, %v395, 0
      %v486 = vsel %vm466, %v396, 0
      %v489 = vsel %vm466, %v397, 0
      %v492 = vsel %vm466, %v398, 0
      %v495 = vsel %vm466, %v399, 0
      %v498 = vsel %vm466, %v400, 0
      %v501 = vsel %vm466, %v401, 0
      %v504 = vsel %vm466, %v402, 0
      %v507 = vsel %vm466, %v403, 0
      %v510 = vsel %vm466, %v404, 0
      %v513 = vsel %vm466, %v405, 0
      %v516 = vsel %vm466, %v406, 0
      %v519 = vsel %vm466, %v407, 0
      %v522 = vsel %vm466, %v408, 0
      %v525 = vsel %vm466, %v409, 0
      %v528 = vsel %vm466, %v410, 0
      %v531 = vsel %vm466, %v411, 0
      %v534 = vsel %vm466, %v412, 0
      %v537 = vsel %vm466, %v413, 0
      %v540 = vsel %vm466, %v414, 0
      %v543 = vsel %vm466, %v415, 0
      %v546 = vsel %vm466, %v416, 0
      %v549 = vsel %vm466, %v417, 0
      %v552 = vsel %vm466, %v418, 0
      %v555 = vsel %vm466, %v419, 0
      %v558 = vsel %vm466, %v420, 0
      %v561 = vsel %vm466, %v421, 0
      %v564 = vsel %vm466, %v422, 0
      %v567 = vsel %vm466, %v423, 0
      %v570 = vsel %vm466, %v424, 0
      %v573 = vsel %vm466, %v425, 0
      %v576 = vsel %vm466, %v426, 0
      %v579 = vsel %vm466, %v427, 0
      %v582 = vsel %vm466, %v428, 0
      %v585 = vsel %vm466, %v429, 0
      %v588 = vsel %vm466, %v430, 0
      %v591 = vsel %vm466, %v431, 0
      %v594 = vsel %vm466, %v432, 0
      %v597 = vsel %vm466, %v433, 0
      %v600 = vsel %vm466, %v434, 0
      %v603 = vsel %vm466, %v435, 0
      %v606 = vsel %vm466, %v436, 0
      %v609 = vsel %vm466, %v437, 0
      %v612 = vsel %vm466, %v438, 0
      %v615 = vsel %vm466, %v439, 0
      %v618 = vsel %vm466, %v440, 0
      %v621 = vsel %vm466, %v441, 0
      %v624 = vsel %vm466, %v442, 0
      %v627 = vsel %vm466, %v443, 0
      %v630 = vsel %vm466, %v444, 0
      %v633 = vsel %vm466, %v445, 0
      %v636 = vsel %vm466, %v446, 0
      %v639 = vsel %vm466, %v447, 0
      %v642 = vsel %vm466, %v448, 0
      %v645 = vsel %vm466, %v449, 0
      %v648 = vsel %vm466, %v450, 0
      %v651 = vsel %vm466, %v451, 0
      %v654 = vsel %vm466, %v452, 0
      %v657 = vsel %vm466, %v453, 0
      %659 = vmatpush.msra.mxu0 0.0
      %660 = vmatpush.msra.mxu0 0.0
      %661 = vmatpush.msra.mxu0 0.0
      %662 = vmatpush.msra.mxu0 0.0
      %663 = vmatpush.msra.mxu0 0.0
      %664 = vmatpush.msra.mxu0 0.0
      %665 = vmatpush.msra.mxu0 0.0
      %666 = vmatpush.msra.mxu0 0.0
      %667 = vmatpush.msra.mxu0 %v461
      %668 = vmatpush.msra.mxu0 %v460
      %669 = vmatpush.msra.mxu0 %v459
      %670 = vmatpush.msra.mxu0 %v458
      %671 = vmatpush.msra.mxu0 %v457
      %672 = vmatpush.msra.mxu0 %v456
      %673 = vmatpush.msra.mxu0 %v455
      %674 = vmatpush.msra.mxu0 %v454
      %675 = vmatmul.f32.gmra.mxu0 %v468
      %v676 = vpop.f32.mrf.mxu0
      %v677 = vadd.f32 %v464, %v676
      %678 = vmatmul.f32.gmra.mxu0 %v471
      %v679 = vpop.f32.mrf.mxu0
      %v680 = vadd.f32 %v464, %v679
      %681 = vmatmul.f32.gmra.mxu0 %v474
      %v682 = vpop.f32.mrf.mxu0
      %v683 = vadd.f32 %v464, %v682
      %684 = vmatmul.f32.gmra.mxu0 %v477
      %v685 = vpop.f32.mrf.mxu0
      %v686 = vadd.f32 %v464, %v685
      %687 = vmatmul.f32.gmra.mxu0 %v480
      %v688 = vpop.f32.mrf.mxu0
      %v689 = vadd.f32 %v464, %v688
      %690 = vmatmul.f32.gmra.mxu0 %v483
      %v691 = vpop.f32.mrf.mxu0
      %v692 = vadd.f32 %v464, %v691
      %693 = vmatmul.f32.gmra.mxu0 %v486
      %v694 = vpop.f32.mrf.mxu0
      %v695 = vadd.f32 %v464, %v694
      %696 = vmatmul.f32.gmra.mxu0 %v489
      %v697 = vpop.f32.mrf.mxu0
      %v698 = vadd.f32 %v464, %v697
      %699 = vmatmul.f32.gmra.mxu0 %v492
      %v700 = vpop.f32.mrf.mxu0
      %v701 = vadd.f32 %v464, %v700
      %702 = vmatmul.f32.gmra.mxu0 %v495
      %v703 = vpop.f32.mrf.mxu0
      %v704 = vadd.f32 %v464, %v703
      %705 = vmatmul.f32.gmra.mxu0 %v498
      %v706 = vpop.f32.mrf.mxu0
      %v707 = vadd.f32 %v464, %v706
      %708 = vmatmul.f32.gmra.mxu0 %v501
      %v709 = vpop.f32.mrf.mxu0
      %v710 = vadd.f32 %v464, %v709
      %711 = vmatmul.f32.gmra.mxu0 %v504
      %v712 = vpop.f32.mrf.mxu0
      %v713 = vadd.f32 %v464, %v712
      %714 = vmatmul.f32.gmra.mxu0 %v507
      %v715 = vpop.f32.mrf.mxu0
      %v716 = vadd.f32 %v464, %v715
      %717 = vmatmul.f32.gmra.mxu0 %v510
      %v718 = vpop.f32.mrf.mxu0
      %v719 = vadd.f32 %v464, %v718
      %720 = vmatmul.f32.gmra.mxu0 %v513
      %v721 = vpop.f32.mrf.mxu0
      %v722 = vadd.f32 %v464, %v721
      %723 = vmatmul.f32.gmra.mxu0 %v516
      %v724 = vpop.f32.mrf.mxu0
      %v725 = vadd.f32 %v464, %v724
      %726 = vmatmul.f32.gmra.mxu0 %v519
      %v727 = vpop.f32.mrf.mxu0
      %v728 = vadd.f32 %v464, %v727
      %729 = vmatmul.f32.gmra.mxu0 %v522
      %v730 = vpop.f32.mrf.mxu0
      %v731 = vadd.f32 %v464, %v730
      %732 = vmatmul.f32.gmra.mxu0 %v525
      %v733 = vpop.f32.mrf.mxu0
      %v734 = vadd.f32 %v464, %v733
      %735 = vmatmul.f32.gmra.mxu0 %v528
      %v736 = vpop.f32.mrf.mxu0
      %v737 = vadd.f32 %v464, %v736
      %738 = vmatmul.f32.gmra.mxu0 %v531
      %v739 = vpop.f32.mrf.mxu0
      %v740 = vadd.f32 %v464, %v739
      %741 = vmatmul.f32.gmra.mxu0 %v534
      %v742 = vpop.f32.mrf.mxu0
      %v743 = vadd.f32 %v464, %v742
      %744 = vmatmul.f32.gmra.mxu0 %v537
      %v745 = vpop.f32.mrf.mxu0
      %v746 = vadd.f32 %v464, %v745
      %747 = vmatmul.f32.gmra.mxu0 %v540
      %v748 = vpop.f32.mrf.mxu0
      %v749 = vadd.f32 %v464, %v748
      %750 = vmatmul.f32.gmra.mxu0 %v543
      %v751 = vpop.f32.mrf.mxu0
      %v752 = vadd.f32 %v464, %v751
      %753 = vmatmul.f32.gmra.mxu0 %v546
      %v754 = vpop.f32.mrf.mxu0
      %v755 = vadd.f32 %v464, %v754
      %756 = vmatmul.f32.gmra.mxu0 %v549
      %v757 = vpop.f32.mrf.mxu0
      %v758 = vadd.f32 %v464, %v757
      %759 = vmatmul.f32.gmra.mxu0 %v552
      %v760 = vpop.f32.mrf.mxu0
      %v761 = vadd.f32 %v464, %v760
      %762 = vmatmul.f32.gmra.mxu0 %v555
      %v763 = vpop.f32.mrf.mxu0
      %v764 = vadd.f32 %v464, %v763
      %765 = vmatmul.f32.gmra.mxu0 %v558
      %v766 = vpop.f32.mrf.mxu0
      %v767 = vadd.f32 %v464, %v766
      %768 = vmatmul.f32.gmra.mxu0 %v561
      %v769 = vpop.f32.mrf.mxu0
      %v770 = vadd.f32 %v464, %v769
      %771 = vmatmul.f32.gmra.mxu0 %v564
      %v772 = vpop.f32.mrf.mxu0
      %v773 = vadd.f32 %v464, %v772
      %774 = vmatmul.f32.gmra.mxu0 %v567
      %v775 = vpop.f32.mrf.mxu0
      %v776 = vadd.f32 %v464, %v775
      %777 = vmatmul.f32.gmra.mxu0 %v570
      %v778 = vpop.f32.mrf.mxu0
      %v779 = vadd.f32 %v464, %v778
      %780 = vmatmul.f32.gmra.mxu0 %v573
      %v781 = vpop.f32.mrf.mxu0
      %v782 = vadd.f32 %v464, %v781
      %783 = vmatmul.f32.gmra.mxu0 %v576
      %v784 = vpop.f32.mrf.mxu0
      %v785 = vadd.f32 %v464, %v784
      %786 = vmatmul.f32.gmra.mxu0 %v579
      %v787 = vpop.f32.mrf.mxu0
      %v788 = vadd.f32 %v464, %v787
      %789 = vmatmul.f32.gmra.mxu0 %v582
      %v790 = vpop.f32.mrf.mxu0
      %v791 = vadd.f32 %v464, %v790
      %792 = vmatmul.f32.gmra.mxu0 %v585
      %v793 = vpop.f32.mrf.mxu0
      %v794 = vadd.f32 %v464, %v793
      %795 = vmatmul.f32.gmra.mxu0 %v588
      %v796 = vpop.f32.mrf.mxu0
      %v797 = vadd.f32 %v464, %v796
      %798 = vmatmul.f32.gmra.mxu0 %v591
      %v799 = vpop.f32.mrf.mxu0
      %v800 = vadd.f32 %v464, %v799
      %801 = vmatmul.f32.gmra.mxu0 %v594
      %v802 = vpop.f32.mrf.mxu0
      %v803 = vadd.f32 %v464, %v802
      %804 = vmatmul.f32.gmra.mxu0 %v597
      %v805 = vpop.f32.mrf.mxu0
      %v806 = vadd.f32 %v464, %v805
      %807 = vmatmul.f32.gmra.mxu0 %v600
      %v808 = vpop.f32.mrf.mxu0
      %v809 = vadd.f32 %v464, %v808
      %810 = vmatmul.f32.gmra.mxu0 %v603
      %v811 = vpop.f32.mrf.mxu0
      %v812 = vadd.f32 %v464, %v811
      %813 = vmatmul.f32.gmra.mxu0 %v606
      %v814 = vpop.f32.mrf.mxu0
      %v815 = vadd.f32 %v464, %v814
      %816 = vmatmul.f32.gmra.mxu0 %v609
      %v817 = vpop.f32.mrf.mxu0
      %v818 = vadd.f32 %v464, %v817
      %819 = vmatmul.f32.gmra.mxu0 %v612
      %v820 = vpop.f32.mrf.mxu0
      %v821 = vadd.f32 %v464, %v820
      %822 = vmatmul.f32.gmra.mxu0 %v615
      %v823 = vpop.f32.mrf.mxu0
      %v824 = vadd.f32 %v464, %v823
      %825 = vmatmul.f32.gmra.mxu0 %v618
      %v826 = vpop.f32.mrf.mxu0
      %v827 = vadd.f32 %v464, %v826
      %828 = vmatmul.f32.gmra.mxu0 %v621
      %v829 = vpop.f32.mrf.mxu0
      %v830 = vadd.f32 %v464, %v829
      %831 = vmatmul.f32.gmra.mxu0 %v624
      %v832 = vpop.f32.mrf.mxu0
      %v833 = vadd.f32 %v464, %v832
      %834 = vmatmul.f32.gmra.mxu0 %v627
      %v835 = vpop.f32.mrf.mxu0
      %v836 = vadd.f32 %v464, %v835
      %837 = vmatmul.f32.gmra.mxu0 %v630
      %v838 = vpop.f32.mrf.mxu0
      %v839 = vadd.f32 %v464, %v838
      %840 = vmatmul.f32.gmra.mxu0 %v633
      %v841 = vpop.f32.mrf.mxu0
      %v842 = vadd.f32 %v464, %v841
      %843 = vmatmul.f32.gmra.mxu0 %v636
      %v844 = vpop.f32.mrf.mxu0
      %v845 = vadd.f32 %v464, %v844
      %846 = vmatmul.f32.gmra.mxu0 %v639
      %v847 = vpop.f32.mrf.mxu0
      %v848 = vadd.f32 %v464, %v847
      %849 = vmatmul.f32.gmra.mxu0 %v642
      %v850 = vpop.f32.mrf.mxu0
      %v851 = vadd.f32 %v464, %v850
      %852 = vmatmul.f32.gmra.mxu0 %v645
      %v853 = vpop.f32.mrf.mxu0
      %v854 = vadd.f32 %v464, %v853
      %855 = vmatmul.f32.gmra.mxu0 %v648
      %v856 = vpop.f32.mrf.mxu0
      %v857 = vadd.f32 %v464, %v856
      %858 = vmatmul.f32.gmra.mxu0 %v651
      %v859 = vpop.f32.mrf.mxu0
      %v860 = vadd.f32 %v464, %v859
      %861 = vmatmul.f32.gmra.mxu0 %v654
      %v862 = vpop.f32.mrf.mxu0
      %v863 = vadd.f32 %v464, %v862
      %864 = vmatmul.f32.gmra.mxu0 %v657
      %v865 = vpop.f32.mrf.mxu0
      %v866 = vadd.f32 %v464, %v865
      %867 = vdwg.mxu0
      %v868 = vld [vmem:[%s9] sm:$0xff]
      %v869 = vld [vmem:[%s9 + $0x8] sm:$0xff]
      %v870 = vld [vmem:[%s9 + $0x10] sm:$0xff]
      %v871 = vld [vmem:[%s9 + $0x18] sm:$0xff]
      %v872 = vld [vmem:[%s9 + $0x20] sm:$0xff]
      %v873 = vld [vmem:[%s9 + $0x28] sm:$0xff]
      %v874 = vld [vmem:[%s9 + $0x30] sm:$0xff]
      %v875 = vld [vmem:[%s9 + $0x38] sm:$0xff]
      %v876 = vld [vmem:[%s9 + $0x40] sm:$0xff]
      %v877 = vld [vmem:[%s9 + $0x48] sm:$0xff]
      %v878 = vld [vmem:[%s9 + $0x50] sm:$0xff]
      %v879 = vld [vmem:[%s9 + $0x58] sm:$0xff]
      %v880 = vld [vmem:[%s9 + $0x60] sm:$0xff]
      %v881 = vld [vmem:[%s9 + $0x68] sm:$0xff]
      %v882 = vld [vmem:[%s9 + $0x70] sm:$0xff]
      %v883 = vld [vmem:[%s9 + $0x78] sm:$0xff]
      %884 = vmatpush.msra.mxu0 %v883
      %885 = vmatpush.msra.mxu0 %v882
      %886 = vmatpush.msra.mxu0 %v881
      %887 = vmatpush.msra.mxu0 %v880
      %888 = vmatpush.msra.mxu0 %v879
      %889 = vmatpush.msra.mxu0 %v878
      %890 = vmatpush.msra.mxu0 %v877
      %891 = vmatpush.msra.mxu0 %v876
      %892 = vmatpush.msra.mxu0 %v875
      %893 = vmatpush.msra.mxu0 %v874
      %894 = vmatpush.msra.mxu0 %v873
      %895 = vmatpush.msra.mxu0 %v872
      %896 = vmatpush.msra.mxu0 %v871
      %897 = vmatpush.msra.mxu0 %v870
      %898 = vmatpush.msra.mxu0 %v869
      %899 = vmatpush.msra.mxu0 %v868
      %900 = vmatmul.f32.gmra.mxu0 %v677
      %v901 = vpop.f32.mrf.mxu0
      %v902 = vadd.f32 0.0, %v901
      %903 = vmatmul.f32.gmra.mxu0 %v680
      %v904 = vpop.f32.mrf.mxu0
      %v905 = vadd.f32 0.0, %v904
      %906 = vmatmul.f32.gmra.mxu0 %v683
      %v907 = vpop.f32.mrf.mxu0
      %v908 = vadd.f32 0.0, %v907
      %909 = vmatmul.f32.gmra.mxu0 %v686
      %v910 = vpop.f32.mrf.mxu0
      %v911 = vadd.f32 0.0, %v910
      %912 = vmatmul.f32.gmra.mxu0 %v689
      %v913 = vpop.f32.mrf.mxu0
      %v914 = vadd.f32 0.0, %v913
      %915 = vmatmul.f32.gmra.mxu0 %v692
      %v916 = vpop.f32.mrf.mxu0
      %v917 = vadd.f32 0.0, %v916
      %918 = vmatmul.f32.gmra.mxu0 %v695
      %v919 = vpop.f32.mrf.mxu0
      %v920 = vadd.f32 0.0, %v919
      %921 = vmatmul.f32.gmra.mxu0 %v698
      %v922 = vpop.f32.mrf.mxu0
      %v923 = vadd.f32 0.0, %v922
      %924 = vmatmul.f32.gmra.mxu0 %v701
      %v925 = vpop.f32.mrf.mxu0
      %v926 = vadd.f32 0.0, %v925
      %927 = vmatmul.f32.gmra.mxu0 %v704
      %v928 = vpop.f32.mrf.mxu0
      %v929 = vadd.f32 0.0, %v928
      %930 = vmatmul.f32.gmra.mxu0 %v707
      %v931 = vpop.f32.mrf.mxu0
      %v932 = vadd.f32 0.0, %v931
      %933 = vmatmul.f32.gmra.mxu0 %v710
      %v934 = vpop.f32.mrf.mxu0
      %v935 = vadd.f32 0.0, %v934
      %936 = vmatmul.f32.gmra.mxu0 %v713
      %v937 = vpop.f32.mrf.mxu0
      %v938 = vadd.f32 0.0, %v937
      %939 = vmatmul.f32.gmra.mxu0 %v716
      %v940 = vpop.f32.mrf.mxu0
      %v941 = vadd.f32 0.0, %v940
      %942 = vmatmul.f32.gmra.mxu0 %v719
      %v943 = vpop.f32.mrf.mxu0
      %v944 = vadd.f32 0.0, %v943
      %945 = vmatmul.f32.gmra.mxu0 %v722
      %v946 = vpop.f32.mrf.mxu0
      %v947 = vadd.f32 0.0, %v946
      %948 = vmatmul.f32.gmra.mxu0 %v725
      %v949 = vpop.f32.mrf.mxu0
      %v950 = vadd.f32 0.0, %v949
      %951 = vmatmul.f32.gmra.mxu0 %v728
      %v952 = vpop.f32.mrf.mxu0
      %v953 = vadd.f32 0.0, %v952
      %954 = vmatmul.f32.gmra.mxu0 %v731
      %v955 = vpop.f32.mrf.mxu0
      %v956 = vadd.f32 0.0, %v955
      %957 = vmatmul.f32.gmra.mxu0 %v734
      %v958 = vpop.f32.mrf.mxu0
      %v959 = vadd.f32 0.0, %v958
      %960 = vmatmul.f32.gmra.mxu0 %v737
      %v961 = vpop.f32.mrf.mxu0
      %v962 = vadd.f32 0.0, %v961
      %963 = vmatmul.f32.gmra.mxu0 %v740
      %v964 = vpop.f32.mrf.mxu0
      %v965 = vadd.f32 0.0, %v964
      %966 = vmatmul.f32.gmra.mxu0 %v743
      %v967 = vpop.f32.mrf.mxu0
      %v968 = vadd.f32 0.0, %v967
      %969 = vmatmul.f32.gmra.mxu0 %v746
      %v970 = vpop.f32.mrf.mxu0
      %v971 = vadd.f32 0.0, %v970
      %972 = vmatmul.f32.gmra.mxu0 %v749
      %v973 = vpop.f32.mrf.mxu0
      %v974 = vadd.f32 0.0, %v973
      %975 = vmatmul.f32.gmra.mxu0 %v752
      %v976 = vpop.f32.mrf.mxu0
      %v977 = vadd.f32 0.0, %v976
      %978 = vmatmul.f32.gmra.mxu0 %v755
      %v979 = vpop.f32.mrf.mxu0
      %v980 = vadd.f32 0.0, %v979
      %981 = vmatmul.f32.gmra.mxu0 %v758
      %v982 = vpop.f32.mrf.mxu0
      %v983 = vadd.f32 0.0, %v982
      %984 = vmatmul.f32.gmra.mxu0 %v761
      %v985 = vpop.f32.mrf.mxu0
      %v986 = vadd.f32 0.0, %v985
      %987 = vmatmul.f32.gmra.mxu0 %v764
      %v988 = vpop.f32.mrf.mxu0
      %v989 = vadd.f32 0.0, %v988
      %990 = vmatmul.f32.gmra.mxu0 %v767
      %v991 = vpop.f32.mrf.mxu0
      %v992 = vadd.f32 0.0, %v991
      %993 = vmatmul.f32.gmra.mxu0 %v770
      %v994 = vpop.f32.mrf.mxu0
      %v995 = vadd.f32 0.0, %v994
      %996 = vmatmul.f32.gmra.mxu0 %v773
      %v997 = vpop.f32.mrf.mxu0
      %v998 = vadd.f32 0.0, %v997
      %999 = vmatmul.f32.gmra.mxu0 %v776
      %v1000 = vpop.f32.mrf.mxu0
      %v1001 = vadd.f32 0.0, %v1000
      %1002 = vmatmul.f32.gmra.mxu0 %v779
      %v1003 = vpop.f32.mrf.mxu0
      %v1004 = vadd.f32 0.0, %v1003
      %1005 = vmatmul.f32.gmra.mxu0 %v782
      %v1006 = vpop.f32.mrf.mxu0
      %v1007 = vadd.f32 0.0, %v1006
      %1008 = vmatmul.f32.gmra.mxu0 %v785
      %v1009 = vpop.f32.mrf.mxu0
      %v1010 = vadd.f32 0.0, %v1009
      %1011 = vmatmul.f32.gmra.mxu0 %v788
      %v1012 = vpop.f32.mrf.mxu0
      %v1013 = vadd.f32 0.0, %v1012
      %1014 = vmatmul.f32.gmra.mxu0 %v791
      %v1015 = vpop.f32.mrf.mxu0
      %v1016 = vadd.f32 0.0, %v1015
      %1017 = vmatmul.f32.gmra.mxu0 %v794
      %v1018 = vpop.f32.mrf.mxu0
      %v1019 = vadd.f32 0.0, %v1018
      %1020 = vmatmul.f32.gmra.mxu0 %v797
      %v1021 = vpop.f32.mrf.mxu0
      %v1022 = vadd.f32 0.0, %v1021
      %1023 = vmatmul.f32.gmra.mxu0 %v800
      %v1024 = vpop.f32.mrf.mxu0
      %v1025 = vadd.f32 0.0, %v1024
      %1026 = vmatmul.f32.gmra.mxu0 %v803
      %v1027 = vpop.f32.mrf.mxu0
      %v1028 = vadd.f32 0.0, %v1027
      %1029 = vmatmul.f32.gmra.mxu0 %v806
      %v1030 = vpop.f32.mrf.mxu0
      %v1031 = vadd.f32 0.0, %v1030
      %1032 = vmatmul.f32.gmra.mxu0 %v809
      %v1033 = vpop.f32.mrf.mxu0
      %v1034 = vadd.f32 0.0, %v1033
      %1035 = vmatmul.f32.gmra.mxu0 %v812
      %v1036 = vpop.f32.mrf.mxu0
      %v1037 = vadd.f32 0.0, %v1036
      %1038 = vmatmul.f32.gmra.mxu0 %v815
      %v1039 = vpop.f32.mrf.mxu0
      %v1040 = vadd.f32 0.0, %v1039
      %1041 = vmatmul.f32.gmra.mxu0 %v818
      %v1042 = vpop.f32.mrf.mxu0
      %v1043 = vadd.f32 0.0, %v1042
      %1044 = vmatmul.f32.gmra.mxu0 %v821
      %v1045 = vpop.f32.mrf.mxu0
      %v1046 = vadd.f32 0.0, %v1045
      %1047 = vmatmul.f32.gmra.mxu0 %v824
      %v1048 = vpop.f32.mrf.mxu0
      %v1049 = vadd.f32 0.0, %v1048
      %1050 = vmatmul.f32.gmra.mxu0 %v827
      %v1051 = vpop.f32.mrf.mxu0
      %v1052 = vadd.f32 0.0, %v1051
      %1053 = vmatmul.f32.gmra.mxu0 %v830
      %v1054 = vpop.f32.mrf.mxu0
      %v1055 = vadd.f32 0.0, %v1054
      %1056 = vmatmul.f32.gmra.mxu0 %v833
      %v1057 = vpop.f32.mrf.mxu0
      %v1058 = vadd.f32 0.0, %v1057
      %1059 = vmatmul.f32.gmra.mxu0 %v836
      %v1060 = vpop.f32.mrf.mxu0
      %v1061 = vadd.f32 0.0, %v1060
      %1062 = vmatmul.f32.gmra.mxu0 %v839
      %v1063 = vpop.f32.mrf.mxu0
      %v1064 = vadd.f32 0.0, %v1063
      %1065 = vmatmul.f32.gmra.mxu0 %v842
      %v1066 = vpop.f32.mrf.mxu0
      %v1067 = vadd.f32 0.0, %v1066
      %1068 = vmatmul.f32.gmra.mxu0 %v845
      %v1069 = vpop.f32.mrf.mxu0
      %v1070 = vadd.f32 0.0, %v1069
      %1071 = vmatmul.f32.gmra.mxu0 %v848
      %v1072 = vpop.f32.mrf.mxu0
      %v1073 = vadd.f32 0.0, %v1072
      %1074 = vmatmul.f32.gmra.mxu0 %v851
      %v1075 = vpop.f32.mrf.mxu0
      %v1076 = vadd.f32 0.0, %v1075
      %1077 = vmatmul.f32.gmra.mxu0 %v854
      %v1078 = vpop.f32.mrf.mxu0
      %v1079 = vadd.f32 0.0, %v1078
      %1080 = vmatmul.f32.gmra.mxu0 %v857
      %v1081 = vpop.f32.mrf.mxu0
      %v1082 = vadd.f32 0.0, %v1081
      %1083 = vmatmul.f32.gmra.mxu0 %v860
      %v1084 = vpop.f32.mrf.mxu0
      %v1085 = vadd.f32 0.0, %v1084
      %1086 = vmatmul.f32.gmra.mxu0 %v863
      %v1087 = vpop.f32.mrf.mxu0
      %v1088 = vadd.f32 0.0, %v1087
      %1089 = vmatmul.f32.gmra.mxu0 %v866
      %v1090 = vpop.f32.mrf.mxu0
      %v1091 = vadd.f32 0.0, %v1090
      %1092 = vdwg.mxu0
      %v1093 = vmul.f32 %v677, %v677
      %v1094 = vmul.f32 %v680, %v680
      %v1095 = vmul.f32 %v683, %v683
      %v1096 = vmul.f32 %v686, %v686
      %v1097 = vmul.f32 %v689, %v689
      %v1098 = vmul.f32 %v692, %v692
      %v1099 = vmul.f32 %v695, %v695
      %v1100 = vmul.f32 %v698, %v698
      %v1101 = vmul.f32 %v701, %v701
      %v1102 = vmul.f32 %v704, %v704
      %v1103 = vmul.f32 %v707, %v707
      %v1104 = vmul.f32 %v710, %v710
      %v1105 = vmul.f32 %v713, %v713
      %v1106 = vmul.f32 %v716, %v716
      %v1107 = vmul.f32 %v719, %v719
      %v1108 = vmul.f32 %v722, %v722
      %v1109 = vmul.f32 %v725, %v725
      %v1110 = vmul.f32 %v728, %v728
      %v1111 = vmul.f32 %v731, %v731
      %v1112 = vmul.f32 %v734, %v734
      %v1113 = vmul.f32 %v737, %v737
      %v1114 = vmul.f32 %v740, %v740
      %v1115 = vmul.f32 %v743, %v743
      %v1116 = vmul.f32 %v746, %v746
      %v1117 = vmul.f32 %v749, %v749
      %v1118 = vmul.f32 %v752, %v752
      %v1119 = vmul.f32 %v755, %v755
      %v1120 = vmul.f32 %v758, %v758
      %v1121 = vmul.f32 %v761, %v761
      %v1122 = vmul.f32 %v764, %v764
      %v1123 = vmul.f32 %v767, %v767
      %v1124 = vmul.f32 %v770, %v770
      %v1125 = vmul.f32 %v773, %v773
      %v1126 = vmul.f32 %v776, %v776
      %v1127 = vmul.f32 %v779, %v779
      %v1128 = vmul.f32 %v782, %v782
      %v1129 = vmul.f32 %v785, %v785
      %v1130 = vmul.f32 %v788, %v788
      %v1131 = vmul.f32 %v791, %v791
      %v1132 = vmul.f32 %v794, %v794
      %v1133 = vmul.f32 %v797, %v797
      %v1134 = vmul.f32 %v800, %v800
      %v1135 = vmul.f32 %v803, %v803
      %v1136 = vmul.f32 %v806, %v806
      %v1137 = vmul.f32 %v809, %v809
      %v1138 = vmul.f32 %v812, %v812
      %v1139 = vmul.f32 %v815, %v815
      %v1140 = vmul.f32 %v818, %v818
      %v1141 = vmul.f32 %v821, %v821
      %v1142 = vmul.f32 %v824, %v824
      %v1143 = vmul.f32 %v827, %v827
      %v1144 = vmul.f32 %v830, %v830
      %v1145 = vmul.f32 %v833, %v833
      %v1146 = vmul.f32 %v836, %v836
      %v1147 = vmul.f32 %v839, %v839
      %v1148 = vmul.f32 %v842, %v842
      %v1149 = vmul.f32 %v845, %v845
      %v1150 = vmul.f32 %v848, %v848
      %v1151 = vmul.f32 %v851, %v851
      %v1152 = vmul.f32 %v854, %v854
      %v1153 = vmul.f32 %v857, %v857
      %v1154 = vmul.f32 %v860, %v860
      %v1155 = vmul.f32 %v863, %v863
      %v1156 = vmul.f32 %v866, %v866
      %1157 = vmatpush.msra.mxu0 %v883
      %1158 = vmatpush.msra.mxu0 %v882
      %1159 = vmatpush.msra.mxu0 %v881
      %1160 = vmatpush.msra.mxu0 %v880
      %1161 = vmatpush.msra.mxu0 %v879
      %1162 = vmatpush.msra.mxu0 %v878
      %1163 = vmatpush.msra.mxu0 %v877
      %1164 = vmatpush.msra.mxu0 %v876
      %1165 = vmatpush.msra.mxu0 %v875
      %1166 = vmatpush.msra.mxu0 %v874
      %1167 = vmatpush.msra.mxu0 %v873
      %1168 = vmatpush.msra.mxu0 %v872
      %1169 = vmatpush.msra.mxu0 %v871
      %1170 = vmatpush.msra.mxu0 %v870
      %1171 = vmatpush.msra.mxu0 %v869
      %1172 = vmatpush.msra.mxu0 %v868
      %1173 = vmatmul.f32.gmra.mxu0 %v1093
      %v1174 = vpop.f32.mrf.mxu0
      %v1175 = vadd.f32 0.0, %v1174
      %1176 = vmatmul.f32.gmra.mxu0 %v1094
      %v1177 = vpop.f32.mrf.mxu0
      %v1178 = vadd.f32 0.0, %v1177
      %1179 = vmatmul.f32.gmra.mxu0 %v1095
      %v1180 = vpop.f32.mrf.mxu0
      %v1181 = vadd.f32 0.0, %v1180
      %1182 = vmatmul.f32.gmra.mxu0 %v1096
      %v1183 = vpop.f32.mrf.mxu0
      %v1184 = vadd.f32 0.0, %v1183
      %1185 = vmatmul.f32.gmra.mxu0 %v1097
      %v1186 = vpop.f32.mrf.mxu0
      %v1187 = vadd.f32 0.0, %v1186
      %1188 = vmatmul.f32.gmra.mxu0 %v1098
      %v1189 = vpop.f32.mrf.mxu0
      %v1190 = vadd.f32 0.0, %v1189
      %1191 = vmatmul.f32.gmra.mxu0 %v1099
      %v1192 = vpop.f32.mrf.mxu0
      %v1193 = vadd.f32 0.0, %v1192
      %1194 = vmatmul.f32.gmra.mxu0 %v1100
      %v1195 = vpop.f32.mrf.mxu0
      %v1196 = vadd.f32 0.0, %v1195
      %1197 = vmatmul.f32.gmra.mxu0 %v1101
      %v1198 = vpop.f32.mrf.mxu0
      %v1199 = vadd.f32 0.0, %v1198
      %1200 = vmatmul.f32.gmra.mxu0 %v1102
      %v1201 = vpop.f32.mrf.mxu0
      %v1202 = vadd.f32 0.0, %v1201
      %1203 = vmatmul.f32.gmra.mxu0 %v1103
      %v1204 = vpop.f32.mrf.mxu0
      %v1205 = vadd.f32 0.0, %v1204
      %1206 = vmatmul.f32.gmra.mxu0 %v1104
      %v1207 = vpop.f32.mrf.mxu0
      %v1208 = vadd.f32 0.0, %v1207
      %1209 = vmatmul.f32.gmra.mxu0 %v1105
      %v1210 = vpop.f32.mrf.mxu0
      %v1211 = vadd.f32 0.0, %v1210
      %1212 = vmatmul.f32.gmra.mxu0 %v1106
      %v1213 = vpop.f32.mrf.mxu0
      %v1214 = vadd.f32 0.0, %v1213
      %1215 = vmatmul.f32.gmra.mxu0 %v1107
      %v1216 = vpop.f32.mrf.mxu0
      %v1217 = vadd.f32 0.0, %v1216
      %1218 = vmatmul.f32.gmra.mxu0 %v1108
      %v1219 = vpop.f32.mrf.mxu0
      %v1220 = vadd.f32 0.0, %v1219
      %1221 = vmatmul.f32.gmra.mxu0 %v1109
      %v1222 = vpop.f32.mrf.mxu0
      %v1223 = vadd.f32 0.0, %v1222
      %1224 = vmatmul.f32.gmra.mxu0 %v1110
      %v1225 = vpop.f32.mrf.mxu0
      %v1226 = vadd.f32 0.0, %v1225
      %1227 = vmatmul.f32.gmra.mxu0 %v1111
      %v1228 = vpop.f32.mrf.mxu0
      %v1229 = vadd.f32 0.0, %v1228
      %1230 = vmatmul.f32.gmra.mxu0 %v1112
      %v1231 = vpop.f32.mrf.mxu0
      %v1232 = vadd.f32 0.0, %v1231
      %1233 = vmatmul.f32.gmra.mxu0 %v1113
      %v1234 = vpop.f32.mrf.mxu0
      %v1235 = vadd.f32 0.0, %v1234
      %1236 = vmatmul.f32.gmra.mxu0 %v1114
      %v1237 = vpop.f32.mrf.mxu0
      %v1238 = vadd.f32 0.0, %v1237
      %1239 = vmatmul.f32.gmra.mxu0 %v1115
      %v1240 = vpop.f32.mrf.mxu0
      %v1241 = vadd.f32 0.0, %v1240
      %1242 = vmatmul.f32.gmra.mxu0 %v1116
      %v1243 = vpop.f32.mrf.mxu0
      %v1244 = vadd.f32 0.0, %v1243
      %1245 = vmatmul.f32.gmra.mxu0 %v1117
      %v1246 = vpop.f32.mrf.mxu0
      %v1247 = vadd.f32 0.0, %v1246
      %1248 = vmatmul.f32.gmra.mxu0 %v1118
      %v1249 = vpop.f32.mrf.mxu0
      %v1250 = vadd.f32 0.0, %v1249
      %1251 = vmatmul.f32.gmra.mxu0 %v1119
      %v1252 = vpop.f32.mrf.mxu0
      %v1253 = vadd.f32 0.0, %v1252
      %1254 = vmatmul.f32.gmra.mxu0 %v1120
      %v1255 = vpop.f32.mrf.mxu0
      %v1256 = vadd.f32 0.0, %v1255
      %1257 = vmatmul.f32.gmra.mxu0 %v1121
      %v1258 = vpop.f32.mrf.mxu0
      %v1259 = vadd.f32 0.0, %v1258
      %1260 = vmatmul.f32.gmra.mxu0 %v1122
      %v1261 = vpop.f32.mrf.mxu0
      %v1262 = vadd.f32 0.0, %v1261
      %1263 = vmatmul.f32.gmra.mxu0 %v1123
      %v1264 = vpop.f32.mrf.mxu0
      %v1265 = vadd.f32 0.0, %v1264
      %1266 = vmatmul.f32.gmra.mxu0 %v1124
      %v1267 = vpop.f32.mrf.mxu0
      %v1268 = vadd.f32 0.0, %v1267
      %1269 = vmatmul.f32.gmra.mxu0 %v1125
      %v1270 = vpop.f32.mrf.mxu0
      %v1271 = vadd.f32 0.0, %v1270
      %1272 = vmatmul.f32.gmra.mxu0 %v1126
      %v1273 = vpop.f32.mrf.mxu0
      %v1274 = vadd.f32 0.0, %v1273
      %1275 = vmatmul.f32.gmra.mxu0 %v1127
      %v1276 = vpop.f32.mrf.mxu0
      %v1277 = vadd.f32 0.0, %v1276
      %1278 = vmatmul.f32.gmra.mxu0 %v1128
      %v1279 = vpop.f32.mrf.mxu0
      %v1280 = vadd.f32 0.0, %v1279
      %1281 = vmatmul.f32.gmra.mxu0 %v1129
      %v1282 = vpop.f32.mrf.mxu0
      %v1283 = vadd.f32 0.0, %v1282
      %1284 = vmatmul.f32.gmra.mxu0 %v1130
      %v1285 = vpop.f32.mrf.mxu0
      %v1286 = vadd.f32 0.0, %v1285
      %1287 = vmatmul.f32.gmra.mxu0 %v1131
      %v1288 = vpop.f32.mrf.mxu0
      %v1289 = vadd.f32 0.0, %v1288
      %1290 = vmatmul.f32.gmra.mxu0 %v1132
      %v1291 = vpop.f32.mrf.mxu0
      %v1292 = vadd.f32 0.0, %v1291
      %1293 = vmatmul.f32.gmra.mxu0 %v1133
      %v1294 = vpop.f32.mrf.mxu0
      %v1295 = vadd.f32 0.0, %v1294
      %1296 = vmatmul.f32.gmra.mxu0 %v1134
      %v1297 = vpop.f32.mrf.mxu0
      %v1298 = vadd.f32 0.0, %v1297
      %1299 = vmatmul.f32.gmra.mxu0 %v1135
      %v1300 = vpop.f32.mrf.mxu0
      %v1301 = vadd.f32 0.0, %v1300
      %1302 = vmatmul.f32.gmra.mxu0 %v1136
      %v1303 = vpop.f32.mrf.mxu0
      %v1304 = vadd.f32 0.0, %v1303
      %1305 = vmatmul.f32.gmra.mxu0 %v1137
      %v1306 = vpop.f32.mrf.mxu0
      %v1307 = vadd.f32 0.0, %v1306
      %1308 = vmatmul.f32.gmra.mxu0 %v1138
      %v1309 = vpop.f32.mrf.mxu0
      %v1310 = vadd.f32 0.0, %v1309
      %1311 = vmatmul.f32.gmra.mxu0 %v1139
      %v1312 = vpop.f32.mrf.mxu0
      %v1313 = vadd.f32 0.0, %v1312
      %1314 = vmatmul.f32.gmra.mxu0 %v1140
      %v1315 = vpop.f32.mrf.mxu0
      %v1316 = vadd.f32 0.0, %v1315
      %1317 = vmatmul.f32.gmra.mxu0 %v1141
      %v1318 = vpop.f32.mrf.mxu0
      %v1319 = vadd.f32 0.0, %v1318
      %1320 = vmatmul.f32.gmra.mxu0 %v1142
      %v1321 = vpop.f32.mrf.mxu0
      %v1322 = vadd.f32 0.0, %v1321
      %1323 = vmatmul.f32.gmra.mxu0 %v1143
      %v1324 = vpop.f32.mrf.mxu0
      %v1325 = vadd.f32 0.0, %v1324
      %1326 = vmatmul.f32.gmra.mxu0 %v1144
      %v1327 = vpop.f32.mrf.mxu0
      %v1328 = vadd.f32 0.0, %v1327
      %1329 = vmatmul.f32.gmra.mxu0 %v1145
      %v1330 = vpop.f32.mrf.mxu0
      %v1331 = vadd.f32 0.0, %v1330
      %1332 = vmatmul.f32.gmra.mxu0 %v1146
      %v1333 = vpop.f32.mrf.mxu0
      %v1334 = vadd.f32 0.0, %v1333
      %1335 = vmatmul.f32.gmra.mxu0 %v1147
      %v1336 = vpop.f32.mrf.mxu0
      %v1337 = vadd.f32 0.0, %v1336
      %1338 = vmatmul.f32.gmra.mxu0 %v1148
      %v1339 = vpop.f32.mrf.mxu0
      %v1340 = vadd.f32 0.0, %v1339
      %1341 = vmatmul.f32.gmra.mxu0 %v1149
      %v1342 = vpop.f32.mrf.mxu0
      %v1343 = vadd.f32 0.0, %v1342
      %1344 = vmatmul.f32.gmra.mxu0 %v1150
      %v1345 = vpop.f32.mrf.mxu0
      %v1346 = vadd.f32 0.0, %v1345
      %1347 = vmatmul.f32.gmra.mxu0 %v1151
      %v1348 = vpop.f32.mrf.mxu0
      %v1349 = vadd.f32 0.0, %v1348
      %1350 = vmatmul.f32.gmra.mxu0 %v1152
      %v1351 = vpop.f32.mrf.mxu0
      %v1352 = vadd.f32 0.0, %v1351
      %1353 = vmatmul.f32.gmra.mxu0 %v1153
      %v1354 = vpop.f32.mrf.mxu0
      %v1355 = vadd.f32 0.0, %v1354
      %1356 = vmatmul.f32.gmra.mxu0 %v1154
      %v1357 = vpop.f32.mrf.mxu0
      %v1358 = vadd.f32 0.0, %v1357
      %1359 = vmatmul.f32.gmra.mxu0 %v1155
      %v1360 = vpop.f32.mrf.mxu0
      %v1361 = vadd.f32 0.0, %v1360
      %1362 = vmatmul.f32.gmra.mxu0 %v1156
      %v1363 = vpop.f32.mrf.mxu0
      %v1364 = vadd.f32 0.0, %v1363
      %1365 = vdwg.mxu0
      %v1366 = vmul.f32 %v902, %v902
      %v1367 = vmul.f32 %v905, %v905
      %v1368 = vmul.f32 %v908, %v908
      %v1369 = vmul.f32 %v911, %v911
      %v1370 = vmul.f32 %v914, %v914
      %v1371 = vmul.f32 %v917, %v917
      %v1372 = vmul.f32 %v920, %v920
      %v1373 = vmul.f32 %v923, %v923
      %v1374 = vmul.f32 %v926, %v926
      %v1375 = vmul.f32 %v929, %v929
      %v1376 = vmul.f32 %v932, %v932
      %v1377 = vmul.f32 %v935, %v935
      %v1378 = vmul.f32 %v938, %v938
      %v1379 = vmul.f32 %v941, %v941
      %v1380 = vmul.f32 %v944, %v944
      %v1381 = vmul.f32 %v947, %v947
      %v1382 = vmul.f32 %v950, %v950
      %v1383 = vmul.f32 %v953, %v953
      %v1384 = vmul.f32 %v956, %v956
      %v1385 = vmul.f32 %v959, %v959
      %v1386 = vmul.f32 %v962, %v962
      %v1387 = vmul.f32 %v965, %v965
      %v1388 = vmul.f32 %v968, %v968
      %v1389 = vmul.f32 %v971, %v971
      %v1390 = vmul.f32 %v974, %v974
      %v1391 = vmul.f32 %v977, %v977
      %v1392 = vmul.f32 %v980, %v980
      %v1393 = vmul.f32 %v983, %v983
      %v1394 = vmul.f32 %v986, %v986
      %v1395 = vmul.f32 %v989, %v989
      %v1396 = vmul.f32 %v992, %v992
      %v1397 = vmul.f32 %v995, %v995
      %v1398 = vmul.f32 %v998, %v998
      %v1399 = vmul.f32 %v1001, %v1001
      %v1400 = vmul.f32 %v1004, %v1004
      %v1401 = vmul.f32 %v1007, %v1007
      %v1402 = vmul.f32 %v1010, %v1010
      %v1403 = vmul.f32 %v1013, %v1013
      %v1404 = vmul.f32 %v1016, %v1016
      %v1405 = vmul.f32 %v1019, %v1019
      %v1406 = vmul.f32 %v1022, %v1022
      %v1407 = vmul.f32 %v1025, %v1025
      %v1408 = vmul.f32 %v1028, %v1028
      %v1409 = vmul.f32 %v1031, %v1031
      %v1410 = vmul.f32 %v1034, %v1034
      %v1411 = vmul.f32 %v1037, %v1037
      %v1412 = vmul.f32 %v1040, %v1040
      %v1413 = vmul.f32 %v1043, %v1043
      %v1414 = vmul.f32 %v1046, %v1046
      %v1415 = vmul.f32 %v1049, %v1049
      %v1416 = vmul.f32 %v1052, %v1052
      %v1417 = vmul.f32 %v1055, %v1055
      %v1418 = vmul.f32 %v1058, %v1058
      %v1419 = vmul.f32 %v1061, %v1061
      %v1420 = vmul.f32 %v1064, %v1064
      %v1421 = vmul.f32 %v1067, %v1067
      %v1422 = vmul.f32 %v1070, %v1070
      %v1423 = vmul.f32 %v1073, %v1073
      %v1424 = vmul.f32 %v1076, %v1076
      %v1425 = vmul.f32 %v1079, %v1079
      %v1426 = vmul.f32 %v1082, %v1082
      %v1427 = vmul.f32 %v1085, %v1085
      %v1428 = vmul.f32 %v1088, %v1088
      %v1429 = vmul.f32 %v1091, %v1091
      %v1430 = vsub.f32 %v1175, %v1366
      %v1431 = vsub.f32 %v1178, %v1367
      %v1432 = vsub.f32 %v1181, %v1368
      %v1433 = vsub.f32 %v1184, %v1369
      %v1434 = vsub.f32 %v1187, %v1370
      %v1435 = vsub.f32 %v1190, %v1371
      %v1436 = vsub.f32 %v1193, %v1372
      %v1437 = vsub.f32 %v1196, %v1373
      %v1438 = vsub.f32 %v1199, %v1374
      %v1439 = vsub.f32 %v1202, %v1375
      %v1440 = vsub.f32 %v1205, %v1376
      %v1441 = vsub.f32 %v1208, %v1377
      %v1442 = vsub.f32 %v1211, %v1378
      %v1443 = vsub.f32 %v1214, %v1379
      %v1444 = vsub.f32 %v1217, %v1380
      %v1445 = vsub.f32 %v1220, %v1381
      %v1446 = vsub.f32 %v1223, %v1382
      %v1447 = vsub.f32 %v1226, %v1383
      %v1448 = vsub.f32 %v1229, %v1384
      %v1449 = vsub.f32 %v1232, %v1385
      %v1450 = vsub.f32 %v1235, %v1386
      %v1451 = vsub.f32 %v1238, %v1387
      %v1452 = vsub.f32 %v1241, %v1388
      %v1453 = vsub.f32 %v1244, %v1389
      %v1454 = vsub.f32 %v1247, %v1390
      %v1455 = vsub.f32 %v1250, %v1391
      %v1456 = vsub.f32 %v1253, %v1392
      %v1457 = vsub.f32 %v1256, %v1393
      %v1458 = vsub.f32 %v1259, %v1394
      %v1459 = vsub.f32 %v1262, %v1395
      %v1460 = vsub.f32 %v1265, %v1396
      %v1461 = vsub.f32 %v1268, %v1397
      %v1462 = vsub.f32 %v1271, %v1398
      %v1463 = vsub.f32 %v1274, %v1399
      %v1464 = vsub.f32 %v1277, %v1400
      %v1465 = vsub.f32 %v1280, %v1401
      %v1466 = vsub.f32 %v1283, %v1402
      %v1467 = vsub.f32 %v1286, %v1403
      %v1468 = vsub.f32 %v1289, %v1404
      %v1469 = vsub.f32 %v1292, %v1405
      %v1470 = vsub.f32 %v1295, %v1406
      %v1471 = vsub.f32 %v1298, %v1407
      %v1472 = vsub.f32 %v1301, %v1408
      %v1473 = vsub.f32 %v1304, %v1409
      %v1474 = vsub.f32 %v1307, %v1410
      %v1475 = vsub.f32 %v1310, %v1411
      %v1476 = vsub.f32 %v1313, %v1412
      %v1477 = vsub.f32 %v1316, %v1413
      %v1478 = vsub.f32 %v1319, %v1414
      %v1479 = vsub.f32 %v1322, %v1415
      %v1480 = vsub.f32 %v1325, %v1416
      %v1481 = vsub.f32 %v1328, %v1417
      %v1482 = vsub.f32 %v1331, %v1418
      %v1483 = vsub.f32 %v1334, %v1419
      %v1484 = vsub.f32 %v1337, %v1420
      %v1485 = vsub.f32 %v1340, %v1421
      %v1486 = vsub.f32 %v1343, %v1422
      %v1487 = vsub.f32 %v1346, %v1423
      %v1488 = vsub.f32 %v1349, %v1424
      %v1489 = vsub.f32 %v1352, %v1425
      %v1490 = vsub.f32 %v1355, %v1426
      %v1491 = vsub.f32 %v1358, %v1427
      %v1492 = vsub.f32 %v1361, %v1428
      %v1493 = vsub.f32 %v1364, %v1429
      %v1494 = vmax.f32 %v1430, 0.0
      %v1495 = vmax.f32 %v1431, 0.0
      %v1496 = vmax.f32 %v1432, 0.0
      %v1497 = vmax.f32 %v1433, 0.0
      %v1498 = vmax.f32 %v1434, 0.0
      %v1499 = vmax.f32 %v1435, 0.0
      %v1500 = vmax.f32 %v1436, 0.0
      %v1501 = vmax.f32 %v1437, 0.0
      %v1502 = vmax.f32 %v1438, 0.0
      %v1503 = vmax.f32 %v1439, 0.0
      %v1504 = vmax.f32 %v1440, 0.0
      %v1505 = vmax.f32 %v1441, 0.0
      %v1506 = vmax.f32 %v1442, 0.0
      %v1507 = vmax.f32 %v1443, 0.0
      %v1508 = vmax.f32 %v1444, 0.0
      %v1509 = vmax.f32 %v1445, 0.0
      %v1510 = vmax.f32 %v1446, 0.0
      %v1511 = vmax.f32 %v1447, 0.0
      %v1512 = vmax.f32 %v1448, 0.0
      %v1513 = vmax.f32 %v1449, 0.0
      %v1514 = vmax.f32 %v1450, 0.0
      %v1515 = vmax.f32 %v1451, 0.0
      %v1516 = vmax.f32 %v1452, 0.0
      %v1517 = vmax.f32 %v1453, 0.0
      %v1518 = vmax.f32 %v1454, 0.0
      %v1519 = vmax.f32 %v1455, 0.0
      %v1520 = vmax.f32 %v1456, 0.0
      %v1521 = vmax.f32 %v1457, 0.0
      %v1522 = vmax.f32 %v1458, 0.0
      %v1523 = vmax.f32 %v1459, 0.0
      %v1524 = vmax.f32 %v1460, 0.0
      %v1525 = vmax.f32 %v1461, 0.0
      %v1526 = vmax.f32 %v1462, 0.0
      %v1527 = vmax.f32 %v1463, 0.0
      %v1528 = vmax.f32 %v1464, 0.0
      %v1529 = vmax.f32 %v1465, 0.0
      %v1530 = vmax.f32 %v1466, 0.0
      %v1531 = vmax.f32 %v1467, 0.0
      %v1532 = vmax.f32 %v1468, 0.0
      %v1533 = vmax.f32 %v1469, 0.0
      %v1534 = vmax.f32 %v1470, 0.0
      %v1535 = vmax.f32 %v1471, 0.0
      %v1536 = vmax.f32 %v1472, 0.0
      %v1537 = vmax.f32 %v1473, 0.0
      %v1538 = vmax.f32 %v1474, 0.0
      %v1539 = vmax.f32 %v1475, 0.0
      %v1540 = vmax.f32 %v1476, 0.0
      %v1541 = vmax.f32 %v1477, 0.0
      %v1542 = vmax.f32 %v1478, 0.0
      %v1543 = vmax.f32 %v1479, 0.0
      %v1544 = vmax.f32 %v1480, 0.0
      %v1545 = vmax.f32 %v1481, 0.0
      %v1546 = vmax.f32 %v1482, 0.0
      %v1547 = vmax.f32 %v1483, 0.0
      %v1548 = vmax.f32 %v1484, 0.0
      %v1549 = vmax.f32 %v1485, 0.0
      %v1550 = vmax.f32 %v1486, 0.0
      %v1551 = vmax.f32 %v1487, 0.0
      %v1552 = vmax.f32 %v1488, 0.0
      %v1553 = vmax.f32 %v1489, 0.0
      %v1554 = vmax.f32 %v1490, 0.0
      %v1555 = vmax.f32 %v1491, 0.0
      %v1556 = vmax.f32 %v1492, 0.0
      %v1557 = vmax.f32 %v1493, 0.0
      %v1558 = vsub.f32 %v677, %v902
      %v1559 = vsub.f32 %v680, %v905
      %v1560 = vsub.f32 %v683, %v908
      %v1561 = vsub.f32 %v686, %v911
      %v1562 = vsub.f32 %v689, %v914
      %v1563 = vsub.f32 %v692, %v917
      %v1564 = vsub.f32 %v695, %v920
      %v1565 = vsub.f32 %v698, %v923
      %v1566 = vsub.f32 %v701, %v926
      %v1567 = vsub.f32 %v704, %v929
      %v1568 = vsub.f32 %v707, %v932
      %v1569 = vsub.f32 %v710, %v935
      %v1570 = vsub.f32 %v713, %v938
      %v1571 = vsub.f32 %v716, %v941
      %v1572 = vsub.f32 %v719, %v944
      %v1573 = vsub.f32 %v722, %v947
      %v1574 = vsub.f32 %v725, %v950
      %v1575 = vsub.f32 %v728, %v953
      %v1576 = vsub.f32 %v731, %v956
      %v1577 = vsub.f32 %v734, %v959
      %v1578 = vsub.f32 %v737, %v962
      %v1579 = vsub.f32 %v740, %v965
      %v1580 = vsub.f32 %v743, %v968
      %v1581 = vsub.f32 %v746, %v971
      %v1582 = vsub.f32 %v749, %v974
      %v1583 = vsub.f32 %v752, %v977
      %v1584 = vsub.f32 %v755, %v980
      %v1585 = vsub.f32 %v758, %v983
      %v1586 = vsub.f32 %v761, %v986
      %v1587 = vsub.f32 %v764, %v989
      %v1588 = vsub.f32 %v767, %v992
      %v1589 = vsub.f32 %v770, %v995
      %v1590 = vsub.f32 %v773, %v998
      %v1591 = vsub.f32 %v776, %v1001
      %v1592 = vsub.f32 %v779, %v1004
      %v1593 = vsub.f32 %v782, %v1007
      %v1594 = vsub.f32 %v785, %v1010
      %v1595 = vsub.f32 %v788, %v1013
      %v1596 = vsub.f32 %v791, %v1016
      %v1597 = vsub.f32 %v794, %v1019
      %v1598 = vsub.f32 %v797, %v1022
      %v1599 = vsub.f32 %v800, %v1025
      %v1600 = vsub.f32 %v803, %v1028
      %v1601 = vsub.f32 %v806, %v1031
      %v1602 = vsub.f32 %v809, %v1034
      %v1603 = vsub.f32 %v812, %v1037
      %v1604 = vsub.f32 %v815, %v1040
      %v1605 = vsub.f32 %v818, %v1043
      %v1606 = vsub.f32 %v821, %v1046
      %v1607 = vsub.f32 %v824, %v1049
      %v1608 = vsub.f32 %v827, %v1052
      %v1609 = vsub.f32 %v830, %v1055
      %v1610 = vsub.f32 %v833, %v1058
      %v1611 = vsub.f32 %v836, %v1061
      %v1612 = vsub.f32 %v839, %v1064
      %v1613 = vsub.f32 %v842, %v1067
      %v1614 = vsub.f32 %v845, %v1070
      %v1615 = vsub.f32 %v848, %v1073
      %v1616 = vsub.f32 %v851, %v1076
      %v1617 = vsub.f32 %v854, %v1079
      %v1618 = vsub.f32 %v857, %v1082
      %v1619 = vsub.f32 %v860, %v1085
      %v1620 = vsub.f32 %v863, %v1088
      %v1621 = vsub.f32 %v866, %v1091
      %v1622 = vadd.f32 %v1494, 1e-05
      %v1623 = vadd.f32 %v1495, 1e-05
      %v1624 = vadd.f32 %v1496, 1e-05
      %v1625 = vadd.f32 %v1497, 1e-05
      %v1626 = vadd.f32 %v1498, 1e-05
      %v1627 = vadd.f32 %v1499, 1e-05
      %v1628 = vadd.f32 %v1500, 1e-05
      %v1629 = vadd.f32 %v1501, 1e-05
      %v1630 = vadd.f32 %v1502, 1e-05
      %v1631 = vadd.f32 %v1503, 1e-05
      %v1632 = vadd.f32 %v1504, 1e-05
      %v1633 = vadd.f32 %v1505, 1e-05
      %v1634 = vadd.f32 %v1506, 1e-05
      %v1635 = vadd.f32 %v1507, 1e-05
      %v1636 = vadd.f32 %v1508, 1e-05
      %v1637 = vadd.f32 %v1509, 1e-05
      %v1638 = vadd.f32 %v1510, 1e-05
      %v1639 = vadd.f32 %v1511, 1e-05
      %v1640 = vadd.f32 %v1512, 1e-05
      %v1641 = vadd.f32 %v1513, 1e-05
      %v1642 = vadd.f32 %v1514, 1e-05
      %v1643 = vadd.f32 %v1515, 1e-05
      %v1644 = vadd.f32 %v1516, 1e-05
      %v1645 = vadd.f32 %v1517, 1e-05
      %v1646 = vadd.f32 %v1518, 1e-05
      %v1647 = vadd.f32 %v1519, 1e-05
      %v1648 = vadd.f32 %v1520, 1e-05
      %v1649 = vadd.f32 %v1521, 1e-05
      %v1650 = vadd.f32 %v1522, 1e-05
      %v1651 = vadd.f32 %v1523, 1e-05
      %v1652 = vadd.f32 %v1524, 1e-05
      %v1653 = vadd.f32 %v1525, 1e-05
      %v1654 = vadd.f32 %v1526, 1e-05
      %v1655 = vadd.f32 %v1527, 1e-05
      %v1656 = vadd.f32 %v1528, 1e-05
      %v1657 = vadd.f32 %v1529, 1e-05
      %v1658 = vadd.f32 %v1530, 1e-05
      %v1659 = vadd.f32 %v1531, 1e-05
      %v1660 = vadd.f32 %v1532, 1e-05
      %v1661 = vadd.f32 %v1533, 1e-05
      %v1662 = vadd.f32 %v1534, 1e-05
      %v1663 = vadd.f32 %v1535, 1e-05
      %v1664 = vadd.f32 %v1536, 1e-05
      %v1665 = vadd.f32 %v1537, 1e-05
      %v1666 = vadd.f32 %v1538, 1e-05
      %v1667 = vadd.f32 %v1539, 1e-05
      %v1668 = vadd.f32 %v1540, 1e-05
      %v1669 = vadd.f32 %v1541, 1e-05
      %v1670 = vadd.f32 %v1542, 1e-05
      %v1671 = vadd.f32 %v1543, 1e-05
      %v1672 = vadd.f32 %v1544, 1e-05
      %v1673 = vadd.f32 %v1545, 1e-05
      %v1674 = vadd.f32 %v1546, 1e-05
      %v1675 = vadd.f32 %v1547, 1e-05
      %v1676 = vadd.f32 %v1548, 1e-05
      %v1677 = vadd.f32 %v1549, 1e-05
      %v1678 = vadd.f32 %v1550, 1e-05
      %v1679 = vadd.f32 %v1551, 1e-05
      %v1680 = vadd.f32 %v1552, 1e-05
      %v1681 = vadd.f32 %v1553, 1e-05
      %v1682 = vadd.f32 %v1554, 1e-05
      %v1683 = vadd.f32 %v1555, 1e-05
      %v1684 = vadd.f32 %v1556, 1e-05
      %v1685 = vadd.f32 %v1557, 1e-05
      %v1686 = vrsqrt.pop %v1622
      %v1687 = vmul.f32 %v1686, %v1622
      %v1688 = vmul.f32 %v1687, %v1686
      %v1689 = vmul.f32 0.5, %v1688
      %v1690 = vsub.f32 1.5, %v1689
      %v1691 = vmul.f32 %v1686, %v1690
      %vm1692 = vweird.f32 %v1622
      %vm1693 = vweird.f32 %v1686
      %vm1694 = vmor %vm1692, %vm1693
      %v1695 = vsel %vm1694, %v1686, %v1691
      %v1696 = vrsqrt.pop %v1623
      %v1697 = vmul.f32 %v1696, %v1623
      %v1698 = vmul.f32 %v1697, %v1696
      %v1699 = vmul.f32 0.5, %v1698
      %v1700 = vsub.f32 1.5, %v1699
      %v1701 = vmul.f32 %v1696, %v1700
      %vm1702 = vweird.f32 %v1623
      %vm1703 = vweird.f32 %v1696
      %vm1704 = vmor %vm1702, %vm1703
      %v1705 = vsel %vm1704, %v1696, %v1701
      %v1706 = vrsqrt.pop %v1624
      %v1707 = vmul.f32 %v1706, %v1624
      %v1708 = vmul.f32 %v1707, %v1706
      %v1709 = vmul.f32 0.5, %v1708
      %v1710 = vsub.f32 1.5, %v1709
      %v1711 = vmul.f32 %v1706, %v1710
      %vm1712 = vweird.f32 %v1624
      %vm1713 = vweird.f32 %v1706
      %vm1714 = vmor %vm1712, %vm1713
      %v1715 = vsel %vm1714, %v1706, %v1711
      %v1716 = vrsqrt.pop %v1625
      %v1717 = vmul.f32 %v1716, %v1625
      %v1718 = vmul.f32 %v1717, %v1716
      %v1719 = vmul.f32 0.5, %v1718
      %v1720 = vsub.f32 1.5, %v1719
      %v1721 = vmul.f32 %v1716, %v1720
      %vm1722 = vweird.f32 %v1625
      %vm1723 = vweird.f32 %v1716
      %vm1724 = vmor %vm1722, %vm1723
      %v1725 = vsel %vm1724, %v1716, %v1721
      %v1726 = vrsqrt.pop %v1626
      %v1727 = vmul.f32 %v1726, %v1626
      %v1728 = vmul.f32 %v1727, %v1726
      %v1729 = vmul.f32 0.5, %v1728
      %v1730 = vsub.f32 1.5, %v1729
      %v1731 = vmul.f32 %v1726, %v1730
      %vm1732 = vweird.f32 %v1626
      %vm1733 = vweird.f32 %v1726
      %vm1734 = vmor %vm1732, %vm1733
      %v1735 = vsel %vm1734, %v1726, %v1731
      %v1736 = vrsqrt.pop %v1627
      %v1737 = vmul.f32 %v1736, %v1627
      %v1738 = vmul.f32 %v1737, %v1736
      %v1739 = vmul.f32 0.5, %v1738
      %v1740 = vsub.f32 1.5, %v1739
      %v1741 = vmul.f32 %v1736, %v1740
      %vm1742 = vweird.f32 %v1627
      %vm1743 = vweird.f32 %v1736
      %vm1744 = vmor %vm1742, %vm1743
      %v1745 = vsel %vm1744, %v1736, %v1741
      %v1746 = vrsqrt.pop %v1628
      %v1747 = vmul.f32 %v1746, %v1628
      %v1748 = vmul.f32 %v1747, %v1746
      %v1749 = vmul.f32 0.5, %v1748
      %v1750 = vsub.f32 1.5, %v1749
      %v1751 = vmul.f32 %v1746, %v1750
      %vm1752 = vweird.f32 %v1628
      %vm1753 = vweird.f32 %v1746
      %vm1754 = vmor %vm1752, %vm1753
      %v1755 = vsel %vm1754, %v1746, %v1751
      %v1756 = vrsqrt.pop %v1629
      %v1757 = vmul.f32 %v1756, %v1629
      %v1758 = vmul.f32 %v1757, %v1756
      %v1759 = vmul.f32 0.5, %v1758
      %v1760 = vsub.f32 1.5, %v1759
      %v1761 = vmul.f32 %v1756, %v1760
      %vm1762 = vweird.f32 %v1629
      %vm1763 = vweird.f32 %v1756
      %vm1764 = vmor %vm1762, %vm1763
      %v1765 = vsel %vm1764, %v1756, %v1761
      %v1766 = vrsqrt.pop %v1630
      %v1767 = vmul.f32 %v1766, %v1630
      %v1768 = vmul.f32 %v1767, %v1766
      %v1769 = vmul.f32 0.5, %v1768
      %v1770 = vsub.f32 1.5, %v1769
      %v1771 = vmul.f32 %v1766, %v1770
      %vm1772 = vweird.f32 %v1630
      %vm1773 = vweird.f32 %v1766
      %vm1774 = vmor %vm1772, %vm1773
      %v1775 = vsel %vm1774, %v1766, %v1771
      %v1776 = vrsqrt.pop %v1631
      %v1777 = vmul.f32 %v1776, %v1631
      %v1778 = vmul.f32 %v1777, %v1776
      %v1779 = vmul.f32 0.5, %v1778
      %v1780 = vsub.f32 1.5, %v1779
      %v1781 = vmul.f32 %v1776, %v1780
      %vm1782 = vweird.f32 %v1631
      %vm1783 = vweird.f32 %v1776
      %vm1784 = vmor %vm1782, %vm1783
      %v1785 = vsel %vm1784, %v1776, %v1781
      %v1786 = vrsqrt.pop %v1632
      %v1787 = vmul.f32 %v1786, %v1632
      %v1788 = vmul.f32 %v1787, %v1786
      %v1789 = vmul.f32 0.5, %v1788
      %v1790 = vsub.f32 1.5, %v1789
      %v1791 = vmul.f32 %v1786, %v1790
      %vm1792 = vweird.f32 %v1632
      %vm1793 = vweird.f32 %v1786
      %vm1794 = vmor %vm1792, %vm1793
      %v1795 = vsel %vm1794, %v1786, %v1791
      %v1796 = vrsqrt.pop %v1633
      %v1797 = vmul.f32 %v1796, %v1633
      %v1798 = vmul.f32 %v1797, %v1796
      %v1799 = vmul.f32 0.5, %v1798
      %v1800 = vsub.f32 1.5, %v1799
      %v1801 = vmul.f32 %v1796, %v1800
      %vm1802 = vweird.f32 %v1633
      %vm1803 = vweird.f32 %v1796
      %vm1804 = vmor %vm1802, %vm1803
      %v1805 = vsel %vm1804, %v1796, %v1801
      %v1806 = vrsqrt.pop %v1634
      %v1807 = vmul.f32 %v1806, %v1634
      %v1808 = vmul.f32 %v1807, %v1806
      %v1809 = vmul.f32 0.5, %v1808
      %v1810 = vsub.f32 1.5, %v1809
      %v1811 = vmul.f32 %v1806, %v1810
      %vm1812 = vweird.f32 %v1634
      %vm1813 = vweird.f32 %v1806
      %vm1814 = vmor %vm1812, %vm1813
      %v1815 = vsel %vm1814, %v1806, %v1811
      %v1816 = vrsqrt.pop %v1635
      %v1817 = vmul.f32 %v1816, %v1635
      %v1818 = vmul.f32 %v1817, %v1816
      %v1819 = vmul.f32 0.5, %v1818
      %v1820 = vsub.f32 1.5, %v1819
      %v1821 = vmul.f32 %v1816, %v1820
      %vm1822 = vweird.f32 %v1635
      %vm1823 = vweird.f32 %v1816
      %vm1824 = vmor %vm1822, %vm1823
      %v1825 = vsel %vm1824, %v1816, %v1821
      %v1826 = vrsqrt.pop %v1636
      %v1827 = vmul.f32 %v1826, %v1636
      %v1828 = vmul.f32 %v1827, %v1826
      %v1829 = vmul.f32 0.5, %v1828
      %v1830 = vsub.f32 1.5, %v1829
      %v1831 = vmul.f32 %v1826, %v1830
      %vm1832 = vweird.f32 %v1636
      %vm1833 = vweird.f32 %v1826
      %vm1834 = vmor %vm1832, %vm1833
      %v1835 = vsel %vm1834, %v1826, %v1831
      %v1836 = vrsqrt.pop %v1637
      %v1837 = vmul.f32 %v1836, %v1637
      %v1838 = vmul.f32 %v1837, %v1836
      %v1839 = vmul.f32 0.5, %v1838
      %v1840 = vsub.f32 1.5, %v1839
      %v1841 = vmul.f32 %v1836, %v1840
      %vm1842 = vweird.f32 %v1637
      %vm1843 = vweird.f32 %v1836
      %vm1844 = vmor %vm1842, %vm1843
      %v1845 = vsel %vm1844, %v1836, %v1841
      %v1846 = vrsqrt.pop %v1638
      %v1847 = vmul.f32 %v1846, %v1638
      %v1848 = vmul.f32 %v1847, %v1846
      %v1849 = vmul.f32 0.5, %v1848
      %v1850 = vsub.f32 1.5, %v1849
      %v1851 = vmul.f32 %v1846, %v1850
      %vm1852 = vweird.f32 %v1638
      %vm1853 = vweird.f32 %v1846
      %vm1854 = vmor %vm1852, %vm1853
      %v1855 = vsel %vm1854, %v1846, %v1851
      %v1856 = vrsqrt.pop %v1639
      %v1857 = vmul.f32 %v1856, %v1639
      %v1858 = vmul.f32 %v1857, %v1856
      %v1859 = vmul.f32 0.5, %v1858
      %v1860 = vsub.f32 1.5, %v1859
      %v1861 = vmul.f32 %v1856, %v1860
      %vm1862 = vweird.f32 %v1639
      %vm1863 = vweird.f32 %v1856
      %vm1864 = vmor %vm1862, %vm1863
      %v1865 = vsel %vm1864, %v1856, %v1861
      %v1866 = vrsqrt.pop %v1640
      %v1867 = vmul.f32 %v1866, %v1640
      %v1868 = vmul.f32 %v1867, %v1866
      %v1869 = vmul.f32 0.5, %v1868
      %v1870 = vsub.f32 1.5, %v1869
      %v1871 = vmul.f32 %v1866, %v1870
      %vm1872 = vweird.f32 %v1640
      %vm1873 = vweird.f32 %v1866
      %vm1874 = vmor %vm1872, %vm1873
      %v1875 = vsel %vm1874, %v1866, %v1871
      %v1876 = vrsqrt.pop %v1641
      %v1877 = vmul.f32 %v1876, %v1641
      %v1878 = vmul.f32 %v1877, %v1876
      %v1879 = vmul.f32 0.5, %v1878
      %v1880 = vsub.f32 1.5, %v1879
      %v1881 = vmul.f32 %v1876, %v1880
      %vm1882 = vweird.f32 %v1641
      %vm1883 = vweird.f32 %v1876
      %vm1884 = vmor %vm1882, %vm1883
      %v1885 = vsel %vm1884, %v1876, %v1881
      %v1886 = vrsqrt.pop %v1642
      %v1887 = vmul.f32 %v1886, %v1642
      %v1888 = vmul.f32 %v1887, %v1886
      %v1889 = vmul.f32 0.5, %v1888
      %v1890 = vsub.f32 1.5, %v1889
      %v1891 = vmul.f32 %v1886, %v1890
      %vm1892 = vweird.f32 %v1642
      %vm1893 = vweird.f32 %v1886
      %vm1894 = vmor %vm1892, %vm1893
      %v1895 = vsel %vm1894, %v1886, %v1891
      %v1896 = vrsqrt.pop %v1643
      %v1897 = vmul.f32 %v1896, %v1643
      %v1898 = vmul.f32 %v1897, %v1896
      %v1899 = vmul.f32 0.5, %v1898
      %v1900 = vsub.f32 1.5, %v1899
      %v1901 = vmul.f32 %v1896, %v1900
      %vm1902 = vweird.f32 %v1643
      %vm1903 = vweird.f32 %v1896
      %vm1904 = vmor %vm1902, %vm1903
      %v1905 = vsel %vm1904, %v1896, %v1901
      %v1906 = vrsqrt.pop %v1644
      %v1907 = vmul.f32 %v1906, %v1644
      %v1908 = vmul.f32 %v1907, %v1906
      %v1909 = vmul.f32 0.5, %v1908
      %v1910 = vsub.f32 1.5, %v1909
      %v1911 = vmul.f32 %v1906, %v1910
      %vm1912 = vweird.f32 %v1644
      %vm1913 = vweird.f32 %v1906
      %vm1914 = vmor %vm1912, %vm1913
      %v1915 = vsel %vm1914, %v1906, %v1911
      %v1916 = vrsqrt.pop %v1645
      %v1917 = vmul.f32 %v1916, %v1645
      %v1918 = vmul.f32 %v1917, %v1916
      %v1919 = vmul.f32 0.5, %v1918
      %v1920 = vsub.f32 1.5, %v1919
      %v1921 = vmul.f32 %v1916, %v1920
      %vm1922 = vweird.f32 %v1645
      %vm1923 = vweird.f32 %v1916
      %vm1924 = vmor %vm1922, %vm1923
      %v1925 = vsel %vm1924, %v1916, %v1921
      %v1926 = vrsqrt.pop %v1646
      %v1927 = vmul.f32 %v1926, %v1646
      %v1928 = vmul.f32 %v1927, %v1926
      %v1929 = vmul.f32 0.5, %v1928
      %v1930 = vsub.f32 1.5, %v1929
      %v1931 = vmul.f32 %v1926, %v1930
      %vm1932 = vweird.f32 %v1646
      %vm1933 = vweird.f32 %v1926
      %vm1934 = vmor %vm1932, %vm1933
      %v1935 = vsel %vm1934, %v1926, %v1931
      %v1936 = vrsqrt.pop %v1647
      %v1937 = vmul.f32 %v1936, %v1647
      %v1938 = vmul.f32 %v1937, %v1936
      %v1939 = vmul.f32 0.5, %v1938
      %v1940 = vsub.f32 1.5, %v1939
      %v1941 = vmul.f32 %v1936, %v1940
      %vm1942 = vweird.f32 %v1647
      %vm1943 = vweird.f32 %v1936
      %vm1944 = vmor %vm1942, %vm1943
      %v1945 = vsel %vm1944, %v1936, %v1941
      %v1946 = vrsqrt.pop %v1648
      %v1947 = vmul.f32 %v1946, %v1648
      %v1948 = vmul.f32 %v1947, %v1946
      %v1949 = vmul.f32 0.5, %v1948
      %v1950 = vsub.f32 1.5, %v1949
      %v1951 = vmul.f32 %v1946, %v1950
      %vm1952 = vweird.f32 %v1648
      %vm1953 = vweird.f32 %v1946
      %vm1954 = vmor %vm1952, %vm1953
      %v1955 = vsel %vm1954, %v1946, %v1951
      %v1956 = vrsqrt.pop %v1649
      %v1957 = vmul.f32 %v1956, %v1649
      %v1958 = vmul.f32 %v1957, %v1956
      %v1959 = vmul.f32 0.5, %v1958
      %v1960 = vsub.f32 1.5, %v1959
      %v1961 = vmul.f32 %v1956, %v1960
      %vm1962 = vweird.f32 %v1649
      %vm1963 = vweird.f32 %v1956
      %vm1964 = vmor %vm1962, %vm1963
      %v1965 = vsel %vm1964, %v1956, %v1961
      %v1966 = vrsqrt.pop %v1650
      %v1967 = vmul.f32 %v1966, %v1650
      %v1968 = vmul.f32 %v1967, %v1966
      %v1969 = vmul.f32 0.5, %v1968
      %v1970 = vsub.f32 1.5, %v1969
      %v1971 = vmul.f32 %v1966, %v1970
      %vm1972 = vweird.f32 %v1650
      %vm1973 = vweird.f32 %v1966
      %vm1974 = vmor %vm1972, %vm1973
      %v1975 = vsel %vm1974, %v1966, %v1971
      %v1976 = vrsqrt.pop %v1651
      %v1977 = vmul.f32 %v1976, %v1651
      %v1978 = vmul.f32 %v1977, %v1976
      %v1979 = vmul.f32 0.5, %v1978
      %v1980 = vsub.f32 1.5, %v1979
      %v1981 = vmul.f32 %v1976, %v1980
      %vm1982 = vweird.f32 %v1651
      %vm1983 = vweird.f32 %v1976
      %vm1984 = vmor %vm1982, %vm1983
      %v1985 = vsel %vm1984, %v1976, %v1981
      %v1986 = vrsqrt.pop %v1652
      %v1987 = vmul.f32 %v1986, %v1652
      %v1988 = vmul.f32 %v1987, %v1986
      %v1989 = vmul.f32 0.5, %v1988
      %v1990 = vsub.f32 1.5, %v1989
      %v1991 = vmul.f32 %v1986, %v1990
      %vm1992 = vweird.f32 %v1652
      %vm1993 = vweird.f32 %v1986
      %vm1994 = vmor %vm1992, %vm1993
      %v1995 = vsel %vm1994, %v1986, %v1991
      %v1996 = vrsqrt.pop %v1653
      %v1997 = vmul.f32 %v1996, %v1653
      %v1998 = vmul.f32 %v1997, %v1996
      %v1999 = vmul.f32 0.5, %v1998
      %v2000 = vsub.f32 1.5, %v1999
      %v2001 = vmul.f32 %v1996, %v2000
      %vm2002 = vweird.f32 %v1653
      %vm2003 = vweird.f32 %v1996
      %vm2004 = vmor %vm2002, %vm2003
      %v2005 = vsel %vm2004, %v1996, %v2001
      %v2006 = vrsqrt.pop %v1654
      %v2007 = vmul.f32 %v2006, %v1654
      %v2008 = vmul.f32 %v2007, %v2006
      %v2009 = vmul.f32 0.5, %v2008
      %v2010 = vsub.f32 1.5, %v2009
      %v2011 = vmul.f32 %v2006, %v2010
      %vm2012 = vweird.f32 %v1654
      %vm2013 = vweird.f32 %v2006
      %vm2014 = vmor %vm2012, %vm2013
      %v2015 = vsel %vm2014, %v2006, %v2011
      %v2016 = vrsqrt.pop %v1655
      %v2017 = vmul.f32 %v2016, %v1655
      %v2018 = vmul.f32 %v2017, %v2016
      %v2019 = vmul.f32 0.5, %v2018
      %v2020 = vsub.f32 1.5, %v2019
      %v2021 = vmul.f32 %v2016, %v2020
      %vm2022 = vweird.f32 %v1655
      %vm2023 = vweird.f32 %v2016
      %vm2024 = vmor %vm2022, %vm2023
      %v2025 = vsel %vm2024, %v2016, %v2021
      %v2026 = vrsqrt.pop %v1656
      %v2027 = vmul.f32 %v2026, %v1656
      %v2028 = vmul.f32 %v2027, %v2026
      %v2029 = vmul.f32 0.5, %v2028
      %v2030 = vsub.f32 1.5, %v2029
      %v2031 = vmul.f32 %v2026, %v2030
      %vm2032 = vweird.f32 %v1656
      %vm2033 = vweird.f32 %v2026
      %vm2034 = vmor %vm2032, %vm2033
      %v2035 = vsel %vm2034, %v2026, %v2031
      %v2036 = vrsqrt.pop %v1657
      %v2037 = vmul.f32 %v2036, %v1657
      %v2038 = vmul.f32 %v2037, %v2036
      %v2039 = vmul.f32 0.5, %v2038
      %v2040 = vsub.f32 1.5, %v2039
      %v2041 = vmul.f32 %v2036, %v2040
      %vm2042 = vweird.f32 %v1657
      %vm2043 = vweird.f32 %v2036
      %vm2044 = vmor %vm2042, %vm2043
      %v2045 = vsel %vm2044, %v2036, %v2041
      %v2046 = vrsqrt.pop %v1658
      %v2047 = vmul.f32 %v2046, %v1658
      %v2048 = vmul.f32 %v2047, %v2046
      %v2049 = vmul.f32 0.5, %v2048
      %v2050 = vsub.f32 1.5, %v2049
      %v2051 = vmul.f32 %v2046, %v2050
      %vm2052 = vweird.f32 %v1658
      %vm2053 = vweird.f32 %v2046
      %vm2054 = vmor %vm2052, %vm2053
      %v2055 = vsel %vm2054, %v2046, %v2051
      %v2056 = vrsqrt.pop %v1659
      %v2057 = vmul.f32 %v2056, %v1659
      %v2058 = vmul.f32 %v2057, %v2056
      %v2059 = vmul.f32 0.5, %v2058
      %v2060 = vsub.f32 1.5, %v2059
      %v2061 = vmul.f32 %v2056, %v2060
      %vm2062 = vweird.f32 %v1659
      %vm2063 = vweird.f32 %v2056
      %vm2064 = vmor %vm2062, %vm2063
      %v2065 = vsel %vm2064, %v2056, %v2061
      %v2066 = vrsqrt.pop %v1660
      %v2067 = vmul.f32 %v2066, %v1660
      %v2068 = vmul.f32 %v2067, %v2066
      %v2069 = vmul.f32 0.5, %v2068
      %v2070 = vsub.f32 1.5, %v2069
      %v2071 = vmul.f32 %v2066, %v2070
      %vm2072 = vweird.f32 %v1660
      %vm2073 = vweird.f32 %v2066
      %vm2074 = vmor %vm2072, %vm2073
      %v2075 = vsel %vm2074, %v2066, %v2071
      %v2076 = vrsqrt.pop %v1661
      %v2077 = vmul.f32 %v2076, %v1661
      %v2078 = vmul.f32 %v2077, %v2076
      %v2079 = vmul.f32 0.5, %v2078
      %v2080 = vsub.f32 1.5, %v2079
      %v2081 = vmul.f32 %v2076, %v2080
      %vm2082 = vweird.f32 %v1661
      %vm2083 = vweird.f32 %v2076
      %vm2084 = vmor %vm2082, %vm2083
      %v2085 = vsel %vm2084, %v2076, %v2081
      %v2086 = vrsqrt.pop %v1662
      %v2087 = vmul.f32 %v2086, %v1662
      %v2088 = vmul.f32 %v2087, %v2086
      %v2089 = vmul.f32 0.5, %v2088
      %v2090 = vsub.f32 1.5, %v2089
      %v2091 = vmul.f32 %v2086, %v2090
      %vm2092 = vweird.f32 %v1662
      %vm2093 = vweird.f32 %v2086
      %vm2094 = vmor %vm2092, %vm2093
      %v2095 = vsel %vm2094, %v2086, %v2091
      %v2096 = vrsqrt.pop %v1663
      %v2097 = vmul.f32 %v2096, %v1663
      %v2098 = vmul.f32 %v2097, %v2096
      %v2099 = vmul.f32 0.5, %v2098
      %v2100 = vsub.f32 1.5, %v2099
      %v2101 = vmul.f32 %v2096, %v2100
      %vm2102 = vweird.f32 %v1663
      %vm2103 = vweird.f32 %v2096
      %vm2104 = vmor %vm2102, %vm2103
      %v2105 = vsel %vm2104, %v2096, %v2101
      %v2106 = vrsqrt.pop %v1664
      %v2107 = vmul.f32 %v2106, %v1664
      %v2108 = vmul.f32 %v2107, %v2106
      %v2109 = vmul.f32 0.5, %v2108
      %v2110 = vsub.f32 1.5, %v2109
      %v2111 = vmul.f32 %v2106, %v2110
      %vm2112 = vweird.f32 %v1664
      %vm2113 = vweird.f32 %v2106
      %vm2114 = vmor %vm2112, %vm2113
      %v2115 = vsel %vm2114, %v2106, %v2111
      %v2116 = vrsqrt.pop %v1665
      %v2117 = vmul.f32 %v2116, %v1665
      %v2118 = vmul.f32 %v2117, %v2116
      %v2119 = vmul.f32 0.5, %v2118
      %v2120 = vsub.f32 1.5, %v2119
      %v2121 = vmul.f32 %v2116, %v2120
      %vm2122 = vweird.f32 %v1665
      %vm2123 = vweird.f32 %v2116
      %vm2124 = vmor %vm2122, %vm2123
      %v2125 = vsel %vm2124, %v2116, %v2121
      %v2126 = vrsqrt.pop %v1666
      %v2127 = vmul.f32 %v2126, %v1666
      %v2128 = vmul.f32 %v2127, %v2126
      %v2129 = vmul.f32 0.5, %v2128
      %v2130 = vsub.f32 1.5, %v2129
      %v2131 = vmul.f32 %v2126, %v2130
      %vm2132 = vweird.f32 %v1666
      %vm2133 = vweird.f32 %v2126
      %vm2134 = vmor %vm2132, %vm2133
      %v2135 = vsel %vm2134, %v2126, %v2131
      %v2136 = vrsqrt.pop %v1667
      %v2137 = vmul.f32 %v2136, %v1667
      %v2138 = vmul.f32 %v2137, %v2136
      %v2139 = vmul.f32 0.5, %v2138
      %v2140 = vsub.f32 1.5, %v2139
      %v2141 = vmul.f32 %v2136, %v2140
      %vm2142 = vweird.f32 %v1667
      %vm2143 = vweird.f32 %v2136
      %vm2144 = vmor %vm2142, %vm2143
      %v2145 = vsel %vm2144, %v2136, %v2141
      %v2146 = vrsqrt.pop %v1668
      %v2147 = vmul.f32 %v2146, %v1668
      %v2148 = vmul.f32 %v2147, %v2146
      %v2149 = vmul.f32 0.5, %v2148
      %v2150 = vsub.f32 1.5, %v2149
      %v2151 = vmul.f32 %v2146, %v2150
      %vm2152 = vweird.f32 %v1668
      %vm2153 = vweird.f32 %v2146
      %vm2154 = vmor %vm2152, %vm2153
      %v2155 = vsel %vm2154, %v2146, %v2151
      %v2156 = vrsqrt.pop %v1669
      %v2157 = vmul.f32 %v2156, %v1669
      %v2158 = vmul.f32 %v2157, %v2156
      %v2159 = vmul.f32 0.5, %v2158
      %v2160 = vsub.f32 1.5, %v2159
      %v2161 = vmul.f32 %v2156, %v2160
      %vm2162 = vweird.f32 %v1669
      %vm2163 = vweird.f32 %v2156
      %vm2164 = vmor %vm2162, %vm2163
      %v2165 = vsel %vm2164, %v2156, %v2161
      %v2166 = vrsqrt.pop %v1670
      %v2167 = vmul.f32 %v2166, %v1670
      %v2168 = vmul.f32 %v2167, %v2166
      %v2169 = vmul.f32 0.5, %v2168
      %v2170 = vsub.f32 1.5, %v2169
      %v2171 = vmul.f32 %v2166, %v2170
      %vm2172 = vweird.f32 %v1670
      %vm2173 = vweird.f32 %v2166
      %vm2174 = vmor %vm2172, %vm2173
      %v2175 = vsel %vm2174, %v2166, %v2171
      %v2176 = vrsqrt.pop %v1671
      %v2177 = vmul.f32 %v2176, %v1671
      %v2178 = vmul.f32 %v2177, %v2176
      %v2179 = vmul.f32 0.5, %v2178
      %v2180 = vsub.f32 1.5, %v2179
      %v2181 = vmul.f32 %v2176, %v2180
      %vm2182 = vweird.f32 %v1671
      %vm2183 = vweird.f32 %v2176
      %vm2184 = vmor %vm2182, %vm2183
      %v2185 = vsel %vm2184, %v2176, %v2181
      %v2186 = vrsqrt.pop %v1672
      %v2187 = vmul.f32 %v2186, %v1672
      %v2188 = vmul.f32 %v2187, %v2186
      %v2189 = vmul.f32 0.5, %v2188
      %v2190 = vsub.f32 1.5, %v2189
      %v2191 = vmul.f32 %v2186, %v2190
      %vm2192 = vweird.f32 %v1672
      %vm2193 = vweird.f32 %v2186
      %vm2194 = vmor %vm2192, %vm2193
      %v2195 = vsel %vm2194, %v2186, %v2191
      %v2196 = vrsqrt.pop %v1673
      %v2197 = vmul.f32 %v2196, %v1673
      %v2198 = vmul.f32 %v2197, %v2196
      %v2199 = vmul.f32 0.5, %v2198
      %v2200 = vsub.f32 1.5, %v2199
      %v2201 = vmul.f32 %v2196, %v2200
      %vm2202 = vweird.f32 %v1673
      %vm2203 = vweird.f32 %v2196
      %vm2204 = vmor %vm2202, %vm2203
      %v2205 = vsel %vm2204, %v2196, %v2201
      %v2206 = vrsqrt.pop %v1674
      %v2207 = vmul.f32 %v2206, %v1674
      %v2208 = vmul.f32 %v2207, %v2206
      %v2209 = vmul.f32 0.5, %v2208
      %v2210 = vsub.f32 1.5, %v2209
      %v2211 = vmul.f32 %v2206, %v2210
      %vm2212 = vweird.f32 %v1674
      %vm2213 = vweird.f32 %v2206
      %vm2214 = vmor %vm2212, %vm2213
      %v2215 = vsel %vm2214, %v2206, %v2211
      %v2216 = vrsqrt.pop %v1675
      %v2217 = vmul.f32 %v2216, %v1675
      %v2218 = vmul.f32 %v2217, %v2216
      %v2219 = vmul.f32 0.5, %v2218
      %v2220 = vsub.f32 1.5, %v2219
      %v2221 = vmul.f32 %v2216, %v2220
      %vm2222 = vweird.f32 %v1675
      %vm2223 = vweird.f32 %v2216
      %vm2224 = vmor %vm2222, %vm2223
      %v2225 = vsel %vm2224, %v2216, %v2221
      %v2226 = vrsqrt.pop %v1676
      %v2227 = vmul.f32 %v2226, %v1676
      %v2228 = vmul.f32 %v2227, %v2226
      %v2229 = vmul.f32 0.5, %v2228
      %v2230 = vsub.f32 1.5, %v2229
      %v2231 = vmul.f32 %v2226, %v2230
      %vm2232 = vweird.f32 %v1676
      %vm2233 = vweird.f32 %v2226
      %vm2234 = vmor %vm2232, %vm2233
      %v2235 = vsel %vm2234, %v2226, %v2231
      %v2236 = vrsqrt.pop %v1677
      %v2237 = vmul.f32 %v2236, %v1677
      %v2238 = vmul.f32 %v2237, %v2236
      %v2239 = vmul.f32 0.5, %v2238
      %v2240 = vsub.f32 1.5, %v2239
      %v2241 = vmul.f32 %v2236, %v2240
      %vm2242 = vweird.f32 %v1677
      %vm2243 = vweird.f32 %v2236
      %vm2244 = vmor %vm2242, %vm2243
      %v2245 = vsel %vm2244, %v2236, %v2241
      %v2246 = vrsqrt.pop %v1678
      %v2247 = vmul.f32 %v2246, %v1678
      %v2248 = vmul.f32 %v2247, %v2246
      %v2249 = vmul.f32 0.5, %v2248
      %v2250 = vsub.f32 1.5, %v2249
      %v2251 = vmul.f32 %v2246, %v2250
      %vm2252 = vweird.f32 %v1678
      %vm2253 = vweird.f32 %v2246
      %vm2254 = vmor %vm2252, %vm2253
      %v2255 = vsel %vm2254, %v2246, %v2251
      %v2256 = vrsqrt.pop %v1679
      %v2257 = vmul.f32 %v2256, %v1679
      %v2258 = vmul.f32 %v2257, %v2256
      %v2259 = vmul.f32 0.5, %v2258
      %v2260 = vsub.f32 1.5, %v2259
      %v2261 = vmul.f32 %v2256, %v2260
      %vm2262 = vweird.f32 %v1679
      %vm2263 = vweird.f32 %v2256
      %vm2264 = vmor %vm2262, %vm2263
      %v2265 = vsel %vm2264, %v2256, %v2261
      %v2266 = vrsqrt.pop %v1680
      %v2267 = vmul.f32 %v2266, %v1680
      %v2268 = vmul.f32 %v2267, %v2266
      %v2269 = vmul.f32 0.5, %v2268
      %v2270 = vsub.f32 1.5, %v2269
      %v2271 = vmul.f32 %v2266, %v2270
      %vm2272 = vweird.f32 %v1680
      %vm2273 = vweird.f32 %v2266
      %vm2274 = vmor %vm2272, %vm2273
      %v2275 = vsel %vm2274, %v2266, %v2271
      %v2276 = vrsqrt.pop %v1681
      %v2277 = vmul.f32 %v2276, %v1681
      %v2278 = vmul.f32 %v2277, %v2276
      %v2279 = vmul.f32 0.5, %v2278
      %v2280 = vsub.f32 1.5, %v2279
      %v2281 = vmul.f32 %v2276, %v2280
      %vm2282 = vweird.f32 %v1681
      %vm2283 = vweird.f32 %v2276
      %vm2284 = vmor %vm2282, %vm2283
      %v2285 = vsel %vm2284, %v2276, %v2281
      %v2286 = vrsqrt.pop %v1682
      %v2287 = vmul.f32 %v2286, %v1682
      %v2288 = vmul.f32 %v2287, %v2286
      %v2289 = vmul.f32 0.5, %v2288
      %v2290 = vsub.f32 1.5, %v2289
      %v2291 = vmul.f32 %v2286, %v2290
      %vm2292 = vweird.f32 %v1682
      %vm2293 = vweird.f32 %v2286
      %vm2294 = vmor %vm2292, %vm2293
      %v2295 = vsel %vm2294, %v2286, %v2291
      %v2296 = vrsqrt.pop %v1683
      %v2297 = vmul.f32 %v2296, %v1683
      %v2298 = vmul.f32 %v2297, %v2296
      %v2299 = vmul.f32 0.5, %v2298
      %v2300 = vsub.f32 1.5, %v2299
      %v2301 = vmul.f32 %v2296, %v2300
      %vm2302 = vweird.f32 %v1683
      %vm2303 = vweird.f32 %v2296
      %vm2304 = vmor %vm2302, %vm2303
      %v2305 = vsel %vm2304, %v2296, %v2301
      %v2306 = vrsqrt.pop %v1684
      %v2307 = vmul.f32 %v2306, %v1684
      %v2308 = vmul.f32 %v2307, %v2306
      %v2309 = vmul.f32 0.5, %v2308
      %v2310 = vsub.f32 1.5, %v2309
      %v2311 = vmul.f32 %v2306, %v2310
      %vm2312 = vweird.f32 %v1684
      %vm2313 = vweird.f32 %v2306
      %vm2314 = vmor %vm2312, %vm2313
      %v2315 = vsel %vm2314, %v2306, %v2311
      %v2316 = vrsqrt.pop %v1685
      %v2317 = vmul.f32 %v2316, %v1685
      %v2318 = vmul.f32 %v2317, %v2316
      %v2319 = vmul.f32 0.5, %v2318
      %v2320 = vsub.f32 1.5, %v2319
      %v2321 = vmul.f32 %v2316, %v2320
      %vm2322 = vweird.f32 %v1685
      %vm2323 = vweird.f32 %v2316
      %vm2324 = vmor %vm2322, %vm2323
      %v2325 = vsel %vm2324, %v2316, %v2321
      %v2326 = vmul.f32 %v1558, %v1695
      %v2327 = vmul.f32 %v1559, %v1705
      %v2328 = vmul.f32 %v1560, %v1715
      %v2329 = vmul.f32 %v1561, %v1725
      %v2330 = vmul.f32 %v1562, %v1735
      %v2331 = vmul.f32 %v1563, %v1745
      %v2332 = vmul.f32 %v1564, %v1755
      %v2333 = vmul.f32 %v1565, %v1765
      %v2334 = vmul.f32 %v1566, %v1775
      %v2335 = vmul.f32 %v1567, %v1785
      %v2336 = vmul.f32 %v1568, %v1795
      %v2337 = vmul.f32 %v1569, %v1805
      %v2338 = vmul.f32 %v1570, %v1815
      %v2339 = vmul.f32 %v1571, %v1825
      %v2340 = vmul.f32 %v1572, %v1835
      %v2341 = vmul.f32 %v1573, %v1845
      %v2342 = vmul.f32 %v1574, %v1855
      %v2343 = vmul.f32 %v1575, %v1865
      %v2344 = vmul.f32 %v1576, %v1875
      %v2345 = vmul.f32 %v1577, %v1885
      %v2346 = vmul.f32 %v1578, %v1895
      %v2347 = vmul.f32 %v1579, %v1905
      %v2348 = vmul.f32 %v1580, %v1915
      %v2349 = vmul.f32 %v1581, %v1925
      %v2350 = vmul.f32 %v1582, %v1935
      %v2351 = vmul.f32 %v1583, %v1945
      %v2352 = vmul.f32 %v1584, %v1955
      %v2353 = vmul.f32 %v1585, %v1965
      %v2354 = vmul.f32 %v1586, %v1975
      %v2355 = vmul.f32 %v1587, %v1985
      %v2356 = vmul.f32 %v1588, %v1995
      %v2357 = vmul.f32 %v1589, %v2005
      %v2358 = vmul.f32 %v1590, %v2015
      %v2359 = vmul.f32 %v1591, %v2025
      %v2360 = vmul.f32 %v1592, %v2035
      %v2361 = vmul.f32 %v1593, %v2045
      %v2362 = vmul.f32 %v1594, %v2055
      %v2363 = vmul.f32 %v1595, %v2065
      %v2364 = vmul.f32 %v1596, %v2075
      %v2365 = vmul.f32 %v1597, %v2085
      %v2366 = vmul.f32 %v1598, %v2095
      %v2367 = vmul.f32 %v1599, %v2105
      %v2368 = vmul.f32 %v1600, %v2115
      %v2369 = vmul.f32 %v1601, %v2125
      %v2370 = vmul.f32 %v1602, %v2135
      %v2371 = vmul.f32 %v1603, %v2145
      %v2372 = vmul.f32 %v1604, %v2155
      %v2373 = vmul.f32 %v1605, %v2165
      %v2374 = vmul.f32 %v1606, %v2175
      %v2375 = vmul.f32 %v1607, %v2185
      %v2376 = vmul.f32 %v1608, %v2195
      %v2377 = vmul.f32 %v1609, %v2205
      %v2378 = vmul.f32 %v1610, %v2215
      %v2379 = vmul.f32 %v1611, %v2225
      %v2380 = vmul.f32 %v1612, %v2235
      %v2381 = vmul.f32 %v1613, %v2245
      %v2382 = vmul.f32 %v1614, %v2255
      %v2383 = vmul.f32 %v1615, %v2265
      %v2384 = vmul.f32 %v1616, %v2275
      %v2385 = vmul.f32 %v1617, %v2285
      %v2386 = vmul.f32 %v1618, %v2295
      %v2387 = vmul.f32 %v1619, %v2305
      %v2388 = vmul.f32 %v1620, %v2315
      %v2389 = vmul.f32 %v1621, %v2325
      %v2390 = vmax.f32 %v2326, 0.0
      %v2391 = vmax.f32 %v2327, 0.0
      %v2392 = vmax.f32 %v2328, 0.0
      %v2393 = vmax.f32 %v2329, 0.0
      %v2394 = vmax.f32 %v2330, 0.0
      %v2395 = vmax.f32 %v2331, 0.0
      %v2396 = vmax.f32 %v2332, 0.0
      %v2397 = vmax.f32 %v2333, 0.0
      %v2398 = vmax.f32 %v2334, 0.0
      %v2399 = vmax.f32 %v2335, 0.0
      %v2400 = vmax.f32 %v2336, 0.0
      %v2401 = vmax.f32 %v2337, 0.0
      %v2402 = vmax.f32 %v2338, 0.0
      %v2403 = vmax.f32 %v2339, 0.0
      %v2404 = vmax.f32 %v2340, 0.0
      %v2405 = vmax.f32 %v2341, 0.0
      %v2406 = vmax.f32 %v2342, 0.0
      %v2407 = vmax.f32 %v2343, 0.0
      %v2408 = vmax.f32 %v2344, 0.0
      %v2409 = vmax.f32 %v2345, 0.0
      %v2410 = vmax.f32 %v2346, 0.0
      %v2411 = vmax.f32 %v2347, 0.0
      %v2412 = vmax.f32 %v2348, 0.0
      %v2413 = vmax.f32 %v2349, 0.0
      %v2414 = vmax.f32 %v2350, 0.0
      %v2415 = vmax.f32 %v2351, 0.0
      %v2416 = vmax.f32 %v2352, 0.0
      %v2417 = vmax.f32 %v2353, 0.0
      %v2418 = vmax.f32 %v2354, 0.0
      %v2419 = vmax.f32 %v2355, 0.0
      %v2420 = vmax.f32 %v2356, 0.0
      %v2421 = vmax.f32 %v2357, 0.0
      %v2422 = vmax.f32 %v2358, 0.0
      %v2423 = vmax.f32 %v2359, 0.0
      %v2424 = vmax.f32 %v2360, 0.0
      %v2425 = vmax.f32 %v2361, 0.0
      %v2426 = vmax.f32 %v2362, 0.0
      %v2427 = vmax.f32 %v2363, 0.0
      %v2428 = vmax.f32 %v2364, 0.0
      %v2429 = vmax.f32 %v2365, 0.0
      %v2430 = vmax.f32 %v2366, 0.0
      %v2431 = vmax.f32 %v2367, 0.0
      %v2432 = vmax.f32 %v2368, 0.0
      %v2433 = vmax.f32 %v2369, 0.0
      %v2434 = vmax.f32 %v2370, 0.0
      %v2435 = vmax.f32 %v2371, 0.0
      %v2436 = vmax.f32 %v2372, 0.0
      %v2437 = vmax.f32 %v2373, 0.0
      %v2438 = vmax.f32 %v2374, 0.0
      %v2439 = vmax.f32 %v2375, 0.0
      %v2440 = vmax.f32 %v2376, 0.0
      %v2441 = vmax.f32 %v2377, 0.0
      %v2442 = vmax.f32 %v2378, 0.0
      %v2443 = vmax.f32 %v2379, 0.0
      %v2444 = vmax.f32 %v2380, 0.0
      %v2445 = vmax.f32 %v2381, 0.0
      %v2446 = vmax.f32 %v2382, 0.0
      %v2447 = vmax.f32 %v2383, 0.0
      %v2448 = vmax.f32 %v2384, 0.0
      %v2449 = vmax.f32 %v2385, 0.0
      %v2450 = vmax.f32 %v2386, 0.0
      %v2451 = vmax.f32 %v2387, 0.0
      %v2452 = vmax.f32 %v2388, 0.0
      %v2453 = vmax.f32 %v2389, 0.0
      %v2454 = vld [vmem:[%s2] sm:$0xff]
      %v2455 = vld [vmem:[%s2 + $0x8] sm:$0xff]
      %v2456 = vld [vmem:[%s2 + $0x10] sm:$0xff]
      %v2457 = vld [vmem:[%s2 + $0x18] sm:$0xff]
      %v2458 = vld [vmem:[%s2 + $0x20] sm:$0xff]
      %v2459 = vld [vmem:[%s2 + $0x28] sm:$0xff]
      %v2460 = vld [vmem:[%s2 + $0x30] sm:$0xff]
      %v2461 = vld [vmem:[%s2 + $0x38] sm:$0xff]
      %v2462 = vld [vmem:[%s2 + $0x40] sm:$0xff]
      %v2463 = vld [vmem:[%s2 + $0x48] sm:$0xff]
      %v2464 = vld [vmem:[%s2 + $0x50] sm:$0xff]
      %v2465 = vld [vmem:[%s2 + $0x58] sm:$0xff]
      %v2466 = vld [vmem:[%s2 + $0x60] sm:$0xff]
      %v2467 = vld [vmem:[%s2 + $0x68] sm:$0xff]
      %v2468 = vld [vmem:[%s2 + $0x70] sm:$0xff]
      %v2469 = vld [vmem:[%s2 + $0x78] sm:$0xff]
      %v2470 = vld [vmem:[%s6] sm:$0x1]
      %v2472 = vperm.slane %v2470, 0
      %2474 = vmatpush.msra.mxu0 %v2469
      %2475 = vmatpush.msra.mxu0 %v2468
      %2476 = vmatpush.msra.mxu0 %v2467
      %2477 = vmatpush.msra.mxu0 %v2466
      %2478 = vmatpush.msra.mxu0 %v2465
      %2479 = vmatpush.msra.mxu0 %v2464
      %2480 = vmatpush.msra.mxu0 %v2463
      %2481 = vmatpush.msra.mxu0 %v2462
      %2482 = vmatpush.msra.mxu0 %v2461
      %2483 = vmatpush.msra.mxu0 %v2460
      %2484 = vmatpush.msra.mxu0 %v2459
      %2485 = vmatpush.msra.mxu0 %v2458
      %2486 = vmatpush.msra.mxu0 %v2457
      %2487 = vmatpush.msra.mxu0 %v2456
      %2488 = vmatpush.msra.mxu0 %v2455
      %2489 = vmatpush.msra.mxu0 %v2454
      %2490 = vmatmul.f32.gmra.mxu0 %v2390
      %v2491 = vpop.f32.mrf.mxu0
      %v2492 = vadd.f32 %v2472, %v2491
      %2493 = vmatmul.f32.gmra.mxu0 %v2391
      %v2494 = vpop.f32.mrf.mxu0
      %v2495 = vadd.f32 %v2472, %v2494
      %2496 = vmatmul.f32.gmra.mxu0 %v2392
      %v2497 = vpop.f32.mrf.mxu0
      %v2498 = vadd.f32 %v2472, %v2497
      %2499 = vmatmul.f32.gmra.mxu0 %v2393
      %v2500 = vpop.f32.mrf.mxu0
      %v2501 = vadd.f32 %v2472, %v2500
      %2502 = vmatmul.f32.gmra.mxu0 %v2394
      %v2503 = vpop.f32.mrf.mxu0
      %v2504 = vadd.f32 %v2472, %v2503
      %2505 = vmatmul.f32.gmra.mxu0 %v2395
      %v2506 = vpop.f32.mrf.mxu0
      %v2507 = vadd.f32 %v2472, %v2506
      %2508 = vmatmul.f32.gmra.mxu0 %v2396
      %v2509 = vpop.f32.mrf.mxu0
      %v2510 = vadd.f32 %v2472, %v2509
      %2511 = vmatmul.f32.gmra.mxu0 %v2397
      %v2512 = vpop.f32.mrf.mxu0
      %v2513 = vadd.f32 %v2472, %v2512
      %2514 = vmatmul.f32.gmra.mxu0 %v2398
      %v2515 = vpop.f32.mrf.mxu0
      %v2516 = vadd.f32 %v2472, %v2515
      %2517 = vmatmul.f32.gmra.mxu0 %v2399
      %v2518 = vpop.f32.mrf.mxu0
      %v2519 = vadd.f32 %v2472, %v2518
      %2520 = vmatmul.f32.gmra.mxu0 %v2400
      %v2521 = vpop.f32.mrf.mxu0
      %v2522 = vadd.f32 %v2472, %v2521
      %2523 = vmatmul.f32.gmra.mxu0 %v2401
      %v2524 = vpop.f32.mrf.mxu0
      %v2525 = vadd.f32 %v2472, %v2524
      %2526 = vmatmul.f32.gmra.mxu0 %v2402
      %v2527 = vpop.f32.mrf.mxu0
      %v2528 = vadd.f32 %v2472, %v2527
      %2529 = vmatmul.f32.gmra.mxu0 %v2403
      %v2530 = vpop.f32.mrf.mxu0
      %v2531 = vadd.f32 %v2472, %v2530
      %2532 = vmatmul.f32.gmra.mxu0 %v2404
      %v2533 = vpop.f32.mrf.mxu0
      %v2534 = vadd.f32 %v2472, %v2533
      %2535 = vmatmul.f32.gmra.mxu0 %v2405
      %v2536 = vpop.f32.mrf.mxu0
      %v2537 = vadd.f32 %v2472, %v2536
      %2538 = vmatmul.f32.gmra.mxu0 %v2406
      %v2539 = vpop.f32.mrf.mxu0
      %v2540 = vadd.f32 %v2472, %v2539
      %2541 = vmatmul.f32.gmra.mxu0 %v2407
      %v2542 = vpop.f32.mrf.mxu0
      %v2543 = vadd.f32 %v2472, %v2542
      %2544 = vmatmul.f32.gmra.mxu0 %v2408
      %v2545 = vpop.f32.mrf.mxu0
      %v2546 = vadd.f32 %v2472, %v2545
      %2547 = vmatmul.f32.gmra.mxu0 %v2409
      %v2548 = vpop.f32.mrf.mxu0
      %v2549 = vadd.f32 %v2472, %v2548
      %2550 = vmatmul.f32.gmra.mxu0 %v2410
      %v2551 = vpop.f32.mrf.mxu0
      %v2552 = vadd.f32 %v2472, %v2551
      %2553 = vmatmul.f32.gmra.mxu0 %v2411
      %v2554 = vpop.f32.mrf.mxu0
      %v2555 = vadd.f32 %v2472, %v2554
      %2556 = vmatmul.f32.gmra.mxu0 %v2412
      %v2557 = vpop.f32.mrf.mxu0
      %v2558 = vadd.f32 %v2472, %v2557
      %2559 = vmatmul.f32.gmra.mxu0 %v2413
      %v2560 = vpop.f32.mrf.mxu0
      %v2561 = vadd.f32 %v2472, %v2560
      %2562 = vmatmul.f32.gmra.mxu0 %v2414
      %v2563 = vpop.f32.mrf.mxu0
      %v2564 = vadd.f32 %v2472, %v2563
      %2565 = vmatmul.f32.gmra.mxu0 %v2415
      %v2566 = vpop.f32.mrf.mxu0
      %v2567 = vadd.f32 %v2472, %v2566
      %2568 = vmatmul.f32.gmra.mxu0 %v2416
      %v2569 = vpop.f32.mrf.mxu0
      %v2570 = vadd.f32 %v2472, %v2569
      %2571 = vmatmul.f32.gmra.mxu0 %v2417
      %v2572 = vpop.f32.mrf.mxu0
      %v2573 = vadd.f32 %v2472, %v2572
      %2574 = vmatmul.f32.gmra.mxu0 %v2418
      %v2575 = vpop.f32.mrf.mxu0
      %v2576 = vadd.f32 %v2472, %v2575
      %2577 = vmatmul.f32.gmra.mxu0 %v2419
      %v2578 = vpop.f32.mrf.mxu0
      %v2579 = vadd.f32 %v2472, %v2578
      %2580 = vmatmul.f32.gmra.mxu0 %v2420
      %v2581 = vpop.f32.mrf.mxu0
      %v2582 = vadd.f32 %v2472, %v2581
      %2583 = vmatmul.f32.gmra.mxu0 %v2421
      %v2584 = vpop.f32.mrf.mxu0
      %v2585 = vadd.f32 %v2472, %v2584
      %2586 = vmatmul.f32.gmra.mxu0 %v2422
      %v2587 = vpop.f32.mrf.mxu0
      %v2588 = vadd.f32 %v2472, %v2587
      %2589 = vmatmul.f32.gmra.mxu0 %v2423
      %v2590 = vpop.f32.mrf.mxu0
      %v2591 = vadd.f32 %v2472, %v2590
      %2592 = vmatmul.f32.gmra.mxu0 %v2424
      %v2593 = vpop.f32.mrf.mxu0
      %v2594 = vadd.f32 %v2472, %v2593
      %2595 = vmatmul.f32.gmra.mxu0 %v2425
      %v2596 = vpop.f32.mrf.mxu0
      %v2597 = vadd.f32 %v2472, %v2596
      %2598 = vmatmul.f32.gmra.mxu0 %v2426
      %v2599 = vpop.f32.mrf.mxu0
      %v2600 = vadd.f32 %v2472, %v2599
      %2601 = vmatmul.f32.gmra.mxu0 %v2427
      %v2602 = vpop.f32.mrf.mxu0
      %v2603 = vadd.f32 %v2472, %v2602
      %2604 = vmatmul.f32.gmra.mxu0 %v2428
      %v2605 = vpop.f32.mrf.mxu0
      %v2606 = vadd.f32 %v2472, %v2605
      %2607 = vmatmul.f32.gmra.mxu0 %v2429
      %v2608 = vpop.f32.mrf.mxu0
      %v2609 = vadd.f32 %v2472, %v2608
      %2610 = vmatmul.f32.gmra.mxu0 %v2430
      %v2611 = vpop.f32.mrf.mxu0
      %v2612 = vadd.f32 %v2472, %v2611
      %2613 = vmatmul.f32.gmra.mxu0 %v2431
      %v2614 = vpop.f32.mrf.mxu0
      %v2615 = vadd.f32 %v2472, %v2614
      %2616 = vmatmul.f32.gmra.mxu0 %v2432
      %v2617 = vpop.f32.mrf.mxu0
      %v2618 = vadd.f32 %v2472, %v2617
      %2619 = vmatmul.f32.gmra.mxu0 %v2433
      %v2620 = vpop.f32.mrf.mxu0
      %v2621 = vadd.f32 %v2472, %v2620
      %2622 = vmatmul.f32.gmra.mxu0 %v2434
      %v2623 = vpop.f32.mrf.mxu0
      %v2624 = vadd.f32 %v2472, %v2623
      %2625 = vmatmul.f32.gmra.mxu0 %v2435
      %v2626 = vpop.f32.mrf.mxu0
      %v2627 = vadd.f32 %v2472, %v2626
      %2628 = vmatmul.f32.gmra.mxu0 %v2436
      %v2629 = vpop.f32.mrf.mxu0
      %v2630 = vadd.f32 %v2472, %v2629
      %2631 = vmatmul.f32.gmra.mxu0 %v2437
      %v2632 = vpop.f32.mrf.mxu0
      %v2633 = vadd.f32 %v2472, %v2632
      %2634 = vmatmul.f32.gmra.mxu0 %v2438
      %v2635 = vpop.f32.mrf.mxu0
      %v2636 = vadd.f32 %v2472, %v2635
      %2637 = vmatmul.f32.gmra.mxu0 %v2439
      %v2638 = vpop.f32.mrf.mxu0
      %v2639 = vadd.f32 %v2472, %v2638
      %2640 = vmatmul.f32.gmra.mxu0 %v2440
      %v2641 = vpop.f32.mrf.mxu0
      %v2642 = vadd.f32 %v2472, %v2641
      %2643 = vmatmul.f32.gmra.mxu0 %v2441
      %v2644 = vpop.f32.mrf.mxu0
      %v2645 = vadd.f32 %v2472, %v2644
      %2646 = vmatmul.f32.gmra.mxu0 %v2442
      %v2647 = vpop.f32.mrf.mxu0
      %v2648 = vadd.f32 %v2472, %v2647
      %2649 = vmatmul.f32.gmra.mxu0 %v2443
      %v2650 = vpop.f32.mrf.mxu0
      %v2651 = vadd.f32 %v2472, %v2650
      %2652 = vmatmul.f32.gmra.mxu0 %v2444
      %v2653 = vpop.f32.mrf.mxu0
      %v2654 = vadd.f32 %v2472, %v2653
      %2655 = vmatmul.f32.gmra.mxu0 %v2445
      %v2656 = vpop.f32.mrf.mxu0
      %v2657 = vadd.f32 %v2472, %v2656
      %2658 = vmatmul.f32.gmra.mxu0 %v2446
      %v2659 = vpop.f32.mrf.mxu0
      %v2660 = vadd.f32 %v2472, %v2659
      %2661 = vmatmul.f32.gmra.mxu0 %v2447
      %v2662 = vpop.f32.mrf.mxu0
      %v2663 = vadd.f32 %v2472, %v2662
      %2664 = vmatmul.f32.gmra.mxu0 %v2448
      %v2665 = vpop.f32.mrf.mxu0
      %v2666 = vadd.f32 %v2472, %v2665
      %2667 = vmatmul.f32.gmra.mxu0 %v2449
      %v2668 = vpop.f32.mrf.mxu0
      %v2669 = vadd.f32 %v2472, %v2668
      %2670 = vmatmul.f32.gmra.mxu0 %v2450
      %v2671 = vpop.f32.mrf.mxu0
      %v2672 = vadd.f32 %v2472, %v2671
      %2673 = vmatmul.f32.gmra.mxu0 %v2451
      %v2674 = vpop.f32.mrf.mxu0
      %v2675 = vadd.f32 %v2472, %v2674
      %2676 = vmatmul.f32.gmra.mxu0 %v2452
      %v2677 = vpop.f32.mrf.mxu0
      %v2678 = vadd.f32 %v2472, %v2677
      %2679 = vmatmul.f32.gmra.mxu0 %v2453
      %v2680 = vpop.f32.mrf.mxu0
      %v2681 = vadd.f32 %v2472, %v2680
      %2682 = vdwg.mxu0
      %2683 = vmatpush.msra.mxu0 %v883
      %2684 = vmatpush.msra.mxu0 %v882
      %2685 = vmatpush.msra.mxu0 %v881
      %2686 = vmatpush.msra.mxu0 %v880
      %2687 = vmatpush.msra.mxu0 %v879
      %2688 = vmatpush.msra.mxu0 %v878
      %2689 = vmatpush.msra.mxu0 %v877
      %2690 = vmatpush.msra.mxu0 %v876
      %2691 = vmatpush.msra.mxu0 %v875
      %2692 = vmatpush.msra.mxu0 %v874
      %2693 = vmatpush.msra.mxu0 %v873
      %2694 = vmatpush.msra.mxu0 %v872
      %2695 = vmatpush.msra.mxu0 %v871
      %2696 = vmatpush.msra.mxu0 %v870
      %2697 = vmatpush.msra.mxu0 %v869
      %2698 = vmatpush.msra.mxu0 %v868
      %2699 = vmatmul.f32.gmra.mxu0 %v2492
      %v2700 = vpop.f32.mrf.mxu0
      %v2701 = vadd.f32 0.0, %v2700
      %2702 = vmatmul.f32.gmra.mxu0 %v2495
      %v2703 = vpop.f32.mrf.mxu0
      %v2704 = vadd.f32 0.0, %v2703
      %2705 = vmatmul.f32.gmra.mxu0 %v2498
      %v2706 = vpop.f32.mrf.mxu0
      %v2707 = vadd.f32 0.0, %v2706
      %2708 = vmatmul.f32.gmra.mxu0 %v2501
      %v2709 = vpop.f32.mrf.mxu0
      %v2710 = vadd.f32 0.0, %v2709
      %2711 = vmatmul.f32.gmra.mxu0 %v2504
      %v2712 = vpop.f32.mrf.mxu0
      %v2713 = vadd.f32 0.0, %v2712
      %2714 = vmatmul.f32.gmra.mxu0 %v2507
      %v2715 = vpop.f32.mrf.mxu0
      %v2716 = vadd.f32 0.0, %v2715
      %2717 = vmatmul.f32.gmra.mxu0 %v2510
      %v2718 = vpop.f32.mrf.mxu0
      %v2719 = vadd.f32 0.0, %v2718
      %2720 = vmatmul.f32.gmra.mxu0 %v2513
      %v2721 = vpop.f32.mrf.mxu0
      %v2722 = vadd.f32 0.0, %v2721
      %2723 = vmatmul.f32.gmra.mxu0 %v2516
      %v2724 = vpop.f32.mrf.mxu0
      %v2725 = vadd.f32 0.0, %v2724
      %2726 = vmatmul.f32.gmra.mxu0 %v2519
      %v2727 = vpop.f32.mrf.mxu0
      %v2728 = vadd.f32 0.0, %v2727
      %2729 = vmatmul.f32.gmra.mxu0 %v2522
      %v2730 = vpop.f32.mrf.mxu0
      %v2731 = vadd.f32 0.0, %v2730
      %2732 = vmatmul.f32.gmra.mxu0 %v2525
      %v2733 = vpop.f32.mrf.mxu0
      %v2734 = vadd.f32 0.0, %v2733
      %2735 = vmatmul.f32.gmra.mxu0 %v2528
      %v2736 = vpop.f32.mrf.mxu0
      %v2737 = vadd.f32 0.0, %v2736
      %2738 = vmatmul.f32.gmra.mxu0 %v2531
      %v2739 = vpop.f32.mrf.mxu0
      %v2740 = vadd.f32 0.0, %v2739
      %2741 = vmatmul.f32.gmra.mxu0 %v2534
      %v2742 = vpop.f32.mrf.mxu0
      %v2743 = vadd.f32 0.0, %v2742
      %2744 = vmatmul.f32.gmra.mxu0 %v2537
      %v2745 = vpop.f32.mrf.mxu0
      %v2746 = vadd.f32 0.0, %v2745
      %2747 = vmatmul.f32.gmra.mxu0 %v2540
      %v2748 = vpop.f32.mrf.mxu0
      %v2749 = vadd.f32 0.0, %v2748
      %2750 = vmatmul.f32.gmra.mxu0 %v2543
      %v2751 = vpop.f32.mrf.mxu0
      %v2752 = vadd.f32 0.0, %v2751
      %2753 = vmatmul.f32.gmra.mxu0 %v2546
      %v2754 = vpop.f32.mrf.mxu0
      %v2755 = vadd.f32 0.0, %v2754
      %2756 = vmatmul.f32.gmra.mxu0 %v2549
      %v2757 = vpop.f32.mrf.mxu0
      %v2758 = vadd.f32 0.0, %v2757
      %2759 = vmatmul.f32.gmra.mxu0 %v2552
      %v2760 = vpop.f32.mrf.mxu0
      %v2761 = vadd.f32 0.0, %v2760
      %2762 = vmatmul.f32.gmra.mxu0 %v2555
      %v2763 = vpop.f32.mrf.mxu0
      %v2764 = vadd.f32 0.0, %v2763
      %2765 = vmatmul.f32.gmra.mxu0 %v2558
      %v2766 = vpop.f32.mrf.mxu0
      %v2767 = vadd.f32 0.0, %v2766
      %2768 = vmatmul.f32.gmra.mxu0 %v2561
      %v2769 = vpop.f32.mrf.mxu0
      %v2770 = vadd.f32 0.0, %v2769
      %2771 = vmatmul.f32.gmra.mxu0 %v2564
      %v2772 = vpop.f32.mrf.mxu0
      %v2773 = vadd.f32 0.0, %v2772
      %2774 = vmatmul.f32.gmra.mxu0 %v2567
      %v2775 = vpop.f32.mrf.mxu0
      %v2776 = vadd.f32 0.0, %v2775
      %2777 = vmatmul.f32.gmra.mxu0 %v2570
      %v2778 = vpop.f32.mrf.mxu0
      %v2779 = vadd.f32 0.0, %v2778
      %2780 = vmatmul.f32.gmra.mxu0 %v2573
      %v2781 = vpop.f32.mrf.mxu0
      %v2782 = vadd.f32 0.0, %v2781
      %2783 = vmatmul.f32.gmra.mxu0 %v2576
      %v2784 = vpop.f32.mrf.mxu0
      %v2785 = vadd.f32 0.0, %v2784
      %2786 = vmatmul.f32.gmra.mxu0 %v2579
      %v2787 = vpop.f32.mrf.mxu0
      %v2788 = vadd.f32 0.0, %v2787
      %2789 = vmatmul.f32.gmra.mxu0 %v2582
      %v2790 = vpop.f32.mrf.mxu0
      %v2791 = vadd.f32 0.0, %v2790
      %2792 = vmatmul.f32.gmra.mxu0 %v2585
      %v2793 = vpop.f32.mrf.mxu0
      %v2794 = vadd.f32 0.0, %v2793
      %2795 = vmatmul.f32.gmra.mxu0 %v2588
      %v2796 = vpop.f32.mrf.mxu0
      %v2797 = vadd.f32 0.0, %v2796
      %2798 = vmatmul.f32.gmra.mxu0 %v2591
      %v2799 = vpop.f32.mrf.mxu0
      %v2800 = vadd.f32 0.0, %v2799
      %2801 = vmatmul.f32.gmra.mxu0 %v2594
      %v2802 = vpop.f32.mrf.mxu0
      %v2803 = vadd.f32 0.0, %v2802
      %2804 = vmatmul.f32.gmra.mxu0 %v2597
      %v2805 = vpop.f32.mrf.mxu0
      %v2806 = vadd.f32 0.0, %v2805
      %2807 = vmatmul.f32.gmra.mxu0 %v2600
      %v2808 = vpop.f32.mrf.mxu0
      %v2809 = vadd.f32 0.0, %v2808
      %2810 = vmatmul.f32.gmra.mxu0 %v2603
      %v2811 = vpop.f32.mrf.mxu0
      %v2812 = vadd.f32 0.0, %v2811
      %2813 = vmatmul.f32.gmra.mxu0 %v2606
      %v2814 = vpop.f32.mrf.mxu0
      %v2815 = vadd.f32 0.0, %v2814
      %2816 = vmatmul.f32.gmra.mxu0 %v2609
      %v2817 = vpop.f32.mrf.mxu0
      %v2818 = vadd.f32 0.0, %v2817
      %2819 = vmatmul.f32.gmra.mxu0 %v2612
      %v2820 = vpop.f32.mrf.mxu0
      %v2821 = vadd.f32 0.0, %v2820
      %2822 = vmatmul.f32.gmra.mxu0 %v2615
      %v2823 = vpop.f32.mrf.mxu0
      %v2824 = vadd.f32 0.0, %v2823
      %2825 = vmatmul.f32.gmra.mxu0 %v2618
      %v2826 = vpop.f32.mrf.mxu0
      %v2827 = vadd.f32 0.0, %v2826
      %2828 = vmatmul.f32.gmra.mxu0 %v2621
      %v2829 = vpop.f32.mrf.mxu0
      %v2830 = vadd.f32 0.0, %v2829
      %2831 = vmatmul.f32.gmra.mxu0 %v2624
      %v2832 = vpop.f32.mrf.mxu0
      %v2833 = vadd.f32 0.0, %v2832
      %2834 = vmatmul.f32.gmra.mxu0 %v2627
      %v2835 = vpop.f32.mrf.mxu0
      %v2836 = vadd.f32 0.0, %v2835
      %2837 = vmatmul.f32.gmra.mxu0 %v2630
      %v2838 = vpop.f32.mrf.mxu0
      %v2839 = vadd.f32 0.0, %v2838
      %2840 = vmatmul.f32.gmra.mxu0 %v2633
      %v2841 = vpop.f32.mrf.mxu0
      %v2842 = vadd.f32 0.0, %v2841
      %2843 = vmatmul.f32.gmra.mxu0 %v2636
      %v2844 = vpop.f32.mrf.mxu0
      %v2845 = vadd.f32 0.0, %v2844
      %2846 = vmatmul.f32.gmra.mxu0 %v2639
      %v2847 = vpop.f32.mrf.mxu0
      %v2848 = vadd.f32 0.0, %v2847
      %2849 = vmatmul.f32.gmra.mxu0 %v2642
      %v2850 = vpop.f32.mrf.mxu0
      %v2851 = vadd.f32 0.0, %v2850
      %2852 = vmatmul.f32.gmra.mxu0 %v2645
      %v2853 = vpop.f32.mrf.mxu0
      %v2854 = vadd.f32 0.0, %v2853
      %2855 = vmatmul.f32.gmra.mxu0 %v2648
      %v2856 = vpop.f32.mrf.mxu0
      %v2857 = vadd.f32 0.0, %v2856
      %2858 = vmatmul.f32.gmra.mxu0 %v2651
      %v2859 = vpop.f32.mrf.mxu0
      %v2860 = vadd.f32 0.0, %v2859
      %2861 = vmatmul.f32.gmra.mxu0 %v2654
      %v2862 = vpop.f32.mrf.mxu0
      %v2863 = vadd.f32 0.0, %v2862
      %2864 = vmatmul.f32.gmra.mxu0 %v2657
      %v2865 = vpop.f32.mrf.mxu0
      %v2866 = vadd.f32 0.0, %v2865
      %2867 = vmatmul.f32.gmra.mxu0 %v2660
      %v2868 = vpop.f32.mrf.mxu0
      %v2869 = vadd.f32 0.0, %v2868
      %2870 = vmatmul.f32.gmra.mxu0 %v2663
      %v2871 = vpop.f32.mrf.mxu0
      %v2872 = vadd.f32 0.0, %v2871
      %2873 = vmatmul.f32.gmra.mxu0 %v2666
      %v2874 = vpop.f32.mrf.mxu0
      %v2875 = vadd.f32 0.0, %v2874
      %2876 = vmatmul.f32.gmra.mxu0 %v2669
      %v2877 = vpop.f32.mrf.mxu0
      %v2878 = vadd.f32 0.0, %v2877
      %2879 = vmatmul.f32.gmra.mxu0 %v2672
      %v2880 = vpop.f32.mrf.mxu0
      %v2881 = vadd.f32 0.0, %v2880
      %2882 = vmatmul.f32.gmra.mxu0 %v2675
      %v2883 = vpop.f32.mrf.mxu0
      %v2884 = vadd.f32 0.0, %v2883
      %2885 = vmatmul.f32.gmra.mxu0 %v2678
      %v2886 = vpop.f32.mrf.mxu0
      %v2887 = vadd.f32 0.0, %v2886
      %2888 = vmatmul.f32.gmra.mxu0 %v2681
      %v2889 = vpop.f32.mrf.mxu0
      %v2890 = vadd.f32 0.0, %v2889
      %2891 = vdwg.mxu0
      %v2892 = vmul.f32 %v2492, %v2492
      %v2893 = vmul.f32 %v2495, %v2495
      %v2894 = vmul.f32 %v2498, %v2498
      %v2895 = vmul.f32 %v2501, %v2501
      %v2896 = vmul.f32 %v2504, %v2504
      %v2897 = vmul.f32 %v2507, %v2507
      %v2898 = vmul.f32 %v2510, %v2510
      %v2899 = vmul.f32 %v2513, %v2513
      %v2900 = vmul.f32 %v2516, %v2516
      %v2901 = vmul.f32 %v2519, %v2519
      %v2902 = vmul.f32 %v2522, %v2522
      %v2903 = vmul.f32 %v2525, %v2525
      %v2904 = vmul.f32 %v2528, %v2528
      %v2905 = vmul.f32 %v2531, %v2531
      %v2906 = vmul.f32 %v2534, %v2534
      %v2907 = vmul.f32 %v2537, %v2537
      %v2908 = vmul.f32 %v2540, %v2540
      %v2909 = vmul.f32 %v2543, %v2543
      %v2910 = vmul.f32 %v2546, %v2546
      %v2911 = vmul.f32 %v2549, %v2549
      %v2912 = vmul.f32 %v2552, %v2552
      %v2913 = vmul.f32 %v2555, %v2555
      %v2914 = vmul.f32 %v2558, %v2558
      %v2915 = vmul.f32 %v2561, %v2561
      %v2916 = vmul.f32 %v2564, %v2564
      %v2917 = vmul.f32 %v2567, %v2567
      %v2918 = vmul.f32 %v2570, %v2570
      %v2919 = vmul.f32 %v2573, %v2573
      %v2920 = vmul.f32 %v2576, %v2576
      %v2921 = vmul.f32 %v2579, %v2579
      %v2922 = vmul.f32 %v2582, %v2582
      %v2923 = vmul.f32 %v2585, %v2585
      %v2924 = vmul.f32 %v2588, %v2588
      %v2925 = vmul.f32 %v2591, %v2591
      %v2926 = vmul.f32 %v2594, %v2594
      %v2927 = vmul.f32 %v2597, %v2597
      %v2928 = vmul.f32 %v2600, %v2600
      %v2929 = vmul.f32 %v2603, %v2603
      %v2930 = vmul.f32 %v2606, %v2606
      %v2931 = vmul.f32 %v2609, %v2609
      %v2932 = vmul.f32 %v2612, %v2612
      %v2933 = vmul.f32 %v2615, %v2615
      %v2934 = vmul.f32 %v2618, %v2618
      %v2935 = vmul.f32 %v2621, %v2621
      %v2936 = vmul.f32 %v2624, %v2624
      %v2937 = vmul.f32 %v2627, %v2627
      %v2938 = vmul.f32 %v2630, %v2630
      %v2939 = vmul.f32 %v2633, %v2633
      %v2940 = vmul.f32 %v2636, %v2636
      %v2941 = vmul.f32 %v2639, %v2639
      %v2942 = vmul.f32 %v2642, %v2642
      %v2943 = vmul.f32 %v2645, %v2645
      %v2944 = vmul.f32 %v2648, %v2648
      %v2945 = vmul.f32 %v2651, %v2651
      %v2946 = vmul.f32 %v2654, %v2654
      %v2947 = vmul.f32 %v2657, %v2657
      %v2948 = vmul.f32 %v2660, %v2660
      %v2949 = vmul.f32 %v2663, %v2663
      %v2950 = vmul.f32 %v2666, %v2666
      %v2951 = vmul.f32 %v2669, %v2669
      %v2952 = vmul.f32 %v2672, %v2672
      %v2953 = vmul.f32 %v2675, %v2675
      %v2954 = vmul.f32 %v2678, %v2678
      %v2955 = vmul.f32 %v2681, %v2681
      %2956 = vmatpush.msra.mxu0 %v883
      %2957 = vmatpush.msra.mxu0 %v882
      %2958 = vmatpush.msra.mxu0 %v881
      %2959 = vmatpush.msra.mxu0 %v880
      %2960 = vmatpush.msra.mxu0 %v879
      %2961 = vmatpush.msra.mxu0 %v878
      %2962 = vmatpush.msra.mxu0 %v877
      %2963 = vmatpush.msra.mxu0 %v876
      %2964 = vmatpush.msra.mxu0 %v875
      %2965 = vmatpush.msra.mxu0 %v874
      %2966 = vmatpush.msra.mxu0 %v873
      %2967 = vmatpush.msra.mxu0 %v872
      %2968 = vmatpush.msra.mxu0 %v871
      %2969 = vmatpush.msra.mxu0 %v870
      %2970 = vmatpush.msra.mxu0 %v869
      %2971 = vmatpush.msra.mxu0 %v868
      %2972 = vmatmul.f32.gmra.mxu0 %v2892
      %v2973 = vpop.f32.mrf.mxu0
      %v2974 = vadd.f32 0.0, %v2973
      %2975 = vmatmul.f32.gmra.mxu0 %v2893
      %v2976 = vpop.f32.mrf.mxu0
      %v2977 = vadd.f32 0.0, %v2976
      %2978 = vmatmul.f32.gmra.mxu0 %v2894
      %v2979 = vpop.f32.mrf.mxu0
      %v2980 = vadd.f32 0.0, %v2979
      %2981 = vmatmul.f32.gmra.mxu0 %v2895
      %v2982 = vpop.f32.mrf.mxu0
      %v2983 = vadd.f32 0.0, %v2982
      %2984 = vmatmul.f32.gmra.mxu0 %v2896
      %v2985 = vpop.f32.mrf.mxu0
      %v2986 = vadd.f32 0.0, %v2985
      %2987 = vmatmul.f32.gmra.mxu0 %v2897
      %v2988 = vpop.f32.mrf.mxu0
      %v2989 = vadd.f32 0.0, %v2988
      %2990 = vmatmul.f32.gmra.mxu0 %v2898
      %v2991 = vpop.f32.mrf.mxu0
      %v2992 = vadd.f32 0.0, %v2991
      %2993 = vmatmul.f32.gmra.mxu0 %v2899
      %v2994 = vpop.f32.mrf.mxu0
      %v2995 = vadd.f32 0.0, %v2994
      %2996 = vmatmul.f32.gmra.mxu0 %v2900
      %v2997 = vpop.f32.mrf.mxu0
      %v2998 = vadd.f32 0.0, %v2997
      %2999 = vmatmul.f32.gmra.mxu0 %v2901
      %v3000 = vpop.f32.mrf.mxu0
      %v3001 = vadd.f32 0.0, %v3000
      %3002 = vmatmul.f32.gmra.mxu0 %v2902
      %v3003 = vpop.f32.mrf.mxu0
      %v3004 = vadd.f32 0.0, %v3003
      %3005 = vmatmul.f32.gmra.mxu0 %v2903
      %v3006 = vpop.f32.mrf.mxu0
      %v3007 = vadd.f32 0.0, %v3006
      %3008 = vmatmul.f32.gmra.mxu0 %v2904
      %v3009 = vpop.f32.mrf.mxu0
      %v3010 = vadd.f32 0.0, %v3009
      %3011 = vmatmul.f32.gmra.mxu0 %v2905
      %v3012 = vpop.f32.mrf.mxu0
      %v3013 = vadd.f32 0.0, %v3012
      %3014 = vmatmul.f32.gmra.mxu0 %v2906
      %v3015 = vpop.f32.mrf.mxu0
      %v3016 = vadd.f32 0.0, %v3015
      %3017 = vmatmul.f32.gmra.mxu0 %v2907
      %v3018 = vpop.f32.mrf.mxu0
      %v3019 = vadd.f32 0.0, %v3018
      %3020 = vmatmul.f32.gmra.mxu0 %v2908
      %v3021 = vpop.f32.mrf.mxu0
      %v3022 = vadd.f32 0.0, %v3021
      %3023 = vmatmul.f32.gmra.mxu0 %v2909
      %v3024 = vpop.f32.mrf.mxu0
      %v3025 = vadd.f32 0.0, %v3024
      %3026 = vmatmul.f32.gmra.mxu0 %v2910
      %v3027 = vpop.f32.mrf.mxu0
      %v3028 = vadd.f32 0.0, %v3027
      %3029 = vmatmul.f32.gmra.mxu0 %v2911
      %v3030 = vpop.f32.mrf.mxu0
      %v3031 = vadd.f32 0.0, %v3030
      %3032 = vmatmul.f32.gmra.mxu0 %v2912
      %v3033 = vpop.f32.mrf.mxu0
      %v3034 = vadd.f32 0.0, %v3033
      %3035 = vmatmul.f32.gmra.mxu0 %v2913
      %v3036 = vpop.f32.mrf.mxu0
      %v3037 = vadd.f32 0.0, %v3036
      %3038 = vmatmul.f32.gmra.mxu0 %v2914
      %v3039 = vpop.f32.mrf.mxu0
      %v3040 = vadd.f32 0.0, %v3039
      %3041 = vmatmul.f32.gmra.mxu0 %v2915
      %v3042 = vpop.f32.mrf.mxu0
      %v3043 = vadd.f32 0.0, %v3042
      %3044 = vmatmul.f32.gmra.mxu0 %v2916
      %v3045 = vpop.f32.mrf.mxu0
      %v3046 = vadd.f32 0.0, %v3045
      %3047 = vmatmul.f32.gmra.mxu0 %v2917
      %v3048 = vpop.f32.mrf.mxu0
      %v3049 = vadd.f32 0.0, %v3048
      %3050 = vmatmul.f32.gmra.mxu0 %v2918
      %v3051 = vpop.f32.mrf.mxu0
      %v3052 = vadd.f32 0.0, %v3051
      %3053 = vmatmul.f32.gmra.mxu0 %v2919
      %v3054 = vpop.f32.mrf.mxu0
      %v3055 = vadd.f32 0.0, %v3054
      %3056 = vmatmul.f32.gmra.mxu0 %v2920
      %v3057 = vpop.f32.mrf.mxu0
      %v3058 = vadd.f32 0.0, %v3057
      %3059 = vmatmul.f32.gmra.mxu0 %v2921
      %v3060 = vpop.f32.mrf.mxu0
      %v3061 = vadd.f32 0.0, %v3060
      %3062 = vmatmul.f32.gmra.mxu0 %v2922
      %v3063 = vpop.f32.mrf.mxu0
      %v3064 = vadd.f32 0.0, %v3063
      %3065 = vmatmul.f32.gmra.mxu0 %v2923
      %v3066 = vpop.f32.mrf.mxu0
      %v3067 = vadd.f32 0.0, %v3066
      %3068 = vmatmul.f32.gmra.mxu0 %v2924
      %v3069 = vpop.f32.mrf.mxu0
      %v3070 = vadd.f32 0.0, %v3069
      %3071 = vmatmul.f32.gmra.mxu0 %v2925
      %v3072 = vpop.f32.mrf.mxu0
      %v3073 = vadd.f32 0.0, %v3072
      %3074 = vmatmul.f32.gmra.mxu0 %v2926
      %v3075 = vpop.f32.mrf.mxu0
      %v3076 = vadd.f32 0.0, %v3075
      %3077 = vmatmul.f32.gmra.mxu0 %v2927
      %v3078 = vpop.f32.mrf.mxu0
      %v3079 = vadd.f32 0.0, %v3078
      %3080 = vmatmul.f32.gmra.mxu0 %v2928
      %v3081 = vpop.f32.mrf.mxu0
      %v3082 = vadd.f32 0.0, %v3081
      %3083 = vmatmul.f32.gmra.mxu0 %v2929
      %v3084 = vpop.f32.mrf.mxu0
      %v3085 = vadd.f32 0.0, %v3084
      %3086 = vmatmul.f32.gmra.mxu0 %v2930
      %v3087 = vpop.f32.mrf.mxu0
      %v3088 = vadd.f32 0.0, %v3087
      %3089 = vmatmul.f32.gmra.mxu0 %v2931
      %v3090 = vpop.f32.mrf.mxu0
      %v3091 = vadd.f32 0.0, %v3090
      %3092 = vmatmul.f32.gmra.mxu0 %v2932
      %v3093 = vpop.f32.mrf.mxu0
      %v3094 = vadd.f32 0.0, %v3093
      %3095 = vmatmul.f32.gmra.mxu0 %v2933
      %v3096 = vpop.f32.mrf.mxu0
      %v3097 = vadd.f32 0.0, %v3096
      %3098 = vmatmul.f32.gmra.mxu0 %v2934
      %v3099 = vpop.f32.mrf.mxu0
      %v3100 = vadd.f32 0.0, %v3099
      %3101 = vmatmul.f32.gmra.mxu0 %v2935
      %v3102 = vpop.f32.mrf.mxu0
      %v3103 = vadd.f32 0.0, %v3102
      %3104 = vmatmul.f32.gmra.mxu0 %v2936
      %v3105 = vpop.f32.mrf.mxu0
      %v3106 = vadd.f32 0.0, %v3105
      %3107 = vmatmul.f32.gmra.mxu0 %v2937
      %v3108 = vpop.f32.mrf.mxu0
      %v3109 = vadd.f32 0.0, %v3108
      %3110 = vmatmul.f32.gmra.mxu0 %v2938
      %v3111 = vpop.f32.mrf.mxu0
      %v3112 = vadd.f32 0.0, %v3111
      %3113 = vmatmul.f32.gmra.mxu0 %v2939
      %v3114 = vpop.f32.mrf.mxu0
      %v3115 = vadd.f32 0.0, %v3114
      %3116 = vmatmul.f32.gmra.mxu0 %v2940
      %v3117 = vpop.f32.mrf.mxu0
      %v3118 = vadd.f32 0.0, %v3117
      %3119 = vmatmul.f32.gmra.mxu0 %v2941
      %v3120 = vpop.f32.mrf.mxu0
      %v3121 = vadd.f32 0.0, %v3120
      %3122 = vmatmul.f32.gmra.mxu0 %v2942
      %v3123 = vpop.f32.mrf.mxu0
      %v3124 = vadd.f32 0.0, %v3123
      %3125 = vmatmul.f32.gmra.mxu0 %v2943
      %v3126 = vpop.f32.mrf.mxu0
      %v3127 = vadd.f32 0.0, %v3126
      %3128 = vmatmul.f32.gmra.mxu0 %v2944
      %v3129 = vpop.f32.mrf.mxu0
      %v3130 = vadd.f32 0.0, %v3129
      %3131 = vmatmul.f32.gmra.mxu0 %v2945
      %v3132 = vpop.f32.mrf.mxu0
      %v3133 = vadd.f32 0.0, %v3132
      %3134 = vmatmul.f32.gmra.mxu0 %v2946
      %v3135 = vpop.f32.mrf.mxu0
      %v3136 = vadd.f32 0.0, %v3135
      %3137 = vmatmul.f32.gmra.mxu0 %v2947
      %v3138 = vpop.f32.mrf.mxu0
      %v3139 = vadd.f32 0.0, %v3138
      %3140 = vmatmul.f32.gmra.mxu0 %v2948
      %v3141 = vpop.f32.mrf.mxu0
      %v3142 = vadd.f32 0.0, %v3141
      %3143 = vmatmul.f32.gmra.mxu0 %v2949
      %v3144 = vpop.f32.mrf.mxu0
      %v3145 = vadd.f32 0.0, %v3144
      %3146 = vmatmul.f32.gmra.mxu0 %v2950
      %v3147 = vpop.f32.mrf.mxu0
      %v3148 = vadd.f32 0.0, %v3147
      %3149 = vmatmul.f32.gmra.mxu0 %v2951
      %v3150 = vpop.f32.mrf.mxu0
      %v3151 = vadd.f32 0.0, %v3150
      %3152 = vmatmul.f32.gmra.mxu0 %v2952
      %v3153 = vpop.f32.mrf.mxu0
      %v3154 = vadd.f32 0.0, %v3153
      %3155 = vmatmul.f32.gmra.mxu0 %v2953
      %v3156 = vpop.f32.mrf.mxu0
      %v3157 = vadd.f32 0.0, %v3156
      %3158 = vmatmul.f32.gmra.mxu0 %v2954
      %v3159 = vpop.f32.mrf.mxu0
      %v3160 = vadd.f32 0.0, %v3159
      %3161 = vmatmul.f32.gmra.mxu0 %v2955
      %v3162 = vpop.f32.mrf.mxu0
      %v3163 = vadd.f32 0.0, %v3162
      %3164 = vdwg.mxu0
      %v3165 = vmul.f32 %v2701, %v2701
      %v3166 = vmul.f32 %v2704, %v2704
      %v3167 = vmul.f32 %v2707, %v2707
      %v3168 = vmul.f32 %v2710, %v2710
      %v3169 = vmul.f32 %v2713, %v2713
      %v3170 = vmul.f32 %v2716, %v2716
      %v3171 = vmul.f32 %v2719, %v2719
      %v3172 = vmul.f32 %v2722, %v2722
      %v3173 = vmul.f32 %v2725, %v2725
      %v3174 = vmul.f32 %v2728, %v2728
      %v3175 = vmul.f32 %v2731, %v2731
      %v3176 = vmul.f32 %v2734, %v2734
      %v3177 = vmul.f32 %v2737, %v2737
      %v3178 = vmul.f32 %v2740, %v2740
      %v3179 = vmul.f32 %v2743, %v2743
      %v3180 = vmul.f32 %v2746, %v2746
      %v3181 = vmul.f32 %v2749, %v2749
      %v3182 = vmul.f32 %v2752, %v2752
      %v3183 = vmul.f32 %v2755, %v2755
      %v3184 = vmul.f32 %v2758, %v2758
      %v3185 = vmul.f32 %v2761, %v2761
      %v3186 = vmul.f32 %v2764, %v2764
      %v3187 = vmul.f32 %v2767, %v2767
      %v3188 = vmul.f32 %v2770, %v2770
      %v3189 = vmul.f32 %v2773, %v2773
      %v3190 = vmul.f32 %v2776, %v2776
      %v3191 = vmul.f32 %v2779, %v2779
      %v3192 = vmul.f32 %v2782, %v2782
      %v3193 = vmul.f32 %v2785, %v2785
      %v3194 = vmul.f32 %v2788, %v2788
      %v3195 = vmul.f32 %v2791, %v2791
      %v3196 = vmul.f32 %v2794, %v2794
      %v3197 = vmul.f32 %v2797, %v2797
      %v3198 = vmul.f32 %v2800, %v2800
      %v3199 = vmul.f32 %v2803, %v2803
      %v3200 = vmul.f32 %v2806, %v2806
      %v3201 = vmul.f32 %v2809, %v2809
      %v3202 = vmul.f32 %v2812, %v2812
      %v3203 = vmul.f32 %v2815, %v2815
      %v3204 = vmul.f32 %v2818, %v2818
      %v3205 = vmul.f32 %v2821, %v2821
      %v3206 = vmul.f32 %v2824, %v2824
      %v3207 = vmul.f32 %v2827, %v2827
      %v3208 = vmul.f32 %v2830, %v2830
      %v3209 = vmul.f32 %v2833, %v2833
      %v3210 = vmul.f32 %v2836, %v2836
      %v3211 = vmul.f32 %v2839, %v2839
      %v3212 = vmul.f32 %v2842, %v2842
      %v3213 = vmul.f32 %v2845, %v2845
      %v3214 = vmul.f32 %v2848, %v2848
      %v3215 = vmul.f32 %v2851, %v2851
      %v3216 = vmul.f32 %v2854, %v2854
      %v3217 = vmul.f32 %v2857, %v2857
      %v3218 = vmul.f32 %v2860, %v2860
      %v3219 = vmul.f32 %v2863, %v2863
      %v3220 = vmul.f32 %v2866, %v2866
      %v3221 = vmul.f32 %v2869, %v2869
      %v3222 = vmul.f32 %v2872, %v2872
      %v3223 = vmul.f32 %v2875, %v2875
      %v3224 = vmul.f32 %v2878, %v2878
      %v3225 = vmul.f32 %v2881, %v2881
      %v3226 = vmul.f32 %v2884, %v2884
      %v3227 = vmul.f32 %v2887, %v2887
      %v3228 = vmul.f32 %v2890, %v2890
      %v3229 = vsub.f32 %v2974, %v3165
      %v3230 = vsub.f32 %v2977, %v3166
      %v3231 = vsub.f32 %v2980, %v3167
      %v3232 = vsub.f32 %v2983, %v3168
      %v3233 = vsub.f32 %v2986, %v3169
      %v3234 = vsub.f32 %v2989, %v3170
      %v3235 = vsub.f32 %v2992, %v3171
      %v3236 = vsub.f32 %v2995, %v3172
      %v3237 = vsub.f32 %v2998, %v3173
      %v3238 = vsub.f32 %v3001, %v3174
      %v3239 = vsub.f32 %v3004, %v3175
      %v3240 = vsub.f32 %v3007, %v3176
      %v3241 = vsub.f32 %v3010, %v3177
      %v3242 = vsub.f32 %v3013, %v3178
      %v3243 = vsub.f32 %v3016, %v3179
      %v3244 = vsub.f32 %v3019, %v3180
      %v3245 = vsub.f32 %v3022, %v3181
      %v3246 = vsub.f32 %v3025, %v3182
      %v3247 = vsub.f32 %v3028, %v3183
      %v3248 = vsub.f32 %v3031, %v3184
      %v3249 = vsub.f32 %v3034, %v3185
      %v3250 = vsub.f32 %v3037, %v3186
      %v3251 = vsub.f32 %v3040, %v3187
      %v3252 = vsub.f32 %v3043, %v3188
      %v3253 = vsub.f32 %v3046, %v3189
      %v3254 = vsub.f32 %v3049, %v3190
      %v3255 = vsub.f32 %v3052, %v3191
      %v3256 = vsub.f32 %v3055, %v3192
      %v3257 = vsub.f32 %v3058, %v3193
      %v3258 = vsub.f32 %v3061, %v3194
      %v3259 = vsub.f32 %v3064, %v3195
      %v3260 = vsub.f32 %v3067, %v3196
      %v3261 = vsub.f32 %v3070, %v3197
      %v3262 = vsub.f32 %v3073, %v3198
      %v3263 = vsub.f32 %v3076, %v3199
      %v3264 = vsub.f32 %v3079, %v3200
      %v3265 = vsub.f32 %v3082, %v3201
      %v3266 = vsub.f32 %v3085, %v3202
      %v3267 = vsub.f32 %v3088, %v3203
      %v3268 = vsub.f32 %v3091, %v3204
      %v3269 = vsub.f32 %v3094, %v3205
      %v3270 = vsub.f32 %v3097, %v3206
      %v3271 = vsub.f32 %v3100, %v3207
      %v3272 = vsub.f32 %v3103, %v3208
      %v3273 = vsub.f32 %v3106, %v3209
      %v3274 = vsub.f32 %v3109, %v3210
      %v3275 = vsub.f32 %v3112, %v3211
      %v3276 = vsub.f32 %v3115, %v3212
      %v3277 = vsub.f32 %v3118, %v3213
      %v3278 = vsub.f32 %v3121, %v3214
      %v3279 = vsub.f32 %v3124, %v3215
      %v3280 = vsub.f32 %v3127, %v3216
      %v3281 = vsub.f32 %v3130, %v3217
      %v3282 = vsub.f32 %v3133, %v3218
      %v3283 = vsub.f32 %v3136, %v3219
      %v3284 = vsub.f32 %v3139, %v3220
      %v3285 = vsub.f32 %v3142, %v3221
      %v3286 = vsub.f32 %v3145, %v3222
      %v3287 = vsub.f32 %v3148, %v3223
      %v3288 = vsub.f32 %v3151, %v3224
      %v3289 = vsub.f32 %v3154, %v3225
      %v3290 = vsub.f32 %v3157, %v3226
      %v3291 = vsub.f32 %v3160, %v3227
      %v3292 = vsub.f32 %v3163, %v3228
      %v3293 = vmax.f32 %v3229, 0.0
      %v3294 = vmax.f32 %v3230, 0.0
      %v3295 = vmax.f32 %v3231, 0.0
      %v3296 = vmax.f32 %v3232, 0.0
      %v3297 = vmax.f32 %v3233, 0.0
      %v3298 = vmax.f32 %v3234, 0.0
      %v3299 = vmax.f32 %v3235, 0.0
      %v3300 = vmax.f32 %v3236, 0.0
      %v3301 = vmax.f32 %v3237, 0.0
      %v3302 = vmax.f32 %v3238, 0.0
      %v3303 = vmax.f32 %v3239, 0.0
      %v3304 = vmax.f32 %v3240, 0.0
      %v3305 = vmax.f32 %v3241, 0.0
      %v3306 = vmax.f32 %v3242, 0.0
      %v3307 = vmax.f32 %v3243, 0.0
      %v3308 = vmax.f32 %v3244, 0.0
      %v3309 = vmax.f32 %v3245, 0.0
      %v3310 = vmax.f32 %v3246, 0.0
      %v3311 = vmax.f32 %v3247, 0.0
      %v3312 = vmax.f32 %v3248, 0.0
      %v3313 = vmax.f32 %v3249, 0.0
      %v3314 = vmax.f32 %v3250, 0.0
      %v3315 = vmax.f32 %v3251, 0.0
      %v3316 = vmax.f32 %v3252, 0.0
      %v3317 = vmax.f32 %v3253, 0.0
      %v3318 = vmax.f32 %v3254, 0.0
      %v3319 = vmax.f32 %v3255, 0.0
      %v3320 = vmax.f32 %v3256, 0.0
      %v3321 = vmax.f32 %v3257, 0.0
      %v3322 = vmax.f32 %v3258, 0.0
      %v3323 = vmax.f32 %v3259, 0.0
      %v3324 = vmax.f32 %v3260, 0.0
      %v3325 = vmax.f32 %v3261, 0.0
      %v3326 = vmax.f32 %v3262, 0.0
      %v3327 = vmax.f32 %v3263, 0.0
      %v3328 = vmax.f32 %v3264, 0.0
      %v3329 = vmax.f32 %v3265, 0.0
      %v3330 = vmax.f32 %v3266, 0.0
      %v3331 = vmax.f32 %v3267, 0.0
      %v3332 = vmax.f32 %v3268, 0.0
      %v3333 = vmax.f32 %v3269, 0.0
      %v3334 = vmax.f32 %v3270, 0.0
      %v3335 = vmax.f32 %v3271, 0.0
      %v3336 = vmax.f32 %v3272, 0.0
      %v3337 = vmax.f32 %v3273, 0.0
      %v3338 = vmax.f32 %v3274, 0.0
      %v3339 = vmax.f32 %v3275, 0.0
      %v3340 = vmax.f32 %v3276, 0.0
      %v3341 = vmax.f32 %v3277, 0.0
      %v3342 = vmax.f32 %v3278, 0.0
      %v3343 = vmax.f32 %v3279, 0.0
      %v3344 = vmax.f32 %v3280, 0.0
      %v3345 = vmax.f32 %v3281, 0.0
      %v3346 = vmax.f32 %v3282, 0.0
      %v3347 = vmax.f32 %v3283, 0.0
      %v3348 = vmax.f32 %v3284, 0.0
      %v3349 = vmax.f32 %v3285, 0.0
      %v3350 = vmax.f32 %v3286, 0.0
      %v3351 = vmax.f32 %v3287, 0.0
      %v3352 = vmax.f32 %v3288, 0.0
      %v3353 = vmax.f32 %v3289, 0.0
      %v3354 = vmax.f32 %v3290, 0.0
      %v3355 = vmax.f32 %v3291, 0.0
      %v3356 = vmax.f32 %v3292, 0.0
      %v3357 = vsub.f32 %v2492, %v2701
      %v3358 = vsub.f32 %v2495, %v2704
      %v3359 = vsub.f32 %v2498, %v2707
      %v3360 = vsub.f32 %v2501, %v2710
      %v3361 = vsub.f32 %v2504, %v2713
      %v3362 = vsub.f32 %v2507, %v2716
      %v3363 = vsub.f32 %v2510, %v2719
      %v3364 = vsub.f32 %v2513, %v2722
      %v3365 = vsub.f32 %v2516, %v2725
      %v3366 = vsub.f32 %v2519, %v2728
      %v3367 = vsub.f32 %v2522, %v2731
      %v3368 = vsub.f32 %v2525, %v2734
      %v3369 = vsub.f32 %v2528, %v2737
      %v3370 = vsub.f32 %v2531, %v2740
      %v3371 = vsub.f32 %v2534, %v2743
      %v3372 = vsub.f32 %v2537, %v2746
      %v3373 = vsub.f32 %v2540, %v2749
      %v3374 = vsub.f32 %v2543, %v2752
      %v3375 = vsub.f32 %v2546, %v2755
      %v3376 = vsub.f32 %v2549, %v2758
      %v3377 = vsub.f32 %v2552, %v2761
      %v3378 = vsub.f32 %v2555, %v2764
      %v3379 = vsub.f32 %v2558, %v2767
      %v3380 = vsub.f32 %v2561, %v2770
      %v3381 = vsub.f32 %v2564, %v2773
      %v3382 = vsub.f32 %v2567, %v2776
      %v3383 = vsub.f32 %v2570, %v2779
      %v3384 = vsub.f32 %v2573, %v2782
      %v3385 = vsub.f32 %v2576, %v2785
      %v3386 = vsub.f32 %v2579, %v2788
      %v3387 = vsub.f32 %v2582, %v2791
      %v3388 = vsub.f32 %v2585, %v2794
      %v3389 = vsub.f32 %v2588, %v2797
      %v3390 = vsub.f32 %v2591, %v2800
      %v3391 = vsub.f32 %v2594, %v2803
      %v3392 = vsub.f32 %v2597, %v2806
      %v3393 = vsub.f32 %v2600, %v2809
      %v3394 = vsub.f32 %v2603, %v2812
      %v3395 = vsub.f32 %v2606, %v2815
      %v3396 = vsub.f32 %v2609, %v2818
      %v3397 = vsub.f32 %v2612, %v2821
      %v3398 = vsub.f32 %v2615, %v2824
      %v3399 = vsub.f32 %v2618, %v2827
      %v3400 = vsub.f32 %v2621, %v2830
      %v3401 = vsub.f32 %v2624, %v2833
      %v3402 = vsub.f32 %v2627, %v2836
      %v3403 = vsub.f32 %v2630, %v2839
      %v3404 = vsub.f32 %v2633, %v2842
      %v3405 = vsub.f32 %v2636, %v2845
      %v3406 = vsub.f32 %v2639, %v2848
      %v3407 = vsub.f32 %v2642, %v2851
      %v3408 = vsub.f32 %v2645, %v2854
      %v3409 = vsub.f32 %v2648, %v2857
      %v3410 = vsub.f32 %v2651, %v2860
      %v3411 = vsub.f32 %v2654, %v2863
      %v3412 = vsub.f32 %v2657, %v2866
      %v3413 = vsub.f32 %v2660, %v2869
      %v3414 = vsub.f32 %v2663, %v2872
      %v3415 = vsub.f32 %v2666, %v2875
      %v3416 = vsub.f32 %v2669, %v2878
      %v3417 = vsub.f32 %v2672, %v2881
      %v3418 = vsub.f32 %v2675, %v2884
      %v3419 = vsub.f32 %v2678, %v2887
      %v3420 = vsub.f32 %v2681, %v2890
      %v3421 = vadd.f32 %v3293, 1e-05
      %v3422 = vadd.f32 %v3294, 1e-05
      %v3423 = vadd.f32 %v3295, 1e-05
      %v3424 = vadd.f32 %v3296, 1e-05
      %v3425 = vadd.f32 %v3297, 1e-05
      %v3426 = vadd.f32 %v3298, 1e-05
      %v3427 = vadd.f32 %v3299, 1e-05
      %v3428 = vadd.f32 %v3300, 1e-05
      %v3429 = vadd.f32 %v3301, 1e-05
      %v3430 = vadd.f32 %v3302, 1e-05
      %v3431 = vadd.f32 %v3303, 1e-05
      %v3432 = vadd.f32 %v3304, 1e-05
      %v3433 = vadd.f32 %v3305, 1e-05
      %v3434 = vadd.f32 %v3306, 1e-05
      %v3435 = vadd.f32 %v3307, 1e-05
      %v3436 = vadd.f32 %v3308, 1e-05
      %v3437 = vadd.f32 %v3309, 1e-05
      %v3438 = vadd.f32 %v3310, 1e-05
      %v3439 = vadd.f32 %v3311, 1e-05
      %v3440 = vadd.f32 %v3312, 1e-05
      %v3441 = vadd.f32 %v3313, 1e-05
      %v3442 = vadd.f32 %v3314, 1e-05
      %v3443 = vadd.f32 %v3315, 1e-05
      %v3444 = vadd.f32 %v3316, 1e-05
      %v3445 = vadd.f32 %v3317, 1e-05
      %v3446 = vadd.f32 %v3318, 1e-05
      %v3447 = vadd.f32 %v3319, 1e-05
      %v3448 = vadd.f32 %v3320, 1e-05
      %v3449 = vadd.f32 %v3321, 1e-05
      %v3450 = vadd.f32 %v3322, 1e-05
      %v3451 = vadd.f32 %v3323, 1e-05
      %v3452 = vadd.f32 %v3324, 1e-05
      %v3453 = vadd.f32 %v3325, 1e-05
      %v3454 = vadd.f32 %v3326, 1e-05
      %v3455 = vadd.f32 %v3327, 1e-05
      %v3456 = vadd.f32 %v3328, 1e-05
      %v3457 = vadd.f32 %v3329, 1e-05
      %v3458 = vadd.f32 %v3330, 1e-05
      %v3459 = vadd.f32 %v3331, 1e-05
      %v3460 = vadd.f32 %v3332, 1e-05
      %v3461 = vadd.f32 %v3333, 1e-05
      %v3462 = vadd.f32 %v3334, 1e-05
      %v3463 = vadd.f32 %v3335, 1e-05
      %v3464 = vadd.f32 %v3336, 1e-05
      %v3465 = vadd.f32 %v3337, 1e-05
      %v3466 = vadd.f32 %v3338, 1e-05
      %v3467 = vadd.f32 %v3339, 1e-05
      %v3468 = vadd.f32 %v3340, 1e-05
      %v3469 = vadd.f32 %v3341, 1e-05
      %v3470 = vadd.f32 %v3342, 1e-05
      %v3471 = vadd.f32 %v3343, 1e-05
      %v3472 = vadd.f32 %v3344, 1e-05
      %v3473 = vadd.f32 %v3345, 1e-05
      %v3474 = vadd.f32 %v3346, 1e-05
      %v3475 = vadd.f32 %v3347, 1e-05
      %v3476 = vadd.f32 %v3348, 1e-05
      %v3477 = vadd.f32 %v3349, 1e-05
      %v3478 = vadd.f32 %v3350, 1e-05
      %v3479 = vadd.f32 %v3351, 1e-05
      %v3480 = vadd.f32 %v3352, 1e-05
      %v3481 = vadd.f32 %v3353, 1e-05
      %v3482 = vadd.f32 %v3354, 1e-05
      %v3483 = vadd.f32 %v3355, 1e-05
      %v3484 = vadd.f32 %v3356, 1e-05
      %v3485 = vrsqrt.pop %v3421
      %v3486 = vmul.f32 %v3485, %v3421
      %v3487 = vmul.f32 %v3486, %v3485
      %v3488 = vmul.f32 0.5, %v3487
      %v3489 = vsub.f32 1.5, %v3488
      %v3490 = vmul.f32 %v3485, %v3489
      %vm3491 = vweird.f32 %v3421
      %vm3492 = vweird.f32 %v3485
      %vm3493 = vmor %vm3491, %vm3492
      %v3494 = vsel %vm3493, %v3485, %v3490
      %v3495 = vrsqrt.pop %v3422
      %v3496 = vmul.f32 %v3495, %v3422
      %v3497 = vmul.f32 %v3496, %v3495
      %v3498 = vmul.f32 0.5, %v3497
      %v3499 = vsub.f32 1.5, %v3498
      %v3500 = vmul.f32 %v3495, %v3499
      %vm3501 = vweird.f32 %v3422
      %vm3502 = vweird.f32 %v3495
      %vm3503 = vmor %vm3501, %vm3502
      %v3504 = vsel %vm3503, %v3495, %v3500
      %v3505 = vrsqrt.pop %v3423
      %v3506 = vmul.f32 %v3505, %v3423
      %v3507 = vmul.f32 %v3506, %v3505
      %v3508 = vmul.f32 0.5, %v3507
      %v3509 = vsub.f32 1.5, %v3508
      %v3510 = vmul.f32 %v3505, %v3509
      %vm3511 = vweird.f32 %v3423
      %vm3512 = vweird.f32 %v3505
      %vm3513 = vmor %vm3511, %vm3512
      %v3514 = vsel %vm3513, %v3505, %v3510
      %v3515 = vrsqrt.pop %v3424
      %v3516 = vmul.f32 %v3515, %v3424
      %v3517 = vmul.f32 %v3516, %v3515
      %v3518 = vmul.f32 0.5, %v3517
      %v3519 = vsub.f32 1.5, %v3518
      %v3520 = vmul.f32 %v3515, %v3519
      %vm3521 = vweird.f32 %v3424
      %vm3522 = vweird.f32 %v3515
      %vm3523 = vmor %vm3521, %vm3522
      %v3524 = vsel %vm3523, %v3515, %v3520
      %v3525 = vrsqrt.pop %v3425
      %v3526 = vmul.f32 %v3525, %v3425
      %v3527 = vmul.f32 %v3526, %v3525
      %v3528 = vmul.f32 0.5, %v3527
      %v3529 = vsub.f32 1.5, %v3528
      %v3530 = vmul.f32 %v3525, %v3529
      %vm3531 = vweird.f32 %v3425
      %vm3532 = vweird.f32 %v3525
      %vm3533 = vmor %vm3531, %vm3532
      %v3534 = vsel %vm3533, %v3525, %v3530
      %v3535 = vrsqrt.pop %v3426
      %v3536 = vmul.f32 %v3535, %v3426
      %v3537 = vmul.f32 %v3536, %v3535
      %v3538 = vmul.f32 0.5, %v3537
      %v3539 = vsub.f32 1.5, %v3538
      %v3540 = vmul.f32 %v3535, %v3539
      %vm3541 = vweird.f32 %v3426
      %vm3542 = vweird.f32 %v3535
      %vm3543 = vmor %vm3541, %vm3542
      %v3544 = vsel %vm3543, %v3535, %v3540
      %v3545 = vrsqrt.pop %v3427
      %v3546 = vmul.f32 %v3545, %v3427
      %v3547 = vmul.f32 %v3546, %v3545
      %v3548 = vmul.f32 0.5, %v3547
      %v3549 = vsub.f32 1.5, %v3548
      %v3550 = vmul.f32 %v3545, %v3549
      %vm3551 = vweird.f32 %v3427
      %vm3552 = vweird.f32 %v3545
      %vm3553 = vmor %vm3551, %vm3552
      %v3554 = vsel %vm3553, %v3545, %v3550
      %v3555 = vrsqrt.pop %v3428
      %v3556 = vmul.f32 %v3555, %v3428
      %v3557 = vmul.f32 %v3556, %v3555
      %v3558 = vmul.f32 0.5, %v3557
      %v3559 = vsub.f32 1.5, %v3558
      %v3560 = vmul.f32 %v3555, %v3559
      %vm3561 = vweird.f32 %v3428
      %vm3562 = vweird.f32 %v3555
      %vm3563 = vmor %vm3561, %vm3562
      %v3564 = vsel %vm3563, %v3555, %v3560
      %v3565 = vrsqrt.pop %v3429
      %v3566 = vmul.f32 %v3565, %v3429
      %v3567 = vmul.f32 %v3566, %v3565
      %v3568 = vmul.f32 0.5, %v3567
      %v3569 = vsub.f32 1.5, %v3568
      %v3570 = vmul.f32 %v3565, %v3569
      %vm3571 = vweird.f32 %v3429
      %vm3572 = vweird.f32 %v3565
      %vm3573 = vmor %vm3571, %vm3572
      %v3574 = vsel %vm3573, %v3565, %v3570
      %v3575 = vrsqrt.pop %v3430
      %v3576 = vmul.f32 %v3575, %v3430
      %v3577 = vmul.f32 %v3576, %v3575
      %v3578 = vmul.f32 0.5, %v3577
      %v3579 = vsub.f32 1.5, %v3578
      %v3580 = vmul.f32 %v3575, %v3579
      %vm3581 = vweird.f32 %v3430
      %vm3582 = vweird.f32 %v3575
      %vm3583 = vmor %vm3581, %vm3582
      %v3584 = vsel %vm3583, %v3575, %v3580
      %v3585 = vrsqrt.pop %v3431
      %v3586 = vmul.f32 %v3585, %v3431
      %v3587 = vmul.f32 %v3586, %v3585
      %v3588 = vmul.f32 0.5, %v3587
      %v3589 = vsub.f32 1.5, %v3588
      %v3590 = vmul.f32 %v3585, %v3589
      %vm3591 = vweird.f32 %v3431
      %vm3592 = vweird.f32 %v3585
      %vm3593 = vmor %vm3591, %vm3592
      %v3594 = vsel %vm3593, %v3585, %v3590
      %v3595 = vrsqrt.pop %v3432
      %v3596 = vmul.f32 %v3595, %v3432
      %v3597 = vmul.f32 %v3596, %v3595
      %v3598 = vmul.f32 0.5, %v3597
      %v3599 = vsub.f32 1.5, %v3598
      %v3600 = vmul.f32 %v3595, %v3599
      %vm3601 = vweird.f32 %v3432
      %vm3602 = vweird.f32 %v3595
      %vm3603 = vmor %vm3601, %vm3602
      %v3604 = vsel %vm3603, %v3595, %v3600
      %v3605 = vrsqrt.pop %v3433
      %v3606 = vmul.f32 %v3605, %v3433
      %v3607 = vmul.f32 %v3606, %v3605
      %v3608 = vmul.f32 0.5, %v3607
      %v3609 = vsub.f32 1.5, %v3608
      %v3610 = vmul.f32 %v3605, %v3609
      %vm3611 = vweird.f32 %v3433
      %vm3612 = vweird.f32 %v3605
      %vm3613 = vmor %vm3611, %vm3612
      %v3614 = vsel %vm3613, %v3605, %v3610
      %v3615 = vrsqrt.pop %v3434
      %v3616 = vmul.f32 %v3615, %v3434
      %v3617 = vmul.f32 %v3616, %v3615
      %v3618 = vmul.f32 0.5, %v3617
      %v3619 = vsub.f32 1.5, %v3618
      %v3620 = vmul.f32 %v3615, %v3619
      %vm3621 = vweird.f32 %v3434
      %vm3622 = vweird.f32 %v3615
      %vm3623 = vmor %vm3621, %vm3622
      %v3624 = vsel %vm3623, %v3615, %v3620
      %v3625 = vrsqrt.pop %v3435
      %v3626 = vmul.f32 %v3625, %v3435
      %v3627 = vmul.f32 %v3626, %v3625
      %v3628 = vmul.f32 0.5, %v3627
      %v3629 = vsub.f32 1.5, %v3628
      %v3630 = vmul.f32 %v3625, %v3629
      %vm3631 = vweird.f32 %v3435
      %vm3632 = vweird.f32 %v3625
      %vm3633 = vmor %vm3631, %vm3632
      %v3634 = vsel %vm3633, %v3625, %v3630
      %v3635 = vrsqrt.pop %v3436
      %v3636 = vmul.f32 %v3635, %v3436
      %v3637 = vmul.f32 %v3636, %v3635
      %v3638 = vmul.f32 0.5, %v3637
      %v3639 = vsub.f32 1.5, %v3638
      %v3640 = vmul.f32 %v3635, %v3639
      %vm3641 = vweird.f32 %v3436
      %vm3642 = vweird.f32 %v3635
      %vm3643 = vmor %vm3641, %vm3642
      %v3644 = vsel %vm3643, %v3635, %v3640
      %v3645 = vrsqrt.pop %v3437
      %v3646 = vmul.f32 %v3645, %v3437
      %v3647 = vmul.f32 %v3646, %v3645
      %v3648 = vmul.f32 0.5, %v3647
      %v3649 = vsub.f32 1.5, %v3648
      %v3650 = vmul.f32 %v3645, %v3649
      %vm3651 = vweird.f32 %v3437
      %vm3652 = vweird.f32 %v3645
      %vm3653 = vmor %vm3651, %vm3652
      %v3654 = vsel %vm3653, %v3645, %v3650
      %v3655 = vrsqrt.pop %v3438
      %v3656 = vmul.f32 %v3655, %v3438
      %v3657 = vmul.f32 %v3656, %v3655
      %v3658 = vmul.f32 0.5, %v3657
      %v3659 = vsub.f32 1.5, %v3658
      %v3660 = vmul.f32 %v3655, %v3659
      %vm3661 = vweird.f32 %v3438
      %vm3662 = vweird.f32 %v3655
      %vm3663 = vmor %vm3661, %vm3662
      %v3664 = vsel %vm3663, %v3655, %v3660
      %v3665 = vrsqrt.pop %v3439
      %v3666 = vmul.f32 %v3665, %v3439
      %v3667 = vmul.f32 %v3666, %v3665
      %v3668 = vmul.f32 0.5, %v3667
      %v3669 = vsub.f32 1.5, %v3668
      %v3670 = vmul.f32 %v3665, %v3669
      %vm3671 = vweird.f32 %v3439
      %vm3672 = vweird.f32 %v3665
      %vm3673 = vmor %vm3671, %vm3672
      %v3674 = vsel %vm3673, %v3665, %v3670
      %v3675 = vrsqrt.pop %v3440
      %v3676 = vmul.f32 %v3675, %v3440
      %v3677 = vmul.f32 %v3676, %v3675
      %v3678 = vmul.f32 0.5, %v3677
      %v3679 = vsub.f32 1.5, %v3678
      %v3680 = vmul.f32 %v3675, %v3679
      %vm3681 = vweird.f32 %v3440
      %vm3682 = vweird.f32 %v3675
      %vm3683 = vmor %vm3681, %vm3682
      %v3684 = vsel %vm3683, %v3675, %v3680
      %v3685 = vrsqrt.pop %v3441
      %v3686 = vmul.f32 %v3685, %v3441
      %v3687 = vmul.f32 %v3686, %v3685
      %v3688 = vmul.f32 0.5, %v3687
      %v3689 = vsub.f32 1.5, %v3688
      %v3690 = vmul.f32 %v3685, %v3689
      %vm3691 = vweird.f32 %v3441
      %vm3692 = vweird.f32 %v3685
      %vm3693 = vmor %vm3691, %vm3692
      %v3694 = vsel %vm3693, %v3685, %v3690
      %v3695 = vrsqrt.pop %v3442
      %v3696 = vmul.f32 %v3695, %v3442
      %v3697 = vmul.f32 %v3696, %v3695
      %v3698 = vmul.f32 0.5, %v3697
      %v3699 = vsub.f32 1.5, %v3698
      %v3700 = vmul.f32 %v3695, %v3699
      %vm3701 = vweird.f32 %v3442
      %vm3702 = vweird.f32 %v3695
      %vm3703 = vmor %vm3701, %vm3702
      %v3704 = vsel %vm3703, %v3695, %v3700
      %v3705 = vrsqrt.pop %v3443
      %v3706 = vmul.f32 %v3705, %v3443
      %v3707 = vmul.f32 %v3706, %v3705
      %v3708 = vmul.f32 0.5, %v3707
      %v3709 = vsub.f32 1.5, %v3708
      %v3710 = vmul.f32 %v3705, %v3709
      %vm3711 = vweird.f32 %v3443
      %vm3712 = vweird.f32 %v3705
      %vm3713 = vmor %vm3711, %vm3712
      %v3714 = vsel %vm3713, %v3705, %v3710
      %v3715 = vrsqrt.pop %v3444
      %v3716 = vmul.f32 %v3715, %v3444
      %v3717 = vmul.f32 %v3716, %v3715
      %v3718 = vmul.f32 0.5, %v3717
      %v3719 = vsub.f32 1.5, %v3718
      %v3720 = vmul.f32 %v3715, %v3719
      %vm3721 = vweird.f32 %v3444
      %vm3722 = vweird.f32 %v3715
      %vm3723 = vmor %vm3721, %vm3722
      %v3724 = vsel %vm3723, %v3715, %v3720
      %v3725 = vrsqrt.pop %v3445
      %v3726 = vmul.f32 %v3725, %v3445
      %v3727 = vmul.f32 %v3726, %v3725
      %v3728 = vmul.f32 0.5, %v3727
      %v3729 = vsub.f32 1.5, %v3728
      %v3730 = vmul.f32 %v3725, %v3729
      %vm3731 = vweird.f32 %v3445
      %vm3732 = vweird.f32 %v3725
      %vm3733 = vmor %vm3731, %vm3732
      %v3734 = vsel %vm3733, %v3725, %v3730
      %v3735 = vrsqrt.pop %v3446
      %v3736 = vmul.f32 %v3735, %v3446
      %v3737 = vmul.f32 %v3736, %v3735
      %v3738 = vmul.f32 0.5, %v3737
      %v3739 = vsub.f32 1.5, %v3738
      %v3740 = vmul.f32 %v3735, %v3739
      %vm3741 = vweird.f32 %v3446
      %vm3742 = vweird.f32 %v3735
      %vm3743 = vmor %vm3741, %vm3742
      %v3744 = vsel %vm3743, %v3735, %v3740
      %v3745 = vrsqrt.pop %v3447
      %v3746 = vmul.f32 %v3745, %v3447
      %v3747 = vmul.f32 %v3746, %v3745
      %v3748 = vmul.f32 0.5, %v3747
      %v3749 = vsub.f32 1.5, %v3748
      %v3750 = vmul.f32 %v3745, %v3749
      %vm3751 = vweird.f32 %v3447
      %vm3752 = vweird.f32 %v3745
      %vm3753 = vmor %vm3751, %vm3752
      %v3754 = vsel %vm3753, %v3745, %v3750
      %v3755 = vrsqrt.pop %v3448
      %v3756 = vmul.f32 %v3755, %v3448
      %v3757 = vmul.f32 %v3756, %v3755
      %v3758 = vmul.f32 0.5, %v3757
      %v3759 = vsub.f32 1.5, %v3758
      %v3760 = vmul.f32 %v3755, %v3759
      %vm3761 = vweird.f32 %v3448
      %vm3762 = vweird.f32 %v3755
      %vm3763 = vmor %vm3761, %vm3762
      %v3764 = vsel %vm3763, %v3755, %v3760
      %v3765 = vrsqrt.pop %v3449
      %v3766 = vmul.f32 %v3765, %v3449
      %v3767 = vmul.f32 %v3766, %v3765
      %v3768 = vmul.f32 0.5, %v3767
      %v3769 = vsub.f32 1.5, %v3768
      %v3770 = vmul.f32 %v3765, %v3769
      %vm3771 = vweird.f32 %v3449
      %vm3772 = vweird.f32 %v3765
      %vm3773 = vmor %vm3771, %vm3772
      %v3774 = vsel %vm3773, %v3765, %v3770
      %v3775 = vrsqrt.pop %v3450
      %v3776 = vmul.f32 %v3775, %v3450
      %v3777 = vmul.f32 %v3776, %v3775
      %v3778 = vmul.f32 0.5, %v3777
      %v3779 = vsub.f32 1.5, %v3778
      %v3780 = vmul.f32 %v3775, %v3779
      %vm3781 = vweird.f32 %v3450
      %vm3782 = vweird.f32 %v3775
      %vm3783 = vmor %vm3781, %vm3782
      %v3784 = vsel %vm3783, %v3775, %v3780
      %v3785 = vrsqrt.pop %v3451
      %v3786 = vmul.f32 %v3785, %v3451
      %v3787 = vmul.f32 %v3786, %v3785
      %v3788 = vmul.f32 0.5, %v3787
      %v3789 = vsub.f32 1.5, %v3788
      %v3790 = vmul.f32 %v3785, %v3789
      %vm3791 = vweird.f32 %v3451
      %vm3792 = vweird.f32 %v3785
      %vm3793 = vmor %vm3791, %vm3792
      %v3794 = vsel %vm3793, %v3785, %v3790
      %v3795 = vrsqrt.pop %v3452
      %v3796 = vmul.f32 %v3795, %v3452
      %v3797 = vmul.f32 %v3796, %v3795
      %v3798 = vmul.f32 0.5, %v3797
      %v3799 = vsub.f32 1.5, %v3798
      %v3800 = vmul.f32 %v3795, %v3799
      %vm3801 = vweird.f32 %v3452
      %vm3802 = vweird.f32 %v3795
      %vm3803 = vmor %vm3801, %vm3802
      %v3804 = vsel %vm3803, %v3795, %v3800
      %v3805 = vrsqrt.pop %v3453
      %v3806 = vmul.f32 %v3805, %v3453
      %v3807 = vmul.f32 %v3806, %v3805
      %v3808 = vmul.f32 0.5, %v3807
      %v3809 = vsub.f32 1.5, %v3808
      %v3810 = vmul.f32 %v3805, %v3809
      %vm3811 = vweird.f32 %v3453
      %vm3812 = vweird.f32 %v3805
      %vm3813 = vmor %vm3811, %vm3812
      %v3814 = vsel %vm3813, %v3805, %v3810
      %v3815 = vrsqrt.pop %v3454
      %v3816 = vmul.f32 %v3815, %v3454
      %v3817 = vmul.f32 %v3816, %v3815
      %v3818 = vmul.f32 0.5, %v3817
      %v3819 = vsub.f32 1.5, %v3818
      %v3820 = vmul.f32 %v3815, %v3819
      %vm3821 = vweird.f32 %v3454
      %vm3822 = vweird.f32 %v3815
      %vm3823 = vmor %vm3821, %vm3822
      %v3824 = vsel %vm3823, %v3815, %v3820
      %v3825 = vrsqrt.pop %v3455
      %v3826 = vmul.f32 %v3825, %v3455
      %v3827 = vmul.f32 %v3826, %v3825
      %v3828 = vmul.f32 0.5, %v3827
      %v3829 = vsub.f32 1.5, %v3828
      %v3830 = vmul.f32 %v3825, %v3829
      %vm3831 = vweird.f32 %v3455
      %vm3832 = vweird.f32 %v3825
      %vm3833 = vmor %vm3831, %vm3832
      %v3834 = vsel %vm3833, %v3825, %v3830
      %v3835 = vrsqrt.pop %v3456
      %v3836 = vmul.f32 %v3835, %v3456
      %v3837 = vmul.f32 %v3836, %v3835
      %v3838 = vmul.f32 0.5, %v3837
      %v3839 = vsub.f32 1.5, %v3838
      %v3840 = vmul.f32 %v3835, %v3839
      %vm3841 = vweird.f32 %v3456
      %vm3842 = vweird.f32 %v3835
      %vm3843 = vmor %vm3841, %vm3842
      %v3844 = vsel %vm3843, %v3835, %v3840
      %v3845 = vrsqrt.pop %v3457
      %v3846 = vmul.f32 %v3845, %v3457
      %v3847 = vmul.f32 %v3846, %v3845
      %v3848 = vmul.f32 0.5, %v3847
      %v3849 = vsub.f32 1.5, %v3848
      %v3850 = vmul.f32 %v3845, %v3849
      %vm3851 = vweird.f32 %v3457
      %vm3852 = vweird.f32 %v3845
      %vm3853 = vmor %vm3851, %vm3852
      %v3854 = vsel %vm3853, %v3845, %v3850
      %v3855 = vrsqrt.pop %v3458
      %v3856 = vmul.f32 %v3855, %v3458
      %v3857 = vmul.f32 %v3856, %v3855
      %v3858 = vmul.f32 0.5, %v3857
      %v3859 = vsub.f32 1.5, %v3858
      %v3860 = vmul.f32 %v3855, %v3859
      %vm3861 = vweird.f32 %v3458
      %vm3862 = vweird.f32 %v3855
      %vm3863 = vmor %vm3861, %vm3862
      %v3864 = vsel %vm3863, %v3855, %v3860
      %v3865 = vrsqrt.pop %v3459
      %v3866 = vmul.f32 %v3865, %v3459
      %v3867 = vmul.f32 %v3866, %v3865
      %v3868 = vmul.f32 0.5, %v3867
      %v3869 = vsub.f32 1.5, %v3868
      %v3870 = vmul.f32 %v3865, %v3869
      %vm3871 = vweird.f32 %v3459
      %vm3872 = vweird.f32 %v3865
      %vm3873 = vmor %vm3871, %vm3872
      %v3874 = vsel %vm3873, %v3865, %v3870
      %v3875 = vrsqrt.pop %v3460
      %v3876 = vmul.f32 %v3875, %v3460
      %v3877 = vmul.f32 %v3876, %v3875
      %v3878 = vmul.f32 0.5, %v3877
      %v3879 = vsub.f32 1.5, %v3878
      %v3880 = vmul.f32 %v3875, %v3879
      %vm3881 = vweird.f32 %v3460
      %vm3882 = vweird.f32 %v3875
      %vm3883 = vmor %vm3881, %vm3882
      %v3884 = vsel %vm3883, %v3875, %v3880
      %v3885 = vrsqrt.pop %v3461
      %v3886 = vmul.f32 %v3885, %v3461
      %v3887 = vmul.f32 %v3886, %v3885
      %v3888 = vmul.f32 0.5, %v3887
      %v3889 = vsub.f32 1.5, %v3888
      %v3890 = vmul.f32 %v3885, %v3889
      %vm3891 = vweird.f32 %v3461
      %vm3892 = vweird.f32 %v3885
      %vm3893 = vmor %vm3891, %vm3892
      %v3894 = vsel %vm3893, %v3885, %v3890
      %v3895 = vrsqrt.pop %v3462
      %v3896 = vmul.f32 %v3895, %v3462
      %v3897 = vmul.f32 %v3896, %v3895
      %v3898 = vmul.f32 0.5, %v3897
      %v3899 = vsub.f32 1.5, %v3898
      %v3900 = vmul.f32 %v3895, %v3899
      %vm3901 = vweird.f32 %v3462
      %vm3902 = vweird.f32 %v3895
      %vm3903 = vmor %vm3901, %vm3902
      %v3904 = vsel %vm3903, %v3895, %v3900
      %v3905 = vrsqrt.pop %v3463
      %v3906 = vmul.f32 %v3905, %v3463
      %v3907 = vmul.f32 %v3906, %v3905
      %v3908 = vmul.f32 0.5, %v3907
      %v3909 = vsub.f32 1.5, %v3908
      %v3910 = vmul.f32 %v3905, %v3909
      %vm3911 = vweird.f32 %v3463
      %vm3912 = vweird.f32 %v3905
      %vm3913 = vmor %vm3911, %vm3912
      %v3914 = vsel %vm3913, %v3905, %v3910
      %v3915 = vrsqrt.pop %v3464
      %v3916 = vmul.f32 %v3915, %v3464
      %v3917 = vmul.f32 %v3916, %v3915
      %v3918 = vmul.f32 0.5, %v3917
      %v3919 = vsub.f32 1.5, %v3918
      %v3920 = vmul.f32 %v3915, %v3919
      %vm3921 = vweird.f32 %v3464
      %vm3922 = vweird.f32 %v3915
      %vm3923 = vmor %vm3921, %vm3922
      %v3924 = vsel %vm3923, %v3915, %v3920
      %v3925 = vrsqrt.pop %v3465
      %v3926 = vmul.f32 %v3925, %v3465
      %v3927 = vmul.f32 %v3926, %v3925
      %v3928 = vmul.f32 0.5, %v3927
      %v3929 = vsub.f32 1.5, %v3928
      %v3930 = vmul.f32 %v3925, %v3929
      %vm3931 = vweird.f32 %v3465
      %vm3932 = vweird.f32 %v3925
      %vm3933 = vmor %vm3931, %vm3932
      %v3934 = vsel %vm3933, %v3925, %v3930
      %v3935 = vrsqrt.pop %v3466
      %v3936 = vmul.f32 %v3935, %v3466
      %v3937 = vmul.f32 %v3936, %v3935
      %v3938 = vmul.f32 0.5, %v3937
      %v3939 = vsub.f32 1.5, %v3938
      %v3940 = vmul.f32 %v3935, %v3939
      %vm3941 = vweird.f32 %v3466
      %vm3942 = vweird.f32 %v3935
      %vm3943 = vmor %vm3941, %vm3942
      %v3944 = vsel %vm3943, %v3935, %v3940
      %v3945 = vrsqrt.pop %v3467
      %v3946 = vmul.f32 %v3945, %v3467
      %v3947 = vmul.f32 %v3946, %v3945
      %v3948 = vmul.f32 0.5, %v3947
      %v3949 = vsub.f32 1.5, %v3948
      %v3950 = vmul.f32 %v3945, %v3949
      %vm3951 = vweird.f32 %v3467
      %vm3952 = vweird.f32 %v3945
      %vm3953 = vmor %vm3951, %vm3952
      %v3954 = vsel %vm3953, %v3945, %v3950
      %v3955 = vrsqrt.pop %v3468
      %v3956 = vmul.f32 %v3955, %v3468
      %v3957 = vmul.f32 %v3956, %v3955
      %v3958 = vmul.f32 0.5, %v3957
      %v3959 = vsub.f32 1.5, %v3958
      %v3960 = vmul.f32 %v3955, %v3959
      %vm3961 = vweird.f32 %v3468
      %vm3962 = vweird.f32 %v3955
      %vm3963 = vmor %vm3961, %vm3962
      %v3964 = vsel %vm3963, %v3955, %v3960
      %v3965 = vrsqrt.pop %v3469
      %v3966 = vmul.f32 %v3965, %v3469
      %v3967 = vmul.f32 %v3966, %v3965
      %v3968 = vmul.f32 0.5, %v3967
      %v3969 = vsub.f32 1.5, %v3968
      %v3970 = vmul.f32 %v3965, %v3969
      %vm3971 = vweird.f32 %v3469
      %vm3972 = vweird.f32 %v3965
      %vm3973 = vmor %vm3971, %vm3972
      %v3974 = vsel %vm3973, %v3965, %v3970
      %v3975 = vrsqrt.pop %v3470
      %v3976 = vmul.f32 %v3975, %v3470
      %v3977 = vmul.f32 %v3976, %v3975
      %v3978 = vmul.f32 0.5, %v3977
      %v3979 = vsub.f32 1.5, %v3978
      %v3980 = vmul.f32 %v3975, %v3979
      %vm3981 = vweird.f32 %v3470
      %vm3982 = vweird.f32 %v3975
      %vm3983 = vmor %vm3981, %vm3982
      %v3984 = vsel %vm3983, %v3975, %v3980
      %v3985 = vrsqrt.pop %v3471
      %v3986 = vmul.f32 %v3985, %v3471
      %v3987 = vmul.f32 %v3986, %v3985
      %v3988 = vmul.f32 0.5, %v3987
      %v3989 = vsub.f32 1.5, %v3988
      %v3990 = vmul.f32 %v3985, %v3989
      %vm3991 = vweird.f32 %v3471
      %vm3992 = vweird.f32 %v3985
      %vm3993 = vmor %vm3991, %vm3992
      %v3994 = vsel %vm3993, %v3985, %v3990
      %v3995 = vrsqrt.pop %v3472
      %v3996 = vmul.f32 %v3995, %v3472
      %v3997 = vmul.f32 %v3996, %v3995
      %v3998 = vmul.f32 0.5, %v3997
      %v3999 = vsub.f32 1.5, %v3998
      %v4000 = vmul.f32 %v3995, %v3999
      %vm4001 = vweird.f32 %v3472
      %vm4002 = vweird.f32 %v3995
      %vm4003 = vmor %vm4001, %vm4002
      %v4004 = vsel %vm4003, %v3995, %v4000
      %v4005 = vrsqrt.pop %v3473
      %v4006 = vmul.f32 %v4005, %v3473
      %v4007 = vmul.f32 %v4006, %v4005
      %v4008 = vmul.f32 0.5, %v4007
      %v4009 = vsub.f32 1.5, %v4008
      %v4010 = vmul.f32 %v4005, %v4009
      %vm4011 = vweird.f32 %v3473
      %vm4012 = vweird.f32 %v4005
      %vm4013 = vmor %vm4011, %vm4012
      %v4014 = vsel %vm4013, %v4005, %v4010
      %v4015 = vrsqrt.pop %v3474
      %v4016 = vmul.f32 %v4015, %v3474
      %v4017 = vmul.f32 %v4016, %v4015
      %v4018 = vmul.f32 0.5, %v4017
      %v4019 = vsub.f32 1.5, %v4018
      %v4020 = vmul.f32 %v4015, %v4019
      %vm4021 = vweird.f32 %v3474
      %vm4022 = vweird.f32 %v4015
      %vm4023 = vmor %vm4021, %vm4022
      %v4024 = vsel %vm4023, %v4015, %v4020
      %v4025 = vrsqrt.pop %v3475
      %v4026 = vmul.f32 %v4025, %v3475
      %v4027 = vmul.f32 %v4026, %v4025
      %v4028 = vmul.f32 0.5, %v4027
      %v4029 = vsub.f32 1.5, %v4028
      %v4030 = vmul.f32 %v4025, %v4029
      %vm4031 = vweird.f32 %v3475
      %vm4032 = vweird.f32 %v4025
      %vm4033 = vmor %vm4031, %vm4032
      %v4034 = vsel %vm4033, %v4025, %v4030
      %v4035 = vrsqrt.pop %v3476
      %v4036 = vmul.f32 %v4035, %v3476
      %v4037 = vmul.f32 %v4036, %v4035
      %v4038 = vmul.f32 0.5, %v4037
      %v4039 = vsub.f32 1.5, %v4038
      %v4040 = vmul.f32 %v4035, %v4039
      %vm4041 = vweird.f32 %v3476
      %vm4042 = vweird.f32 %v4035
      %vm4043 = vmor %vm4041, %vm4042
      %v4044 = vsel %vm4043, %v4035, %v4040
      %v4045 = vrsqrt.pop %v3477
      %v4046 = vmul.f32 %v4045, %v3477
      %v4047 = vmul.f32 %v4046, %v4045
      %v4048 = vmul.f32 0.5, %v4047
      %v4049 = vsub.f32 1.5, %v4048
      %v4050 = vmul.f32 %v4045, %v4049
      %vm4051 = vweird.f32 %v3477
      %vm4052 = vweird.f32 %v4045
      %vm4053 = vmor %vm4051, %vm4052
      %v4054 = vsel %vm4053, %v4045, %v4050
      %v4055 = vrsqrt.pop %v3478
      %v4056 = vmul.f32 %v4055, %v3478
      %v4057 = vmul.f32 %v4056, %v4055
      %v4058 = vmul.f32 0.5, %v4057
      %v4059 = vsub.f32 1.5, %v4058
      %v4060 = vmul.f32 %v4055, %v4059
      %vm4061 = vweird.f32 %v3478
      %vm4062 = vweird.f32 %v4055
      %vm4063 = vmor %vm4061, %vm4062
      %v4064 = vsel %vm4063, %v4055, %v4060
      %v4065 = vrsqrt.pop %v3479
      %v4066 = vmul.f32 %v4065, %v3479
      %v4067 = vmul.f32 %v4066, %v4065
      %v4068 = vmul.f32 0.5, %v4067
      %v4069 = vsub.f32 1.5, %v4068
      %v4070 = vmul.f32 %v4065, %v4069
      %vm4071 = vweird.f32 %v3479
      %vm4072 = vweird.f32 %v4065
      %vm4073 = vmor %vm4071, %vm4072
      %v4074 = vsel %vm4073, %v4065, %v4070
      %v4075 = vrsqrt.pop %v3480
      %v4076 = vmul.f32 %v4075, %v3480
      %v4077 = vmul.f32 %v4076, %v4075
      %v4078 = vmul.f32 0.5, %v4077
      %v4079 = vsub.f32 1.5, %v4078
      %v4080 = vmul.f32 %v4075, %v4079
      %vm4081 = vweird.f32 %v3480
      %vm4082 = vweird.f32 %v4075
      %vm4083 = vmor %vm4081, %vm4082
      %v4084 = vsel %vm4083, %v4075, %v4080
      %v4085 = vrsqrt.pop %v3481
      %v4086 = vmul.f32 %v4085, %v3481
      %v4087 = vmul.f32 %v4086, %v4085
      %v4088 = vmul.f32 0.5, %v4087
      %v4089 = vsub.f32 1.5, %v4088
      %v4090 = vmul.f32 %v4085, %v4089
      %vm4091 = vweird.f32 %v3481
      %vm4092 = vweird.f32 %v4085
      %vm4093 = vmor %vm4091, %vm4092
      %v4094 = vsel %vm4093, %v4085, %v4090
      %v4095 = vrsqrt.pop %v3482
      %v4096 = vmul.f32 %v4095, %v3482
      %v4097 = vmul.f32 %v4096, %v4095
      %v4098 = vmul.f32 0.5, %v4097
      %v4099 = vsub.f32 1.5, %v4098
      %v4100 = vmul.f32 %v4095, %v4099
      %vm4101 = vweird.f32 %v3482
      %vm4102 = vweird.f32 %v4095
      %vm4103 = vmor %vm4101, %vm4102
      %v4104 = vsel %vm4103, %v4095, %v4100
      %v4105 = vrsqrt.pop %v3483
      %v4106 = vmul.f32 %v4105, %v3483
      %v4107 = vmul.f32 %v4106, %v4105
      %v4108 = vmul.f32 0.5, %v4107
      %v4109 = vsub.f32 1.5, %v4108
      %v4110 = vmul.f32 %v4105, %v4109
      %vm4111 = vweird.f32 %v3483
      %vm4112 = vweird.f32 %v4105
      %vm4113 = vmor %vm4111, %vm4112
      %v4114 = vsel %vm4113, %v4105, %v4110
      %v4115 = vrsqrt.pop %v3484
      %v4116 = vmul.f32 %v4115, %v3484
      %v4117 = vmul.f32 %v4116, %v4115
      %v4118 = vmul.f32 0.5, %v4117
      %v4119 = vsub.f32 1.5, %v4118
      %v4120 = vmul.f32 %v4115, %v4119
      %vm4121 = vweird.f32 %v3484
      %vm4122 = vweird.f32 %v4115
      %vm4123 = vmor %vm4121, %vm4122
      %v4124 = vsel %vm4123, %v4115, %v4120
      %v4125 = vmul.f32 %v3357, %v3494
      %v4126 = vmul.f32 %v3358, %v3504
      %v4127 = vmul.f32 %v3359, %v3514
      %v4128 = vmul.f32 %v3360, %v3524
      %v4129 = vmul.f32 %v3361, %v3534
      %v4130 = vmul.f32 %v3362, %v3544
      %v4131 = vmul.f32 %v3363, %v3554
      %v4132 = vmul.f32 %v3364, %v3564
      %v4133 = vmul.f32 %v3365, %v3574
      %v4134 = vmul.f32 %v3366, %v3584
      %v4135 = vmul.f32 %v3367, %v3594
      %v4136 = vmul.f32 %v3368, %v3604
      %v4137 = vmul.f32 %v3369, %v3614
      %v4138 = vmul.f32 %v3370, %v3624
      %v4139 = vmul.f32 %v3371, %v3634
      %v4140 = vmul.f32 %v3372, %v3644
      %v4141 = vmul.f32 %v3373, %v3654
      %v4142 = vmul.f32 %v3374, %v3664
      %v4143 = vmul.f32 %v3375, %v3674
      %v4144 = vmul.f32 %v3376, %v3684
      %v4145 = vmul.f32 %v3377, %v3694
      %v4146 = vmul.f32 %v3378, %v3704
      %v4147 = vmul.f32 %v3379, %v3714
      %v4148 = vmul.f32 %v3380, %v3724
      %v4149 = vmul.f32 %v3381, %v3734
      %v4150 = vmul.f32 %v3382, %v3744
      %v4151 = vmul.f32 %v3383, %v3754
      %v4152 = vmul.f32 %v3384, %v3764
      %v4153 = vmul.f32 %v3385, %v3774
      %v4154 = vmul.f32 %v3386, %v3784
      %v4155 = vmul.f32 %v3387, %v3794
      %v4156 = vmul.f32 %v3388, %v3804
      %v4157 = vmul.f32 %v3389, %v3814
      %v4158 = vmul.f32 %v3390, %v3824
      %v4159 = vmul.f32 %v3391, %v3834
      %v4160 = vmul.f32 %v3392, %v3844
      %v4161 = vmul.f32 %v3393, %v3854
      %v4162 = vmul.f32 %v3394, %v3864
      %v4163 = vmul.f32 %v3395, %v3874
      %v4164 = vmul.f32 %v3396, %v3884
      %v4165 = vmul.f32 %v3397, %v3894
      %v4166 = vmul.f32 %v3398, %v3904
      %v4167 = vmul.f32 %v3399, %v3914
      %v4168 = vmul.f32 %v3400, %v3924
      %v4169 = vmul.f32 %v3401, %v3934
      %v4170 = vmul.f32 %v3402, %v3944
      %v4171 = vmul.f32 %v3403, %v3954
      %v4172 = vmul.f32 %v3404, %v3964
      %v4173 = vmul.f32 %v3405, %v3974
      %v4174 = vmul.f32 %v3406, %v3984
      %v4175 = vmul.f32 %v3407, %v3994
      %v4176 = vmul.f32 %v3408, %v4004
      %v4177 = vmul.f32 %v3409, %v4014
      %v4178 = vmul.f32 %v3410, %v4024
      %v4179 = vmul.f32 %v3411, %v4034
      %v4180 = vmul.f32 %v3412, %v4044
      %v4181 = vmul.f32 %v3413, %v4054
      %v4182 = vmul.f32 %v3414, %v4064
      %v4183 = vmul.f32 %v3415, %v4074
      %v4184 = vmul.f32 %v3416, %v4084
      %v4185 = vmul.f32 %v3417, %v4094
      %v4186 = vmul.f32 %v3418, %v4104
      %v4187 = vmul.f32 %v3419, %v4114
      %v4188 = vmul.f32 %v3420, %v4124
      %v4189 = vmax.f32 %v4125, 0.0
      %v4190 = vmax.f32 %v4126, 0.0
      %v4191 = vmax.f32 %v4127, 0.0
      %v4192 = vmax.f32 %v4128, 0.0
      %v4193 = vmax.f32 %v4129, 0.0
      %v4194 = vmax.f32 %v4130, 0.0
      %v4195 = vmax.f32 %v4131, 0.0
      %v4196 = vmax.f32 %v4132, 0.0
      %v4197 = vmax.f32 %v4133, 0.0
      %v4198 = vmax.f32 %v4134, 0.0
      %v4199 = vmax.f32 %v4135, 0.0
      %v4200 = vmax.f32 %v4136, 0.0
      %v4201 = vmax.f32 %v4137, 0.0
      %v4202 = vmax.f32 %v4138, 0.0
      %v4203 = vmax.f32 %v4139, 0.0
      %v4204 = vmax.f32 %v4140, 0.0
      %v4205 = vmax.f32 %v4141, 0.0
      %v4206 = vmax.f32 %v4142, 0.0
      %v4207 = vmax.f32 %v4143, 0.0
      %v4208 = vmax.f32 %v4144, 0.0
      %v4209 = vmax.f32 %v4145, 0.0
      %v4210 = vmax.f32 %v4146, 0.0
      %v4211 = vmax.f32 %v4147, 0.0
      %v4212 = vmax.f32 %v4148, 0.0
      %v4213 = vmax.f32 %v4149, 0.0
      %v4214 = vmax.f32 %v4150, 0.0
      %v4215 = vmax.f32 %v4151, 0.0
      %v4216 = vmax.f32 %v4152, 0.0
      %v4217 = vmax.f32 %v4153, 0.0
      %v4218 = vmax.f32 %v4154, 0.0
      %v4219 = vmax.f32 %v4155, 0.0
      %v4220 = vmax.f32 %v4156, 0.0
      %v4221 = vmax.f32 %v4157, 0.0
      %v4222 = vmax.f32 %v4158, 0.0
      %v4223 = vmax.f32 %v4159, 0.0
      %v4224 = vmax.f32 %v4160, 0.0
      %v4225 = vmax.f32 %v4161, 0.0
      %v4226 = vmax.f32 %v4162, 0.0
      %v4227 = vmax.f32 %v4163, 0.0
      %v4228 = vmax.f32 %v4164, 0.0
      %v4229 = vmax.f32 %v4165, 0.0
      %v4230 = vmax.f32 %v4166, 0.0
      %v4231 = vmax.f32 %v4167, 0.0
      %v4232 = vmax.f32 %v4168, 0.0
      %v4233 = vmax.f32 %v4169, 0.0
      %v4234 = vmax.f32 %v4170, 0.0
      %v4235 = vmax.f32 %v4171, 0.0
      %v4236 = vmax.f32 %v4172, 0.0
      %v4237 = vmax.f32 %v4173, 0.0
      %v4238 = vmax.f32 %v4174, 0.0
      %v4239 = vmax.f32 %v4175, 0.0
      %v4240 = vmax.f32 %v4176, 0.0
      %v4241 = vmax.f32 %v4177, 0.0
      %v4242 = vmax.f32 %v4178, 0.0
      %v4243 = vmax.f32 %v4179, 0.0
      %v4244 = vmax.f32 %v4180, 0.0
      %v4245 = vmax.f32 %v4181, 0.0
      %v4246 = vmax.f32 %v4182, 0.0
      %v4247 = vmax.f32 %v4183, 0.0
      %v4248 = vmax.f32 %v4184, 0.0
      %v4249 = vmax.f32 %v4185, 0.0
      %v4250 = vmax.f32 %v4186, 0.0
      %v4251 = vmax.f32 %v4187, 0.0
      %v4252 = vmax.f32 %v4188, 0.0
      %v4253 = vld [vmem:[%s3] sm:$0xff]
      %v4254 = vld [vmem:[%s3 + $0x8] sm:$0xff]
      %v4255 = vld [vmem:[%s3 + $0x10] sm:$0xff]
      %v4256 = vld [vmem:[%s3 + $0x18] sm:$0xff]
      %v4257 = vld [vmem:[%s3 + $0x20] sm:$0xff]
      %v4258 = vld [vmem:[%s3 + $0x28] sm:$0xff]
      %v4259 = vld [vmem:[%s3 + $0x30] sm:$0xff]
      %v4260 = vld [vmem:[%s3 + $0x38] sm:$0xff]
      %v4261 = vld [vmem:[%s3 + $0x40] sm:$0xff]
      %v4262 = vld [vmem:[%s3 + $0x48] sm:$0xff]
      %v4263 = vld [vmem:[%s3 + $0x50] sm:$0xff]
      %v4264 = vld [vmem:[%s3 + $0x58] sm:$0xff]
      %v4265 = vld [vmem:[%s3 + $0x60] sm:$0xff]
      %v4266 = vld [vmem:[%s3 + $0x68] sm:$0xff]
      %v4267 = vld [vmem:[%s3 + $0x70] sm:$0xff]
      %v4268 = vld [vmem:[%s3 + $0x78] sm:$0xff]
      %v4269 = vld [vmem:[%s7] sm:$0x1]
      %v4271 = vperm.slane %v4269, 0
      %4273 = vmatpush.msra.mxu0 %v4268
      %4274 = vmatpush.msra.mxu0 %v4267
      %4275 = vmatpush.msra.mxu0 %v4266
      %4276 = vmatpush.msra.mxu0 %v4265
      %4277 = vmatpush.msra.mxu0 %v4264
      %4278 = vmatpush.msra.mxu0 %v4263
      %4279 = vmatpush.msra.mxu0 %v4262
      %4280 = vmatpush.msra.mxu0 %v4261
      %4281 = vmatpush.msra.mxu0 %v4260
      %4282 = vmatpush.msra.mxu0 %v4259
      %4283 = vmatpush.msra.mxu0 %v4258
      %4284 = vmatpush.msra.mxu0 %v4257
      %4285 = vmatpush.msra.mxu0 %v4256
      %4286 = vmatpush.msra.mxu0 %v4255
      %4287 = vmatpush.msra.mxu0 %v4254
      %4288 = vmatpush.msra.mxu0 %v4253
      %4289 = vmatmul.f32.gmra.mxu0 %v4189
      %v4290 = vpop.f32.mrf.mxu0
      %v4291 = vadd.f32 %v4271, %v4290
      %4292 = vmatmul.f32.gmra.mxu0 %v4190
      %v4293 = vpop.f32.mrf.mxu0
      %v4294 = vadd.f32 %v4271, %v4293
      %4295 = vmatmul.f32.gmra.mxu0 %v4191
      %v4296 = vpop.f32.mrf.mxu0
      %v4297 = vadd.f32 %v4271, %v4296
      %4298 = vmatmul.f32.gmra.mxu0 %v4192
      %v4299 = vpop.f32.mrf.mxu0
      %v4300 = vadd.f32 %v4271, %v4299
      %4301 = vmatmul.f32.gmra.mxu0 %v4193
      %v4302 = vpop.f32.mrf.mxu0
      %v4303 = vadd.f32 %v4271, %v4302
      %4304 = vmatmul.f32.gmra.mxu0 %v4194
      %v4305 = vpop.f32.mrf.mxu0
      %v4306 = vadd.f32 %v4271, %v4305
      %4307 = vmatmul.f32.gmra.mxu0 %v4195
      %v4308 = vpop.f32.mrf.mxu0
      %v4309 = vadd.f32 %v4271, %v4308
      %4310 = vmatmul.f32.gmra.mxu0 %v4196
      %v4311 = vpop.f32.mrf.mxu0
      %v4312 = vadd.f32 %v4271, %v4311
      %4313 = vmatmul.f32.gmra.mxu0 %v4197
      %v4314 = vpop.f32.mrf.mxu0
      %v4315 = vadd.f32 %v4271, %v4314
      %4316 = vmatmul.f32.gmra.mxu0 %v4198
      %v4317 = vpop.f32.mrf.mxu0
      %v4318 = vadd.f32 %v4271, %v4317
      %4319 = vmatmul.f32.gmra.mxu0 %v4199
      %v4320 = vpop.f32.mrf.mxu0
      %v4321 = vadd.f32 %v4271, %v4320
      %4322 = vmatmul.f32.gmra.mxu0 %v4200
      %v4323 = vpop.f32.mrf.mxu0
      %v4324 = vadd.f32 %v4271, %v4323
      %4325 = vmatmul.f32.gmra.mxu0 %v4201
      %v4326 = vpop.f32.mrf.mxu0
      %v4327 = vadd.f32 %v4271, %v4326
      %4328 = vmatmul.f32.gmra.mxu0 %v4202
      %v4329 = vpop.f32.mrf.mxu0
      %v4330 = vadd.f32 %v4271, %v4329
      %4331 = vmatmul.f32.gmra.mxu0 %v4203
      %v4332 = vpop.f32.mrf.mxu0
      %v4333 = vadd.f32 %v4271, %v4332
      %4334 = vmatmul.f32.gmra.mxu0 %v4204
      %v4335 = vpop.f32.mrf.mxu0
      %v4336 = vadd.f32 %v4271, %v4335
      %4337 = vmatmul.f32.gmra.mxu0 %v4205
      %v4338 = vpop.f32.mrf.mxu0
      %v4339 = vadd.f32 %v4271, %v4338
      %4340 = vmatmul.f32.gmra.mxu0 %v4206
      %v4341 = vpop.f32.mrf.mxu0
      %v4342 = vadd.f32 %v4271, %v4341
      %4343 = vmatmul.f32.gmra.mxu0 %v4207
      %v4344 = vpop.f32.mrf.mxu0
      %v4345 = vadd.f32 %v4271, %v4344
      %4346 = vmatmul.f32.gmra.mxu0 %v4208
      %v4347 = vpop.f32.mrf.mxu0
      %v4348 = vadd.f32 %v4271, %v4347
      %4349 = vmatmul.f32.gmra.mxu0 %v4209
      %v4350 = vpop.f32.mrf.mxu0
      %v4351 = vadd.f32 %v4271, %v4350
      %4352 = vmatmul.f32.gmra.mxu0 %v4210
      %v4353 = vpop.f32.mrf.mxu0
      %v4354 = vadd.f32 %v4271, %v4353
      %4355 = vmatmul.f32.gmra.mxu0 %v4211
      %v4356 = vpop.f32.mrf.mxu0
      %v4357 = vadd.f32 %v4271, %v4356
      %4358 = vmatmul.f32.gmra.mxu0 %v4212
      %v4359 = vpop.f32.mrf.mxu0
      %v4360 = vadd.f32 %v4271, %v4359
      %4361 = vmatmul.f32.gmra.mxu0 %v4213
      %v4362 = vpop.f32.mrf.mxu0
      %v4363 = vadd.f32 %v4271, %v4362
      %4364 = vmatmul.f32.gmra.mxu0 %v4214
      %v4365 = vpop.f32.mrf.mxu0
      %v4366 = vadd.f32 %v4271, %v4365
      %4367 = vmatmul.f32.gmra.mxu0 %v4215
      %v4368 = vpop.f32.mrf.mxu0
      %v4369 = vadd.f32 %v4271, %v4368
      %4370 = vmatmul.f32.gmra.mxu0 %v4216
      %v4371 = vpop.f32.mrf.mxu0
      %v4372 = vadd.f32 %v4271, %v4371
      %4373 = vmatmul.f32.gmra.mxu0 %v4217
      %v4374 = vpop.f32.mrf.mxu0
      %v4375 = vadd.f32 %v4271, %v4374
      %4376 = vmatmul.f32.gmra.mxu0 %v4218
      %v4377 = vpop.f32.mrf.mxu0
      %v4378 = vadd.f32 %v4271, %v4377
      %4379 = vmatmul.f32.gmra.mxu0 %v4219
      %v4380 = vpop.f32.mrf.mxu0
      %v4381 = vadd.f32 %v4271, %v4380
      %4382 = vmatmul.f32.gmra.mxu0 %v4220
      %v4383 = vpop.f32.mrf.mxu0
      %v4384 = vadd.f32 %v4271, %v4383
      %4385 = vmatmul.f32.gmra.mxu0 %v4221
      %v4386 = vpop.f32.mrf.mxu0
      %v4387 = vadd.f32 %v4271, %v4386
      %4388 = vmatmul.f32.gmra.mxu0 %v4222
      %v4389 = vpop.f32.mrf.mxu0
      %v4390 = vadd.f32 %v4271, %v4389
      %4391 = vmatmul.f32.gmra.mxu0 %v4223
      %v4392 = vpop.f32.mrf.mxu0
      %v4393 = vadd.f32 %v4271, %v4392
      %4394 = vmatmul.f32.gmra.mxu0 %v4224
      %v4395 = vpop.f32.mrf.mxu0
      %v4396 = vadd.f32 %v4271, %v4395
      %4397 = vmatmul.f32.gmra.mxu0 %v4225
      %v4398 = vpop.f32.mrf.mxu0
      %v4399 = vadd.f32 %v4271, %v4398
      %4400 = vmatmul.f32.gmra.mxu0 %v4226
      %v4401 = vpop.f32.mrf.mxu0
      %v4402 = vadd.f32 %v4271, %v4401
      %4403 = vmatmul.f32.gmra.mxu0 %v4227
      %v4404 = vpop.f32.mrf.mxu0
      %v4405 = vadd.f32 %v4271, %v4404
      %4406 = vmatmul.f32.gmra.mxu0 %v4228
      %v4407 = vpop.f32.mrf.mxu0
      %v4408 = vadd.f32 %v4271, %v4407
      %4409 = vmatmul.f32.gmra.mxu0 %v4229
      %v4410 = vpop.f32.mrf.mxu0
      %v4411 = vadd.f32 %v4271, %v4410
      %4412 = vmatmul.f32.gmra.mxu0 %v4230
      %v4413 = vpop.f32.mrf.mxu0
      %v4414 = vadd.f32 %v4271, %v4413
      %4415 = vmatmul.f32.gmra.mxu0 %v4231
      %v4416 = vpop.f32.mrf.mxu0
      %v4417 = vadd.f32 %v4271, %v4416
      %4418 = vmatmul.f32.gmra.mxu0 %v4232
      %v4419 = vpop.f32.mrf.mxu0
      %v4420 = vadd.f32 %v4271, %v4419
      %4421 = vmatmul.f32.gmra.mxu0 %v4233
      %v4422 = vpop.f32.mrf.mxu0
      %v4423 = vadd.f32 %v4271, %v4422
      %4424 = vmatmul.f32.gmra.mxu0 %v4234
      %v4425 = vpop.f32.mrf.mxu0
      %v4426 = vadd.f32 %v4271, %v4425
      %4427 = vmatmul.f32.gmra.mxu0 %v4235
      %v4428 = vpop.f32.mrf.mxu0
      %v4429 = vadd.f32 %v4271, %v4428
      %4430 = vmatmul.f32.gmra.mxu0 %v4236
      %v4431 = vpop.f32.mrf.mxu0
      %v4432 = vadd.f32 %v4271, %v4431
      %4433 = vmatmul.f32.gmra.mxu0 %v4237
      %v4434 = vpop.f32.mrf.mxu0
      %v4435 = vadd.f32 %v4271, %v4434
      %4436 = vmatmul.f32.gmra.mxu0 %v4238
      %v4437 = vpop.f32.mrf.mxu0
      %v4438 = vadd.f32 %v4271, %v4437
      %4439 = vmatmul.f32.gmra.mxu0 %v4239
      %v4440 = vpop.f32.mrf.mxu0
      %v4441 = vadd.f32 %v4271, %v4440
      %4442 = vmatmul.f32.gmra.mxu0 %v4240
      %v4443 = vpop.f32.mrf.mxu0
      %v4444 = vadd.f32 %v4271, %v4443
      %4445 = vmatmul.f32.gmra.mxu0 %v4241
      %v4446 = vpop.f32.mrf.mxu0
      %v4447 = vadd.f32 %v4271, %v4446
      %4448 = vmatmul.f32.gmra.mxu0 %v4242
      %v4449 = vpop.f32.mrf.mxu0
      %v4450 = vadd.f32 %v4271, %v4449
      %4451 = vmatmul.f32.gmra.mxu0 %v4243
      %v4452 = vpop.f32.mrf.mxu0
      %v4453 = vadd.f32 %v4271, %v4452
      %4454 = vmatmul.f32.gmra.mxu0 %v4244
      %v4455 = vpop.f32.mrf.mxu0
      %v4456 = vadd.f32 %v4271, %v4455
      %4457 = vmatmul.f32.gmra.mxu0 %v4245
      %v4458 = vpop.f32.mrf.mxu0
      %v4459 = vadd.f32 %v4271, %v4458
      %4460 = vmatmul.f32.gmra.mxu0 %v4246
      %v4461 = vpop.f32.mrf.mxu0
      %v4462 = vadd.f32 %v4271, %v4461
      %4463 = vmatmul.f32.gmra.mxu0 %v4247
      %v4464 = vpop.f32.mrf.mxu0
      %v4465 = vadd.f32 %v4271, %v4464
      %4466 = vmatmul.f32.gmra.mxu0 %v4248
      %v4467 = vpop.f32.mrf.mxu0
      %v4468 = vadd.f32 %v4271, %v4467
      %4469 = vmatmul.f32.gmra.mxu0 %v4249
      %v4470 = vpop.f32.mrf.mxu0
      %v4471 = vadd.f32 %v4271, %v4470
      %4472 = vmatmul.f32.gmra.mxu0 %v4250
      %v4473 = vpop.f32.mrf.mxu0
      %v4474 = vadd.f32 %v4271, %v4473
      %4475 = vmatmul.f32.gmra.mxu0 %v4251
      %v4476 = vpop.f32.mrf.mxu0
      %v4477 = vadd.f32 %v4271, %v4476
      %4478 = vmatmul.f32.gmra.mxu0 %v4252
      %v4479 = vpop.f32.mrf.mxu0
      %v4480 = vadd.f32 %v4271, %v4479
      %4481 = vdwg.mxu0
      %4482 = vmatpush.msra.mxu0 %v883
      %4483 = vmatpush.msra.mxu0 %v882
      %4484 = vmatpush.msra.mxu0 %v881
      %4485 = vmatpush.msra.mxu0 %v880
      %4486 = vmatpush.msra.mxu0 %v879
      %4487 = vmatpush.msra.mxu0 %v878
      %4488 = vmatpush.msra.mxu0 %v877
      %4489 = vmatpush.msra.mxu0 %v876
      %4490 = vmatpush.msra.mxu0 %v875
      %4491 = vmatpush.msra.mxu0 %v874
      %4492 = vmatpush.msra.mxu0 %v873
      %4493 = vmatpush.msra.mxu0 %v872
      %4494 = vmatpush.msra.mxu0 %v871
      %4495 = vmatpush.msra.mxu0 %v870
      %4496 = vmatpush.msra.mxu0 %v869
      %4497 = vmatpush.msra.mxu0 %v868
      %4498 = vmatmul.f32.gmra.mxu0 %v4291
      %v4499 = vpop.f32.mrf.mxu0
      %v4500 = vadd.f32 0.0, %v4499
      %4501 = vmatmul.f32.gmra.mxu0 %v4294
      %v4502 = vpop.f32.mrf.mxu0
      %v4503 = vadd.f32 0.0, %v4502
      %4504 = vmatmul.f32.gmra.mxu0 %v4297
      %v4505 = vpop.f32.mrf.mxu0
      %v4506 = vadd.f32 0.0, %v4505
      %4507 = vmatmul.f32.gmra.mxu0 %v4300
      %v4508 = vpop.f32.mrf.mxu0
      %v4509 = vadd.f32 0.0, %v4508
      %4510 = vmatmul.f32.gmra.mxu0 %v4303
      %v4511 = vpop.f32.mrf.mxu0
      %v4512 = vadd.f32 0.0, %v4511
      %4513 = vmatmul.f32.gmra.mxu0 %v4306
      %v4514 = vpop.f32.mrf.mxu0
      %v4515 = vadd.f32 0.0, %v4514
      %4516 = vmatmul.f32.gmra.mxu0 %v4309
      %v4517 = vpop.f32.mrf.mxu0
      %v4518 = vadd.f32 0.0, %v4517
      %4519 = vmatmul.f32.gmra.mxu0 %v4312
      %v4520 = vpop.f32.mrf.mxu0
      %v4521 = vadd.f32 0.0, %v4520
      %4522 = vmatmul.f32.gmra.mxu0 %v4315
      %v4523 = vpop.f32.mrf.mxu0
      %v4524 = vadd.f32 0.0, %v4523
      %4525 = vmatmul.f32.gmra.mxu0 %v4318
      %v4526 = vpop.f32.mrf.mxu0
      %v4527 = vadd.f32 0.0, %v4526
      %4528 = vmatmul.f32.gmra.mxu0 %v4321
      %v4529 = vpop.f32.mrf.mxu0
      %v4530 = vadd.f32 0.0, %v4529
      %4531 = vmatmul.f32.gmra.mxu0 %v4324
      %v4532 = vpop.f32.mrf.mxu0
      %v4533 = vadd.f32 0.0, %v4532
      %4534 = vmatmul.f32.gmra.mxu0 %v4327
      %v4535 = vpop.f32.mrf.mxu0
      %v4536 = vadd.f32 0.0, %v4535
      %4537 = vmatmul.f32.gmra.mxu0 %v4330
      %v4538 = vpop.f32.mrf.mxu0
      %v4539 = vadd.f32 0.0, %v4538
      %4540 = vmatmul.f32.gmra.mxu0 %v4333
      %v4541 = vpop.f32.mrf.mxu0
      %v4542 = vadd.f32 0.0, %v4541
      %4543 = vmatmul.f32.gmra.mxu0 %v4336
      %v4544 = vpop.f32.mrf.mxu0
      %v4545 = vadd.f32 0.0, %v4544
      %4546 = vmatmul.f32.gmra.mxu0 %v4339
      %v4547 = vpop.f32.mrf.mxu0
      %v4548 = vadd.f32 0.0, %v4547
      %4549 = vmatmul.f32.gmra.mxu0 %v4342
      %v4550 = vpop.f32.mrf.mxu0
      %v4551 = vadd.f32 0.0, %v4550
      %4552 = vmatmul.f32.gmra.mxu0 %v4345
      %v4553 = vpop.f32.mrf.mxu0
      %v4554 = vadd.f32 0.0, %v4553
      %4555 = vmatmul.f32.gmra.mxu0 %v4348
      %v4556 = vpop.f32.mrf.mxu0
      %v4557 = vadd.f32 0.0, %v4556
      %4558 = vmatmul.f32.gmra.mxu0 %v4351
      %v4559 = vpop.f32.mrf.mxu0
      %v4560 = vadd.f32 0.0, %v4559
      %4561 = vmatmul.f32.gmra.mxu0 %v4354
      %v4562 = vpop.f32.mrf.mxu0
      %v4563 = vadd.f32 0.0, %v4562
      %4564 = vmatmul.f32.gmra.mxu0 %v4357
      %v4565 = vpop.f32.mrf.mxu0
      %v4566 = vadd.f32 0.0, %v4565
      %4567 = vmatmul.f32.gmra.mxu0 %v4360
      %v4568 = vpop.f32.mrf.mxu0
      %v4569 = vadd.f32 0.0, %v4568
      %4570 = vmatmul.f32.gmra.mxu0 %v4363
      %v4571 = vpop.f32.mrf.mxu0
      %v4572 = vadd.f32 0.0, %v4571
      %4573 = vmatmul.f32.gmra.mxu0 %v4366
      %v4574 = vpop.f32.mrf.mxu0
      %v4575 = vadd.f32 0.0, %v4574
      %4576 = vmatmul.f32.gmra.mxu0 %v4369
      %v4577 = vpop.f32.mrf.mxu0
      %v4578 = vadd.f32 0.0, %v4577
      %4579 = vmatmul.f32.gmra.mxu0 %v4372
      %v4580 = vpop.f32.mrf.mxu0
      %v4581 = vadd.f32 0.0, %v4580
      %4582 = vmatmul.f32.gmra.mxu0 %v4375
      %v4583 = vpop.f32.mrf.mxu0
      %v4584 = vadd.f32 0.0, %v4583
      %4585 = vmatmul.f32.gmra.mxu0 %v4378
      %v4586 = vpop.f32.mrf.mxu0
      %v4587 = vadd.f32 0.0, %v4586
      %4588 = vmatmul.f32.gmra.mxu0 %v4381
      %v4589 = vpop.f32.mrf.mxu0
      %v4590 = vadd.f32 0.0, %v4589
      %4591 = vmatmul.f32.gmra.mxu0 %v4384
      %v4592 = vpop.f32.mrf.mxu0
      %v4593 = vadd.f32 0.0, %v4592
      %4594 = vmatmul.f32.gmra.mxu0 %v4387
      %v4595 = vpop.f32.mrf.mxu0
      %v4596 = vadd.f32 0.0, %v4595
      %4597 = vmatmul.f32.gmra.mxu0 %v4390
      %v4598 = vpop.f32.mrf.mxu0
      %v4599 = vadd.f32 0.0, %v4598
      %4600 = vmatmul.f32.gmra.mxu0 %v4393
      %v4601 = vpop.f32.mrf.mxu0
      %v4602 = vadd.f32 0.0, %v4601
      %4603 = vmatmul.f32.gmra.mxu0 %v4396
      %v4604 = vpop.f32.mrf.mxu0
      %v4605 = vadd.f32 0.0, %v4604
      %4606 = vmatmul.f32.gmra.mxu0 %v4399
      %v4607 = vpop.f32.mrf.mxu0
      %v4608 = vadd.f32 0.0, %v4607
      %4609 = vmatmul.f32.gmra.mxu0 %v4402
      %v4610 = vpop.f32.mrf.mxu0
      %v4611 = vadd.f32 0.0, %v4610
      %4612 = vmatmul.f32.gmra.mxu0 %v4405
      %v4613 = vpop.f32.mrf.mxu0
      %v4614 = vadd.f32 0.0, %v4613
      %4615 = vmatmul.f32.gmra.mxu0 %v4408
      %v4616 = vpop.f32.mrf.mxu0
      %v4617 = vadd.f32 0.0, %v4616
      %4618 = vmatmul.f32.gmra.mxu0 %v4411
      %v4619 = vpop.f32.mrf.mxu0
      %v4620 = vadd.f32 0.0, %v4619
      %4621 = vmatmul.f32.gmra.mxu0 %v4414
      %v4622 = vpop.f32.mrf.mxu0
      %v4623 = vadd.f32 0.0, %v4622
      %4624 = vmatmul.f32.gmra.mxu0 %v4417
      %v4625 = vpop.f32.mrf.mxu0
      %v4626 = vadd.f32 0.0, %v4625
      %4627 = vmatmul.f32.gmra.mxu0 %v4420
      %v4628 = vpop.f32.mrf.mxu0
      %v4629 = vadd.f32 0.0, %v4628
      %4630 = vmatmul.f32.gmra.mxu0 %v4423
      %v4631 = vpop.f32.mrf.mxu0
      %v4632 = vadd.f32 0.0, %v4631
      %4633 = vmatmul.f32.gmra.mxu0 %v4426
      %v4634 = vpop.f32.mrf.mxu0
      %v4635 = vadd.f32 0.0, %v4634
      %4636 = vmatmul.f32.gmra.mxu0 %v4429
      %v4637 = vpop.f32.mrf.mxu0
      %v4638 = vadd.f32 0.0, %v4637
      %4639 = vmatmul.f32.gmra.mxu0 %v4432
      %v4640 = vpop.f32.mrf.mxu0
      %v4641 = vadd.f32 0.0, %v4640
      %4642 = vmatmul.f32.gmra.mxu0 %v4435
      %v4643 = vpop.f32.mrf.mxu0
      %v4644 = vadd.f32 0.0, %v4643
      %4645 = vmatmul.f32.gmra.mxu0 %v4438
      %v4646 = vpop.f32.mrf.mxu0
      %v4647 = vadd.f32 0.0, %v4646
      %4648 = vmatmul.f32.gmra.mxu0 %v4441
      %v4649 = vpop.f32.mrf.mxu0
      %v4650 = vadd.f32 0.0, %v4649
      %4651 = vmatmul.f32.gmra.mxu0 %v4444
      %v4652 = vpop.f32.mrf.mxu0
      %v4653 = vadd.f32 0.0, %v4652
      %4654 = vmatmul.f32.gmra.mxu0 %v4447
      %v4655 = vpop.f32.mrf.mxu0
      %v4656 = vadd.f32 0.0, %v4655
      %4657 = vmatmul.f32.gmra.mxu0 %v4450
      %v4658 = vpop.f32.mrf.mxu0
      %v4659 = vadd.f32 0.0, %v4658
      %4660 = vmatmul.f32.gmra.mxu0 %v4453
      %v4661 = vpop.f32.mrf.mxu0
      %v4662 = vadd.f32 0.0, %v4661
      %4663 = vmatmul.f32.gmra.mxu0 %v4456
      %v4664 = vpop.f32.mrf.mxu0
      %v4665 = vadd.f32 0.0, %v4664
      %4666 = vmatmul.f32.gmra.mxu0 %v4459
      %v4667 = vpop.f32.mrf.mxu0
      %v4668 = vadd.f32 0.0, %v4667
      %4669 = vmatmul.f32.gmra.mxu0 %v4462
      %v4670 = vpop.f32.mrf.mxu0
      %v4671 = vadd.f32 0.0, %v4670
      %4672 = vmatmul.f32.gmra.mxu0 %v4465
      %v4673 = vpop.f32.mrf.mxu0
      %v4674 = vadd.f32 0.0, %v4673
      %4675 = vmatmul.f32.gmra.mxu0 %v4468
      %v4676 = vpop.f32.mrf.mxu0
      %v4677 = vadd.f32 0.0, %v4676
      %4678 = vmatmul.f32.gmra.mxu0 %v4471
      %v4679 = vpop.f32.mrf.mxu0
      %v4680 = vadd.f32 0.0, %v4679
      %4681 = vmatmul.f32.gmra.mxu0 %v4474
      %v4682 = vpop.f32.mrf.mxu0
      %v4683 = vadd.f32 0.0, %v4682
      %4684 = vmatmul.f32.gmra.mxu0 %v4477
      %v4685 = vpop.f32.mrf.mxu0
      %v4686 = vadd.f32 0.0, %v4685
      %4687 = vmatmul.f32.gmra.mxu0 %v4480
      %v4688 = vpop.f32.mrf.mxu0
      %v4689 = vadd.f32 0.0, %v4688
      %4690 = vdwg.mxu0
      %v4691 = vmul.f32 %v4291, %v4291
      %v4692 = vmul.f32 %v4294, %v4294
      %v4693 = vmul.f32 %v4297, %v4297
      %v4694 = vmul.f32 %v4300, %v4300
      %v4695 = vmul.f32 %v4303, %v4303
      %v4696 = vmul.f32 %v4306, %v4306
      %v4697 = vmul.f32 %v4309, %v4309
      %v4698 = vmul.f32 %v4312, %v4312
      %v4699 = vmul.f32 %v4315, %v4315
      %v4700 = vmul.f32 %v4318, %v4318
      %v4701 = vmul.f32 %v4321, %v4321
      %v4702 = vmul.f32 %v4324, %v4324
      %v4703 = vmul.f32 %v4327, %v4327
      %v4704 = vmul.f32 %v4330, %v4330
      %v4705 = vmul.f32 %v4333, %v4333
      %v4706 = vmul.f32 %v4336, %v4336
      %v4707 = vmul.f32 %v4339, %v4339
      %v4708 = vmul.f32 %v4342, %v4342
      %v4709 = vmul.f32 %v4345, %v4345
      %v4710 = vmul.f32 %v4348, %v4348
      %v4711 = vmul.f32 %v4351, %v4351
      %v4712 = vmul.f32 %v4354, %v4354
      %v4713 = vmul.f32 %v4357, %v4357
      %v4714 = vmul.f32 %v4360, %v4360
      %v4715 = vmul.f32 %v4363, %v4363
      %v4716 = vmul.f32 %v4366, %v4366
      %v4717 = vmul.f32 %v4369, %v4369
      %v4718 = vmul.f32 %v4372, %v4372
      %v4719 = vmul.f32 %v4375, %v4375
      %v4720 = vmul.f32 %v4378, %v4378
      %v4721 = vmul.f32 %v4381, %v4381
      %v4722 = vmul.f32 %v4384, %v4384
      %v4723 = vmul.f32 %v4387, %v4387
      %v4724 = vmul.f32 %v4390, %v4390
      %v4725 = vmul.f32 %v4393, %v4393
      %v4726 = vmul.f32 %v4396, %v4396
      %v4727 = vmul.f32 %v4399, %v4399
      %v4728 = vmul.f32 %v4402, %v4402
      %v4729 = vmul.f32 %v4405, %v4405
      %v4730 = vmul.f32 %v4408, %v4408
      %v4731 = vmul.f32 %v4411, %v4411
      %v4732 = vmul.f32 %v4414, %v4414
      %v4733 = vmul.f32 %v4417, %v4417
      %v4734 = vmul.f32 %v4420, %v4420
      %v4735 = vmul.f32 %v4423, %v4423
      %v4736 = vmul.f32 %v4426, %v4426
      %v4737 = vmul.f32 %v4429, %v4429
      %v4738 = vmul.f32 %v4432, %v4432
      %v4739 = vmul.f32 %v4435, %v4435
      %v4740 = vmul.f32 %v4438, %v4438
      %v4741 = vmul.f32 %v4441, %v4441
      %v4742 = vmul.f32 %v4444, %v4444
      %v4743 = vmul.f32 %v4447, %v4447
      %v4744 = vmul.f32 %v4450, %v4450
      %v4745 = vmul.f32 %v4453, %v4453
      %v4746 = vmul.f32 %v4456, %v4456
      %v4747 = vmul.f32 %v4459, %v4459
      %v4748 = vmul.f32 %v4462, %v4462
      %v4749 = vmul.f32 %v4465, %v4465
      %v4750 = vmul.f32 %v4468, %v4468
      %v4751 = vmul.f32 %v4471, %v4471
      %v4752 = vmul.f32 %v4474, %v4474
      %v4753 = vmul.f32 %v4477, %v4477
      %v4754 = vmul.f32 %v4480, %v4480
      %4755 = vmatpush.msra.mxu0 %v883
      %4756 = vmatpush.msra.mxu0 %v882
      %4757 = vmatpush.msra.mxu0 %v881
      %4758 = vmatpush.msra.mxu0 %v880
      %4759 = vmatpush.msra.mxu0 %v879
      %4760 = vmatpush.msra.mxu0 %v878
      %4761 = vmatpush.msra.mxu0 %v877
      %4762 = vmatpush.msra.mxu0 %v876
      %4763 = vmatpush.msra.mxu0 %v875
      %4764 = vmatpush.msra.mxu0 %v874
      %4765 = vmatpush.msra.mxu0 %v873
      %4766 = vmatpush.msra.mxu0 %v872
      %4767 = vmatpush.msra.mxu0 %v871
      %4768 = vmatpush.msra.mxu0 %v870
      %4769 = vmatpush.msra.mxu0 %v869
      %4770 = vmatpush.msra.mxu0 %v868
      %4771 = vmatmul.f32.gmra.mxu0 %v4691
      %v4772 = vpop.f32.mrf.mxu0
      %v4773 = vadd.f32 0.0, %v4772
      %4774 = vmatmul.f32.gmra.mxu0 %v4692
      %v4775 = vpop.f32.mrf.mxu0
      %v4776 = vadd.f32 0.0, %v4775
      %4777 = vmatmul.f32.gmra.mxu0 %v4693
      %v4778 = vpop.f32.mrf.mxu0
      %v4779 = vadd.f32 0.0, %v4778
      %4780 = vmatmul.f32.gmra.mxu0 %v4694
      %v4781 = vpop.f32.mrf.mxu0
      %v4782 = vadd.f32 0.0, %v4781
      %4783 = vmatmul.f32.gmra.mxu0 %v4695
      %v4784 = vpop.f32.mrf.mxu0
      %v4785 = vadd.f32 0.0, %v4784
      %4786 = vmatmul.f32.gmra.mxu0 %v4696
      %v4787 = vpop.f32.mrf.mxu0
      %v4788 = vadd.f32 0.0, %v4787
      %4789 = vmatmul.f32.gmra.mxu0 %v4697
      %v4790 = vpop.f32.mrf.mxu0
      %v4791 = vadd.f32 0.0, %v4790
      %4792 = vmatmul.f32.gmra.mxu0 %v4698
      %v4793 = vpop.f32.mrf.mxu0
      %v4794 = vadd.f32 0.0, %v4793
      %4795 = vmatmul.f32.gmra.mxu0 %v4699
      %v4796 = vpop.f32.mrf.mxu0
      %v4797 = vadd.f32 0.0, %v4796
      %4798 = vmatmul.f32.gmra.mxu0 %v4700
      %v4799 = vpop.f32.mrf.mxu0
      %v4800 = vadd.f32 0.0, %v4799
      %4801 = vmatmul.f32.gmra.mxu0 %v4701
      %v4802 = vpop.f32.mrf.mxu0
      %v4803 = vadd.f32 0.0, %v4802
      %4804 = vmatmul.f32.gmra.mxu0 %v4702
      %v4805 = vpop.f32.mrf.mxu0
      %v4806 = vadd.f32 0.0, %v4805
      %4807 = vmatmul.f32.gmra.mxu0 %v4703
      %v4808 = vpop.f32.mrf.mxu0
      %v4809 = vadd.f32 0.0, %v4808
      %4810 = vmatmul.f32.gmra.mxu0 %v4704
      %v4811 = vpop.f32.mrf.mxu0
      %v4812 = vadd.f32 0.0, %v4811
      %4813 = vmatmul.f32.gmra.mxu0 %v4705
      %v4814 = vpop.f32.mrf.mxu0
      %v4815 = vadd.f32 0.0, %v4814
      %4816 = vmatmul.f32.gmra.mxu0 %v4706
      %v4817 = vpop.f32.mrf.mxu0
      %v4818 = vadd.f32 0.0, %v4817
      %4819 = vmatmul.f32.gmra.mxu0 %v4707
      %v4820 = vpop.f32.mrf.mxu0
      %v4821 = vadd.f32 0.0, %v4820
      %4822 = vmatmul.f32.gmra.mxu0 %v4708
      %v4823 = vpop.f32.mrf.mxu0
      %v4824 = vadd.f32 0.0, %v4823
      %4825 = vmatmul.f32.gmra.mxu0 %v4709
      %v4826 = vpop.f32.mrf.mxu0
      %v4827 = vadd.f32 0.0, %v4826
      %4828 = vmatmul.f32.gmra.mxu0 %v4710
      %v4829 = vpop.f32.mrf.mxu0
      %v4830 = vadd.f32 0.0, %v4829
      %4831 = vmatmul.f32.gmra.mxu0 %v4711
      %v4832 = vpop.f32.mrf.mxu0
      %v4833 = vadd.f32 0.0, %v4832
      %4834 = vmatmul.f32.gmra.mxu0 %v4712
      %v4835 = vpop.f32.mrf.mxu0
      %v4836 = vadd.f32 0.0, %v4835
      %4837 = vmatmul.f32.gmra.mxu0 %v4713
      %v4838 = vpop.f32.mrf.mxu0
      %v4839 = vadd.f32 0.0, %v4838
      %4840 = vmatmul.f32.gmra.mxu0 %v4714
      %v4841 = vpop.f32.mrf.mxu0
      %v4842 = vadd.f32 0.0, %v4841
      %4843 = vmatmul.f32.gmra.mxu0 %v4715
      %v4844 = vpop.f32.mrf.mxu0
      %v4845 = vadd.f32 0.0, %v4844
      %4846 = vmatmul.f32.gmra.mxu0 %v4716
      %v4847 = vpop.f32.mrf.mxu0
      %v4848 = vadd.f32 0.0, %v4847
      %4849 = vmatmul.f32.gmra.mxu0 %v4717
      %v4850 = vpop.f32.mrf.mxu0
      %v4851 = vadd.f32 0.0, %v4850
      %4852 = vmatmul.f32.gmra.mxu0 %v4718
      %v4853 = vpop.f32.mrf.mxu0
      %v4854 = vadd.f32 0.0, %v4853
      %4855 = vmatmul.f32.gmra.mxu0 %v4719
      %v4856 = vpop.f32.mrf.mxu0
      %v4857 = vadd.f32 0.0, %v4856
      %4858 = vmatmul.f32.gmra.mxu0 %v4720
      %v4859 = vpop.f32.mrf.mxu0
      %v4860 = vadd.f32 0.0, %v4859
      %4861 = vmatmul.f32.gmra.mxu0 %v4721
      %v4862 = vpop.f32.mrf.mxu0
      %v4863 = vadd.f32 0.0, %v4862
      %4864 = vmatmul.f32.gmra.mxu0 %v4722
      %v4865 = vpop.f32.mrf.mxu0
      %v4866 = vadd.f32 0.0, %v4865
      %4867 = vmatmul.f32.gmra.mxu0 %v4723
      %v4868 = vpop.f32.mrf.mxu0
      %v4869 = vadd.f32 0.0, %v4868
      %4870 = vmatmul.f32.gmra.mxu0 %v4724
      %v4871 = vpop.f32.mrf.mxu0
      %v4872 = vadd.f32 0.0, %v4871
      %4873 = vmatmul.f32.gmra.mxu0 %v4725
      %v4874 = vpop.f32.mrf.mxu0
      %v4875 = vadd.f32 0.0, %v4874
      %4876 = vmatmul.f32.gmra.mxu0 %v4726
      %v4877 = vpop.f32.mrf.mxu0
      %v4878 = vadd.f32 0.0, %v4877
      %4879 = vmatmul.f32.gmra.mxu0 %v4727
      %v4880 = vpop.f32.mrf.mxu0
      %v4881 = vadd.f32 0.0, %v4880
      %4882 = vmatmul.f32.gmra.mxu0 %v4728
      %v4883 = vpop.f32.mrf.mxu0
      %v4884 = vadd.f32 0.0, %v4883
      %4885 = vmatmul.f32.gmra.mxu0 %v4729
      %v4886 = vpop.f32.mrf.mxu0
      %v4887 = vadd.f32 0.0, %v4886
      %4888 = vmatmul.f32.gmra.mxu0 %v4730
      %v4889 = vpop.f32.mrf.mxu0
      %v4890 = vadd.f32 0.0, %v4889
      %4891 = vmatmul.f32.gmra.mxu0 %v4731
      %v4892 = vpop.f32.mrf.mxu0
      %v4893 = vadd.f32 0.0, %v4892
      %4894 = vmatmul.f32.gmra.mxu0 %v4732
      %v4895 = vpop.f32.mrf.mxu0
      %v4896 = vadd.f32 0.0, %v4895
      %4897 = vmatmul.f32.gmra.mxu0 %v4733
      %v4898 = vpop.f32.mrf.mxu0
      %v4899 = vadd.f32 0.0, %v4898
      %4900 = vmatmul.f32.gmra.mxu0 %v4734
      %v4901 = vpop.f32.mrf.mxu0
      %v4902 = vadd.f32 0.0, %v4901
      %4903 = vmatmul.f32.gmra.mxu0 %v4735
      %v4904 = vpop.f32.mrf.mxu0
      %v4905 = vadd.f32 0.0, %v4904
      %4906 = vmatmul.f32.gmra.mxu0 %v4736
      %v4907 = vpop.f32.mrf.mxu0
      %v4908 = vadd.f32 0.0, %v4907
      %4909 = vmatmul.f32.gmra.mxu0 %v4737
      %v4910 = vpop.f32.mrf.mxu0
      %v4911 = vadd.f32 0.0, %v4910
      %4912 = vmatmul.f32.gmra.mxu0 %v4738
      %v4913 = vpop.f32.mrf.mxu0
      %v4914 = vadd.f32 0.0, %v4913
      %4915 = vmatmul.f32.gmra.mxu0 %v4739
      %v4916 = vpop.f32.mrf.mxu0
      %v4917 = vadd.f32 0.0, %v4916
      %4918 = vmatmul.f32.gmra.mxu0 %v4740
      %v4919 = vpop.f32.mrf.mxu0
      %v4920 = vadd.f32 0.0, %v4919
      %4921 = vmatmul.f32.gmra.mxu0 %v4741
      %v4922 = vpop.f32.mrf.mxu0
      %v4923 = vadd.f32 0.0, %v4922
      %4924 = vmatmul.f32.gmra.mxu0 %v4742
      %v4925 = vpop.f32.mrf.mxu0
      %v4926 = vadd.f32 0.0, %v4925
      %4927 = vmatmul.f32.gmra.mxu0 %v4743
      %v4928 = vpop.f32.mrf.mxu0
      %v4929 = vadd.f32 0.0, %v4928
      %4930 = vmatmul.f32.gmra.mxu0 %v4744
      %v4931 = vpop.f32.mrf.mxu0
      %v4932 = vadd.f32 0.0, %v4931
      %4933 = vmatmul.f32.gmra.mxu0 %v4745
      %v4934 = vpop.f32.mrf.mxu0
      %v4935 = vadd.f32 0.0, %v4934
      %4936 = vmatmul.f32.gmra.mxu0 %v4746
      %v4937 = vpop.f32.mrf.mxu0
      %v4938 = vadd.f32 0.0, %v4937
      %4939 = vmatmul.f32.gmra.mxu0 %v4747
      %v4940 = vpop.f32.mrf.mxu0
      %v4941 = vadd.f32 0.0, %v4940
      %4942 = vmatmul.f32.gmra.mxu0 %v4748
      %v4943 = vpop.f32.mrf.mxu0
      %v4944 = vadd.f32 0.0, %v4943
      %4945 = vmatmul.f32.gmra.mxu0 %v4749
      %v4946 = vpop.f32.mrf.mxu0
      %v4947 = vadd.f32 0.0, %v4946
      %4948 = vmatmul.f32.gmra.mxu0 %v4750
      %v4949 = vpop.f32.mrf.mxu0
      %v4950 = vadd.f32 0.0, %v4949
      %4951 = vmatmul.f32.gmra.mxu0 %v4751
      %v4952 = vpop.f32.mrf.mxu0
      %v4953 = vadd.f32 0.0, %v4952
      %4954 = vmatmul.f32.gmra.mxu0 %v4752
      %v4955 = vpop.f32.mrf.mxu0
      %v4956 = vadd.f32 0.0, %v4955
      %4957 = vmatmul.f32.gmra.mxu0 %v4753
      %v4958 = vpop.f32.mrf.mxu0
      %v4959 = vadd.f32 0.0, %v4958
      %4960 = vmatmul.f32.gmra.mxu0 %v4754
      %v4961 = vpop.f32.mrf.mxu0
      %v4962 = vadd.f32 0.0, %v4961
      %4963 = vdwg.mxu0
      %v4964 = vmul.f32 %v4500, %v4500
      %v4965 = vmul.f32 %v4503, %v4503
      %v4966 = vmul.f32 %v4506, %v4506
      %v4967 = vmul.f32 %v4509, %v4509
      %v4968 = vmul.f32 %v4512, %v4512
      %v4969 = vmul.f32 %v4515, %v4515
      %v4970 = vmul.f32 %v4518, %v4518
      %v4971 = vmul.f32 %v4521, %v4521
      %v4972 = vmul.f32 %v4524, %v4524
      %v4973 = vmul.f32 %v4527, %v4527
      %v4974 = vmul.f32 %v4530, %v4530
      %v4975 = vmul.f32 %v4533, %v4533
      %v4976 = vmul.f32 %v4536, %v4536
      %v4977 = vmul.f32 %v4539, %v4539
      %v4978 = vmul.f32 %v4542, %v4542
      %v4979 = vmul.f32 %v4545, %v4545
      %v4980 = vmul.f32 %v4548, %v4548
      %v4981 = vmul.f32 %v4551, %v4551
      %v4982 = vmul.f32 %v4554, %v4554
      %v4983 = vmul.f32 %v4557, %v4557
      %v4984 = vmul.f32 %v4560, %v4560
      %v4985 = vmul.f32 %v4563, %v4563
      %v4986 = vmul.f32 %v4566, %v4566
      %v4987 = vmul.f32 %v4569, %v4569
      %v4988 = vmul.f32 %v4572, %v4572
      %v4989 = vmul.f32 %v4575, %v4575
      %v4990 = vmul.f32 %v4578, %v4578
      %v4991 = vmul.f32 %v4581, %v4581
      %v4992 = vmul.f32 %v4584, %v4584
      %v4993 = vmul.f32 %v4587, %v4587
      %v4994 = vmul.f32 %v4590, %v4590
      %v4995 = vmul.f32 %v4593, %v4593
      %v4996 = vmul.f32 %v4596, %v4596
      %v4997 = vmul.f32 %v4599, %v4599
      %v4998 = vmul.f32 %v4602, %v4602
      %v4999 = vmul.f32 %v4605, %v4605
      %v5000 = vmul.f32 %v4608, %v4608
      %v5001 = vmul.f32 %v4611, %v4611
      %v5002 = vmul.f32 %v4614, %v4614
      %v5003 = vmul.f32 %v4617, %v4617
      %v5004 = vmul.f32 %v4620, %v4620
      %v5005 = vmul.f32 %v4623, %v4623
      %v5006 = vmul.f32 %v4626, %v4626
      %v5007 = vmul.f32 %v4629, %v4629
      %v5008 = vmul.f32 %v4632, %v4632
      %v5009 = vmul.f32 %v4635, %v4635
      %v5010 = vmul.f32 %v4638, %v4638
      %v5011 = vmul.f32 %v4641, %v4641
      %v5012 = vmul.f32 %v4644, %v4644
      %v5013 = vmul.f32 %v4647, %v4647
      %v5014 = vmul.f32 %v4650, %v4650
      %v5015 = vmul.f32 %v4653, %v4653
      %v5016 = vmul.f32 %v4656, %v4656
      %v5017 = vmul.f32 %v4659, %v4659
      %v5018 = vmul.f32 %v4662, %v4662
      %v5019 = vmul.f32 %v4665, %v4665
      %v5020 = vmul.f32 %v4668, %v4668
      %v5021 = vmul.f32 %v4671, %v4671
      %v5022 = vmul.f32 %v4674, %v4674
      %v5023 = vmul.f32 %v4677, %v4677
      %v5024 = vmul.f32 %v4680, %v4680
      %v5025 = vmul.f32 %v4683, %v4683
      %v5026 = vmul.f32 %v4686, %v4686
      %v5027 = vmul.f32 %v4689, %v4689
      %v5028 = vsub.f32 %v4773, %v4964
      %v5029 = vsub.f32 %v4776, %v4965
      %v5030 = vsub.f32 %v4779, %v4966
      %v5031 = vsub.f32 %v4782, %v4967
      %v5032 = vsub.f32 %v4785, %v4968
      %v5033 = vsub.f32 %v4788, %v4969
      %v5034 = vsub.f32 %v4791, %v4970
      %v5035 = vsub.f32 %v4794, %v4971
      %v5036 = vsub.f32 %v4797, %v4972
      %v5037 = vsub.f32 %v4800, %v4973
      %v5038 = vsub.f32 %v4803, %v4974
      %v5039 = vsub.f32 %v4806, %v4975
      %v5040 = vsub.f32 %v4809, %v4976
      %v5041 = vsub.f32 %v4812, %v4977
      %v5042 = vsub.f32 %v4815, %v4978
      %v5043 = vsub.f32 %v4818, %v4979
      %v5044 = vsub.f32 %v4821, %v4980
      %v5045 = vsub.f32 %v4824, %v4981
      %v5046 = vsub.f32 %v4827, %v4982
      %v5047 = vsub.f32 %v4830, %v4983
      %v5048 = vsub.f32 %v4833, %v4984
      %v5049 = vsub.f32 %v4836, %v4985
      %v5050 = vsub.f32 %v4839, %v4986
      %v5051 = vsub.f32 %v4842, %v4987
      %v5052 = vsub.f32 %v4845, %v4988
      %v5053 = vsub.f32 %v4848, %v4989
      %v5054 = vsub.f32 %v4851, %v4990
      %v5055 = vsub.f32 %v4854, %v4991
      %v5056 = vsub.f32 %v4857, %v4992
      %v5057 = vsub.f32 %v4860, %v4993
      %v5058 = vsub.f32 %v4863, %v4994
      %v5059 = vsub.f32 %v4866, %v4995
      %v5060 = vsub.f32 %v4869, %v4996
      %v5061 = vsub.f32 %v4872, %v4997
      %v5062 = vsub.f32 %v4875, %v4998
      %v5063 = vsub.f32 %v4878, %v4999
      %v5064 = vsub.f32 %v4881, %v5000
      %v5065 = vsub.f32 %v4884, %v5001
      %v5066 = vsub.f32 %v4887, %v5002
      %v5067 = vsub.f32 %v4890, %v5003
      %v5068 = vsub.f32 %v4893, %v5004
      %v5069 = vsub.f32 %v4896, %v5005
      %v5070 = vsub.f32 %v4899, %v5006
      %v5071 = vsub.f32 %v4902, %v5007
      %v5072 = vsub.f32 %v4905, %v5008
      %v5073 = vsub.f32 %v4908, %v5009
      %v5074 = vsub.f32 %v4911, %v5010
      %v5075 = vsub.f32 %v4914, %v5011
      %v5076 = vsub.f32 %v4917, %v5012
      %v5077 = vsub.f32 %v4920, %v5013
      %v5078 = vsub.f32 %v4923, %v5014
      %v5079 = vsub.f32 %v4926, %v5015
      %v5080 = vsub.f32 %v4929, %v5016
      %v5081 = vsub.f32 %v4932, %v5017
      %v5082 = vsub.f32 %v4935, %v5018
      %v5083 = vsub.f32 %v4938, %v5019
      %v5084 = vsub.f32 %v4941, %v5020
      %v5085 = vsub.f32 %v4944, %v5021
      %v5086 = vsub.f32 %v4947, %v5022
      %v5087 = vsub.f32 %v4950, %v5023
      %v5088 = vsub.f32 %v4953, %v5024
      %v5089 = vsub.f32 %v4956, %v5025
      %v5090 = vsub.f32 %v4959, %v5026
      %v5091 = vsub.f32 %v4962, %v5027
      %v5092 = vmax.f32 %v5028, 0.0
      %v5093 = vmax.f32 %v5029, 0.0
      %v5094 = vmax.f32 %v5030, 0.0
      %v5095 = vmax.f32 %v5031, 0.0
      %v5096 = vmax.f32 %v5032, 0.0
      %v5097 = vmax.f32 %v5033, 0.0
      %v5098 = vmax.f32 %v5034, 0.0
      %v5099 = vmax.f32 %v5035, 0.0
      %v5100 = vmax.f32 %v5036, 0.0
      %v5101 = vmax.f32 %v5037, 0.0
      %v5102 = vmax.f32 %v5038, 0.0
      %v5103 = vmax.f32 %v5039, 0.0
      %v5104 = vmax.f32 %v5040, 0.0
      %v5105 = vmax.f32 %v5041, 0.0
      %v5106 = vmax.f32 %v5042, 0.0
      %v5107 = vmax.f32 %v5043, 0.0
      %v5108 = vmax.f32 %v5044, 0.0
      %v5109 = vmax.f32 %v5045, 0.0
      %v5110 = vmax.f32 %v5046, 0.0
      %v5111 = vmax.f32 %v5047, 0.0
      %v5112 = vmax.f32 %v5048, 0.0
      %v5113 = vmax.f32 %v5049, 0.0
      %v5114 = vmax.f32 %v5050, 0.0
      %v5115 = vmax.f32 %v5051, 0.0
      %v5116 = vmax.f32 %v5052, 0.0
      %v5117 = vmax.f32 %v5053, 0.0
      %v5118 = vmax.f32 %v5054, 0.0
      %v5119 = vmax.f32 %v5055, 0.0
      %v5120 = vmax.f32 %v5056, 0.0
      %v5121 = vmax.f32 %v5057, 0.0
      %v5122 = vmax.f32 %v5058, 0.0
      %v5123 = vmax.f32 %v5059, 0.0
      %v5124 = vmax.f32 %v5060, 0.0
      %v5125 = vmax.f32 %v5061, 0.0
      %v5126 = vmax.f32 %v5062, 0.0
      %v5127 = vmax.f32 %v5063, 0.0
      %v5128 = vmax.f32 %v5064, 0.0
      %v5129 = vmax.f32 %v5065, 0.0
      %v5130 = vmax.f32 %v5066, 0.0
      %v5131 = vmax.f32 %v5067, 0.0
      %v5132 = vmax.f32 %v5068, 0.0
      %v5133 = vmax.f32 %v5069, 0.0
      %v5134 = vmax.f32 %v5070, 0.0
      %v5135 = vmax.f32 %v5071, 0.0
      %v5136 = vmax.f32 %v5072, 0.0
      %v5137 = vmax.f32 %v5073, 0.0
      %v5138 = vmax.f32 %v5074, 0.0
      %v5139 = vmax.f32 %v5075, 0.0
      %v5140 = vmax.f32 %v5076, 0.0
      %v5141 = vmax.f32 %v5077, 0.0
      %v5142 = vmax.f32 %v5078, 0.0
      %v5143 = vmax.f32 %v5079, 0.0
      %v5144 = vmax.f32 %v5080, 0.0
      %v5145 = vmax.f32 %v5081, 0.0
      %v5146 = vmax.f32 %v5082, 0.0
      %v5147 = vmax.f32 %v5083, 0.0
      %v5148 = vmax.f32 %v5084, 0.0
      %v5149 = vmax.f32 %v5085, 0.0
      %v5150 = vmax.f32 %v5086, 0.0
      %v5151 = vmax.f32 %v5087, 0.0
      %v5152 = vmax.f32 %v5088, 0.0
      %v5153 = vmax.f32 %v5089, 0.0
      %v5154 = vmax.f32 %v5090, 0.0
      %v5155 = vmax.f32 %v5091, 0.0
      %v5156 = vsub.f32 %v4291, %v4500
      %v5157 = vsub.f32 %v4294, %v4503
      %v5158 = vsub.f32 %v4297, %v4506
      %v5159 = vsub.f32 %v4300, %v4509
      %v5160 = vsub.f32 %v4303, %v4512
      %v5161 = vsub.f32 %v4306, %v4515
      %v5162 = vsub.f32 %v4309, %v4518
      %v5163 = vsub.f32 %v4312, %v4521
      %v5164 = vsub.f32 %v4315, %v4524
      %v5165 = vsub.f32 %v4318, %v4527
      %v5166 = vsub.f32 %v4321, %v4530
      %v5167 = vsub.f32 %v4324, %v4533
      %v5168 = vsub.f32 %v4327, %v4536
      %v5169 = vsub.f32 %v4330, %v4539
      %v5170 = vsub.f32 %v4333, %v4542
      %v5171 = vsub.f32 %v4336, %v4545
      %v5172 = vsub.f32 %v4339, %v4548
      %v5173 = vsub.f32 %v4342, %v4551
      %v5174 = vsub.f32 %v4345, %v4554
      %v5175 = vsub.f32 %v4348, %v4557
      %v5176 = vsub.f32 %v4351, %v4560
      %v5177 = vsub.f32 %v4354, %v4563
      %v5178 = vsub.f32 %v4357, %v4566
      %v5179 = vsub.f32 %v4360, %v4569
      %v5180 = vsub.f32 %v4363, %v4572
      %v5181 = vsub.f32 %v4366, %v4575
      %v5182 = vsub.f32 %v4369, %v4578
      %v5183 = vsub.f32 %v4372, %v4581
      %v5184 = vsub.f32 %v4375, %v4584
      %v5185 = vsub.f32 %v4378, %v4587
      %v5186 = vsub.f32 %v4381, %v4590
      %v5187 = vsub.f32 %v4384, %v4593
      %v5188 = vsub.f32 %v4387, %v4596
      %v5189 = vsub.f32 %v4390, %v4599
      %v5190 = vsub.f32 %v4393, %v4602
      %v5191 = vsub.f32 %v4396, %v4605
      %v5192 = vsub.f32 %v4399, %v4608
      %v5193 = vsub.f32 %v4402, %v4611
      %v5194 = vsub.f32 %v4405, %v4614
      %v5195 = vsub.f32 %v4408, %v4617
      %v5196 = vsub.f32 %v4411, %v4620
      %v5197 = vsub.f32 %v4414, %v4623
      %v5198 = vsub.f32 %v4417, %v4626
      %v5199 = vsub.f32 %v4420, %v4629
      %v5200 = vsub.f32 %v4423, %v4632
      %v5201 = vsub.f32 %v4426, %v4635
      %v5202 = vsub.f32 %v4429, %v4638
      %v5203 = vsub.f32 %v4432, %v4641
      %v5204 = vsub.f32 %v4435, %v4644
      %v5205 = vsub.f32 %v4438, %v4647
      %v5206 = vsub.f32 %v4441, %v4650
      %v5207 = vsub.f32 %v4444, %v4653
      %v5208 = vsub.f32 %v4447, %v4656
      %v5209 = vsub.f32 %v4450, %v4659
      %v5210 = vsub.f32 %v4453, %v4662
      %v5211 = vsub.f32 %v4456, %v4665
      %v5212 = vsub.f32 %v4459, %v4668
      %v5213 = vsub.f32 %v4462, %v4671
      %v5214 = vsub.f32 %v4465, %v4674
      %v5215 = vsub.f32 %v4468, %v4677
      %v5216 = vsub.f32 %v4471, %v4680
      %v5217 = vsub.f32 %v4474, %v4683
      %v5218 = vsub.f32 %v4477, %v4686
      %v5219 = vsub.f32 %v4480, %v4689
      %v5220 = vadd.f32 %v5092, 1e-05
      %v5221 = vadd.f32 %v5093, 1e-05
      %v5222 = vadd.f32 %v5094, 1e-05
      %v5223 = vadd.f32 %v5095, 1e-05
      %v5224 = vadd.f32 %v5096, 1e-05
      %v5225 = vadd.f32 %v5097, 1e-05
      %v5226 = vadd.f32 %v5098, 1e-05
      %v5227 = vadd.f32 %v5099, 1e-05
      %v5228 = vadd.f32 %v5100, 1e-05
      %v5229 = vadd.f32 %v5101, 1e-05
      %v5230 = vadd.f32 %v5102, 1e-05
      %v5231 = vadd.f32 %v5103, 1e-05
      %v5232 = vadd.f32 %v5104, 1e-05
      %v5233 = vadd.f32 %v5105, 1e-05
      %v5234 = vadd.f32 %v5106, 1e-05
      %v5235 = vadd.f32 %v5107, 1e-05
      %v5236 = vadd.f32 %v5108, 1e-05
      %v5237 = vadd.f32 %v5109, 1e-05
      %v5238 = vadd.f32 %v5110, 1e-05
      %v5239 = vadd.f32 %v5111, 1e-05
      %v5240 = vadd.f32 %v5112, 1e-05
      %v5241 = vadd.f32 %v5113, 1e-05
      %v5242 = vadd.f32 %v5114, 1e-05
      %v5243 = vadd.f32 %v5115, 1e-05
      %v5244 = vadd.f32 %v5116, 1e-05
      %v5245 = vadd.f32 %v5117, 1e-05
      %v5246 = vadd.f32 %v5118, 1e-05
      %v5247 = vadd.f32 %v5119, 1e-05
      %v5248 = vadd.f32 %v5120, 1e-05
      %v5249 = vadd.f32 %v5121, 1e-05
      %v5250 = vadd.f32 %v5122, 1e-05
      %v5251 = vadd.f32 %v5123, 1e-05
      %v5252 = vadd.f32 %v5124, 1e-05
      %v5253 = vadd.f32 %v5125, 1e-05
      %v5254 = vadd.f32 %v5126, 1e-05
      %v5255 = vadd.f32 %v5127, 1e-05
      %v5256 = vadd.f32 %v5128, 1e-05
      %v5257 = vadd.f32 %v5129, 1e-05
      %v5258 = vadd.f32 %v5130, 1e-05
      %v5259 = vadd.f32 %v5131, 1e-05
      %v5260 = vadd.f32 %v5132, 1e-05
      %v5261 = vadd.f32 %v5133, 1e-05
      %v5262 = vadd.f32 %v5134, 1e-05
      %v5263 = vadd.f32 %v5135, 1e-05
      %v5264 = vadd.f32 %v5136, 1e-05
      %v5265 = vadd.f32 %v5137, 1e-05
      %v5266 = vadd.f32 %v5138, 1e-05
      %v5267 = vadd.f32 %v5139, 1e-05
      %v5268 = vadd.f32 %v5140, 1e-05
      %v5269 = vadd.f32 %v5141, 1e-05
      %v5270 = vadd.f32 %v5142, 1e-05
      %v5271 = vadd.f32 %v5143, 1e-05
      %v5272 = vadd.f32 %v5144, 1e-05
      %v5273 = vadd.f32 %v5145, 1e-05
      %v5274 = vadd.f32 %v5146, 1e-05
      %v5275 = vadd.f32 %v5147, 1e-05
      %v5276 = vadd.f32 %v5148, 1e-05
      %v5277 = vadd.f32 %v5149, 1e-05
      %v5278 = vadd.f32 %v5150, 1e-05
      %v5279 = vadd.f32 %v5151, 1e-05
      %v5280 = vadd.f32 %v5152, 1e-05
      %v5281 = vadd.f32 %v5153, 1e-05
      %v5282 = vadd.f32 %v5154, 1e-05
      %v5283 = vadd.f32 %v5155, 1e-05
      %v5284 = vrsqrt.pop %v5220
      %v5285 = vmul.f32 %v5284, %v5220
      %v5286 = vmul.f32 %v5285, %v5284
      %v5287 = vmul.f32 0.5, %v5286
      %v5288 = vsub.f32 1.5, %v5287
      %v5289 = vmul.f32 %v5284, %v5288
      %vm5290 = vweird.f32 %v5220
      %vm5291 = vweird.f32 %v5284
      %vm5292 = vmor %vm5290, %vm5291
      %v5293 = vsel %vm5292, %v5284, %v5289
      %v5294 = vrsqrt.pop %v5221
      %v5295 = vmul.f32 %v5294, %v5221
      %v5296 = vmul.f32 %v5295, %v5294
      %v5297 = vmul.f32 0.5, %v5296
      %v5298 = vsub.f32 1.5, %v5297
      %v5299 = vmul.f32 %v5294, %v5298
      %vm5300 = vweird.f32 %v5221
      %vm5301 = vweird.f32 %v5294
      %vm5302 = vmor %vm5300, %vm5301
      %v5303 = vsel %vm5302, %v5294, %v5299
      %v5304 = vrsqrt.pop %v5222
      %v5305 = vmul.f32 %v5304, %v5222
      %v5306 = vmul.f32 %v5305, %v5304
      %v5307 = vmul.f32 0.5, %v5306
      %v5308 = vsub.f32 1.5, %v5307
      %v5309 = vmul.f32 %v5304, %v5308
      %vm5310 = vweird.f32 %v5222
      %vm5311 = vweird.f32 %v5304
      %vm5312 = vmor %vm5310, %vm5311
      %v5313 = vsel %vm5312, %v5304, %v5309
      %v5314 = vrsqrt.pop %v5223
      %v5315 = vmul.f32 %v5314, %v5223
      %v5316 = vmul.f32 %v5315, %v5314
      %v5317 = vmul.f32 0.5, %v5316
      %v5318 = vsub.f32 1.5, %v5317
      %v5319 = vmul.f32 %v5314, %v5318
      %vm5320 = vweird.f32 %v5223
      %vm5321 = vweird.f32 %v5314
      %vm5322 = vmor %vm5320, %vm5321
      %v5323 = vsel %vm5322, %v5314, %v5319
      %v5324 = vrsqrt.pop %v5224
      %v5325 = vmul.f32 %v5324, %v5224
      %v5326 = vmul.f32 %v5325, %v5324
      %v5327 = vmul.f32 0.5, %v5326
      %v5328 = vsub.f32 1.5, %v5327
      %v5329 = vmul.f32 %v5324, %v5328
      %vm5330 = vweird.f32 %v5224
      %vm5331 = vweird.f32 %v5324
      %vm5332 = vmor %vm5330, %vm5331
      %v5333 = vsel %vm5332, %v5324, %v5329
      %v5334 = vrsqrt.pop %v5225
      %v5335 = vmul.f32 %v5334, %v5225
      %v5336 = vmul.f32 %v5335, %v5334
      %v5337 = vmul.f32 0.5, %v5336
      %v5338 = vsub.f32 1.5, %v5337
      %v5339 = vmul.f32 %v5334, %v5338
      %vm5340 = vweird.f32 %v5225
      %vm5341 = vweird.f32 %v5334
      %vm5342 = vmor %vm5340, %vm5341
      %v5343 = vsel %vm5342, %v5334, %v5339
      %v5344 = vrsqrt.pop %v5226
      %v5345 = vmul.f32 %v5344, %v5226
      %v5346 = vmul.f32 %v5345, %v5344
      %v5347 = vmul.f32 0.5, %v5346
      %v5348 = vsub.f32 1.5, %v5347
      %v5349 = vmul.f32 %v5344, %v5348
      %vm5350 = vweird.f32 %v5226
      %vm5351 = vweird.f32 %v5344
      %vm5352 = vmor %vm5350, %vm5351
      %v5353 = vsel %vm5352, %v5344, %v5349
      %v5354 = vrsqrt.pop %v5227
      %v5355 = vmul.f32 %v5354, %v5227
      %v5356 = vmul.f32 %v5355, %v5354
      %v5357 = vmul.f32 0.5, %v5356
      %v5358 = vsub.f32 1.5, %v5357
      %v5359 = vmul.f32 %v5354, %v5358
      %vm5360 = vweird.f32 %v5227
      %vm5361 = vweird.f32 %v5354
      %vm5362 = vmor %vm5360, %vm5361
      %v5363 = vsel %vm5362, %v5354, %v5359
      %v5364 = vrsqrt.pop %v5228
      %v5365 = vmul.f32 %v5364, %v5228
      %v5366 = vmul.f32 %v5365, %v5364
      %v5367 = vmul.f32 0.5, %v5366
      %v5368 = vsub.f32 1.5, %v5367
      %v5369 = vmul.f32 %v5364, %v5368
      %vm5370 = vweird.f32 %v5228
      %vm5371 = vweird.f32 %v5364
      %vm5372 = vmor %vm5370, %vm5371
      %v5373 = vsel %vm5372, %v5364, %v5369
      %v5374 = vrsqrt.pop %v5229
      %v5375 = vmul.f32 %v5374, %v5229
      %v5376 = vmul.f32 %v5375, %v5374
      %v5377 = vmul.f32 0.5, %v5376
      %v5378 = vsub.f32 1.5, %v5377
      %v5379 = vmul.f32 %v5374, %v5378
      %vm5380 = vweird.f32 %v5229
      %vm5381 = vweird.f32 %v5374
      %vm5382 = vmor %vm5380, %vm5381
      %v5383 = vsel %vm5382, %v5374, %v5379
      %v5384 = vrsqrt.pop %v5230
      %v5385 = vmul.f32 %v5384, %v5230
      %v5386 = vmul.f32 %v5385, %v5384
      %v5387 = vmul.f32 0.5, %v5386
      %v5388 = vsub.f32 1.5, %v5387
      %v5389 = vmul.f32 %v5384, %v5388
      %vm5390 = vweird.f32 %v5230
      %vm5391 = vweird.f32 %v5384
      %vm5392 = vmor %vm5390, %vm5391
      %v5393 = vsel %vm5392, %v5384, %v5389
      %v5394 = vrsqrt.pop %v5231
      %v5395 = vmul.f32 %v5394, %v5231
      %v5396 = vmul.f32 %v5395, %v5394
      %v5397 = vmul.f32 0.5, %v5396
      %v5398 = vsub.f32 1.5, %v5397
      %v5399 = vmul.f32 %v5394, %v5398
      %vm5400 = vweird.f32 %v5231
      %vm5401 = vweird.f32 %v5394
      %vm5402 = vmor %vm5400, %vm5401
      %v5403 = vsel %vm5402, %v5394, %v5399
      %v5404 = vrsqrt.pop %v5232
      %v5405 = vmul.f32 %v5404, %v5232
      %v5406 = vmul.f32 %v5405, %v5404
      %v5407 = vmul.f32 0.5, %v5406
      %v5408 = vsub.f32 1.5, %v5407
      %v5409 = vmul.f32 %v5404, %v5408
      %vm5410 = vweird.f32 %v5232
      %vm5411 = vweird.f32 %v5404
      %vm5412 = vmor %vm5410, %vm5411
      %v5413 = vsel %vm5412, %v5404, %v5409
      %v5414 = vrsqrt.pop %v5233
      %v5415 = vmul.f32 %v5414, %v5233
      %v5416 = vmul.f32 %v5415, %v5414
      %v5417 = vmul.f32 0.5, %v5416
      %v5418 = vsub.f32 1.5, %v5417
      %v5419 = vmul.f32 %v5414, %v5418
      %vm5420 = vweird.f32 %v5233
      %vm5421 = vweird.f32 %v5414
      %vm5422 = vmor %vm5420, %vm5421
      %v5423 = vsel %vm5422, %v5414, %v5419
      %v5424 = vrsqrt.pop %v5234
      %v5425 = vmul.f32 %v5424, %v5234
      %v5426 = vmul.f32 %v5425, %v5424
      %v5427 = vmul.f32 0.5, %v5426
      %v5428 = vsub.f32 1.5, %v5427
      %v5429 = vmul.f32 %v5424, %v5428
      %vm5430 = vweird.f32 %v5234
      %vm5431 = vweird.f32 %v5424
      %vm5432 = vmor %vm5430, %vm5431
      %v5433 = vsel %vm5432, %v5424, %v5429
      %v5434 = vrsqrt.pop %v5235
      %v5435 = vmul.f32 %v5434, %v5235
      %v5436 = vmul.f32 %v5435, %v5434
      %v5437 = vmul.f32 0.5, %v5436
      %v5438 = vsub.f32 1.5, %v5437
      %v5439 = vmul.f32 %v5434, %v5438
      %vm5440 = vweird.f32 %v5235
      %vm5441 = vweird.f32 %v5434
      %vm5442 = vmor %vm5440, %vm5441
      %v5443 = vsel %vm5442, %v5434, %v5439
      %v5444 = vrsqrt.pop %v5236
      %v5445 = vmul.f32 %v5444, %v5236
      %v5446 = vmul.f32 %v5445, %v5444
      %v5447 = vmul.f32 0.5, %v5446
      %v5448 = vsub.f32 1.5, %v5447
      %v5449 = vmul.f32 %v5444, %v5448
      %vm5450 = vweird.f32 %v5236
      %vm5451 = vweird.f32 %v5444
      %vm5452 = vmor %vm5450, %vm5451
      %v5453 = vsel %vm5452, %v5444, %v5449
      %v5454 = vrsqrt.pop %v5237
      %v5455 = vmul.f32 %v5454, %v5237
      %v5456 = vmul.f32 %v5455, %v5454
      %v5457 = vmul.f32 0.5, %v5456
      %v5458 = vsub.f32 1.5, %v5457
      %v5459 = vmul.f32 %v5454, %v5458
      %vm5460 = vweird.f32 %v5237
      %vm5461 = vweird.f32 %v5454
      %vm5462 = vmor %vm5460, %vm5461
      %v5463 = vsel %vm5462, %v5454, %v5459
      %v5464 = vrsqrt.pop %v5238
      %v5465 = vmul.f32 %v5464, %v5238
      %v5466 = vmul.f32 %v5465, %v5464
      %v5467 = vmul.f32 0.5, %v5466
      %v5468 = vsub.f32 1.5, %v5467
      %v5469 = vmul.f32 %v5464, %v5468
      %vm5470 = vweird.f32 %v5238
      %vm5471 = vweird.f32 %v5464
      %vm5472 = vmor %vm5470, %vm5471
      %v5473 = vsel %vm5472, %v5464, %v5469
      %v5474 = vrsqrt.pop %v5239
      %v5475 = vmul.f32 %v5474, %v5239
      %v5476 = vmul.f32 %v5475, %v5474
      %v5477 = vmul.f32 0.5, %v5476
      %v5478 = vsub.f32 1.5, %v5477
      %v5479 = vmul.f32 %v5474, %v5478
      %vm5480 = vweird.f32 %v5239
      %vm5481 = vweird.f32 %v5474
      %vm5482 = vmor %vm5480, %vm5481
      %v5483 = vsel %vm5482, %v5474, %v5479
      %v5484 = vrsqrt.pop %v5240
      %v5485 = vmul.f32 %v5484, %v5240
      %v5486 = vmul.f32 %v5485, %v5484
      %v5487 = vmul.f32 0.5, %v5486
      %v5488 = vsub.f32 1.5, %v5487
      %v5489 = vmul.f32 %v5484, %v5488
      %vm5490 = vweird.f32 %v5240
      %vm5491 = vweird.f32 %v5484
      %vm5492 = vmor %vm5490, %vm5491
      %v5493 = vsel %vm5492, %v5484, %v5489
      %v5494 = vrsqrt.pop %v5241
      %v5495 = vmul.f32 %v5494, %v5241
      %v5496 = vmul.f32 %v5495, %v5494
      %v5497 = vmul.f32 0.5, %v5496
      %v5498 = vsub.f32 1.5, %v5497
      %v5499 = vmul.f32 %v5494, %v5498
      %vm5500 = vweird.f32 %v5241
      %vm5501 = vweird.f32 %v5494
      %vm5502 = vmor %vm5500, %vm5501
      %v5503 = vsel %vm5502, %v5494, %v5499
      %v5504 = vrsqrt.pop %v5242
      %v5505 = vmul.f32 %v5504, %v5242
      %v5506 = vmul.f32 %v5505, %v5504
      %v5507 = vmul.f32 0.5, %v5506
      %v5508 = vsub.f32 1.5, %v5507
      %v5509 = vmul.f32 %v5504, %v5508
      %vm5510 = vweird.f32 %v5242
      %vm5511 = vweird.f32 %v5504
      %vm5512 = vmor %vm5510, %vm5511
      %v5513 = vsel %vm5512, %v5504, %v5509
      %v5514 = vrsqrt.pop %v5243
      %v5515 = vmul.f32 %v5514, %v5243
      %v5516 = vmul.f32 %v5515, %v5514
      %v5517 = vmul.f32 0.5, %v5516
      %v5518 = vsub.f32 1.5, %v5517
      %v5519 = vmul.f32 %v5514, %v5518
      %vm5520 = vweird.f32 %v5243
      %vm5521 = vweird.f32 %v5514
      %vm5522 = vmor %vm5520, %vm5521
      %v5523 = vsel %vm5522, %v5514, %v5519
      %v5524 = vrsqrt.pop %v5244
      %v5525 = vmul.f32 %v5524, %v5244
      %v5526 = vmul.f32 %v5525, %v5524
      %v5527 = vmul.f32 0.5, %v5526
      %v5528 = vsub.f32 1.5, %v5527
      %v5529 = vmul.f32 %v5524, %v5528
      %vm5530 = vweird.f32 %v5244
      %vm5531 = vweird.f32 %v5524
      %vm5532 = vmor %vm5530, %vm5531
      %v5533 = vsel %vm5532, %v5524, %v5529
      %v5534 = vrsqrt.pop %v5245
      %v5535 = vmul.f32 %v5534, %v5245
      %v5536 = vmul.f32 %v5535, %v5534
      %v5537 = vmul.f32 0.5, %v5536
      %v5538 = vsub.f32 1.5, %v5537
      %v5539 = vmul.f32 %v5534, %v5538
      %vm5540 = vweird.f32 %v5245
      %vm5541 = vweird.f32 %v5534
      %vm5542 = vmor %vm5540, %vm5541
      %v5543 = vsel %vm5542, %v5534, %v5539
      %v5544 = vrsqrt.pop %v5246
      %v5545 = vmul.f32 %v5544, %v5246
      %v5546 = vmul.f32 %v5545, %v5544
      %v5547 = vmul.f32 0.5, %v5546
      %v5548 = vsub.f32 1.5, %v5547
      %v5549 = vmul.f32 %v5544, %v5548
      %vm5550 = vweird.f32 %v5246
      %vm5551 = vweird.f32 %v5544
      %vm5552 = vmor %vm5550, %vm5551
      %v5553 = vsel %vm5552, %v5544, %v5549
      %v5554 = vrsqrt.pop %v5247
      %v5555 = vmul.f32 %v5554, %v5247
      %v5556 = vmul.f32 %v5555, %v5554
      %v5557 = vmul.f32 0.5, %v5556
      %v5558 = vsub.f32 1.5, %v5557
      %v5559 = vmul.f32 %v5554, %v5558
      %vm5560 = vweird.f32 %v5247
      %vm5561 = vweird.f32 %v5554
      %vm5562 = vmor %vm5560, %vm5561
      %v5563 = vsel %vm5562, %v5554, %v5559
      %v5564 = vrsqrt.pop %v5248
      %v5565 = vmul.f32 %v5564, %v5248
      %v5566 = vmul.f32 %v5565, %v5564
      %v5567 = vmul.f32 0.5, %v5566
      %v5568 = vsub.f32 1.5, %v5567
      %v5569 = vmul.f32 %v5564, %v5568
      %vm5570 = vweird.f32 %v5248
      %vm5571 = vweird.f32 %v5564
      %vm5572 = vmor %vm5570, %vm5571
      %v5573 = vsel %vm5572, %v5564, %v5569
      %v5574 = vrsqrt.pop %v5249
      %v5575 = vmul.f32 %v5574, %v5249
      %v5576 = vmul.f32 %v5575, %v5574
      %v5577 = vmul.f32 0.5, %v5576
      %v5578 = vsub.f32 1.5, %v5577
      %v5579 = vmul.f32 %v5574, %v5578
      %vm5580 = vweird.f32 %v5249
      %vm5581 = vweird.f32 %v5574
      %vm5582 = vmor %vm5580, %vm5581
      %v5583 = vsel %vm5582, %v5574, %v5579
      %v5584 = vrsqrt.pop %v5250
      %v5585 = vmul.f32 %v5584, %v5250
      %v5586 = vmul.f32 %v5585, %v5584
      %v5587 = vmul.f32 0.5, %v5586
      %v5588 = vsub.f32 1.5, %v5587
      %v5589 = vmul.f32 %v5584, %v5588
      %vm5590 = vweird.f32 %v5250
      %vm5591 = vweird.f32 %v5584
      %vm5592 = vmor %vm5590, %vm5591
      %v5593 = vsel %vm5592, %v5584, %v5589
      %v5594 = vrsqrt.pop %v5251
      %v5595 = vmul.f32 %v5594, %v5251
      %v5596 = vmul.f32 %v5595, %v5594
      %v5597 = vmul.f32 0.5, %v5596
      %v5598 = vsub.f32 1.5, %v5597
      %v5599 = vmul.f32 %v5594, %v5598
      %vm5600 = vweird.f32 %v5251
      %vm5601 = vweird.f32 %v5594
      %vm5602 = vmor %vm5600, %vm5601
      %v5603 = vsel %vm5602, %v5594, %v5599
      %v5604 = vrsqrt.pop %v5252
      %v5605 = vmul.f32 %v5604, %v5252
      %v5606 = vmul.f32 %v5605, %v5604
      %v5607 = vmul.f32 0.5, %v5606
      %v5608 = vsub.f32 1.5, %v5607
      %v5609 = vmul.f32 %v5604, %v5608
      %vm5610 = vweird.f32 %v5252
      %vm5611 = vweird.f32 %v5604
      %vm5612 = vmor %vm5610, %vm5611
      %v5613 = vsel %vm5612, %v5604, %v5609
      %v5614 = vrsqrt.pop %v5253
      %v5615 = vmul.f32 %v5614, %v5253
      %v5616 = vmul.f32 %v5615, %v5614
      %v5617 = vmul.f32 0.5, %v5616
      %v5618 = vsub.f32 1.5, %v5617
      %v5619 = vmul.f32 %v5614, %v5618
      %vm5620 = vweird.f32 %v5253
      %vm5621 = vweird.f32 %v5614
      %vm5622 = vmor %vm5620, %vm5621
      %v5623 = vsel %vm5622, %v5614, %v5619
      %v5624 = vrsqrt.pop %v5254
      %v5625 = vmul.f32 %v5624, %v5254
      %v5626 = vmul.f32 %v5625, %v5624
      %v5627 = vmul.f32 0.5, %v5626
      %v5628 = vsub.f32 1.5, %v5627
      %v5629 = vmul.f32 %v5624, %v5628
      %vm5630 = vweird.f32 %v5254
      %vm5631 = vweird.f32 %v5624
      %vm5632 = vmor %vm5630, %vm5631
      %v5633 = vsel %vm5632, %v5624, %v5629
      %v5634 = vrsqrt.pop %v5255
      %v5635 = vmul.f32 %v5634, %v5255
      %v5636 = vmul.f32 %v5635, %v5634
      %v5637 = vmul.f32 0.5, %v5636
      %v5638 = vsub.f32 1.5, %v5637
      %v5639 = vmul.f32 %v5634, %v5638
      %vm5640 = vweird.f32 %v5255
      %vm5641 = vweird.f32 %v5634
      %vm5642 = vmor %vm5640, %vm5641
      %v5643 = vsel %vm5642, %v5634, %v5639
      %v5644 = vrsqrt.pop %v5256
      %v5645 = vmul.f32 %v5644, %v5256
      %v5646 = vmul.f32 %v5645, %v5644
      %v5647 = vmul.f32 0.5, %v5646
      %v5648 = vsub.f32 1.5, %v5647
      %v5649 = vmul.f32 %v5644, %v5648
      %vm5650 = vweird.f32 %v5256
      %vm5651 = vweird.f32 %v5644
      %vm5652 = vmor %vm5650, %vm5651
      %v5653 = vsel %vm5652, %v5644, %v5649
      %v5654 = vrsqrt.pop %v5257
      %v5655 = vmul.f32 %v5654, %v5257
      %v5656 = vmul.f32 %v5655, %v5654
      %v5657 = vmul.f32 0.5, %v5656
      %v5658 = vsub.f32 1.5, %v5657
      %v5659 = vmul.f32 %v5654, %v5658
      %vm5660 = vweird.f32 %v5257
      %vm5661 = vweird.f32 %v5654
      %vm5662 = vmor %vm5660, %vm5661
      %v5663 = vsel %vm5662, %v5654, %v5659
      %v5664 = vrsqrt.pop %v5258
      %v5665 = vmul.f32 %v5664, %v5258
      %v5666 = vmul.f32 %v5665, %v5664
      %v5667 = vmul.f32 0.5, %v5666
      %v5668 = vsub.f32 1.5, %v5667
      %v5669 = vmul.f32 %v5664, %v5668
      %vm5670 = vweird.f32 %v5258
      %vm5671 = vweird.f32 %v5664
      %vm5672 = vmor %vm5670, %vm5671
      %v5673 = vsel %vm5672, %v5664, %v5669
      %v5674 = vrsqrt.pop %v5259
      %v5675 = vmul.f32 %v5674, %v5259
      %v5676 = vmul.f32 %v5675, %v5674
      %v5677 = vmul.f32 0.5, %v5676
      %v5678 = vsub.f32 1.5, %v5677
      %v5679 = vmul.f32 %v5674, %v5678
      %vm5680 = vweird.f32 %v5259
      %vm5681 = vweird.f32 %v5674
      %vm5682 = vmor %vm5680, %vm5681
      %v5683 = vsel %vm5682, %v5674, %v5679
      %v5684 = vrsqrt.pop %v5260
      %v5685 = vmul.f32 %v5684, %v5260
      %v5686 = vmul.f32 %v5685, %v5684
      %v5687 = vmul.f32 0.5, %v5686
      %v5688 = vsub.f32 1.5, %v5687
      %v5689 = vmul.f32 %v5684, %v5688
      %vm5690 = vweird.f32 %v5260
      %vm5691 = vweird.f32 %v5684
      %vm5692 = vmor %vm5690, %vm5691
      %v5693 = vsel %vm5692, %v5684, %v5689
      %v5694 = vrsqrt.pop %v5261
      %v5695 = vmul.f32 %v5694, %v5261
      %v5696 = vmul.f32 %v5695, %v5694
      %v5697 = vmul.f32 0.5, %v5696
      %v5698 = vsub.f32 1.5, %v5697
      %v5699 = vmul.f32 %v5694, %v5698
      %vm5700 = vweird.f32 %v5261
      %vm5701 = vweird.f32 %v5694
      %vm5702 = vmor %vm5700, %vm5701
      %v5703 = vsel %vm5702, %v5694, %v5699
      %v5704 = vrsqrt.pop %v5262
      %v5705 = vmul.f32 %v5704, %v5262
      %v5706 = vmul.f32 %v5705, %v5704
      %v5707 = vmul.f32 0.5, %v5706
      %v5708 = vsub.f32 1.5, %v5707
      %v5709 = vmul.f32 %v5704, %v5708
      %vm5710 = vweird.f32 %v5262
      %vm5711 = vweird.f32 %v5704
      %vm5712 = vmor %vm5710, %vm5711
      %v5713 = vsel %vm5712, %v5704, %v5709
      %v5714 = vrsqrt.pop %v5263
      %v5715 = vmul.f32 %v5714, %v5263
      %v5716 = vmul.f32 %v5715, %v5714
      %v5717 = vmul.f32 0.5, %v5716
      %v5718 = vsub.f32 1.5, %v5717
      %v5719 = vmul.f32 %v5714, %v5718
      %vm5720 = vweird.f32 %v5263
      %vm5721 = vweird.f32 %v5714
      %vm5722 = vmor %vm5720, %vm5721
      %v5723 = vsel %vm5722, %v5714, %v5719
      %v5724 = vrsqrt.pop %v5264
      %v5725 = vmul.f32 %v5724, %v5264
      %v5726 = vmul.f32 %v5725, %v5724
      %v5727 = vmul.f32 0.5, %v5726
      %v5728 = vsub.f32 1.5, %v5727
      %v5729 = vmul.f32 %v5724, %v5728
      %vm5730 = vweird.f32 %v5264
      %vm5731 = vweird.f32 %v5724
      %vm5732 = vmor %vm5730, %vm5731
      %v5733 = vsel %vm5732, %v5724, %v5729
      %v5734 = vrsqrt.pop %v5265
      %v5735 = vmul.f32 %v5734, %v5265
      %v5736 = vmul.f32 %v5735, %v5734
      %v5737 = vmul.f32 0.5, %v5736
      %v5738 = vsub.f32 1.5, %v5737
      %v5739 = vmul.f32 %v5734, %v5738
      %vm5740 = vweird.f32 %v5265
      %vm5741 = vweird.f32 %v5734
      %vm5742 = vmor %vm5740, %vm5741
      %v5743 = vsel %vm5742, %v5734, %v5739
      %v5744 = vrsqrt.pop %v5266
      %v5745 = vmul.f32 %v5744, %v5266
      %v5746 = vmul.f32 %v5745, %v5744
      %v5747 = vmul.f32 0.5, %v5746
      %v5748 = vsub.f32 1.5, %v5747
      %v5749 = vmul.f32 %v5744, %v5748
      %vm5750 = vweird.f32 %v5266
      %vm5751 = vweird.f32 %v5744
      %vm5752 = vmor %vm5750, %vm5751
      %v5753 = vsel %vm5752, %v5744, %v5749
      %v5754 = vrsqrt.pop %v5267
      %v5755 = vmul.f32 %v5754, %v5267
      %v5756 = vmul.f32 %v5755, %v5754
      %v5757 = vmul.f32 0.5, %v5756
      %v5758 = vsub.f32 1.5, %v5757
      %v5759 = vmul.f32 %v5754, %v5758
      %vm5760 = vweird.f32 %v5267
      %vm5761 = vweird.f32 %v5754
      %vm5762 = vmor %vm5760, %vm5761
      %v5763 = vsel %vm5762, %v5754, %v5759
      %v5764 = vrsqrt.pop %v5268
      %v5765 = vmul.f32 %v5764, %v5268
      %v5766 = vmul.f32 %v5765, %v5764
      %v5767 = vmul.f32 0.5, %v5766
      %v5768 = vsub.f32 1.5, %v5767
      %v5769 = vmul.f32 %v5764, %v5768
      %vm5770 = vweird.f32 %v5268
      %vm5771 = vweird.f32 %v5764
      %vm5772 = vmor %vm5770, %vm5771
      %v5773 = vsel %vm5772, %v5764, %v5769
      %v5774 = vrsqrt.pop %v5269
      %v5775 = vmul.f32 %v5774, %v5269
      %v5776 = vmul.f32 %v5775, %v5774
      %v5777 = vmul.f32 0.5, %v5776
      %v5778 = vsub.f32 1.5, %v5777
      %v5779 = vmul.f32 %v5774, %v5778
      %vm5780 = vweird.f32 %v5269
      %vm5781 = vweird.f32 %v5774
      %vm5782 = vmor %vm5780, %vm5781
      %v5783 = vsel %vm5782, %v5774, %v5779
      %v5784 = vrsqrt.pop %v5270
      %v5785 = vmul.f32 %v5784, %v5270
      %v5786 = vmul.f32 %v5785, %v5784
      %v5787 = vmul.f32 0.5, %v5786
      %v5788 = vsub.f32 1.5, %v5787
      %v5789 = vmul.f32 %v5784, %v5788
      %vm5790 = vweird.f32 %v5270
      %vm5791 = vweird.f32 %v5784
      %vm5792 = vmor %vm5790, %vm5791
      %v5793 = vsel %vm5792, %v5784, %v5789
      %v5794 = vrsqrt.pop %v5271
      %v5795 = vmul.f32 %v5794, %v5271
      %v5796 = vmul.f32 %v5795, %v5794
      %v5797 = vmul.f32 0.5, %v5796
      %v5798 = vsub.f32 1.5, %v5797
      %v5799 = vmul.f32 %v5794, %v5798
      %vm5800 = vweird.f32 %v5271
      %vm5801 = vweird.f32 %v5794
      %vm5802 = vmor %vm5800, %vm5801
      %v5803 = vsel %vm5802, %v5794, %v5799
      %v5804 = vrsqrt.pop %v5272
      %v5805 = vmul.f32 %v5804, %v5272
      %v5806 = vmul.f32 %v5805, %v5804
      %v5807 = vmul.f32 0.5, %v5806
      %v5808 = vsub.f32 1.5, %v5807
      %v5809 = vmul.f32 %v5804, %v5808
      %vm5810 = vweird.f32 %v5272
      %vm5811 = vweird.f32 %v5804
      %vm5812 = vmor %vm5810, %vm5811
      %v5813 = vsel %vm5812, %v5804, %v5809
      %v5814 = vrsqrt.pop %v5273
      %v5815 = vmul.f32 %v5814, %v5273
      %v5816 = vmul.f32 %v5815, %v5814
      %v5817 = vmul.f32 0.5, %v5816
      %v5818 = vsub.f32 1.5, %v5817
      %v5819 = vmul.f32 %v5814, %v5818
      %vm5820 = vweird.f32 %v5273
      %vm5821 = vweird.f32 %v5814
      %vm5822 = vmor %vm5820, %vm5821
      %v5823 = vsel %vm5822, %v5814, %v5819
      %v5824 = vrsqrt.pop %v5274
      %v5825 = vmul.f32 %v5824, %v5274
      %v5826 = vmul.f32 %v5825, %v5824
      %v5827 = vmul.f32 0.5, %v5826
      %v5828 = vsub.f32 1.5, %v5827
      %v5829 = vmul.f32 %v5824, %v5828
      %vm5830 = vweird.f32 %v5274
      %vm5831 = vweird.f32 %v5824
      %vm5832 = vmor %vm5830, %vm5831
      %v5833 = vsel %vm5832, %v5824, %v5829
      %v5834 = vrsqrt.pop %v5275
      %v5835 = vmul.f32 %v5834, %v5275
      %v5836 = vmul.f32 %v5835, %v5834
      %v5837 = vmul.f32 0.5, %v5836
      %v5838 = vsub.f32 1.5, %v5837
      %v5839 = vmul.f32 %v5834, %v5838
      %vm5840 = vweird.f32 %v5275
      %vm5841 = vweird.f32 %v5834
      %vm5842 = vmor %vm5840, %vm5841
      %v5843 = vsel %vm5842, %v5834, %v5839
      %v5844 = vrsqrt.pop %v5276
      %v5845 = vmul.f32 %v5844, %v5276
      %v5846 = vmul.f32 %v5845, %v5844
      %v5847 = vmul.f32 0.5, %v5846
      %v5848 = vsub.f32 1.5, %v5847
      %v5849 = vmul.f32 %v5844, %v5848
      %vm5850 = vweird.f32 %v5276
      %vm5851 = vweird.f32 %v5844
      %vm5852 = vmor %vm5850, %vm5851
      %v5853 = vsel %vm5852, %v5844, %v5849
      %v5854 = vrsqrt.pop %v5277
      %v5855 = vmul.f32 %v5854, %v5277
      %v5856 = vmul.f32 %v5855, %v5854
      %v5857 = vmul.f32 0.5, %v5856
      %v5858 = vsub.f32 1.5, %v5857
      %v5859 = vmul.f32 %v5854, %v5858
      %vm5860 = vweird.f32 %v5277
      %vm5861 = vweird.f32 %v5854
      %vm5862 = vmor %vm5860, %vm5861
      %v5863 = vsel %vm5862, %v5854, %v5859
      %v5864 = vrsqrt.pop %v5278
      %v5865 = vmul.f32 %v5864, %v5278
      %v5866 = vmul.f32 %v5865, %v5864
      %v5867 = vmul.f32 0.5, %v5866
      %v5868 = vsub.f32 1.5, %v5867
      %v5869 = vmul.f32 %v5864, %v5868
      %vm5870 = vweird.f32 %v5278
      %vm5871 = vweird.f32 %v5864
      %vm5872 = vmor %vm5870, %vm5871
      %v5873 = vsel %vm5872, %v5864, %v5869
      %v5874 = vrsqrt.pop %v5279
      %v5875 = vmul.f32 %v5874, %v5279
      %v5876 = vmul.f32 %v5875, %v5874
      %v5877 = vmul.f32 0.5, %v5876
      %v5878 = vsub.f32 1.5, %v5877
      %v5879 = vmul.f32 %v5874, %v5878
      %vm5880 = vweird.f32 %v5279
      %vm5881 = vweird.f32 %v5874
      %vm5882 = vmor %vm5880, %vm5881
      %v5883 = vsel %vm5882, %v5874, %v5879
      %v5884 = vrsqrt.pop %v5280
      %v5885 = vmul.f32 %v5884, %v5280
      %v5886 = vmul.f32 %v5885, %v5884
      %v5887 = vmul.f32 0.5, %v5886
      %v5888 = vsub.f32 1.5, %v5887
      %v5889 = vmul.f32 %v5884, %v5888
      %vm5890 = vweird.f32 %v5280
      %vm5891 = vweird.f32 %v5884
      %vm5892 = vmor %vm5890, %vm5891
      %v5893 = vsel %vm5892, %v5884, %v5889
      %v5894 = vrsqrt.pop %v5281
      %v5895 = vmul.f32 %v5894, %v5281
      %v5896 = vmul.f32 %v5895, %v5894
      %v5897 = vmul.f32 0.5, %v5896
      %v5898 = vsub.f32 1.5, %v5897
      %v5899 = vmul.f32 %v5894, %v5898
      %vm5900 = vweird.f32 %v5281
      %vm5901 = vweird.f32 %v5894
      %vm5902 = vmor %vm5900, %vm5901
      %v5903 = vsel %vm5902, %v5894, %v5899
      %v5904 = vrsqrt.pop %v5282
      %v5905 = vmul.f32 %v5904, %v5282
      %v5906 = vmul.f32 %v5905, %v5904
      %v5907 = vmul.f32 0.5, %v5906
      %v5908 = vsub.f32 1.5, %v5907
      %v5909 = vmul.f32 %v5904, %v5908
      %vm5910 = vweird.f32 %v5282
      %vm5911 = vweird.f32 %v5904
      %vm5912 = vmor %vm5910, %vm5911
      %v5913 = vsel %vm5912, %v5904, %v5909
      %v5914 = vrsqrt.pop %v5283
      %v5915 = vmul.f32 %v5914, %v5283
      %v5916 = vmul.f32 %v5915, %v5914
      %v5917 = vmul.f32 0.5, %v5916
      %v5918 = vsub.f32 1.5, %v5917
      %v5919 = vmul.f32 %v5914, %v5918
      %vm5920 = vweird.f32 %v5283
      %vm5921 = vweird.f32 %v5914
      %vm5922 = vmor %vm5920, %vm5921
      %v5923 = vsel %vm5922, %v5914, %v5919
      %v5924 = vmul.f32 %v5156, %v5293
      %v5925 = vmul.f32 %v5157, %v5303
      %v5926 = vmul.f32 %v5158, %v5313
      %v5927 = vmul.f32 %v5159, %v5323
      %v5928 = vmul.f32 %v5160, %v5333
      %v5929 = vmul.f32 %v5161, %v5343
      %v5930 = vmul.f32 %v5162, %v5353
      %v5931 = vmul.f32 %v5163, %v5363
      %v5932 = vmul.f32 %v5164, %v5373
      %v5933 = vmul.f32 %v5165, %v5383
      %v5934 = vmul.f32 %v5166, %v5393
      %v5935 = vmul.f32 %v5167, %v5403
      %v5936 = vmul.f32 %v5168, %v5413
      %v5937 = vmul.f32 %v5169, %v5423
      %v5938 = vmul.f32 %v5170, %v5433
      %v5939 = vmul.f32 %v5171, %v5443
      %v5940 = vmul.f32 %v5172, %v5453
      %v5941 = vmul.f32 %v5173, %v5463
      %v5942 = vmul.f32 %v5174, %v5473
      %v5943 = vmul.f32 %v5175, %v5483
      %v5944 = vmul.f32 %v5176, %v5493
      %v5945 = vmul.f32 %v5177, %v5503
      %v5946 = vmul.f32 %v5178, %v5513
      %v5947 = vmul.f32 %v5179, %v5523
      %v5948 = vmul.f32 %v5180, %v5533
      %v5949 = vmul.f32 %v5181, %v5543
      %v5950 = vmul.f32 %v5182, %v5553
      %v5951 = vmul.f32 %v5183, %v5563
      %v5952 = vmul.f32 %v5184, %v5573
      %v5953 = vmul.f32 %v5185, %v5583
      %v5954 = vmul.f32 %v5186, %v5593
      %v5955 = vmul.f32 %v5187, %v5603
      %v5956 = vmul.f32 %v5188, %v5613
      %v5957 = vmul.f32 %v5189, %v5623
      %v5958 = vmul.f32 %v5190, %v5633
      %v5959 = vmul.f32 %v5191, %v5643
      %v5960 = vmul.f32 %v5192, %v5653
      %v5961 = vmul.f32 %v5193, %v5663
      %v5962 = vmul.f32 %v5194, %v5673
      %v5963 = vmul.f32 %v5195, %v5683
      %v5964 = vmul.f32 %v5196, %v5693
      %v5965 = vmul.f32 %v5197, %v5703
      %v5966 = vmul.f32 %v5198, %v5713
      %v5967 = vmul.f32 %v5199, %v5723
      %v5968 = vmul.f32 %v5200, %v5733
      %v5969 = vmul.f32 %v5201, %v5743
      %v5970 = vmul.f32 %v5202, %v5753
      %v5971 = vmul.f32 %v5203, %v5763
      %v5972 = vmul.f32 %v5204, %v5773
      %v5973 = vmul.f32 %v5205, %v5783
      %v5974 = vmul.f32 %v5206, %v5793
      %v5975 = vmul.f32 %v5207, %v5803
      %v5976 = vmul.f32 %v5208, %v5813
      %v5977 = vmul.f32 %v5209, %v5823
      %v5978 = vmul.f32 %v5210, %v5833
      %v5979 = vmul.f32 %v5211, %v5843
      %v5980 = vmul.f32 %v5212, %v5853
      %v5981 = vmul.f32 %v5213, %v5863
      %v5982 = vmul.f32 %v5214, %v5873
      %v5983 = vmul.f32 %v5215, %v5883
      %v5984 = vmul.f32 %v5216, %v5893
      %v5985 = vmul.f32 %v5217, %v5903
      %v5986 = vmul.f32 %v5218, %v5913
      %v5987 = vmul.f32 %v5219, %v5923
      %v5988 = vmax.f32 %v5924, 0.0
      %v5989 = vmax.f32 %v5925, 0.0
      %v5990 = vmax.f32 %v5926, 0.0
      %v5991 = vmax.f32 %v5927, 0.0
      %v5992 = vmax.f32 %v5928, 0.0
      %v5993 = vmax.f32 %v5929, 0.0
      %v5994 = vmax.f32 %v5930, 0.0
      %v5995 = vmax.f32 %v5931, 0.0
      %v5996 = vmax.f32 %v5932, 0.0
      %v5997 = vmax.f32 %v5933, 0.0
      %v5998 = vmax.f32 %v5934, 0.0
      %v5999 = vmax.f32 %v5935, 0.0
      %v6000 = vmax.f32 %v5936, 0.0
      %v6001 = vmax.f32 %v5937, 0.0
      %v6002 = vmax.f32 %v5938, 0.0
      %v6003 = vmax.f32 %v5939, 0.0
      %v6004 = vmax.f32 %v5940, 0.0
      %v6005 = vmax.f32 %v5941, 0.0
      %v6006 = vmax.f32 %v5942, 0.0
      %v6007 = vmax.f32 %v5943, 0.0
      %v6008 = vmax.f32 %v5944, 0.0
      %v6009 = vmax.f32 %v5945, 0.0
      %v6010 = vmax.f32 %v5946, 0.0
      %v6011 = vmax.f32 %v5947, 0.0
      %v6012 = vmax.f32 %v5948, 0.0
      %v6013 = vmax.f32 %v5949, 0.0
      %v6014 = vmax.f32 %v5950, 0.0
      %v6015 = vmax.f32 %v5951, 0.0
      %v6016 = vmax.f32 %v5952, 0.0
      %v6017 = vmax.f32 %v5953, 0.0
      %v6018 = vmax.f32 %v5954, 0.0
      %v6019 = vmax.f32 %v5955, 0.0
      %v6020 = vmax.f32 %v5956, 0.0
      %v6021 = vmax.f32 %v5957, 0.0
      %v6022 = vmax.f32 %v5958, 0.0
      %v6023 = vmax.f32 %v5959, 0.0
      %v6024 = vmax.f32 %v5960, 0.0
      %v6025 = vmax.f32 %v5961, 0.0
      %v6026 = vmax.f32 %v5962, 0.0
      %v6027 = vmax.f32 %v5963, 0.0
      %v6028 = vmax.f32 %v5964, 0.0
      %v6029 = vmax.f32 %v5965, 0.0
      %v6030 = vmax.f32 %v5966, 0.0
      %v6031 = vmax.f32 %v5967, 0.0
      %v6032 = vmax.f32 %v5968, 0.0
      %v6033 = vmax.f32 %v5969, 0.0
      %v6034 = vmax.f32 %v5970, 0.0
      %v6035 = vmax.f32 %v5971, 0.0
      %v6036 = vmax.f32 %v5972, 0.0
      %v6037 = vmax.f32 %v5973, 0.0
      %v6038 = vmax.f32 %v5974, 0.0
      %v6039 = vmax.f32 %v5975, 0.0
      %v6040 = vmax.f32 %v5976, 0.0
      %v6041 = vmax.f32 %v5977, 0.0
      %v6042 = vmax.f32 %v5978, 0.0
      %v6043 = vmax.f32 %v5979, 0.0
      %v6044 = vmax.f32 %v5980, 0.0
      %v6045 = vmax.f32 %v5981, 0.0
      %v6046 = vmax.f32 %v5982, 0.0
      %v6047 = vmax.f32 %v5983, 0.0
      %v6048 = vmax.f32 %v5984, 0.0
      %v6049 = vmax.f32 %v5985, 0.0
      %v6050 = vmax.f32 %v5986, 0.0
      %v6051 = vmax.f32 %v5987, 0.0
      %v6052 = vld [vmem:[%s4] sm:$0xff]
      %v6053 = vld [vmem:[%s4 + $0x8] sm:$0xff]
      %v6054 = vld [vmem:[%s4 + $0x10] sm:$0xff]
      %v6055 = vld [vmem:[%s4 + $0x18] sm:$0xff]
      %v6056 = vld [vmem:[%s4 + $0x20] sm:$0xff]
      %v6057 = vld [vmem:[%s4 + $0x28] sm:$0xff]
      %v6058 = vld [vmem:[%s4 + $0x30] sm:$0xff]
      %v6059 = vld [vmem:[%s4 + $0x38] sm:$0xff]
      %v6060 = vld [vmem:[%s4 + $0x40] sm:$0xff]
      %v6061 = vld [vmem:[%s4 + $0x48] sm:$0xff]
      %v6062 = vld [vmem:[%s4 + $0x50] sm:$0xff]
      %v6063 = vld [vmem:[%s4 + $0x58] sm:$0xff]
      %v6064 = vld [vmem:[%s4 + $0x60] sm:$0xff]
      %v6065 = vld [vmem:[%s4 + $0x68] sm:$0xff]
      %v6066 = vld [vmem:[%s4 + $0x70] sm:$0xff]
      %v6067 = vld [vmem:[%s4 + $0x78] sm:$0xff]
      %v6068 = vld [vmem:[%s8] sm:$0x1]
      %v6070 = vperm.slane %v6068, 0
      %6072 = vmatpush.msra.mxu0 %v6067
      %6073 = vmatpush.msra.mxu0 %v6066
      %6074 = vmatpush.msra.mxu0 %v6065
      %6075 = vmatpush.msra.mxu0 %v6064
      %6076 = vmatpush.msra.mxu0 %v6063
      %6077 = vmatpush.msra.mxu0 %v6062
      %6078 = vmatpush.msra.mxu0 %v6061
      %6079 = vmatpush.msra.mxu0 %v6060
      %6080 = vmatpush.msra.mxu0 %v6059
      %6081 = vmatpush.msra.mxu0 %v6058
      %6082 = vmatpush.msra.mxu0 %v6057
      %6083 = vmatpush.msra.mxu0 %v6056
      %6084 = vmatpush.msra.mxu0 %v6055
      %6085 = vmatpush.msra.mxu0 %v6054
      %6086 = vmatpush.msra.mxu0 %v6053
      %6087 = vmatpush.msra.mxu0 %v6052
      %6088 = vmatmul.f32.gmra.mxu0 %v5988
      %v6089 = vpop.f32.mrf.mxu0
      %v6090 = vadd.f32 %v6070, %v6089
      %6091 = vmatmul.f32.gmra.mxu0 %v5989
      %v6092 = vpop.f32.mrf.mxu0
      %v6093 = vadd.f32 %v6070, %v6092
      %6094 = vmatmul.f32.gmra.mxu0 %v5990
      %v6095 = vpop.f32.mrf.mxu0
      %v6096 = vadd.f32 %v6070, %v6095
      %6097 = vmatmul.f32.gmra.mxu0 %v5991
      %v6098 = vpop.f32.mrf.mxu0
      %v6099 = vadd.f32 %v6070, %v6098
      %6100 = vmatmul.f32.gmra.mxu0 %v5992
      %v6101 = vpop.f32.mrf.mxu0
      %v6102 = vadd.f32 %v6070, %v6101
      %6103 = vmatmul.f32.gmra.mxu0 %v5993
      %v6104 = vpop.f32.mrf.mxu0
      %v6105 = vadd.f32 %v6070, %v6104
      %6106 = vmatmul.f32.gmra.mxu0 %v5994
      %v6107 = vpop.f32.mrf.mxu0
      %v6108 = vadd.f32 %v6070, %v6107
      %6109 = vmatmul.f32.gmra.mxu0 %v5995
      %v6110 = vpop.f32.mrf.mxu0
      %v6111 = vadd.f32 %v6070, %v6110
      %6112 = vmatmul.f32.gmra.mxu0 %v5996
      %v6113 = vpop.f32.mrf.mxu0
      %v6114 = vadd.f32 %v6070, %v6113
      %6115 = vmatmul.f32.gmra.mxu0 %v5997
      %v6116 = vpop.f32.mrf.mxu0
      %v6117 = vadd.f32 %v6070, %v6116
      %6118 = vmatmul.f32.gmra.mxu0 %v5998
      %v6119 = vpop.f32.mrf.mxu0
      %v6120 = vadd.f32 %v6070, %v6119
      %6121 = vmatmul.f32.gmra.mxu0 %v5999
      %v6122 = vpop.f32.mrf.mxu0
      %v6123 = vadd.f32 %v6070, %v6122
      %6124 = vmatmul.f32.gmra.mxu0 %v6000
      %v6125 = vpop.f32.mrf.mxu0
      %v6126 = vadd.f32 %v6070, %v6125
      %6127 = vmatmul.f32.gmra.mxu0 %v6001
      %v6128 = vpop.f32.mrf.mxu0
      %v6129 = vadd.f32 %v6070, %v6128
      %6130 = vmatmul.f32.gmra.mxu0 %v6002
      %v6131 = vpop.f32.mrf.mxu0
      %v6132 = vadd.f32 %v6070, %v6131
      %6133 = vmatmul.f32.gmra.mxu0 %v6003
      %v6134 = vpop.f32.mrf.mxu0
      %v6135 = vadd.f32 %v6070, %v6134
      %6136 = vmatmul.f32.gmra.mxu0 %v6004
      %v6137 = vpop.f32.mrf.mxu0
      %v6138 = vadd.f32 %v6070, %v6137
      %6139 = vmatmul.f32.gmra.mxu0 %v6005
      %v6140 = vpop.f32.mrf.mxu0
      %v6141 = vadd.f32 %v6070, %v6140
      %6142 = vmatmul.f32.gmra.mxu0 %v6006
      %v6143 = vpop.f32.mrf.mxu0
      %v6144 = vadd.f32 %v6070, %v6143
      %6145 = vmatmul.f32.gmra.mxu0 %v6007
      %v6146 = vpop.f32.mrf.mxu0
      %v6147 = vadd.f32 %v6070, %v6146
      %6148 = vmatmul.f32.gmra.mxu0 %v6008
      %v6149 = vpop.f32.mrf.mxu0
      %v6150 = vadd.f32 %v6070, %v6149
      %6151 = vmatmul.f32.gmra.mxu0 %v6009
      %v6152 = vpop.f32.mrf.mxu0
      %v6153 = vadd.f32 %v6070, %v6152
      %6154 = vmatmul.f32.gmra.mxu0 %v6010
      %v6155 = vpop.f32.mrf.mxu0
      %v6156 = vadd.f32 %v6070, %v6155
      %6157 = vmatmul.f32.gmra.mxu0 %v6011
      %v6158 = vpop.f32.mrf.mxu0
      %v6159 = vadd.f32 %v6070, %v6158
      %6160 = vmatmul.f32.gmra.mxu0 %v6012
      %v6161 = vpop.f32.mrf.mxu0
      %v6162 = vadd.f32 %v6070, %v6161
      %6163 = vmatmul.f32.gmra.mxu0 %v6013
      %v6164 = vpop.f32.mrf.mxu0
      %v6165 = vadd.f32 %v6070, %v6164
      %6166 = vmatmul.f32.gmra.mxu0 %v6014
      %v6167 = vpop.f32.mrf.mxu0
      %v6168 = vadd.f32 %v6070, %v6167
      %6169 = vmatmul.f32.gmra.mxu0 %v6015
      %v6170 = vpop.f32.mrf.mxu0
      %v6171 = vadd.f32 %v6070, %v6170
      %6172 = vmatmul.f32.gmra.mxu0 %v6016
      %v6173 = vpop.f32.mrf.mxu0
      %v6174 = vadd.f32 %v6070, %v6173
      %6175 = vmatmul.f32.gmra.mxu0 %v6017
      %v6176 = vpop.f32.mrf.mxu0
      %v6177 = vadd.f32 %v6070, %v6176
      %6178 = vmatmul.f32.gmra.mxu0 %v6018
      %v6179 = vpop.f32.mrf.mxu0
      %v6180 = vadd.f32 %v6070, %v6179
      %6181 = vmatmul.f32.gmra.mxu0 %v6019
      %v6182 = vpop.f32.mrf.mxu0
      %v6183 = vadd.f32 %v6070, %v6182
      %6184 = vmatmul.f32.gmra.mxu0 %v6020
      %v6185 = vpop.f32.mrf.mxu0
      %v6186 = vadd.f32 %v6070, %v6185
      %6187 = vmatmul.f32.gmra.mxu0 %v6021
      %v6188 = vpop.f32.mrf.mxu0
      %v6189 = vadd.f32 %v6070, %v6188
      %6190 = vmatmul.f32.gmra.mxu0 %v6022
      %v6191 = vpop.f32.mrf.mxu0
      %v6192 = vadd.f32 %v6070, %v6191
      %6193 = vmatmul.f32.gmra.mxu0 %v6023
      %v6194 = vpop.f32.mrf.mxu0
      %v6195 = vadd.f32 %v6070, %v6194
      %6196 = vmatmul.f32.gmra.mxu0 %v6024
      %v6197 = vpop.f32.mrf.mxu0
      %v6198 = vadd.f32 %v6070, %v6197
      %6199 = vmatmul.f32.gmra.mxu0 %v6025
      %v6200 = vpop.f32.mrf.mxu0
      %v6201 = vadd.f32 %v6070, %v6200
      %6202 = vmatmul.f32.gmra.mxu0 %v6026
      %v6203 = vpop.f32.mrf.mxu0
      %v6204 = vadd.f32 %v6070, %v6203
      %6205 = vmatmul.f32.gmra.mxu0 %v6027
      %v6206 = vpop.f32.mrf.mxu0
      %v6207 = vadd.f32 %v6070, %v6206
      %6208 = vmatmul.f32.gmra.mxu0 %v6028
      %v6209 = vpop.f32.mrf.mxu0
      %v6210 = vadd.f32 %v6070, %v6209
      %6211 = vmatmul.f32.gmra.mxu0 %v6029
      %v6212 = vpop.f32.mrf.mxu0
      %v6213 = vadd.f32 %v6070, %v6212
      %6214 = vmatmul.f32.gmra.mxu0 %v6030
      %v6215 = vpop.f32.mrf.mxu0
      %v6216 = vadd.f32 %v6070, %v6215
      %6217 = vmatmul.f32.gmra.mxu0 %v6031
      %v6218 = vpop.f32.mrf.mxu0
      %v6219 = vadd.f32 %v6070, %v6218
      %6220 = vmatmul.f32.gmra.mxu0 %v6032
      %v6221 = vpop.f32.mrf.mxu0
      %v6222 = vadd.f32 %v6070, %v6221
      %6223 = vmatmul.f32.gmra.mxu0 %v6033
      %v6224 = vpop.f32.mrf.mxu0
      %v6225 = vadd.f32 %v6070, %v6224
      %6226 = vmatmul.f32.gmra.mxu0 %v6034
      %v6227 = vpop.f32.mrf.mxu0
      %v6228 = vadd.f32 %v6070, %v6227
      %6229 = vmatmul.f32.gmra.mxu0 %v6035
      %v6230 = vpop.f32.mrf.mxu0
      %v6231 = vadd.f32 %v6070, %v6230
      %6232 = vmatmul.f32.gmra.mxu0 %v6036
      %v6233 = vpop.f32.mrf.mxu0
      %v6234 = vadd.f32 %v6070, %v6233
      %6235 = vmatmul.f32.gmra.mxu0 %v6037
      %v6236 = vpop.f32.mrf.mxu0
      %v6237 = vadd.f32 %v6070, %v6236
      %6238 = vmatmul.f32.gmra.mxu0 %v6038
      %v6239 = vpop.f32.mrf.mxu0
      %v6240 = vadd.f32 %v6070, %v6239
      %6241 = vmatmul.f32.gmra.mxu0 %v6039
      %v6242 = vpop.f32.mrf.mxu0
      %v6243 = vadd.f32 %v6070, %v6242
      %6244 = vmatmul.f32.gmra.mxu0 %v6040
      %v6245 = vpop.f32.mrf.mxu0
      %v6246 = vadd.f32 %v6070, %v6245
      %6247 = vmatmul.f32.gmra.mxu0 %v6041
      %v6248 = vpop.f32.mrf.mxu0
      %v6249 = vadd.f32 %v6070, %v6248
      %6250 = vmatmul.f32.gmra.mxu0 %v6042
      %v6251 = vpop.f32.mrf.mxu0
      %v6252 = vadd.f32 %v6070, %v6251
      %6253 = vmatmul.f32.gmra.mxu0 %v6043
      %v6254 = vpop.f32.mrf.mxu0
      %v6255 = vadd.f32 %v6070, %v6254
      %6256 = vmatmul.f32.gmra.mxu0 %v6044
      %v6257 = vpop.f32.mrf.mxu0
      %v6258 = vadd.f32 %v6070, %v6257
      %6259 = vmatmul.f32.gmra.mxu0 %v6045
      %v6260 = vpop.f32.mrf.mxu0
      %v6261 = vadd.f32 %v6070, %v6260
      %6262 = vmatmul.f32.gmra.mxu0 %v6046
      %v6263 = vpop.f32.mrf.mxu0
      %v6264 = vadd.f32 %v6070, %v6263
      %6265 = vmatmul.f32.gmra.mxu0 %v6047
      %v6266 = vpop.f32.mrf.mxu0
      %v6267 = vadd.f32 %v6070, %v6266
      %6268 = vmatmul.f32.gmra.mxu0 %v6048
      %v6269 = vpop.f32.mrf.mxu0
      %v6270 = vadd.f32 %v6070, %v6269
      %6271 = vmatmul.f32.gmra.mxu0 %v6049
      %v6272 = vpop.f32.mrf.mxu0
      %v6273 = vadd.f32 %v6070, %v6272
      %6274 = vmatmul.f32.gmra.mxu0 %v6050
      %v6275 = vpop.f32.mrf.mxu0
      %v6276 = vadd.f32 %v6070, %v6275
      %6277 = vmatmul.f32.gmra.mxu0 %v6051
      %v6278 = vpop.f32.mrf.mxu0
      %v6279 = vadd.f32 %v6070, %v6278
      %6280 = vdwg.mxu0
      %v6281 = vld [vmem:[%s10] sm:$0xff]
      %v6282 = vld [vmem:[%s10 + $0x8] sm:$0xff]
      %vm6283 = vcmask 130048
      %v6285 = vsel %vm6283, %v6090, 0
      %v6288 = vsel %vm6283, %v6093, 0
      %v6291 = vsel %vm6283, %v6096, 0
      %v6294 = vsel %vm6283, %v6099, 0
      %v6297 = vsel %vm6283, %v6102, 0
      %v6300 = vsel %vm6283, %v6105, 0
      %v6303 = vsel %vm6283, %v6108, 0
      %v6306 = vsel %vm6283, %v6111, 0
      %v6309 = vsel %vm6283, %v6114, 0
      %v6312 = vsel %vm6283, %v6117, 0
      %v6315 = vsel %vm6283, %v6120, 0
      %v6318 = vsel %vm6283, %v6123, 0
      %v6321 = vsel %vm6283, %v6126, 0
      %v6324 = vsel %vm6283, %v6129, 0
      %v6327 = vsel %vm6283, %v6132, 0
      %v6330 = vsel %vm6283, %v6135, 0
      %v6333 = vsel %vm6283, %v6138, 0
      %v6336 = vsel %vm6283, %v6141, 0
      %v6339 = vsel %vm6283, %v6144, 0
      %v6342 = vsel %vm6283, %v6147, 0
      %v6345 = vsel %vm6283, %v6150, 0
      %v6348 = vsel %vm6283, %v6153, 0
      %v6351 = vsel %vm6283, %v6156, 0
      %v6354 = vsel %vm6283, %v6159, 0
      %v6357 = vsel %vm6283, %v6162, 0
      %v6360 = vsel %vm6283, %v6165, 0
      %v6363 = vsel %vm6283, %v6168, 0
      %v6366 = vsel %vm6283, %v6171, 0
      %v6369 = vsel %vm6283, %v6174, 0
      %v6372 = vsel %vm6283, %v6177, 0
      %v6375 = vsel %vm6283, %v6180, 0
      %v6378 = vsel %vm6283, %v6183, 0
      %v6381 = vsel %vm6283, %v6186, 0
      %v6384 = vsel %vm6283, %v6189, 0
      %v6387 = vsel %vm6283, %v6192, 0
      %v6390 = vsel %vm6283, %v6195, 0
      %v6393 = vsel %vm6283, %v6198, 0
      %v6396 = vsel %vm6283, %v6201, 0
      %v6399 = vsel %vm6283, %v6204, 0
      %v6402 = vsel %vm6283, %v6207, 0
      %v6405 = vsel %vm6283, %v6210, 0
      %v6408 = vsel %vm6283, %v6213, 0
      %v6411 = vsel %vm6283, %v6216, 0
      %v6414 = vsel %vm6283, %v6219, 0
      %v6417 = vsel %vm6283, %v6222, 0
      %v6420 = vsel %vm6283, %v6225, 0
      %v6423 = vsel %vm6283, %v6228, 0
      %v6426 = vsel %vm6283, %v6231, 0
      %v6429 = vsel %vm6283, %v6234, 0
      %v6432 = vsel %vm6283, %v6237, 0
      %v6435 = vsel %vm6283, %v6240, 0
      %v6438 = vsel %vm6283, %v6243, 0
      %v6441 = vsel %vm6283, %v6246, 0
      %v6444 = vsel %vm6283, %v6249, 0
      %v6447 = vsel %vm6283, %v6252, 0
      %v6450 = vsel %vm6283, %v6255, 0
      %v6453 = vsel %vm6283, %v6258, 0
      %v6456 = vsel %vm6283, %v6261, 0
      %v6459 = vsel %vm6283, %v6264, 0
      %v6462 = vsel %vm6283, %v6267, 0
      %v6465 = vsel %vm6283, %v6270, 0
      %v6468 = vsel %vm6283, %v6273, 0
      %v6471 = vsel %vm6283, %v6276, 0
      %v6474 = vsel %vm6283, %v6279, 0
      %6476 = vmatpush.msra.mxu0 0.0
      %6477 = vmatpush.msra.mxu0 0.0
      %6478 = vmatpush.msra.mxu0 0.0
      %6479 = vmatpush.msra.mxu0 0.0
      %6480 = vmatpush.msra.mxu0 0.0
      %6481 = vmatpush.msra.mxu0 0.0
      %6482 = vmatpush.msra.mxu0 0.0
      %6483 = vmatpush.msra.mxu0 0.0
      %6484 = vmatpush.msra.mxu0 0.0
      %6485 = vmatpush.msra.mxu0 0.0
      %6486 = vmatpush.msra.mxu0 0.0
      %6487 = vmatpush.msra.mxu0 0.0
      %6488 = vmatpush.msra.mxu0 0.0
      %6489 = vmatpush.msra.mxu0 0.0
      %6490 = vmatpush.msra.mxu0 %v6282
      %6491 = vmatpush.msra.mxu0 %v6281
      %6492 = vmatmul.f32.gmra.mxu0 %v6285
      %v6493 = vpop.f32.mrf.mxu0
      %v6494 = vadd.f32 0.0, %v6493
      %6495 = vmatmul.f32.gmra.mxu0 %v6288
      %v6496 = vpop.f32.mrf.mxu0
      %v6497 = vadd.f32 0.0, %v6496
      %6498 = vmatmul.f32.gmra.mxu0 %v6291
      %v6499 = vpop.f32.mrf.mxu0
      %v6500 = vadd.f32 0.0, %v6499
      %6501 = vmatmul.f32.gmra.mxu0 %v6294
      %v6502 = vpop.f32.mrf.mxu0
      %v6503 = vadd.f32 0.0, %v6502
      %6504 = vmatmul.f32.gmra.mxu0 %v6297
      %v6505 = vpop.f32.mrf.mxu0
      %v6506 = vadd.f32 0.0, %v6505
      %6507 = vmatmul.f32.gmra.mxu0 %v6300
      %v6508 = vpop.f32.mrf.mxu0
      %v6509 = vadd.f32 0.0, %v6508
      %6510 = vmatmul.f32.gmra.mxu0 %v6303
      %v6511 = vpop.f32.mrf.mxu0
      %v6512 = vadd.f32 0.0, %v6511
      %6513 = vmatmul.f32.gmra.mxu0 %v6306
      %v6514 = vpop.f32.mrf.mxu0
      %v6515 = vadd.f32 0.0, %v6514
      %6516 = vmatmul.f32.gmra.mxu0 %v6309
      %v6517 = vpop.f32.mrf.mxu0
      %v6518 = vadd.f32 0.0, %v6517
      %6519 = vmatmul.f32.gmra.mxu0 %v6312
      %v6520 = vpop.f32.mrf.mxu0
      %v6521 = vadd.f32 0.0, %v6520
      %6522 = vmatmul.f32.gmra.mxu0 %v6315
      %v6523 = vpop.f32.mrf.mxu0
      %v6524 = vadd.f32 0.0, %v6523
      %6525 = vmatmul.f32.gmra.mxu0 %v6318
      %v6526 = vpop.f32.mrf.mxu0
      %v6527 = vadd.f32 0.0, %v6526
      %6528 = vmatmul.f32.gmra.mxu0 %v6321
      %v6529 = vpop.f32.mrf.mxu0
      %v6530 = vadd.f32 0.0, %v6529
      %6531 = vmatmul.f32.gmra.mxu0 %v6324
      %v6532 = vpop.f32.mrf.mxu0
      %v6533 = vadd.f32 0.0, %v6532
      %6534 = vmatmul.f32.gmra.mxu0 %v6327
      %v6535 = vpop.f32.mrf.mxu0
      %v6536 = vadd.f32 0.0, %v6535
      %6537 = vmatmul.f32.gmra.mxu0 %v6330
      %v6538 = vpop.f32.mrf.mxu0
      %v6539 = vadd.f32 0.0, %v6538
      %6540 = vmatmul.f32.gmra.mxu0 %v6333
      %v6541 = vpop.f32.mrf.mxu0
      %v6542 = vadd.f32 0.0, %v6541
      %6543 = vmatmul.f32.gmra.mxu0 %v6336
      %v6544 = vpop.f32.mrf.mxu0
      %v6545 = vadd.f32 0.0, %v6544
      %6546 = vmatmul.f32.gmra.mxu0 %v6339
      %v6547 = vpop.f32.mrf.mxu0
      %v6548 = vadd.f32 0.0, %v6547
      %6549 = vmatmul.f32.gmra.mxu0 %v6342
      %v6550 = vpop.f32.mrf.mxu0
      %v6551 = vadd.f32 0.0, %v6550
      %6552 = vmatmul.f32.gmra.mxu0 %v6345
      %v6553 = vpop.f32.mrf.mxu0
      %v6554 = vadd.f32 0.0, %v6553
      %6555 = vmatmul.f32.gmra.mxu0 %v6348
      %v6556 = vpop.f32.mrf.mxu0
      %v6557 = vadd.f32 0.0, %v6556
      %6558 = vmatmul.f32.gmra.mxu0 %v6351
      %v6559 = vpop.f32.mrf.mxu0
      %v6560 = vadd.f32 0.0, %v6559
      %6561 = vmatmul.f32.gmra.mxu0 %v6354
      %v6562 = vpop.f32.mrf.mxu0
      %v6563 = vadd.f32 0.0, %v6562
      %6564 = vmatmul.f32.gmra.mxu0 %v6357
      %v6565 = vpop.f32.mrf.mxu0
      %v6566 = vadd.f32 0.0, %v6565
      %6567 = vmatmul.f32.gmra.mxu0 %v6360
      %v6568 = vpop.f32.mrf.mxu0
      %v6569 = vadd.f32 0.0, %v6568
      %6570 = vmatmul.f32.gmra.mxu0 %v6363
      %v6571 = vpop.f32.mrf.mxu0
      %v6572 = vadd.f32 0.0, %v6571
      %6573 = vmatmul.f32.gmra.mxu0 %v6366
      %v6574 = vpop.f32.mrf.mxu0
      %v6575 = vadd.f32 0.0, %v6574
      %6576 = vmatmul.f32.gmra.mxu0 %v6369
      %v6577 = vpop.f32.mrf.mxu0
      %v6578 = vadd.f32 0.0, %v6577
      %6579 = vmatmul.f32.gmra.mxu0 %v6372
      %v6580 = vpop.f32.mrf.mxu0
      %v6581 = vadd.f32 0.0, %v6580
      %6582 = vmatmul.f32.gmra.mxu0 %v6375
      %v6583 = vpop.f32.mrf.mxu0
      %v6584 = vadd.f32 0.0, %v6583
      %6585 = vmatmul.f32.gmra.mxu0 %v6378
      %v6586 = vpop.f32.mrf.mxu0
      %v6587 = vadd.f32 0.0, %v6586
      %6588 = vmatmul.f32.gmra.mxu0 %v6381
      %v6589 = vpop.f32.mrf.mxu0
      %v6590 = vadd.f32 0.0, %v6589
      %6591 = vmatmul.f32.gmra.mxu0 %v6384
      %v6592 = vpop.f32.mrf.mxu0
      %v6593 = vadd.f32 0.0, %v6592
      %6594 = vmatmul.f32.gmra.mxu0 %v6387
      %v6595 = vpop.f32.mrf.mxu0
      %v6596 = vadd.f32 0.0, %v6595
      %6597 = vmatmul.f32.gmra.mxu0 %v6390
      %v6598 = vpop.f32.mrf.mxu0
      %v6599 = vadd.f32 0.0, %v6598
      %6600 = vmatmul.f32.gmra.mxu0 %v6393
      %v6601 = vpop.f32.mrf.mxu0
      %v6602 = vadd.f32 0.0, %v6601
      %6603 = vmatmul.f32.gmra.mxu0 %v6396
      %v6604 = vpop.f32.mrf.mxu0
      %v6605 = vadd.f32 0.0, %v6604
      %6606 = vmatmul.f32.gmra.mxu0 %v6399
      %v6607 = vpop.f32.mrf.mxu0
      %v6608 = vadd.f32 0.0, %v6607
      %6609 = vmatmul.f32.gmra.mxu0 %v6402
      %v6610 = vpop.f32.mrf.mxu0
      %v6611 = vadd.f32 0.0, %v6610
      %6612 = vmatmul.f32.gmra.mxu0 %v6405
      %v6613 = vpop.f32.mrf.mxu0
      %v6614 = vadd.f32 0.0, %v6613
      %6615 = vmatmul.f32.gmra.mxu0 %v6408
      %v6616 = vpop.f32.mrf.mxu0
      %v6617 = vadd.f32 0.0, %v6616
      %6618 = vmatmul.f32.gmra.mxu0 %v6411
      %v6619 = vpop.f32.mrf.mxu0
      %v6620 = vadd.f32 0.0, %v6619
      %6621 = vmatmul.f32.gmra.mxu0 %v6414
      %v6622 = vpop.f32.mrf.mxu0
      %v6623 = vadd.f32 0.0, %v6622
      %6624 = vmatmul.f32.gmra.mxu0 %v6417
      %v6625 = vpop.f32.mrf.mxu0
      %v6626 = vadd.f32 0.0, %v6625
      %6627 = vmatmul.f32.gmra.mxu0 %v6420
      %v6628 = vpop.f32.mrf.mxu0
      %v6629 = vadd.f32 0.0, %v6628
      %6630 = vmatmul.f32.gmra.mxu0 %v6423
      %v6631 = vpop.f32.mrf.mxu0
      %v6632 = vadd.f32 0.0, %v6631
      %6633 = vmatmul.f32.gmra.mxu0 %v6426
      %v6634 = vpop.f32.mrf.mxu0
      %v6635 = vadd.f32 0.0, %v6634
      %6636 = vmatmul.f32.gmra.mxu0 %v6429
      %v6637 = vpop.f32.mrf.mxu0
      %v6638 = vadd.f32 0.0, %v6637
      %6639 = vmatmul.f32.gmra.mxu0 %v6432
      %v6640 = vpop.f32.mrf.mxu0
      %v6641 = vadd.f32 0.0, %v6640
      %6642 = vmatmul.f32.gmra.mxu0 %v6435
      %v6643 = vpop.f32.mrf.mxu0
      %v6644 = vadd.f32 0.0, %v6643
      %6645 = vmatmul.f32.gmra.mxu0 %v6438
      %v6646 = vpop.f32.mrf.mxu0
      %v6647 = vadd.f32 0.0, %v6646
      %6648 = vmatmul.f32.gmra.mxu0 %v6441
      %v6649 = vpop.f32.mrf.mxu0
      %v6650 = vadd.f32 0.0, %v6649
      %6651 = vmatmul.f32.gmra.mxu0 %v6444
      %v6652 = vpop.f32.mrf.mxu0
      %v6653 = vadd.f32 0.0, %v6652
      %6654 = vmatmul.f32.gmra.mxu0 %v6447
      %v6655 = vpop.f32.mrf.mxu0
      %v6656 = vadd.f32 0.0, %v6655
      %6657 = vmatmul.f32.gmra.mxu0 %v6450
      %v6658 = vpop.f32.mrf.mxu0
      %v6659 = vadd.f32 0.0, %v6658
      %6660 = vmatmul.f32.gmra.mxu0 %v6453
      %v6661 = vpop.f32.mrf.mxu0
      %v6662 = vadd.f32 0.0, %v6661
      %6663 = vmatmul.f32.gmra.mxu0 %v6456
      %v6664 = vpop.f32.mrf.mxu0
      %v6665 = vadd.f32 0.0, %v6664
      %6666 = vmatmul.f32.gmra.mxu0 %v6459
      %v6667 = vpop.f32.mrf.mxu0
      %v6668 = vadd.f32 0.0, %v6667
      %6669 = vmatmul.f32.gmra.mxu0 %v6462
      %v6670 = vpop.f32.mrf.mxu0
      %v6671 = vadd.f32 0.0, %v6670
      %6672 = vmatmul.f32.gmra.mxu0 %v6465
      %v6673 = vpop.f32.mrf.mxu0
      %v6674 = vadd.f32 0.0, %v6673
      %6675 = vmatmul.f32.gmra.mxu0 %v6468
      %v6676 = vpop.f32.mrf.mxu0
      %v6677 = vadd.f32 0.0, %v6676
      %6678 = vmatmul.f32.gmra.mxu0 %v6471
      %v6679 = vpop.f32.mrf.mxu0
      %v6680 = vadd.f32 0.0, %v6679
      %6681 = vmatmul.f32.gmra.mxu0 %v6474
      %v6682 = vpop.f32.mrf.mxu0
      %v6683 = vadd.f32 0.0, %v6682
      %6684 = vdwg.mxu0
      %v6685 = vmul.f32 %v6090, %v6090
      %v6686 = vmul.f32 %v6093, %v6093
      %v6687 = vmul.f32 %v6096, %v6096
      %v6688 = vmul.f32 %v6099, %v6099
      %v6689 = vmul.f32 %v6102, %v6102
      %v6690 = vmul.f32 %v6105, %v6105
      %v6691 = vmul.f32 %v6108, %v6108
      %v6692 = vmul.f32 %v6111, %v6111
      %v6693 = vmul.f32 %v6114, %v6114
      %v6694 = vmul.f32 %v6117, %v6117
      %v6695 = vmul.f32 %v6120, %v6120
      %v6696 = vmul.f32 %v6123, %v6123
      %v6697 = vmul.f32 %v6126, %v6126
      %v6698 = vmul.f32 %v6129, %v6129
      %v6699 = vmul.f32 %v6132, %v6132
      %v6700 = vmul.f32 %v6135, %v6135
      %v6701 = vmul.f32 %v6138, %v6138
      %v6702 = vmul.f32 %v6141, %v6141
      %v6703 = vmul.f32 %v6144, %v6144
      %v6704 = vmul.f32 %v6147, %v6147
      %v6705 = vmul.f32 %v6150, %v6150
      %v6706 = vmul.f32 %v6153, %v6153
      %v6707 = vmul.f32 %v6156, %v6156
      %v6708 = vmul.f32 %v6159, %v6159
      %v6709 = vmul.f32 %v6162, %v6162
      %v6710 = vmul.f32 %v6165, %v6165
      %v6711 = vmul.f32 %v6168, %v6168
      %v6712 = vmul.f32 %v6171, %v6171
      %v6713 = vmul.f32 %v6174, %v6174
      %v6714 = vmul.f32 %v6177, %v6177
      %v6715 = vmul.f32 %v6180, %v6180
      %v6716 = vmul.f32 %v6183, %v6183
      %v6717 = vmul.f32 %v6186, %v6186
      %v6718 = vmul.f32 %v6189, %v6189
      %v6719 = vmul.f32 %v6192, %v6192
      %v6720 = vmul.f32 %v6195, %v6195
      %v6721 = vmul.f32 %v6198, %v6198
      %v6722 = vmul.f32 %v6201, %v6201
      %v6723 = vmul.f32 %v6204, %v6204
      %v6724 = vmul.f32 %v6207, %v6207
      %v6725 = vmul.f32 %v6210, %v6210
      %v6726 = vmul.f32 %v6213, %v6213
      %v6727 = vmul.f32 %v6216, %v6216
      %v6728 = vmul.f32 %v6219, %v6219
      %v6729 = vmul.f32 %v6222, %v6222
      %v6730 = vmul.f32 %v6225, %v6225
      %v6731 = vmul.f32 %v6228, %v6228
      %v6732 = vmul.f32 %v6231, %v6231
      %v6733 = vmul.f32 %v6234, %v6234
      %v6734 = vmul.f32 %v6237, %v6237
      %v6735 = vmul.f32 %v6240, %v6240
      %v6736 = vmul.f32 %v6243, %v6243
      %v6737 = vmul.f32 %v6246, %v6246
      %v6738 = vmul.f32 %v6249, %v6249
      %v6739 = vmul.f32 %v6252, %v6252
      %v6740 = vmul.f32 %v6255, %v6255
      %v6741 = vmul.f32 %v6258, %v6258
      %v6742 = vmul.f32 %v6261, %v6261
      %v6743 = vmul.f32 %v6264, %v6264
      %v6744 = vmul.f32 %v6267, %v6267
      %v6745 = vmul.f32 %v6270, %v6270
      %v6746 = vmul.f32 %v6273, %v6273
      %v6747 = vmul.f32 %v6276, %v6276
      %v6748 = vmul.f32 %v6279, %v6279
      %v6750 = vsel %vm6283, %v6685, 0
      %v6753 = vsel %vm6283, %v6686, 0
      %v6756 = vsel %vm6283, %v6687, 0
      %v6759 = vsel %vm6283, %v6688, 0
      %v6762 = vsel %vm6283, %v6689, 0
      %v6765 = vsel %vm6283, %v6690, 0
      %v6768 = vsel %vm6283, %v6691, 0
      %v6771 = vsel %vm6283, %v6692, 0
      %v6774 = vsel %vm6283, %v6693, 0
      %v6777 = vsel %vm6283, %v6694, 0
      %v6780 = vsel %vm6283, %v6695, 0
      %v6783 = vsel %vm6283, %v6696, 0
      %v6786 = vsel %vm6283, %v6697, 0
      %v6789 = vsel %vm6283, %v6698, 0
      %v6792 = vsel %vm6283, %v6699, 0
      %v6795 = vsel %vm6283, %v6700, 0
      %v6798 = vsel %vm6283, %v6701, 0
      %v6801 = vsel %vm6283, %v6702, 0
      %v6804 = vsel %vm6283, %v6703, 0
      %v6807 = vsel %vm6283, %v6704, 0
      %v6810 = vsel %vm6283, %v6705, 0
      %v6813 = vsel %vm6283, %v6706, 0
      %v6816 = vsel %vm6283, %v6707, 0
      %v6819 = vsel %vm6283, %v6708, 0
      %v6822 = vsel %vm6283, %v6709, 0
      %v6825 = vsel %vm6283, %v6710, 0
      %v6828 = vsel %vm6283, %v6711, 0
      %v6831 = vsel %vm6283, %v6712, 0
      %v6834 = vsel %vm6283, %v6713, 0
      %v6837 = vsel %vm6283, %v6714, 0
      %v6840 = vsel %vm6283, %v6715, 0
      %v6843 = vsel %vm6283, %v6716, 0
      %v6846 = vsel %vm6283, %v6717, 0
      %v6849 = vsel %vm6283, %v6718, 0
      %v6852 = vsel %vm6283, %v6719, 0
      %v6855 = vsel %vm6283, %v6720, 0
      %v6858 = vsel %vm6283, %v6721, 0
      %v6861 = vsel %vm6283, %v6722, 0
      %v6864 = vsel %vm6283, %v6723, 0
      %v6867 = vsel %vm6283, %v6724, 0
      %v6870 = vsel %vm6283, %v6725, 0
      %v6873 = vsel %vm6283, %v6726, 0
      %v6876 = vsel %vm6283, %v6727, 0
      %v6879 = vsel %vm6283, %v6728, 0
      %v6882 = vsel %vm6283, %v6729, 0
      %v6885 = vsel %vm6283, %v6730, 0
      %v6888 = vsel %vm6283, %v6731, 0
      %v6891 = vsel %vm6283, %v6732, 0
      %v6894 = vsel %vm6283, %v6733, 0
      %v6897 = vsel %vm6283, %v6734, 0
      %v6900 = vsel %vm6283, %v6735, 0
      %v6903 = vsel %vm6283, %v6736, 0
      %v6906 = vsel %vm6283, %v6737, 0
      %v6909 = vsel %vm6283, %v6738, 0
      %v6912 = vsel %vm6283, %v6739, 0
      %v6915 = vsel %vm6283, %v6740, 0
      %v6918 = vsel %vm6283, %v6741, 0
      %v6921 = vsel %vm6283, %v6742, 0
      %v6924 = vsel %vm6283, %v6743, 0
      %v6927 = vsel %vm6283, %v6744, 0
      %v6930 = vsel %vm6283, %v6745, 0
      %v6933 = vsel %vm6283, %v6746, 0
      %v6936 = vsel %vm6283, %v6747, 0
      %v6939 = vsel %vm6283, %v6748, 0
      %6941 = vmatpush.msra.mxu0 0.0
      %6942 = vmatpush.msra.mxu0 0.0
      %6943 = vmatpush.msra.mxu0 0.0
      %6944 = vmatpush.msra.mxu0 0.0
      %6945 = vmatpush.msra.mxu0 0.0
      %6946 = vmatpush.msra.mxu0 0.0
      %6947 = vmatpush.msra.mxu0 0.0
      %6948 = vmatpush.msra.mxu0 0.0
      %6949 = vmatpush.msra.mxu0 0.0
      %6950 = vmatpush.msra.mxu0 0.0
      %6951 = vmatpush.msra.mxu0 0.0
      %6952 = vmatpush.msra.mxu0 0.0
      %6953 = vmatpush.msra.mxu0 0.0
      %6954 = vmatpush.msra.mxu0 0.0
      %6955 = vmatpush.msra.mxu0 %v6282
      %6956 = vmatpush.msra.mxu0 %v6281
      %6957 = vmatmul.f32.gmra.mxu0 %v6750
      %v6958 = vpop.f32.mrf.mxu0
      %v6959 = vadd.f32 0.0, %v6958
      %6960 = vmatmul.f32.gmra.mxu0 %v6753
      %v6961 = vpop.f32.mrf.mxu0
      %v6962 = vadd.f32 0.0, %v6961
      %6963 = vmatmul.f32.gmra.mxu0 %v6756
      %v6964 = vpop.f32.mrf.mxu0
      %v6965 = vadd.f32 0.0, %v6964
      %6966 = vmatmul.f32.gmra.mxu0 %v6759
      %v6967 = vpop.f32.mrf.mxu0
      %v6968 = vadd.f32 0.0, %v6967
      %6969 = vmatmul.f32.gmra.mxu0 %v6762
      %v6970 = vpop.f32.mrf.mxu0
      %v6971 = vadd.f32 0.0, %v6970
      %6972 = vmatmul.f32.gmra.mxu0 %v6765
      %v6973 = vpop.f32.mrf.mxu0
      %v6974 = vadd.f32 0.0, %v6973
      %6975 = vmatmul.f32.gmra.mxu0 %v6768
      %v6976 = vpop.f32.mrf.mxu0
      %v6977 = vadd.f32 0.0, %v6976
      %6978 = vmatmul.f32.gmra.mxu0 %v6771
      %v6979 = vpop.f32.mrf.mxu0
      %v6980 = vadd.f32 0.0, %v6979
      %6981 = vmatmul.f32.gmra.mxu0 %v6774
      %v6982 = vpop.f32.mrf.mxu0
      %v6983 = vadd.f32 0.0, %v6982
      %6984 = vmatmul.f32.gmra.mxu0 %v6777
      %v6985 = vpop.f32.mrf.mxu0
      %v6986 = vadd.f32 0.0, %v6985
      %6987 = vmatmul.f32.gmra.mxu0 %v6780
      %v6988 = vpop.f32.mrf.mxu0
      %v6989 = vadd.f32 0.0, %v6988
      %6990 = vmatmul.f32.gmra.mxu0 %v6783
      %v6991 = vpop.f32.mrf.mxu0
      %v6992 = vadd.f32 0.0, %v6991
      %6993 = vmatmul.f32.gmra.mxu0 %v6786
      %v6994 = vpop.f32.mrf.mxu0
      %v6995 = vadd.f32 0.0, %v6994
      %6996 = vmatmul.f32.gmra.mxu0 %v6789
      %v6997 = vpop.f32.mrf.mxu0
      %v6998 = vadd.f32 0.0, %v6997
      %6999 = vmatmul.f32.gmra.mxu0 %v6792
      %v7000 = vpop.f32.mrf.mxu0
      %v7001 = vadd.f32 0.0, %v7000
      %7002 = vmatmul.f32.gmra.mxu0 %v6795
      %v7003 = vpop.f32.mrf.mxu0
      %v7004 = vadd.f32 0.0, %v7003
      %7005 = vmatmul.f32.gmra.mxu0 %v6798
      %v7006 = vpop.f32.mrf.mxu0
      %v7007 = vadd.f32 0.0, %v7006
      %7008 = vmatmul.f32.gmra.mxu0 %v6801
      %v7009 = vpop.f32.mrf.mxu0
      %v7010 = vadd.f32 0.0, %v7009
      %7011 = vmatmul.f32.gmra.mxu0 %v6804
      %v7012 = vpop.f32.mrf.mxu0
      %v7013 = vadd.f32 0.0, %v7012
      %7014 = vmatmul.f32.gmra.mxu0 %v6807
      %v7015 = vpop.f32.mrf.mxu0
      %v7016 = vadd.f32 0.0, %v7015
      %7017 = vmatmul.f32.gmra.mxu0 %v6810
      %v7018 = vpop.f32.mrf.mxu0
      %v7019 = vadd.f32 0.0, %v7018
      %7020 = vmatmul.f32.gmra.mxu0 %v6813
      %v7021 = vpop.f32.mrf.mxu0
      %v7022 = vadd.f32 0.0, %v7021
      %7023 = vmatmul.f32.gmra.mxu0 %v6816
      %v7024 = vpop.f32.mrf.mxu0
      %v7025 = vadd.f32 0.0, %v7024
      %7026 = vmatmul.f32.gmra.mxu0 %v6819
      %v7027 = vpop.f32.mrf.mxu0
      %v7028 = vadd.f32 0.0, %v7027
      %7029 = vmatmul.f32.gmra.mxu0 %v6822
      %v7030 = vpop.f32.mrf.mxu0
      %v7031 = vadd.f32 0.0, %v7030
      %7032 = vmatmul.f32.gmra.mxu0 %v6825
      %v7033 = vpop.f32.mrf.mxu0
      %v7034 = vadd.f32 0.0, %v7033
      %7035 = vmatmul.f32.gmra.mxu0 %v6828
      %v7036 = vpop.f32.mrf.mxu0
      %v7037 = vadd.f32 0.0, %v7036
      %7038 = vmatmul.f32.gmra.mxu0 %v6831
      %v7039 = vpop.f32.mrf.mxu0
      %v7040 = vadd.f32 0.0, %v7039
      %7041 = vmatmul.f32.gmra.mxu0 %v6834
      %v7042 = vpop.f32.mrf.mxu0
      %v7043 = vadd.f32 0.0, %v7042
      %7044 = vmatmul.f32.gmra.mxu0 %v6837
      %v7045 = vpop.f32.mrf.mxu0
      %v7046 = vadd.f32 0.0, %v7045
      %7047 = vmatmul.f32.gmra.mxu0 %v6840
      %v7048 = vpop.f32.mrf.mxu0
      %v7049 = vadd.f32 0.0, %v7048
      %7050 = vmatmul.f32.gmra.mxu0 %v6843
      %v7051 = vpop.f32.mrf.mxu0
      %v7052 = vadd.f32 0.0, %v7051
      %7053 = vmatmul.f32.gmra.mxu0 %v6846
      %v7054 = vpop.f32.mrf.mxu0
      %v7055 = vadd.f32 0.0, %v7054
      %7056 = vmatmul.f32.gmra.mxu0 %v6849
      %v7057 = vpop.f32.mrf.mxu0
      %v7058 = vadd.f32 0.0, %v7057
      %7059 = vmatmul.f32.gmra.mxu0 %v6852
      %v7060 = vpop.f32.mrf.mxu0
      %v7061 = vadd.f32 0.0, %v7060
      %7062 = vmatmul.f32.gmra.mxu0 %v6855
      %v7063 = vpop.f32.mrf.mxu0
      %v7064 = vadd.f32 0.0, %v7063
      %7065 = vmatmul.f32.gmra.mxu0 %v6858
      %v7066 = vpop.f32.mrf.mxu0
      %v7067 = vadd.f32 0.0, %v7066
      %7068 = vmatmul.f32.gmra.mxu0 %v6861
      %v7069 = vpop.f32.mrf.mxu0
      %v7070 = vadd.f32 0.0, %v7069
      %7071 = vmatmul.f32.gmra.mxu0 %v6864
      %v7072 = vpop.f32.mrf.mxu0
      %v7073 = vadd.f32 0.0, %v7072
      %7074 = vmatmul.f32.gmra.mxu0 %v6867
      %v7075 = vpop.f32.mrf.mxu0
      %v7076 = vadd.f32 0.0, %v7075
      %7077 = vmatmul.f32.gmra.mxu0 %v6870
      %v7078 = vpop.f32.mrf.mxu0
      %v7079 = vadd.f32 0.0, %v7078
      %7080 = vmatmul.f32.gmra.mxu0 %v6873
      %v7081 = vpop.f32.mrf.mxu0
      %v7082 = vadd.f32 0.0, %v7081
      %7083 = vmatmul.f32.gmra.mxu0 %v6876
      %v7084 = vpop.f32.mrf.mxu0
      %v7085 = vadd.f32 0.0, %v7084
      %7086 = vmatmul.f32.gmra.mxu0 %v6879
      %v7087 = vpop.f32.mrf.mxu0
      %v7088 = vadd.f32 0.0, %v7087
      %7089 = vmatmul.f32.gmra.mxu0 %v6882
      %v7090 = vpop.f32.mrf.mxu0
      %v7091 = vadd.f32 0.0, %v7090
      %7092 = vmatmul.f32.gmra.mxu0 %v6885
      %v7093 = vpop.f32.mrf.mxu0
      %v7094 = vadd.f32 0.0, %v7093
      %7095 = vmatmul.f32.gmra.mxu0 %v6888
      %v7096 = vpop.f32.mrf.mxu0
      %v7097 = vadd.f32 0.0, %v7096
      %7098 = vmatmul.f32.gmra.mxu0 %v6891
      %v7099 = vpop.f32.mrf.mxu0
      %v7100 = vadd.f32 0.0, %v7099
      %7101 = vmatmul.f32.gmra.mxu0 %v6894
      %v7102 = vpop.f32.mrf.mxu0
      %v7103 = vadd.f32 0.0, %v7102
      %7104 = vmatmul.f32.gmra.mxu0 %v6897
      %v7105 = vpop.f32.mrf.mxu0
      %v7106 = vadd.f32 0.0, %v7105
      %7107 = vmatmul.f32.gmra.mxu0 %v6900
      %v7108 = vpop.f32.mrf.mxu0
      %v7109 = vadd.f32 0.0, %v7108
      %7110 = vmatmul.f32.gmra.mxu0 %v6903
      %v7111 = vpop.f32.mrf.mxu0
      %v7112 = vadd.f32 0.0, %v7111
      %7113 = vmatmul.f32.gmra.mxu0 %v6906
      %v7114 = vpop.f32.mrf.mxu0
      %v7115 = vadd.f32 0.0, %v7114
      %7116 = vmatmul.f32.gmra.mxu0 %v6909
      %v7117 = vpop.f32.mrf.mxu0
      %v7118 = vadd.f32 0.0, %v7117
      %7119 = vmatmul.f32.gmra.mxu0 %v6912
      %v7120 = vpop.f32.mrf.mxu0
      %v7121 = vadd.f32 0.0, %v7120
      %7122 = vmatmul.f32.gmra.mxu0 %v6915
      %v7123 = vpop.f32.mrf.mxu0
      %v7124 = vadd.f32 0.0, %v7123
      %7125 = vmatmul.f32.gmra.mxu0 %v6918
      %v7126 = vpop.f32.mrf.mxu0
      %v7127 = vadd.f32 0.0, %v7126
      %7128 = vmatmul.f32.gmra.mxu0 %v6921
      %v7129 = vpop.f32.mrf.mxu0
      %v7130 = vadd.f32 0.0, %v7129
      %7131 = vmatmul.f32.gmra.mxu0 %v6924
      %v7132 = vpop.f32.mrf.mxu0
      %v7133 = vadd.f32 0.0, %v7132
      %7134 = vmatmul.f32.gmra.mxu0 %v6927
      %v7135 = vpop.f32.mrf.mxu0
      %v7136 = vadd.f32 0.0, %v7135
      %7137 = vmatmul.f32.gmra.mxu0 %v6930
      %v7138 = vpop.f32.mrf.mxu0
      %v7139 = vadd.f32 0.0, %v7138
      %7140 = vmatmul.f32.gmra.mxu0 %v6933
      %v7141 = vpop.f32.mrf.mxu0
      %v7142 = vadd.f32 0.0, %v7141
      %7143 = vmatmul.f32.gmra.mxu0 %v6936
      %v7144 = vpop.f32.mrf.mxu0
      %v7145 = vadd.f32 0.0, %v7144
      %7146 = vmatmul.f32.gmra.mxu0 %v6939
      %v7147 = vpop.f32.mrf.mxu0
      %v7148 = vadd.f32 0.0, %v7147
      %7149 = vdwg.mxu0
      %v7150 = vmul.f32 %v6494, %v6494
      %v7151 = vmul.f32 %v6497, %v6497
      %v7152 = vmul.f32 %v6500, %v6500
      %v7153 = vmul.f32 %v6503, %v6503
      %v7154 = vmul.f32 %v6506, %v6506
      %v7155 = vmul.f32 %v6509, %v6509
      %v7156 = vmul.f32 %v6512, %v6512
      %v7157 = vmul.f32 %v6515, %v6515
      %v7158 = vmul.f32 %v6518, %v6518
      %v7159 = vmul.f32 %v6521, %v6521
      %v7160 = vmul.f32 %v6524, %v6524
      %v7161 = vmul.f32 %v6527, %v6527
      %v7162 = vmul.f32 %v6530, %v6530
      %v7163 = vmul.f32 %v6533, %v6533
      %v7164 = vmul.f32 %v6536, %v6536
      %v7165 = vmul.f32 %v6539, %v6539
      %v7166 = vmul.f32 %v6542, %v6542
      %v7167 = vmul.f32 %v6545, %v6545
      %v7168 = vmul.f32 %v6548, %v6548
      %v7169 = vmul.f32 %v6551, %v6551
      %v7170 = vmul.f32 %v6554, %v6554
      %v7171 = vmul.f32 %v6557, %v6557
      %v7172 = vmul.f32 %v6560, %v6560
      %v7173 = vmul.f32 %v6563, %v6563
      %v7174 = vmul.f32 %v6566, %v6566
      %v7175 = vmul.f32 %v6569, %v6569
      %v7176 = vmul.f32 %v6572, %v6572
      %v7177 = vmul.f32 %v6575, %v6575
      %v7178 = vmul.f32 %v6578, %v6578
      %v7179 = vmul.f32 %v6581, %v6581
      %v7180 = vmul.f32 %v6584, %v6584
      %v7181 = vmul.f32 %v6587, %v6587
      %v7182 = vmul.f32 %v6590, %v6590
      %v7183 = vmul.f32 %v6593, %v6593
      %v7184 = vmul.f32 %v6596, %v6596
      %v7185 = vmul.f32 %v6599, %v6599
      %v7186 = vmul.f32 %v6602, %v6602
      %v7187 = vmul.f32 %v6605, %v6605
      %v7188 = vmul.f32 %v6608, %v6608
      %v7189 = vmul.f32 %v6611, %v6611
      %v7190 = vmul.f32 %v6614, %v6614
      %v7191 = vmul.f32 %v6617, %v6617
      %v7192 = vmul.f32 %v6620, %v6620
      %v7193 = vmul.f32 %v6623, %v6623
      %v7194 = vmul.f32 %v6626, %v6626
      %v7195 = vmul.f32 %v6629, %v6629
      %v7196 = vmul.f32 %v6632, %v6632
      %v7197 = vmul.f32 %v6635, %v6635
      %v7198 = vmul.f32 %v6638, %v6638
      %v7199 = vmul.f32 %v6641, %v6641
      %v7200 = vmul.f32 %v6644, %v6644
      %v7201 = vmul.f32 %v6647, %v6647
      %v7202 = vmul.f32 %v6650, %v6650
      %v7203 = vmul.f32 %v6653, %v6653
      %v7204 = vmul.f32 %v6656, %v6656
      %v7205 = vmul.f32 %v6659, %v6659
      %v7206 = vmul.f32 %v6662, %v6662
      %v7207 = vmul.f32 %v6665, %v6665
      %v7208 = vmul.f32 %v6668, %v6668
      %v7209 = vmul.f32 %v6671, %v6671
      %v7210 = vmul.f32 %v6674, %v6674
      %v7211 = vmul.f32 %v6677, %v6677
      %v7212 = vmul.f32 %v6680, %v6680
      %v7213 = vmul.f32 %v6683, %v6683
      %v7214 = vsub.f32 %v6959, %v7150
      %v7215 = vsub.f32 %v6962, %v7151
      %v7216 = vsub.f32 %v6965, %v7152
      %v7217 = vsub.f32 %v6968, %v7153
      %v7218 = vsub.f32 %v6971, %v7154
      %v7219 = vsub.f32 %v6974, %v7155
      %v7220 = vsub.f32 %v6977, %v7156
      %v7221 = vsub.f32 %v6980, %v7157
      %v7222 = vsub.f32 %v6983, %v7158
      %v7223 = vsub.f32 %v6986, %v7159
      %v7224 = vsub.f32 %v6989, %v7160
      %v7225 = vsub.f32 %v6992, %v7161
      %v7226 = vsub.f32 %v6995, %v7162
      %v7227 = vsub.f32 %v6998, %v7163
      %v7228 = vsub.f32 %v7001, %v7164
      %v7229 = vsub.f32 %v7004, %v7165
      %v7230 = vsub.f32 %v7007, %v7166
      %v7231 = vsub.f32 %v7010, %v7167
      %v7232 = vsub.f32 %v7013, %v7168
      %v7233 = vsub.f32 %v7016, %v7169
      %v7234 = vsub.f32 %v7019, %v7170
      %v7235 = vsub.f32 %v7022, %v7171
      %v7236 = vsub.f32 %v7025, %v7172
      %v7237 = vsub.f32 %v7028, %v7173
      %v7238 = vsub.f32 %v7031, %v7174
      %v7239 = vsub.f32 %v7034, %v7175
      %v7240 = vsub.f32 %v7037, %v7176
      %v7241 = vsub.f32 %v7040, %v7177
      %v7242 = vsub.f32 %v7043, %v7178
      %v7243 = vsub.f32 %v7046, %v7179
      %v7244 = vsub.f32 %v7049, %v7180
      %v7245 = vsub.f32 %v7052, %v7181
      %v7246 = vsub.f32 %v7055, %v7182
      %v7247 = vsub.f32 %v7058, %v7183
      %v7248 = vsub.f32 %v7061, %v7184
      %v7249 = vsub.f32 %v7064, %v7185
      %v7250 = vsub.f32 %v7067, %v7186
      %v7251 = vsub.f32 %v7070, %v7187
      %v7252 = vsub.f32 %v7073, %v7188
      %v7253 = vsub.f32 %v7076, %v7189
      %v7254 = vsub.f32 %v7079, %v7190
      %v7255 = vsub.f32 %v7082, %v7191
      %v7256 = vsub.f32 %v7085, %v7192
      %v7257 = vsub.f32 %v7088, %v7193
      %v7258 = vsub.f32 %v7091, %v7194
      %v7259 = vsub.f32 %v7094, %v7195
      %v7260 = vsub.f32 %v7097, %v7196
      %v7261 = vsub.f32 %v7100, %v7197
      %v7262 = vsub.f32 %v7103, %v7198
      %v7263 = vsub.f32 %v7106, %v7199
      %v7264 = vsub.f32 %v7109, %v7200
      %v7265 = vsub.f32 %v7112, %v7201
      %v7266 = vsub.f32 %v7115, %v7202
      %v7267 = vsub.f32 %v7118, %v7203
      %v7268 = vsub.f32 %v7121, %v7204
      %v7269 = vsub.f32 %v7124, %v7205
      %v7270 = vsub.f32 %v7127, %v7206
      %v7271 = vsub.f32 %v7130, %v7207
      %v7272 = vsub.f32 %v7133, %v7208
      %v7273 = vsub.f32 %v7136, %v7209
      %v7274 = vsub.f32 %v7139, %v7210
      %v7275 = vsub.f32 %v7142, %v7211
      %v7276 = vsub.f32 %v7145, %v7212
      %v7277 = vsub.f32 %v7148, %v7213
      %v7278 = vmax.f32 %v7214, 0.0
      %v7279 = vmax.f32 %v7215, 0.0
      %v7280 = vmax.f32 %v7216, 0.0
      %v7281 = vmax.f32 %v7217, 0.0
      %v7282 = vmax.f32 %v7218, 0.0
      %v7283 = vmax.f32 %v7219, 0.0
      %v7284 = vmax.f32 %v7220, 0.0
      %v7285 = vmax.f32 %v7221, 0.0
      %v7286 = vmax.f32 %v7222, 0.0
      %v7287 = vmax.f32 %v7223, 0.0
      %v7288 = vmax.f32 %v7224, 0.0
      %v7289 = vmax.f32 %v7225, 0.0
      %v7290 = vmax.f32 %v7226, 0.0
      %v7291 = vmax.f32 %v7227, 0.0
      %v7292 = vmax.f32 %v7228, 0.0
      %v7293 = vmax.f32 %v7229, 0.0
      %v7294 = vmax.f32 %v7230, 0.0
      %v7295 = vmax.f32 %v7231, 0.0
      %v7296 = vmax.f32 %v7232, 0.0
      %v7297 = vmax.f32 %v7233, 0.0
      %v7298 = vmax.f32 %v7234, 0.0
      %v7299 = vmax.f32 %v7235, 0.0
      %v7300 = vmax.f32 %v7236, 0.0
      %v7301 = vmax.f32 %v7237, 0.0
      %v7302 = vmax.f32 %v7238, 0.0
      %v7303 = vmax.f32 %v7239, 0.0
      %v7304 = vmax.f32 %v7240, 0.0
      %v7305 = vmax.f32 %v7241, 0.0
      %v7306 = vmax.f32 %v7242, 0.0
      %v7307 = vmax.f32 %v7243, 0.0
      %v7308 = vmax.f32 %v7244, 0.0
      %v7309 = vmax.f32 %v7245, 0.0
      %v7310 = vmax.f32 %v7246, 0.0
      %v7311 = vmax.f32 %v7247, 0.0
      %v7312 = vmax.f32 %v7248, 0.0
      %v7313 = vmax.f32 %v7249, 0.0
      %v7314 = vmax.f32 %v7250, 0.0
      %v7315 = vmax.f32 %v7251, 0.0
      %v7316 = vmax.f32 %v7252, 0.0
      %v7317 = vmax.f32 %v7253, 0.0
      %v7318 = vmax.f32 %v7254, 0.0
      %v7319 = vmax.f32 %v7255, 0.0
      %v7320 = vmax.f32 %v7256, 0.0
      %v7321 = vmax.f32 %v7257, 0.0
      %v7322 = vmax.f32 %v7258, 0.0
      %v7323 = vmax.f32 %v7259, 0.0
      %v7324 = vmax.f32 %v7260, 0.0
      %v7325 = vmax.f32 %v7261, 0.0
      %v7326 = vmax.f32 %v7262, 0.0
      %v7327 = vmax.f32 %v7263, 0.0
      %v7328 = vmax.f32 %v7264, 0.0
      %v7329 = vmax.f32 %v7265, 0.0
      %v7330 = vmax.f32 %v7266, 0.0
      %v7331 = vmax.f32 %v7267, 0.0
      %v7332 = vmax.f32 %v7268, 0.0
      %v7333 = vmax.f32 %v7269, 0.0
      %v7334 = vmax.f32 %v7270, 0.0
      %v7335 = vmax.f32 %v7271, 0.0
      %v7336 = vmax.f32 %v7272, 0.0
      %v7337 = vmax.f32 %v7273, 0.0
      %v7338 = vmax.f32 %v7274, 0.0
      %v7339 = vmax.f32 %v7275, 0.0
      %v7340 = vmax.f32 %v7276, 0.0
      %v7341 = vmax.f32 %v7277, 0.0
      %v7342 = vsub.f32 %v6090, %v6494
      %v7343 = vsub.f32 %v6093, %v6497
      %v7344 = vsub.f32 %v6096, %v6500
      %v7345 = vsub.f32 %v6099, %v6503
      %v7346 = vsub.f32 %v6102, %v6506
      %v7347 = vsub.f32 %v6105, %v6509
      %v7348 = vsub.f32 %v6108, %v6512
      %v7349 = vsub.f32 %v6111, %v6515
      %v7350 = vsub.f32 %v6114, %v6518
      %v7351 = vsub.f32 %v6117, %v6521
      %v7352 = vsub.f32 %v6120, %v6524
      %v7353 = vsub.f32 %v6123, %v6527
      %v7354 = vsub.f32 %v6126, %v6530
      %v7355 = vsub.f32 %v6129, %v6533
      %v7356 = vsub.f32 %v6132, %v6536
      %v7357 = vsub.f32 %v6135, %v6539
      %v7358 = vsub.f32 %v6138, %v6542
      %v7359 = vsub.f32 %v6141, %v6545
      %v7360 = vsub.f32 %v6144, %v6548
      %v7361 = vsub.f32 %v6147, %v6551
      %v7362 = vsub.f32 %v6150, %v6554
      %v7363 = vsub.f32 %v6153, %v6557
      %v7364 = vsub.f32 %v6156, %v6560
      %v7365 = vsub.f32 %v6159, %v6563
      %v7366 = vsub.f32 %v6162, %v6566
      %v7367 = vsub.f32 %v6165, %v6569
      %v7368 = vsub.f32 %v6168, %v6572
      %v7369 = vsub.f32 %v6171, %v6575
      %v7370 = vsub.f32 %v6174, %v6578
      %v7371 = vsub.f32 %v6177, %v6581
      %v7372 = vsub.f32 %v6180, %v6584
      %v7373 = vsub.f32 %v6183, %v6587
      %v7374 = vsub.f32 %v6186, %v6590
      %v7375 = vsub.f32 %v6189, %v6593
      %v7376 = vsub.f32 %v6192, %v6596
      %v7377 = vsub.f32 %v6195, %v6599
      %v7378 = vsub.f32 %v6198, %v6602
      %v7379 = vsub.f32 %v6201, %v6605
      %v7380 = vsub.f32 %v6204, %v6608
      %v7381 = vsub.f32 %v6207, %v6611
      %v7382 = vsub.f32 %v6210, %v6614
      %v7383 = vsub.f32 %v6213, %v6617
      %v7384 = vsub.f32 %v6216, %v6620
      %v7385 = vsub.f32 %v6219, %v6623
      %v7386 = vsub.f32 %v6222, %v6626
      %v7387 = vsub.f32 %v6225, %v6629
      %v7388 = vsub.f32 %v6228, %v6632
      %v7389 = vsub.f32 %v6231, %v6635
      %v7390 = vsub.f32 %v6234, %v6638
      %v7391 = vsub.f32 %v6237, %v6641
      %v7392 = vsub.f32 %v6240, %v6644
      %v7393 = vsub.f32 %v6243, %v6647
      %v7394 = vsub.f32 %v6246, %v6650
      %v7395 = vsub.f32 %v6249, %v6653
      %v7396 = vsub.f32 %v6252, %v6656
      %v7397 = vsub.f32 %v6255, %v6659
      %v7398 = vsub.f32 %v6258, %v6662
      %v7399 = vsub.f32 %v6261, %v6665
      %v7400 = vsub.f32 %v6264, %v6668
      %v7401 = vsub.f32 %v6267, %v6671
      %v7402 = vsub.f32 %v6270, %v6674
      %v7403 = vsub.f32 %v6273, %v6677
      %v7404 = vsub.f32 %v6276, %v6680
      %v7405 = vsub.f32 %v6279, %v6683
      %v7406 = vadd.f32 %v7278, 1e-05
      %v7407 = vadd.f32 %v7279, 1e-05
      %v7408 = vadd.f32 %v7280, 1e-05
      %v7409 = vadd.f32 %v7281, 1e-05
      %v7410 = vadd.f32 %v7282, 1e-05
      %v7411 = vadd.f32 %v7283, 1e-05
      %v7412 = vadd.f32 %v7284, 1e-05
      %v7413 = vadd.f32 %v7285, 1e-05
      %v7414 = vadd.f32 %v7286, 1e-05
      %v7415 = vadd.f32 %v7287, 1e-05
      %v7416 = vadd.f32 %v7288, 1e-05
      %v7417 = vadd.f32 %v7289, 1e-05
      %v7418 = vadd.f32 %v7290, 1e-05
      %v7419 = vadd.f32 %v7291, 1e-05
      %v7420 = vadd.f32 %v7292, 1e-05
      %v7421 = vadd.f32 %v7293, 1e-05
      %v7422 = vadd.f32 %v7294, 1e-05
      %v7423 = vadd.f32 %v7295, 1e-05
      %v7424 = vadd.f32 %v7296, 1e-05
      %v7425 = vadd.f32 %v7297, 1e-05
      %v7426 = vadd.f32 %v7298, 1e-05
      %v7427 = vadd.f32 %v7299, 1e-05
      %v7428 = vadd.f32 %v7300, 1e-05
      %v7429 = vadd.f32 %v7301, 1e-05
      %v7430 = vadd.f32 %v7302, 1e-05
      %v7431 = vadd.f32 %v7303, 1e-05
      %v7432 = vadd.f32 %v7304, 1e-05
      %v7433 = vadd.f32 %v7305, 1e-05
      %v7434 = vadd.f32 %v7306, 1e-05
      %v7435 = vadd.f32 %v7307, 1e-05
      %v7436 = vadd.f32 %v7308, 1e-05
      %v7437 = vadd.f32 %v7309, 1e-05
      %v7438 = vadd.f32 %v7310, 1e-05
      %v7439 = vadd.f32 %v7311, 1e-05
      %v7440 = vadd.f32 %v7312, 1e-05
      %v7441 = vadd.f32 %v7313, 1e-05
      %v7442 = vadd.f32 %v7314, 1e-05
      %v7443 = vadd.f32 %v7315, 1e-05
      %v7444 = vadd.f32 %v7316, 1e-05
      %v7445 = vadd.f32 %v7317, 1e-05
      %v7446 = vadd.f32 %v7318, 1e-05
      %v7447 = vadd.f32 %v7319, 1e-05
      %v7448 = vadd.f32 %v7320, 1e-05
      %v7449 = vadd.f32 %v7321, 1e-05
      %v7450 = vadd.f32 %v7322, 1e-05
      %v7451 = vadd.f32 %v7323, 1e-05
      %v7452 = vadd.f32 %v7324, 1e-05
      %v7453 = vadd.f32 %v7325, 1e-05
      %v7454 = vadd.f32 %v7326, 1e-05
      %v7455 = vadd.f32 %v7327, 1e-05
      %v7456 = vadd.f32 %v7328, 1e-05
      %v7457 = vadd.f32 %v7329, 1e-05
      %v7458 = vadd.f32 %v7330, 1e-05
      %v7459 = vadd.f32 %v7331, 1e-05
      %v7460 = vadd.f32 %v7332, 1e-05
      %v7461 = vadd.f32 %v7333, 1e-05
      %v7462 = vadd.f32 %v7334, 1e-05
      %v7463 = vadd.f32 %v7335, 1e-05
      %v7464 = vadd.f32 %v7336, 1e-05
      %v7465 = vadd.f32 %v7337, 1e-05
      %v7466 = vadd.f32 %v7338, 1e-05
      %v7467 = vadd.f32 %v7339, 1e-05
      %v7468 = vadd.f32 %v7340, 1e-05
      %v7469 = vadd.f32 %v7341, 1e-05
      %v7470 = vrsqrt.pop %v7406
      %v7471 = vmul.f32 %v7470, %v7406
      %v7472 = vmul.f32 %v7471, %v7470
      %v7473 = vmul.f32 0.5, %v7472
      %v7474 = vsub.f32 1.5, %v7473
      %v7475 = vmul.f32 %v7470, %v7474
      %vm7476 = vweird.f32 %v7406
      %vm7477 = vweird.f32 %v7470
      %vm7478 = vmor %vm7476, %vm7477
      %v7479 = vsel %vm7478, %v7470, %v7475
      %v7480 = vrsqrt.pop %v7407
      %v7481 = vmul.f32 %v7480, %v7407
      %v7482 = vmul.f32 %v7481, %v7480
      %v7483 = vmul.f32 0.5, %v7482
      %v7484 = vsub.f32 1.5, %v7483
      %v7485 = vmul.f32 %v7480, %v7484
      %vm7486 = vweird.f32 %v7407
      %vm7487 = vweird.f32 %v7480
      %vm7488 = vmor %vm7486, %vm7487
      %v7489 = vsel %vm7488, %v7480, %v7485
      %v7490 = vrsqrt.pop %v7408
      %v7491 = vmul.f32 %v7490, %v7408
      %v7492 = vmul.f32 %v7491, %v7490
      %v7493 = vmul.f32 0.5, %v7492
      %v7494 = vsub.f32 1.5, %v7493
      %v7495 = vmul.f32 %v7490, %v7494
      %vm7496 = vweird.f32 %v7408
      %vm7497 = vweird.f32 %v7490
      %vm7498 = vmor %vm7496, %vm7497
      %v7499 = vsel %vm7498, %v7490, %v7495
      %v7500 = vrsqrt.pop %v7409
      %v7501 = vmul.f32 %v7500, %v7409
      %v7502 = vmul.f32 %v7501, %v7500
      %v7503 = vmul.f32 0.5, %v7502
      %v7504 = vsub.f32 1.5, %v7503
      %v7505 = vmul.f32 %v7500, %v7504
      %vm7506 = vweird.f32 %v7409
      %vm7507 = vweird.f32 %v7500
      %vm7508 = vmor %vm7506, %vm7507
      %v7509 = vsel %vm7508, %v7500, %v7505
      %v7510 = vrsqrt.pop %v7410
      %v7511 = vmul.f32 %v7510, %v7410
      %v7512 = vmul.f32 %v7511, %v7510
      %v7513 = vmul.f32 0.5, %v7512
      %v7514 = vsub.f32 1.5, %v7513
      %v7515 = vmul.f32 %v7510, %v7514
      %vm7516 = vweird.f32 %v7410
      %vm7517 = vweird.f32 %v7510
      %vm7518 = vmor %vm7516, %vm7517
      %v7519 = vsel %vm7518, %v7510, %v7515
      %v7520 = vrsqrt.pop %v7411
      %v7521 = vmul.f32 %v7520, %v7411
      %v7522 = vmul.f32 %v7521, %v7520
      %v7523 = vmul.f32 0.5, %v7522
      %v7524 = vsub.f32 1.5, %v7523
      %v7525 = vmul.f32 %v7520, %v7524
      %vm7526 = vweird.f32 %v7411
      %vm7527 = vweird.f32 %v7520
      %vm7528 = vmor %vm7526, %vm7527
      %v7529 = vsel %vm7528, %v7520, %v7525
      %v7530 = vrsqrt.pop %v7412
      %v7531 = vmul.f32 %v7530, %v7412
      %v7532 = vmul.f32 %v7531, %v7530
      %v7533 = vmul.f32 0.5, %v7532
      %v7534 = vsub.f32 1.5, %v7533
      %v7535 = vmul.f32 %v7530, %v7534
      %vm7536 = vweird.f32 %v7412
      %vm7537 = vweird.f32 %v7530
      %vm7538 = vmor %vm7536, %vm7537
      %v7539 = vsel %vm7538, %v7530, %v7535
      %v7540 = vrsqrt.pop %v7413
      %v7541 = vmul.f32 %v7540, %v7413
      %v7542 = vmul.f32 %v7541, %v7540
      %v7543 = vmul.f32 0.5, %v7542
      %v7544 = vsub.f32 1.5, %v7543
      %v7545 = vmul.f32 %v7540, %v7544
      %vm7546 = vweird.f32 %v7413
      %vm7547 = vweird.f32 %v7540
      %vm7548 = vmor %vm7546, %vm7547
      %v7549 = vsel %vm7548, %v7540, %v7545
      %v7550 = vrsqrt.pop %v7414
      %v7551 = vmul.f32 %v7550, %v7414
      %v7552 = vmul.f32 %v7551, %v7550
      %v7553 = vmul.f32 0.5, %v7552
      %v7554 = vsub.f32 1.5, %v7553
      %v7555 = vmul.f32 %v7550, %v7554
      %vm7556 = vweird.f32 %v7414
      %vm7557 = vweird.f32 %v7550
      %vm7558 = vmor %vm7556, %vm7557
      %v7559 = vsel %vm7558, %v7550, %v7555
      %v7560 = vrsqrt.pop %v7415
      %v7561 = vmul.f32 %v7560, %v7415
      %v7562 = vmul.f32 %v7561, %v7560
      %v7563 = vmul.f32 0.5, %v7562
      %v7564 = vsub.f32 1.5, %v7563
      %v7565 = vmul.f32 %v7560, %v7564
      %vm7566 = vweird.f32 %v7415
      %vm7567 = vweird.f32 %v7560
      %vm7568 = vmor %vm7566, %vm7567
      %v7569 = vsel %vm7568, %v7560, %v7565
      %v7570 = vrsqrt.pop %v7416
      %v7571 = vmul.f32 %v7570, %v7416
      %v7572 = vmul.f32 %v7571, %v7570
      %v7573 = vmul.f32 0.5, %v7572
      %v7574 = vsub.f32 1.5, %v7573
      %v7575 = vmul.f32 %v7570, %v7574
      %vm7576 = vweird.f32 %v7416
      %vm7577 = vweird.f32 %v7570
      %vm7578 = vmor %vm7576, %vm7577
      %v7579 = vsel %vm7578, %v7570, %v7575
      %v7580 = vrsqrt.pop %v7417
      %v7581 = vmul.f32 %v7580, %v7417
      %v7582 = vmul.f32 %v7581, %v7580
      %v7583 = vmul.f32 0.5, %v7582
      %v7584 = vsub.f32 1.5, %v7583
      %v7585 = vmul.f32 %v7580, %v7584
      %vm7586 = vweird.f32 %v7417
      %vm7587 = vweird.f32 %v7580
      %vm7588 = vmor %vm7586, %vm7587
      %v7589 = vsel %vm7588, %v7580, %v7585
      %v7590 = vrsqrt.pop %v7418
      %v7591 = vmul.f32 %v7590, %v7418
      %v7592 = vmul.f32 %v7591, %v7590
      %v7593 = vmul.f32 0.5, %v7592
      %v7594 = vsub.f32 1.5, %v7593
      %v7595 = vmul.f32 %v7590, %v7594
      %vm7596 = vweird.f32 %v7418
      %vm7597 = vweird.f32 %v7590
      %vm7598 = vmor %vm7596, %vm7597
      %v7599 = vsel %vm7598, %v7590, %v7595
      %v7600 = vrsqrt.pop %v7419
      %v7601 = vmul.f32 %v7600, %v7419
      %v7602 = vmul.f32 %v7601, %v7600
      %v7603 = vmul.f32 0.5, %v7602
      %v7604 = vsub.f32 1.5, %v7603
      %v7605 = vmul.f32 %v7600, %v7604
      %vm7606 = vweird.f32 %v7419
      %vm7607 = vweird.f32 %v7600
      %vm7608 = vmor %vm7606, %vm7607
      %v7609 = vsel %vm7608, %v7600, %v7605
      %v7610 = vrsqrt.pop %v7420
      %v7611 = vmul.f32 %v7610, %v7420
      %v7612 = vmul.f32 %v7611, %v7610
      %v7613 = vmul.f32 0.5, %v7612
      %v7614 = vsub.f32 1.5, %v7613
      %v7615 = vmul.f32 %v7610, %v7614
      %vm7616 = vweird.f32 %v7420
      %vm7617 = vweird.f32 %v7610
      %vm7618 = vmor %vm7616, %vm7617
      %v7619 = vsel %vm7618, %v7610, %v7615
      %v7620 = vrsqrt.pop %v7421
      %v7621 = vmul.f32 %v7620, %v7421
      %v7622 = vmul.f32 %v7621, %v7620
      %v7623 = vmul.f32 0.5, %v7622
      %v7624 = vsub.f32 1.5, %v7623
      %v7625 = vmul.f32 %v7620, %v7624
      %vm7626 = vweird.f32 %v7421
      %vm7627 = vweird.f32 %v7620
      %vm7628 = vmor %vm7626, %vm7627
      %v7629 = vsel %vm7628, %v7620, %v7625
      %v7630 = vrsqrt.pop %v7422
      %v7631 = vmul.f32 %v7630, %v7422
      %v7632 = vmul.f32 %v7631, %v7630
      %v7633 = vmul.f32 0.5, %v7632
      %v7634 = vsub.f32 1.5, %v7633
      %v7635 = vmul.f32 %v7630, %v7634
      %vm7636 = vweird.f32 %v7422
      %vm7637 = vweird.f32 %v7630
      %vm7638 = vmor %vm7636, %vm7637
      %v7639 = vsel %vm7638, %v7630, %v7635
      %v7640 = vrsqrt.pop %v7423
      %v7641 = vmul.f32 %v7640, %v7423
      %v7642 = vmul.f32 %v7641, %v7640
      %v7643 = vmul.f32 0.5, %v7642
      %v7644 = vsub.f32 1.5, %v7643
      %v7645 = vmul.f32 %v7640, %v7644
      %vm7646 = vweird.f32 %v7423
      %vm7647 = vweird.f32 %v7640
      %vm7648 = vmor %vm7646, %vm7647
      %v7649 = vsel %vm7648, %v7640, %v7645
      %v7650 = vrsqrt.pop %v7424
      %v7651 = vmul.f32 %v7650, %v7424
      %v7652 = vmul.f32 %v7651, %v7650
      %v7653 = vmul.f32 0.5, %v7652
      %v7654 = vsub.f32 1.5, %v7653
      %v7655 = vmul.f32 %v7650, %v7654
      %vm7656 = vweird.f32 %v7424
      %vm7657 = vweird.f32 %v7650
      %vm7658 = vmor %vm7656, %vm7657
      %v7659 = vsel %vm7658, %v7650, %v7655
      %v7660 = vrsqrt.pop %v7425
      %v7661 = vmul.f32 %v7660, %v7425
      %v7662 = vmul.f32 %v7661, %v7660
      %v7663 = vmul.f32 0.5, %v7662
      %v7664 = vsub.f32 1.5, %v7663
      %v7665 = vmul.f32 %v7660, %v7664
      %vm7666 = vweird.f32 %v7425
      %vm7667 = vweird.f32 %v7660
      %vm7668 = vmor %vm7666, %vm7667
      %v7669 = vsel %vm7668, %v7660, %v7665
      %v7670 = vrsqrt.pop %v7426
      %v7671 = vmul.f32 %v7670, %v7426
      %v7672 = vmul.f32 %v7671, %v7670
      %v7673 = vmul.f32 0.5, %v7672
      %v7674 = vsub.f32 1.5, %v7673
      %v7675 = vmul.f32 %v7670, %v7674
      %vm7676 = vweird.f32 %v7426
      %vm7677 = vweird.f32 %v7670
      %vm7678 = vmor %vm7676, %vm7677
      %v7679 = vsel %vm7678, %v7670, %v7675
      %v7680 = vrsqrt.pop %v7427
      %v7681 = vmul.f32 %v7680, %v7427
      %v7682 = vmul.f32 %v7681, %v7680
      %v7683 = vmul.f32 0.5, %v7682
      %v7684 = vsub.f32 1.5, %v7683
      %v7685 = vmul.f32 %v7680, %v7684
      %vm7686 = vweird.f32 %v7427
      %vm7687 = vweird.f32 %v7680
      %vm7688 = vmor %vm7686, %vm7687
      %v7689 = vsel %vm7688, %v7680, %v7685
      %v7690 = vrsqrt.pop %v7428
      %v7691 = vmul.f32 %v7690, %v7428
      %v7692 = vmul.f32 %v7691, %v7690
      %v7693 = vmul.f32 0.5, %v7692
      %v7694 = vsub.f32 1.5, %v7693
      %v7695 = vmul.f32 %v7690, %v7694
      %vm7696 = vweird.f32 %v7428
      %vm7697 = vweird.f32 %v7690
      %vm7698 = vmor %vm7696, %vm7697
      %v7699 = vsel %vm7698, %v7690, %v7695
      %v7700 = vrsqrt.pop %v7429
      %v7701 = vmul.f32 %v7700, %v7429
      %v7702 = vmul.f32 %v7701, %v7700
      %v7703 = vmul.f32 0.5, %v7702
      %v7704 = vsub.f32 1.5, %v7703
      %v7705 = vmul.f32 %v7700, %v7704
      %vm7706 = vweird.f32 %v7429
      %vm7707 = vweird.f32 %v7700
      %vm7708 = vmor %vm7706, %vm7707
      %v7709 = vsel %vm7708, %v7700, %v7705
      %v7710 = vrsqrt.pop %v7430
      %v7711 = vmul.f32 %v7710, %v7430
      %v7712 = vmul.f32 %v7711, %v7710
      %v7713 = vmul.f32 0.5, %v7712
      %v7714 = vsub.f32 1.5, %v7713
      %v7715 = vmul.f32 %v7710, %v7714
      %vm7716 = vweird.f32 %v7430
      %vm7717 = vweird.f32 %v7710
      %vm7718 = vmor %vm7716, %vm7717
      %v7719 = vsel %vm7718, %v7710, %v7715
      %v7720 = vrsqrt.pop %v7431
      %v7721 = vmul.f32 %v7720, %v7431
      %v7722 = vmul.f32 %v7721, %v7720
      %v7723 = vmul.f32 0.5, %v7722
      %v7724 = vsub.f32 1.5, %v7723
      %v7725 = vmul.f32 %v7720, %v7724
      %vm7726 = vweird.f32 %v7431
      %vm7727 = vweird.f32 %v7720
      %vm7728 = vmor %vm7726, %vm7727
      %v7729 = vsel %vm7728, %v7720, %v7725
      %v7730 = vrsqrt.pop %v7432
      %v7731 = vmul.f32 %v7730, %v7432
      %v7732 = vmul.f32 %v7731, %v7730
      %v7733 = vmul.f32 0.5, %v7732
      %v7734 = vsub.f32 1.5, %v7733
      %v7735 = vmul.f32 %v7730, %v7734
      %vm7736 = vweird.f32 %v7432
      %vm7737 = vweird.f32 %v7730
      %vm7738 = vmor %vm7736, %vm7737
      %v7739 = vsel %vm7738, %v7730, %v7735
      %v7740 = vrsqrt.pop %v7433
      %v7741 = vmul.f32 %v7740, %v7433
      %v7742 = vmul.f32 %v7741, %v7740
      %v7743 = vmul.f32 0.5, %v7742
      %v7744 = vsub.f32 1.5, %v7743
      %v7745 = vmul.f32 %v7740, %v7744
      %vm7746 = vweird.f32 %v7433
      %vm7747 = vweird.f32 %v7740
      %vm7748 = vmor %vm7746, %vm7747
      %v7749 = vsel %vm7748, %v7740, %v7745
      %v7750 = vrsqrt.pop %v7434
      %v7751 = vmul.f32 %v7750, %v7434
      %v7752 = vmul.f32 %v7751, %v7750
      %v7753 = vmul.f32 0.5, %v7752
      %v7754 = vsub.f32 1.5, %v7753
      %v7755 = vmul.f32 %v7750, %v7754
      %vm7756 = vweird.f32 %v7434
      %vm7757 = vweird.f32 %v7750
      %vm7758 = vmor %vm7756, %vm7757
      %v7759 = vsel %vm7758, %v7750, %v7755
      %v7760 = vrsqrt.pop %v7435
      %v7761 = vmul.f32 %v7760, %v7435
      %v7762 = vmul.f32 %v7761, %v7760
      %v7763 = vmul.f32 0.5, %v7762
      %v7764 = vsub.f32 1.5, %v7763
      %v7765 = vmul.f32 %v7760, %v7764
      %vm7766 = vweird.f32 %v7435
      %vm7767 = vweird.f32 %v7760
      %vm7768 = vmor %vm7766, %vm7767
      %v7769 = vsel %vm7768, %v7760, %v7765
      %v7770 = vrsqrt.pop %v7436
      %v7771 = vmul.f32 %v7770, %v7436
      %v7772 = vmul.f32 %v7771, %v7770
      %v7773 = vmul.f32 0.5, %v7772
      %v7774 = vsub.f32 1.5, %v7773
      %v7775 = vmul.f32 %v7770, %v7774
      %vm7776 = vweird.f32 %v7436
      %vm7777 = vweird.f32 %v7770
      %vm7778 = vmor %vm7776, %vm7777
      %v7779 = vsel %vm7778, %v7770, %v7775
      %v7780 = vrsqrt.pop %v7437
      %v7781 = vmul.f32 %v7780, %v7437
      %v7782 = vmul.f32 %v7781, %v7780
      %v7783 = vmul.f32 0.5, %v7782
      %v7784 = vsub.f32 1.5, %v7783
      %v7785 = vmul.f32 %v7780, %v7784
      %vm7786 = vweird.f32 %v7437
      %vm7787 = vweird.f32 %v7780
      %vm7788 = vmor %vm7786, %vm7787
      %v7789 = vsel %vm7788, %v7780, %v7785
      %v7790 = vrsqrt.pop %v7438
      %v7791 = vmul.f32 %v7790, %v7438
      %v7792 = vmul.f32 %v7791, %v7790
      %v7793 = vmul.f32 0.5, %v7792
      %v7794 = vsub.f32 1.5, %v7793
      %v7795 = vmul.f32 %v7790, %v7794
      %vm7796 = vweird.f32 %v7438
      %vm7797 = vweird.f32 %v7790
      %vm7798 = vmor %vm7796, %vm7797
      %v7799 = vsel %vm7798, %v7790, %v7795
      %v7800 = vrsqrt.pop %v7439
      %v7801 = vmul.f32 %v7800, %v7439
      %v7802 = vmul.f32 %v7801, %v7800
      %v7803 = vmul.f32 0.5, %v7802
      %v7804 = vsub.f32 1.5, %v7803
      %v7805 = vmul.f32 %v7800, %v7804
      %vm7806 = vweird.f32 %v7439
      %vm7807 = vweird.f32 %v7800
      %vm7808 = vmor %vm7806, %vm7807
      %v7809 = vsel %vm7808, %v7800, %v7805
      %v7810 = vrsqrt.pop %v7440
      %v7811 = vmul.f32 %v7810, %v7440
      %v7812 = vmul.f32 %v7811, %v7810
      %v7813 = vmul.f32 0.5, %v7812
      %v7814 = vsub.f32 1.5, %v7813
      %v7815 = vmul.f32 %v7810, %v7814
      %vm7816 = vweird.f32 %v7440
      %vm7817 = vweird.f32 %v7810
      %vm7818 = vmor %vm7816, %vm7817
      %v7819 = vsel %vm7818, %v7810, %v7815
      %v7820 = vrsqrt.pop %v7441
      %v7821 = vmul.f32 %v7820, %v7441
      %v7822 = vmul.f32 %v7821, %v7820
      %v7823 = vmul.f32 0.5, %v7822
      %v7824 = vsub.f32 1.5, %v7823
      %v7825 = vmul.f32 %v7820, %v7824
      %vm7826 = vweird.f32 %v7441
      %vm7827 = vweird.f32 %v7820
      %vm7828 = vmor %vm7826, %vm7827
      %v7829 = vsel %vm7828, %v7820, %v7825
      %v7830 = vrsqrt.pop %v7442
      %v7831 = vmul.f32 %v7830, %v7442
      %v7832 = vmul.f32 %v7831, %v7830
      %v7833 = vmul.f32 0.5, %v7832
      %v7834 = vsub.f32 1.5, %v7833
      %v7835 = vmul.f32 %v7830, %v7834
      %vm7836 = vweird.f32 %v7442
      %vm7837 = vweird.f32 %v7830
      %vm7838 = vmor %vm7836, %vm7837
      %v7839 = vsel %vm7838, %v7830, %v7835
      %v7840 = vrsqrt.pop %v7443
      %v7841 = vmul.f32 %v7840, %v7443
      %v7842 = vmul.f32 %v7841, %v7840
      %v7843 = vmul.f32 0.5, %v7842
      %v7844 = vsub.f32 1.5, %v7843
      %v7845 = vmul.f32 %v7840, %v7844
      %vm7846 = vweird.f32 %v7443
      %vm7847 = vweird.f32 %v7840
      %vm7848 = vmor %vm7846, %vm7847
      %v7849 = vsel %vm7848, %v7840, %v7845
      %v7850 = vrsqrt.pop %v7444
      %v7851 = vmul.f32 %v7850, %v7444
      %v7852 = vmul.f32 %v7851, %v7850
      %v7853 = vmul.f32 0.5, %v7852
      %v7854 = vsub.f32 1.5, %v7853
      %v7855 = vmul.f32 %v7850, %v7854
      %vm7856 = vweird.f32 %v7444
      %vm7857 = vweird.f32 %v7850
      %vm7858 = vmor %vm7856, %vm7857
      %v7859 = vsel %vm7858, %v7850, %v7855
      %v7860 = vrsqrt.pop %v7445
      %v7861 = vmul.f32 %v7860, %v7445
      %v7862 = vmul.f32 %v7861, %v7860
      %v7863 = vmul.f32 0.5, %v7862
      %v7864 = vsub.f32 1.5, %v7863
      %v7865 = vmul.f32 %v7860, %v7864
      %vm7866 = vweird.f32 %v7445
      %vm7867 = vweird.f32 %v7860
      %vm7868 = vmor %vm7866, %vm7867
      %v7869 = vsel %vm7868, %v7860, %v7865
      %v7870 = vrsqrt.pop %v7446
      %v7871 = vmul.f32 %v7870, %v7446
      %v7872 = vmul.f32 %v7871, %v7870
      %v7873 = vmul.f32 0.5, %v7872
      %v7874 = vsub.f32 1.5, %v7873
      %v7875 = vmul.f32 %v7870, %v7874
      %vm7876 = vweird.f32 %v7446
      %vm7877 = vweird.f32 %v7870
      %vm7878 = vmor %vm7876, %vm7877
      %v7879 = vsel %vm7878, %v7870, %v7875
      %v7880 = vrsqrt.pop %v7447
      %v7881 = vmul.f32 %v7880, %v7447
      %v7882 = vmul.f32 %v7881, %v7880
      %v7883 = vmul.f32 0.5, %v7882
      %v7884 = vsub.f32 1.5, %v7883
      %v7885 = vmul.f32 %v7880, %v7884
      %vm7886 = vweird.f32 %v7447
      %vm7887 = vweird.f32 %v7880
      %vm7888 = vmor %vm7886, %vm7887
      %v7889 = vsel %vm7888, %v7880, %v7885
      %v7890 = vrsqrt.pop %v7448
      %v7891 = vmul.f32 %v7890, %v7448
      %v7892 = vmul.f32 %v7891, %v7890
      %v7893 = vmul.f32 0.5, %v7892
      %v7894 = vsub.f32 1.5, %v7893
      %v7895 = vmul.f32 %v7890, %v7894
      %vm7896 = vweird.f32 %v7448
      %vm7897 = vweird.f32 %v7890
      %vm7898 = vmor %vm7896, %vm7897
      %v7899 = vsel %vm7898, %v7890, %v7895
      %v7900 = vrsqrt.pop %v7449
      %v7901 = vmul.f32 %v7900, %v7449
      %v7902 = vmul.f32 %v7901, %v7900
      %v7903 = vmul.f32 0.5, %v7902
      %v7904 = vsub.f32 1.5, %v7903
      %v7905 = vmul.f32 %v7900, %v7904
      %vm7906 = vweird.f32 %v7449
      %vm7907 = vweird.f32 %v7900
      %vm7908 = vmor %vm7906, %vm7907
      %v7909 = vsel %vm7908, %v7900, %v7905
      %v7910 = vrsqrt.pop %v7450
      %v7911 = vmul.f32 %v7910, %v7450
      %v7912 = vmul.f32 %v7911, %v7910
      %v7913 = vmul.f32 0.5, %v7912
      %v7914 = vsub.f32 1.5, %v7913
      %v7915 = vmul.f32 %v7910, %v7914
      %vm7916 = vweird.f32 %v7450
      %vm7917 = vweird.f32 %v7910
      %vm7918 = vmor %vm7916, %vm7917
      %v7919 = vsel %vm7918, %v7910, %v7915
      %v7920 = vrsqrt.pop %v7451
      %v7921 = vmul.f32 %v7920, %v7451
      %v7922 = vmul.f32 %v7921, %v7920
      %v7923 = vmul.f32 0.5, %v7922
      %v7924 = vsub.f32 1.5, %v7923
      %v7925 = vmul.f32 %v7920, %v7924
      %vm7926 = vweird.f32 %v7451
      %vm7927 = vweird.f32 %v7920
      %vm7928 = vmor %vm7926, %vm7927
      %v7929 = vsel %vm7928, %v7920, %v7925
      %v7930 = vrsqrt.pop %v7452
      %v7931 = vmul.f32 %v7930, %v7452
      %v7932 = vmul.f32 %v7931, %v7930
      %v7933 = vmul.f32 0.5, %v7932
      %v7934 = vsub.f32 1.5, %v7933
      %v7935 = vmul.f32 %v7930, %v7934
      %vm7936 = vweird.f32 %v7452
      %vm7937 = vweird.f32 %v7930
      %vm7938 = vmor %vm7936, %vm7937
      %v7939 = vsel %vm7938, %v7930, %v7935
      %v7940 = vrsqrt.pop %v7453
      %v7941 = vmul.f32 %v7940, %v7453
      %v7942 = vmul.f32 %v7941, %v7940
      %v7943 = vmul.f32 0.5, %v7942
      %v7944 = vsub.f32 1.5, %v7943
      %v7945 = vmul.f32 %v7940, %v7944
      %vm7946 = vweird.f32 %v7453
      %vm7947 = vweird.f32 %v7940
      %vm7948 = vmor %vm7946, %vm7947
      %v7949 = vsel %vm7948, %v7940, %v7945
      %v7950 = vrsqrt.pop %v7454
      %v7951 = vmul.f32 %v7950, %v7454
      %v7952 = vmul.f32 %v7951, %v7950
      %v7953 = vmul.f32 0.5, %v7952
      %v7954 = vsub.f32 1.5, %v7953
      %v7955 = vmul.f32 %v7950, %v7954
      %vm7956 = vweird.f32 %v7454
      %vm7957 = vweird.f32 %v7950
      %vm7958 = vmor %vm7956, %vm7957
      %v7959 = vsel %vm7958, %v7950, %v7955
      %v7960 = vrsqrt.pop %v7455
      %v7961 = vmul.f32 %v7960, %v7455
      %v7962 = vmul.f32 %v7961, %v7960
      %v7963 = vmul.f32 0.5, %v7962
      %v7964 = vsub.f32 1.5, %v7963
      %v7965 = vmul.f32 %v7960, %v7964
      %vm7966 = vweird.f32 %v7455
      %vm7967 = vweird.f32 %v7960
      %vm7968 = vmor %vm7966, %vm7967
      %v7969 = vsel %vm7968, %v7960, %v7965
      %v7970 = vrsqrt.pop %v7456
      %v7971 = vmul.f32 %v7970, %v7456
      %v7972 = vmul.f32 %v7971, %v7970
      %v7973 = vmul.f32 0.5, %v7972
      %v7974 = vsub.f32 1.5, %v7973
      %v7975 = vmul.f32 %v7970, %v7974
      %vm7976 = vweird.f32 %v7456
      %vm7977 = vweird.f32 %v7970
      %vm7978 = vmor %vm7976, %vm7977
      %v7979 = vsel %vm7978, %v7970, %v7975
      %v7980 = vrsqrt.pop %v7457
      %v7981 = vmul.f32 %v7980, %v7457
      %v7982 = vmul.f32 %v7981, %v7980
      %v7983 = vmul.f32 0.5, %v7982
      %v7984 = vsub.f32 1.5, %v7983
      %v7985 = vmul.f32 %v7980, %v7984
      %vm7986 = vweird.f32 %v7457
      %vm7987 = vweird.f32 %v7980
      %vm7988 = vmor %vm7986, %vm7987
      %v7989 = vsel %vm7988, %v7980, %v7985
      %v7990 = vrsqrt.pop %v7458
      %v7991 = vmul.f32 %v7990, %v7458
      %v7992 = vmul.f32 %v7991, %v7990
      %v7993 = vmul.f32 0.5, %v7992
      %v7994 = vsub.f32 1.5, %v7993
      %v7995 = vmul.f32 %v7990, %v7994
      %vm7996 = vweird.f32 %v7458
      %vm7997 = vweird.f32 %v7990
      %vm7998 = vmor %vm7996, %vm7997
      %v7999 = vsel %vm7998, %v7990, %v7995
      %v8000 = vrsqrt.pop %v7459
      %v8001 = vmul.f32 %v8000, %v7459
      %v8002 = vmul.f32 %v8001, %v8000
      %v8003 = vmul.f32 0.5, %v8002
      %v8004 = vsub.f32 1.5, %v8003
      %v8005 = vmul.f32 %v8000, %v8004
      %vm8006 = vweird.f32 %v7459
      %vm8007 = vweird.f32 %v8000
      %vm8008 = vmor %vm8006, %vm8007
      %v8009 = vsel %vm8008, %v8000, %v8005
      %v8010 = vrsqrt.pop %v7460
      %v8011 = vmul.f32 %v8010, %v7460
      %v8012 = vmul.f32 %v8011, %v8010
      %v8013 = vmul.f32 0.5, %v8012
      %v8014 = vsub.f32 1.5, %v8013
      %v8015 = vmul.f32 %v8010, %v8014
      %vm8016 = vweird.f32 %v7460
      %vm8017 = vweird.f32 %v8010
      %vm8018 = vmor %vm8016, %vm8017
      %v8019 = vsel %vm8018, %v8010, %v8015
      %v8020 = vrsqrt.pop %v7461
      %v8021 = vmul.f32 %v8020, %v7461
      %v8022 = vmul.f32 %v8021, %v8020
      %v8023 = vmul.f32 0.5, %v8022
      %v8024 = vsub.f32 1.5, %v8023
      %v8025 = vmul.f32 %v8020, %v8024
      %vm8026 = vweird.f32 %v7461
      %vm8027 = vweird.f32 %v8020
      %vm8028 = vmor %vm8026, %vm8027
      %v8029 = vsel %vm8028, %v8020, %v8025
      %v8030 = vrsqrt.pop %v7462
      %v8031 = vmul.f32 %v8030, %v7462
      %v8032 = vmul.f32 %v8031, %v8030
      %v8033 = vmul.f32 0.5, %v8032
      %v8034 = vsub.f32 1.5, %v8033
      %v8035 = vmul.f32 %v8030, %v8034
      %vm8036 = vweird.f32 %v7462
      %vm8037 = vweird.f32 %v8030
      %vm8038 = vmor %vm8036, %vm8037
      %v8039 = vsel %vm8038, %v8030, %v8035
      %v8040 = vrsqrt.pop %v7463
      %v8041 = vmul.f32 %v8040, %v7463
      %v8042 = vmul.f32 %v8041, %v8040
      %v8043 = vmul.f32 0.5, %v8042
      %v8044 = vsub.f32 1.5, %v8043
      %v8045 = vmul.f32 %v8040, %v8044
      %vm8046 = vweird.f32 %v7463
      %vm8047 = vweird.f32 %v8040
      %vm8048 = vmor %vm8046, %vm8047
      %v8049 = vsel %vm8048, %v8040, %v8045
      %v8050 = vrsqrt.pop %v7464
      %v8051 = vmul.f32 %v8050, %v7464
      %v8052 = vmul.f32 %v8051, %v8050
      %v8053 = vmul.f32 0.5, %v8052
      %v8054 = vsub.f32 1.5, %v8053
      %v8055 = vmul.f32 %v8050, %v8054
      %vm8056 = vweird.f32 %v7464
      %vm8057 = vweird.f32 %v8050
      %vm8058 = vmor %vm8056, %vm8057
      %v8059 = vsel %vm8058, %v8050, %v8055
      %v8060 = vrsqrt.pop %v7465
      %v8061 = vmul.f32 %v8060, %v7465
      %v8062 = vmul.f32 %v8061, %v8060
      %v8063 = vmul.f32 0.5, %v8062
      %v8064 = vsub.f32 1.5, %v8063
      %v8065 = vmul.f32 %v8060, %v8064
      %vm8066 = vweird.f32 %v7465
      %vm8067 = vweird.f32 %v8060
      %vm8068 = vmor %vm8066, %vm8067
      %v8069 = vsel %vm8068, %v8060, %v8065
      %v8070 = vrsqrt.pop %v7466
      %v8071 = vmul.f32 %v8070, %v7466
      %v8072 = vmul.f32 %v8071, %v8070
      %v8073 = vmul.f32 0.5, %v8072
      %v8074 = vsub.f32 1.5, %v8073
      %v8075 = vmul.f32 %v8070, %v8074
      %vm8076 = vweird.f32 %v7466
      %vm8077 = vweird.f32 %v8070
      %vm8078 = vmor %vm8076, %vm8077
      %v8079 = vsel %vm8078, %v8070, %v8075
      %v8080 = vrsqrt.pop %v7467
      %v8081 = vmul.f32 %v8080, %v7467
      %v8082 = vmul.f32 %v8081, %v8080
      %v8083 = vmul.f32 0.5, %v8082
      %v8084 = vsub.f32 1.5, %v8083
      %v8085 = vmul.f32 %v8080, %v8084
      %vm8086 = vweird.f32 %v7467
      %vm8087 = vweird.f32 %v8080
      %vm8088 = vmor %vm8086, %vm8087
      %v8089 = vsel %vm8088, %v8080, %v8085
      %v8090 = vrsqrt.pop %v7468
      %v8091 = vmul.f32 %v8090, %v7468
      %v8092 = vmul.f32 %v8091, %v8090
      %v8093 = vmul.f32 0.5, %v8092
      %v8094 = vsub.f32 1.5, %v8093
      %v8095 = vmul.f32 %v8090, %v8094
      %vm8096 = vweird.f32 %v7468
      %vm8097 = vweird.f32 %v8090
      %vm8098 = vmor %vm8096, %vm8097
      %v8099 = vsel %vm8098, %v8090, %v8095
      %v8100 = vrsqrt.pop %v7469
      %v8101 = vmul.f32 %v8100, %v7469
      %v8102 = vmul.f32 %v8101, %v8100
      %v8103 = vmul.f32 0.5, %v8102
      %v8104 = vsub.f32 1.5, %v8103
      %v8105 = vmul.f32 %v8100, %v8104
      %vm8106 = vweird.f32 %v7469
      %vm8107 = vweird.f32 %v8100
      %vm8108 = vmor %vm8106, %vm8107
      %v8109 = vsel %vm8108, %v8100, %v8105
      %v8110 = vmul.f32 %v7342, %v7479
      %v8111 = vmul.f32 %v7343, %v7489
      %v8112 = vmul.f32 %v7344, %v7499
      %v8113 = vmul.f32 %v7345, %v7509
      %v8114 = vmul.f32 %v7346, %v7519
      %v8115 = vmul.f32 %v7347, %v7529
      %v8116 = vmul.f32 %v7348, %v7539
      %v8117 = vmul.f32 %v7349, %v7549
      %v8118 = vmul.f32 %v7350, %v7559
      %v8119 = vmul.f32 %v7351, %v7569
      %v8120 = vmul.f32 %v7352, %v7579
      %v8121 = vmul.f32 %v7353, %v7589
      %v8122 = vmul.f32 %v7354, %v7599
      %v8123 = vmul.f32 %v7355, %v7609
      %v8124 = vmul.f32 %v7356, %v7619
      %v8125 = vmul.f32 %v7357, %v7629
      %v8126 = vmul.f32 %v7358, %v7639
      %v8127 = vmul.f32 %v7359, %v7649
      %v8128 = vmul.f32 %v7360, %v7659
      %v8129 = vmul.f32 %v7361, %v7669
      %v8130 = vmul.f32 %v7362, %v7679
      %v8131 = vmul.f32 %v7363, %v7689
      %v8132 = vmul.f32 %v7364, %v7699
      %v8133 = vmul.f32 %v7365, %v7709
      %v8134 = vmul.f32 %v7366, %v7719
      %v8135 = vmul.f32 %v7367, %v7729
      %v8136 = vmul.f32 %v7368, %v7739
      %v8137 = vmul.f32 %v7369, %v7749
      %v8138 = vmul.f32 %v7370, %v7759
      %v8139 = vmul.f32 %v7371, %v7769
      %v8140 = vmul.f32 %v7372, %v7779
      %v8141 = vmul.f32 %v7373, %v7789
      %v8142 = vmul.f32 %v7374, %v7799
      %v8143 = vmul.f32 %v7375, %v7809
      %v8144 = vmul.f32 %v7376, %v7819
      %v8145 = vmul.f32 %v7377, %v7829
      %v8146 = vmul.f32 %v7378, %v7839
      %v8147 = vmul.f32 %v7379, %v7849
      %v8148 = vmul.f32 %v7380, %v7859
      %v8149 = vmul.f32 %v7381, %v7869
      %v8150 = vmul.f32 %v7382, %v7879
      %v8151 = vmul.f32 %v7383, %v7889
      %v8152 = vmul.f32 %v7384, %v7899
      %v8153 = vmul.f32 %v7385, %v7909
      %v8154 = vmul.f32 %v7386, %v7919
      %v8155 = vmul.f32 %v7387, %v7929
      %v8156 = vmul.f32 %v7388, %v7939
      %v8157 = vmul.f32 %v7389, %v7949
      %v8158 = vmul.f32 %v7390, %v7959
      %v8159 = vmul.f32 %v7391, %v7969
      %v8160 = vmul.f32 %v7392, %v7979
      %v8161 = vmul.f32 %v7393, %v7989
      %v8162 = vmul.f32 %v7394, %v7999
      %v8163 = vmul.f32 %v7395, %v8009
      %v8164 = vmul.f32 %v7396, %v8019
      %v8165 = vmul.f32 %v7397, %v8029
      %v8166 = vmul.f32 %v7398, %v8039
      %v8167 = vmul.f32 %v7399, %v8049
      %v8168 = vmul.f32 %v7400, %v8059
      %v8169 = vmul.f32 %v7401, %v8069
      %v8170 = vmul.f32 %v7402, %v8079
      %v8171 = vmul.f32 %v7403, %v8089
      %v8172 = vmul.f32 %v7404, %v8099
      %v8173 = vmul.f32 %v7405, %v8109
      %v8174 = vmax.f32 %v8110, 0.0
      %v8175 = vmax.f32 %v8111, 0.0
      %v8176 = vmax.f32 %v8112, 0.0
      %v8177 = vmax.f32 %v8113, 0.0
      %v8178 = vmax.f32 %v8114, 0.0
      %v8179 = vmax.f32 %v8115, 0.0
      %v8180 = vmax.f32 %v8116, 0.0
      %v8181 = vmax.f32 %v8117, 0.0
      %v8182 = vmax.f32 %v8118, 0.0
      %v8183 = vmax.f32 %v8119, 0.0
      %v8184 = vmax.f32 %v8120, 0.0
      %v8185 = vmax.f32 %v8121, 0.0
      %v8186 = vmax.f32 %v8122, 0.0
      %v8187 = vmax.f32 %v8123, 0.0
      %v8188 = vmax.f32 %v8124, 0.0
      %v8189 = vmax.f32 %v8125, 0.0
      %v8190 = vmax.f32 %v8126, 0.0
      %v8191 = vmax.f32 %v8127, 0.0
      %v8192 = vmax.f32 %v8128, 0.0
      %v8193 = vmax.f32 %v8129, 0.0
      %v8194 = vmax.f32 %v8130, 0.0
      %v8195 = vmax.f32 %v8131, 0.0
      %v8196 = vmax.f32 %v8132, 0.0
      %v8197 = vmax.f32 %v8133, 0.0
      %v8198 = vmax.f32 %v8134, 0.0
      %v8199 = vmax.f32 %v8135, 0.0
      %v8200 = vmax.f32 %v8136, 0.0
      %v8201 = vmax.f32 %v8137, 0.0
      %v8202 = vmax.f32 %v8138, 0.0
      %v8203 = vmax.f32 %v8139, 0.0
      %v8204 = vmax.f32 %v8140, 0.0
      %v8205 = vmax.f32 %v8141, 0.0
      %v8206 = vmax.f32 %v8142, 0.0
      %v8207 = vmax.f32 %v8143, 0.0
      %v8208 = vmax.f32 %v8144, 0.0
      %v8209 = vmax.f32 %v8145, 0.0
      %v8210 = vmax.f32 %v8146, 0.0
      %v8211 = vmax.f32 %v8147, 0.0
      %v8212 = vmax.f32 %v8148, 0.0
      %v8213 = vmax.f32 %v8149, 0.0
      %v8214 = vmax.f32 %v8150, 0.0
      %v8215 = vmax.f32 %v8151, 0.0
      %v8216 = vmax.f32 %v8152, 0.0
      %v8217 = vmax.f32 %v8153, 0.0
      %v8218 = vmax.f32 %v8154, 0.0
      %v8219 = vmax.f32 %v8155, 0.0
      %v8220 = vmax.f32 %v8156, 0.0
      %v8221 = vmax.f32 %v8157, 0.0
      %v8222 = vmax.f32 %v8158, 0.0
      %v8223 = vmax.f32 %v8159, 0.0
      %v8224 = vmax.f32 %v8160, 0.0
      %v8225 = vmax.f32 %v8161, 0.0
      %v8226 = vmax.f32 %v8162, 0.0
      %v8227 = vmax.f32 %v8163, 0.0
      %v8228 = vmax.f32 %v8164, 0.0
      %v8229 = vmax.f32 %v8165, 0.0
      %v8230 = vmax.f32 %v8166, 0.0
      %v8231 = vmax.f32 %v8167, 0.0
      %v8232 = vmax.f32 %v8168, 0.0
      %v8233 = vmax.f32 %v8169, 0.0
      %v8234 = vmax.f32 %v8170, 0.0
      %v8235 = vmax.f32 %v8171, 0.0
      %v8236 = vmax.f32 %v8172, 0.0
      %v8237 = vmax.f32 %v8173, 0.0
      %8238 = vst.msk [vmem:[%s388] sm:$0xff] %vm6283, %v8174
      %8239 = vst.msk [vmem:[%s388 + $0x8] sm:$0xff] %vm6283, %v8175
      %8240 = vst.msk [vmem:[%s388 + $0x10] sm:$0xff] %vm6283, %v8176
      %8241 = vst.msk [vmem:[%s388 + $0x18] sm:$0xff] %vm6283, %v8177
      %8242 = vst.msk [vmem:[%s388 + $0x20] sm:$0xff] %vm6283, %v8178
      %8243 = vst.msk [vmem:[%s388 + $0x28] sm:$0xff] %vm6283, %v8179
      %8244 = vst.msk [vmem:[%s388 + $0x30] sm:$0xff] %vm6283, %v8180
      %8245 = vst.msk [vmem:[%s388 + $0x38] sm:$0xff] %vm6283, %v8181
      %8246 = vst.msk [vmem:[%s388 + $0x40] sm:$0xff] %vm6283, %v8182
      %8247 = vst.msk [vmem:[%s388 + $0x48] sm:$0xff] %vm6283, %v8183
      %8248 = vst.msk [vmem:[%s388 + $0x50] sm:$0xff] %vm6283, %v8184
      %8249 = vst.msk [vmem:[%s388 + $0x58] sm:$0xff] %vm6283, %v8185
      %8250 = vst.msk [vmem:[%s388 + $0x60] sm:$0xff] %vm6283, %v8186
      %8251 = vst.msk [vmem:[%s388 + $0x68] sm:$0xff] %vm6283, %v8187
      %8252 = vst.msk [vmem:[%s388 + $0x70] sm:$0xff] %vm6283, %v8188
      %8253 = vst.msk [vmem:[%s388 + $0x78] sm:$0xff] %vm6283, %v8189
      %8254 = vst.msk [vmem:[%s388 + $0x80] sm:$0xff] %vm6283, %v8190
      %8255 = vst.msk [vmem:[%s388 + $0x88] sm:$0xff] %vm6283, %v8191
      %8256 = vst.msk [vmem:[%s388 + $0x90] sm:$0xff] %vm6283, %v8192
      %8257 = vst.msk [vmem:[%s388 + $0x98] sm:$0xff] %vm6283, %v8193
      %8258 = vst.msk [vmem:[%s388 + $0xa0] sm:$0xff] %vm6283, %v8194
      %8259 = vst.msk [vmem:[%s388 + $0xa8] sm:$0xff] %vm6283, %v8195
      %8260 = vst.msk [vmem:[%s388 + $0xb0] sm:$0xff] %vm6283, %v8196
      %8261 = vst.msk [vmem:[%s388 + $0xb8] sm:$0xff] %vm6283, %v8197
      %8262 = vst.msk [vmem:[%s388 + $0xc0] sm:$0xff] %vm6283, %v8198
      %8263 = vst.msk [vmem:[%s388 + $0xc8] sm:$0xff] %vm6283, %v8199
      %8264 = vst.msk [vmem:[%s388 + $0xd0] sm:$0xff] %vm6283, %v8200
      %8265 = vst.msk [vmem:[%s388 + $0xd8] sm:$0xff] %vm6283, %v8201
      %8266 = vst.msk [vmem:[%s388 + $0xe0] sm:$0xff] %vm6283, %v8202
      %8267 = vst.msk [vmem:[%s388 + $0xe8] sm:$0xff] %vm6283, %v8203
      %8268 = vst.msk [vmem:[%s388 + $0xf0] sm:$0xff] %vm6283, %v8204
      %8269 = vst.msk [vmem:[%s388 + $0xf8] sm:$0xff] %vm6283, %v8205
      %8270 = vst.msk [vmem:[%s388 + $0x100] sm:$0xff] %vm6283, %v8206
      %8271 = vst.msk [vmem:[%s388 + $0x108] sm:$0xff] %vm6283, %v8207
      %8272 = vst.msk [vmem:[%s388 + $0x110] sm:$0xff] %vm6283, %v8208
      %8273 = vst.msk [vmem:[%s388 + $0x118] sm:$0xff] %vm6283, %v8209
      %8274 = vst.msk [vmem:[%s388 + $0x120] sm:$0xff] %vm6283, %v8210
      %8275 = vst.msk [vmem:[%s388 + $0x128] sm:$0xff] %vm6283, %v8211
      %8276 = vst.msk [vmem:[%s388 + $0x130] sm:$0xff] %vm6283, %v8212
      %8277 = vst.msk [vmem:[%s388 + $0x138] sm:$0xff] %vm6283, %v8213
      %8278 = vst.msk [vmem:[%s388 + $0x140] sm:$0xff] %vm6283, %v8214
      %8279 = vst.msk [vmem:[%s388 + $0x148] sm:$0xff] %vm6283, %v8215
      %8280 = vst.msk [vmem:[%s388 + $0x150] sm:$0xff] %vm6283, %v8216
      %8281 = vst.msk [vmem:[%s388 + $0x158] sm:$0xff] %vm6283, %v8217
      %8282 = vst.msk [vmem:[%s388 + $0x160] sm:$0xff] %vm6283, %v8218
      %8283 = vst.msk [vmem:[%s388 + $0x168] sm:$0xff] %vm6283, %v8219
      %8284 = vst.msk [vmem:[%s388 + $0x170] sm:$0xff] %vm6283, %v8220
      %8285 = vst.msk [vmem:[%s388 + $0x178] sm:$0xff] %vm6283, %v8221
      %8286 = vst.msk [vmem:[%s388 + $0x180] sm:$0xff] %vm6283, %v8222
      %8287 = vst.msk [vmem:[%s388 + $0x188] sm:$0xff] %vm6283, %v8223
      %8288 = vst.msk [vmem:[%s388 + $0x190] sm:$0xff] %vm6283, %v8224
      %8289 = vst.msk [vmem:[%s388 + $0x198] sm:$0xff] %vm6283, %v8225
      %8290 = vst.msk [vmem:[%s388 + $0x1a0] sm:$0xff] %vm6283, %v8226
      %8291 = vst.msk [vmem:[%s388 + $0x1a8] sm:$0xff] %vm6283, %v8227
      %8292 = vst.msk [vmem:[%s388 + $0x1b0] sm:$0xff] %vm6283, %v8228
      %8293 = vst.msk [vmem:[%s388 + $0x1b8] sm:$0xff] %vm6283, %v8229
      %8294 = vst.msk [vmem:[%s388 + $0x1c0] sm:$0xff] %vm6283, %v8230
      %8295 = vst.msk [vmem:[%s388 + $0x1c8] sm:$0xff] %vm6283, %v8231
      %8296 = vst.msk [vmem:[%s388 + $0x1d0] sm:$0xff] %vm6283, %v8232
      %8297 = vst.msk [vmem:[%s388 + $0x1d8] sm:$0xff] %vm6283, %v8233
      %8298 = vst.msk [vmem:[%s388 + $0x1e0] sm:$0xff] %vm6283, %v8234
      %8299 = vst.msk [vmem:[%s388 + $0x1e8] sm:$0xff] %vm6283, %v8235
      %8300 = vst.msk [vmem:[%s388 + $0x1f0] sm:$0xff] %vm6283, %v8236
      %8301 = vst.msk [vmem:[%s388 + $0x1f8] sm:$0xff] %vm6283, %v8237
      %s8302 = smul.u32 64, %s22
      %p8303 = scmp.lt.s32.totalorder %s8302, 127
      %s8304 = scalar_select %p8303, %s8302, 127
      %s8305 = smul.addr %s8304, 8
      %s8306 = scalar_lea.vmem %s11, %s8305
      // Predicated region
      $region65: #{hyper_implicit_field_forward.1} parent=63 // pred_check
        %p8307 = pneg %p276
      $region66: #{hyper_implicit_field_forward.1} parent=63 // pred_check_branch
        %8309 = sbr.rel (%p8307) target = $region68
      $region67: #{hyper_implicit_field_forward.1} parent=63 // pred_region
        %s8310 = smul.u32 64, %s22
      $region68: #{hyper_implicit_field_forward.1} parent=63 // pred_fallthru
        _
    $region64: #{hyper_implicit_field_forward.1} parent=5 // pred_fallthru
      _
    %p8311 = scmp.le.s32.totalorder 2, %s17
    // Predicated region
    $region69: #{hyper_implicit_field_forward.1} parent=5 // pred_check
      %p8312 = pneg %p8311
    $region70: #{hyper_implicit_field_forward.1} parent=5 // pred_check_branch
      %8314 = sbr.rel (%p8312) target = $region72
    $region71: #{hyper_implicit_field_forward.1} parent=5 // pred_region
      %s8315 = ssub.s32 %s17, 2
      // Predicated region
      $region73: #{hyper_implicit_field_forward.1} parent=71 // pred_check
        %p8316 = pneg %p282
      $region74: #{hyper_implicit_field_forward.1} parent=71 // pred_check_branch
        %8318 = sbr.rel (%p8316) target = $region76
      $region75: #{hyper_implicit_field_forward.1} parent=71 // pred_region
        %s8319 = smul.u32 64, %s23
        %p8320 = scmp.lt.s32.totalorder %s8319, 127
        %s8321 = scalar_select %p8320, %s8319, 127
        %s8322 = smul.addr %s8321, 8
        %s8323 = scalar_lea.vmem %s11, %s8322
      $region76: #{hyper_implicit_field_forward.1} parent=71 // pred_fallthru
        _
    $region72: #{hyper_implicit_field_forward.1} parent=5 // pred_fallthru
      _
  $region6: #{hyper_implicit_field_forward.1} parent=0 // loop_footer
    %s21 = sadd.s32 1, %s17
  $region7: #{hyper_implicit_field_forward.1} parent=0 // loop_footer_branch
    %16 = sbr.rel target = $region3
  $region8: #{hyper_implicit_field_forward.1} parent=0 // loop_exit
    _

</llo_original>
